<compile_context>
chip_gen: v7x
topology: tpu7x:2x2x1
jax: 0.10.0
libtpu: 0.0.40
codegen_flags: <defaults>
</compile_context>

<pallas_src>
import functools
import math

import jax
import jax.numpy as jnp
from jax.experimental import pallas as pl
from jax.experimental.pallas import tpu as pltpu


# ----------------------------------------------------------------------------
# Fused forward kernel (bb batch elements per grid step)
# ----------------------------------------------------------------------------
def _cls4_kernel(x_ref, pe_ref, bias_ref, pw_ref, pb_ref, query_ref,
                 wqkv_ref, bqkv_ref, wo_ref, bo_ref,
                 w1_ref, b1_ref, w2_ref, b2_ref,
                 ln1g_ref, ln1b_ref, ln2g_ref, ln2b_ref,
                 clsw_ref, clsb_ref,
                 o_ref,
                 h_scr,
                 *, bb, lv, n_layers, n_heads, dim, dh, eps):
    S = lv + 1                      # tokens per batch element (incl. query)
    R = bb * S                      # total resident rows this grid step
    bf = jnp.bfloat16
    f32 = jnp.float32
    scale = 1.0 / math.sqrt(dh)

    def layer_norm(t, g, b):
        mean = jnp.mean(t, axis=-1, keepdims=True)
        tc = t - mean
        var = jnp.mean(tc * tc, axis=-1, keepdims=True)
        return tc * jax.lax.rsqrt(var + eps) * g + b

    # ---- input projection + positional embedding (batch folded into rows) ----
    x = x_ref[0]                                                    # (bb*lv, in_dim)
    h0 = jnp.dot(x.astype(bf), pw_ref[...], preferred_element_type=f32)
    h0 = h0 + pb_ref[...] + pe_ref[...]                             # (bb*lv, dim)

    # interleave [lv projected tokens, query token] per batch element
    q_row = query_ref[...]                                          # (1, dim)
    for bi in range(bb):
        h_scr[bi * S:bi * S + lv, :] = h0[bi * lv:(bi + 1) * lv, :]
        h_scr[bi * S + lv:bi * S + lv + 1, :] = q_row
    h = h_scr[...]                                                  # (R, dim) f32

    bias = bias_ref[...]                                            # (R, R) block-diag mask

    # ---- encoder layers (weights resident in VMEM, static unrolled loop) ----
    for li in range(n_layers):
        hb = h.astype(bf)
        # fused Q/K/V projection: (R, dim) @ (dim, 3*dim)
        qkv = jnp.dot(hb, wqkv_ref[li], preferred_element_type=f32) + bqkv_ref[li]
        wo_l = wo_ref[li]                                           # (dim, dim) bf16

        attn = jnp.zeros((R, dim), f32)
        for hh in range(n_heads):
            lo = hh * dh
            qh = (qkv[:, lo:lo + dh] * scale).astype(bf)            # (R, dh)
            kh = qkv[:, dim + lo:dim + lo + dh].astype(bf)          # (R, dh)
            vh = qkv[:, 2 * dim + lo:2 * dim + lo + dh].astype(bf)  # (R, dh)
            s = jax.lax.dot_general(qh, kh, (((1,), (1,)), ((), ())),
                                    preferred_element_type=f32)     # (R, R)
            s = s + bias                                            # mask cross-batch keys
            m = jnp.max(s, axis=-1, keepdims=True)
            p = jnp.exp(s - m)
            lsum = jnp.sum(p, axis=-1, keepdims=True)
            p = p * pl.reciprocal(lsum, approx=True)
            oh = jnp.dot(p.astype(bf), vh, preferred_element_type=f32)  # (R, dh)
            # fold the output projection per head: concat_h(oh) @ Wo
            attn = attn + jnp.dot(oh.astype(bf), wo_l[lo:lo + dh, :],
                                  preferred_element_type=f32)
        attn = attn + bo_ref[li]

        h1 = layer_norm(h + attn, ln1g_ref[li], ln1b_ref[li])

        ff = jnp.dot(h1.astype(bf), w1_ref[li], preferred_element_type=f32) + b1_ref[li]
        ff = jnp.maximum(ff, 0.0)
        ff = jnp.dot(ff.astype(bf), w2_ref[li], preferred_element_type=f32) + b2_ref[li]

        h = layer_norm(h1 + ff, ln2g_ref[li], ln2b_ref[li])

    # ---- classifier on the query token (last row of each batch element) ----
    for bi in range(bb):
        h_scr[bi:bi + 1, :] = h[bi * S + lv:bi * S + lv + 1, :]
    cls_in = h_scr[0:bb, :]                                         # (bb, dim)
    logits = jnp.dot(cls_in.astype(bf), clsw_ref[...], preferred_element_type=f32)
    o_ref[0] = logits + clsb_ref[...]                               # (bb, 128)


# ----------------------------------------------------------------------------
# Parameter init (deterministic, synthetic, weights stacked per layer)
# ----------------------------------------------------------------------------
def init_params(key, lv, in_dim, dim=128, n_layers=4):
    ffn = 4 * dim
    ks = jax.random.split(key, 8)

    def w(k, shape, scale=0.02):
        return scale * jax.random.normal(k, shape, jnp.float32)

    return {
        "proj_w": w(ks[0], (in_dim, dim)),
        "proj_b": jnp.zeros((dim,), jnp.float32),
        "pe_em": w(ks[1], (lv, dim)),
        "query_em": w(ks[2], (1, dim)),
        "cls_w": w(ks[3], (dim, 10)),
        "cls_b": jnp.zeros((10,), jnp.float32),
        # stacked encoder-layer weights (leading axis = layer)
        "wqkv": w(ks[4], (n_layers, dim, 3 * dim)),
        "bqkv": jnp.zeros((n_layers, 3 * dim), jnp.float32),
        "wo": w(ks[5], (n_layers, dim, dim)),
        "bo": jnp.zeros((n_layers, dim), jnp.float32),
        "w1": w(ks[6], (n_layers, dim, ffn)),
        "b1": jnp.zeros((n_layers, ffn), jnp.float32),
        "w2": w(ks[7], (n_layers, ffn, dim)),
        "b2": jnp.zeros((n_layers, dim), jnp.float32),
        "ln1_g": jnp.ones((n_layers, dim), jnp.float32),
        "ln1_b": jnp.zeros((n_layers, dim), jnp.float32),
        "ln2_g": jnp.ones((n_layers, dim), jnp.float32),
        "ln2_b": jnp.zeros((n_layers, dim), jnp.float32),
    }


# ----------------------------------------------------------------------------
# Cls4 forward (single fused pallas_call)
# ----------------------------------------------------------------------------
def cls4_forward(params, x, n_heads=4, ln_eps=1e-5, max_bb=8):
    B, lv, in_dim = x.shape
    dim = params["proj_w"].shape[1]
    n_layers = params["wqkv"].shape[0]
    ffn = params["w1"].shape[2]
    dh = dim // n_heads
    S = lv + 1
    ncls_pad = 128   # lane-dense classifier output, sliced to 10 outside

    # batch-block size: largest divisor of B not exceeding max_bb
    bb = max(d for d in range(1, min(B, max_bb) + 1) if B % d == 0)
    steps = B // bb
    R = bb * S

    bf = jnp.bfloat16
    # bf16 matmul operands (MXU-native); biases / LN / pe stay f32.
    proj_w = params["proj_w"].astype(bf)
    wqkv = params["wqkv"].astype(bf)
    wo = params["wo"].astype(bf)
    w1 = params["w1"].astype(bf)
    w2 = params["w2"].astype(bf)
    cls_w = jnp.zeros((dim, ncls_pad), jnp.float32).at[:, :10].set(params["cls_w"]).astype(bf)
    cls_b = jnp.zeros((1, ncls_pad), jnp.float32).at[:, :10].set(params["cls_b"])

    proj_b = params["proj_b"].reshape(1, dim)
    pe_tiled = jnp.tile(params["pe_em"], (bb, 1))                   # (bb*lv, dim)
    query = params["query_em"].reshape(1, dim)
    bqkv = params["bqkv"].reshape(n_layers, 1, 3 * dim)
    bo = params["bo"].reshape(n_layers, 1, dim)
    b1 = params["b1"].reshape(n_layers, 1, ffn)
    b2 = params["b2"].reshape(n_layers, 1, dim)
    ln1_g = params["ln1_g"].reshape(n_layers, 1, dim)
    ln1_b = params["ln1_b"].reshape(n_layers, 1, dim)
    ln2_g = params["ln2_g"].reshape(n_layers, 1, dim)
    ln2_b = params["ln2_b"].reshape(n_layers, 1, dim)

    # block-diagonal attention bias (rows/cols of different batch elems masked)
    rid = jnp.arange(R) // S
    attn_bias = jnp.where(rid[:, None] == rid[None, :], 0.0, -1e30).astype(jnp.float32)

    # batch folded into rows for the projection matmuls
    x_r = x.reshape(steps, bb * lv, in_dim)

    def full_spec(shape):
        return pl.BlockSpec(shape, lambda i, _n=len(shape): (0,) * _n)

    kern = functools.partial(
        _cls4_kernel, bb=bb, lv=lv, n_layers=n_layers, n_heads=n_heads,
        dim=dim, dh=dh, eps=ln_eps)

    out = pl.pallas_call(
        kern,
        out_shape=jax.ShapeDtypeStruct((steps, bb, ncls_pad), jnp.float32),
        grid=(steps,),
        in_specs=[
            pl.BlockSpec((1, bb * lv, in_dim), lambda i: (i, 0, 0)),  # x (per batch block)
            full_spec((bb * lv, dim)),                                # pe (tiled)
            full_spec((R, R)),                                        # attn bias
            full_spec((in_dim, dim)),                                 # proj_w
            full_spec((1, dim)),                                      # proj_b
            full_spec((1, dim)),                                      # query_em
            full_spec((n_layers, dim, 3 * dim)),                      # wqkv
            full_spec((n_layers, 1, 3 * dim)),                        # bqkv
            full_spec((n_layers, dim, dim)),                          # wo
            full_spec((n_layers, 1, dim)),                            # bo
            full_spec((n_layers, dim, ffn)),                          # w1
            full_spec((n_layers, 1, ffn)),                            # b1
            full_spec((n_layers, ffn, dim)),                          # w2
            full_spec((n_layers, 1, dim)),                            # b2
            full_spec((n_layers, 1, dim)),                            # ln1_g
            full_spec((n_layers, 1, dim)),                            # ln1_b
            full_spec((n_layers, 1, dim)),                            # ln2_g
            full_spec((n_layers, 1, dim)),                            # ln2_b
            full_spec((dim, ncls_pad)),                               # cls_w (padded)
            full_spec((1, ncls_pad)),                                 # cls_b (padded)
        ],
        out_specs=pl.BlockSpec((1, bb, ncls_pad), lambda i: (i, 0, 0)),
        scratch_shapes=[pltpu.VMEM((R, dim), jnp.float32)],           # resident slab
        compiler_params=pltpu.CompilerParams(
            dimension_semantics=("parallel",)),
    )(x_r, pe_tiled, attn_bias, proj_w, proj_b, query,
      wqkv, bqkv, wo, bo, w1, b1, w2, b2,
      ln1_g, ln1_b, ln2_g, ln2_b, cls_w, cls_b)

    return out.reshape(B, ncls_pad)[:, :10]


if __name__ == "__main__":
    B, LV, IN_DIM, DIM = 2, 8, 16, 128

    params = init_params(jax.random.PRNGKey(42), LV, IN_DIM, DIM)
    x = jax.random.normal(jax.random.PRNGKey(0), (B, LV, IN_DIM), jnp.float32)

    fwd = jax.jit(cls4_forward)
    out = fwd(params, x)
    jax.block_until_ready(out)

    assert out.shape == (B, 10), out.shape
    assert out.dtype == jnp.float32
    assert bool(jnp.all(jnp.isfinite(out)))
    print("KERNEL_OK")
</pallas_src>

<mosaic_0001>
module attributes {stable_mosaic.version = 11 : i64} {
  func.func @_cls4_kernel(%arg0: i32, %arg1: memref<1x16x16xf32, #tpu.memory_space<vmem>>, %arg2: memref<16x128xf32, #tpu.memory_space<vmem>>, %arg3: memref<18x18xf32, #tpu.memory_space<vmem>>, %arg4: memref<16x128xbf16, #tpu.memory_space<vmem>>, %arg5: memref<1x128xf32, #tpu.memory_space<vmem>>, %arg6: memref<1x128xf32, #tpu.memory_space<vmem>>, %arg7: memref<4x128x384xbf16, #tpu.memory_space<vmem>>, %arg8: memref<4x1x384xf32, #tpu.memory_space<vmem>>, %arg9: memref<4x128x128xbf16, #tpu.memory_space<vmem>>, %arg10: memref<4x1x128xf32, #tpu.memory_space<vmem>>, %arg11: memref<4x128x512xbf16, #tpu.memory_space<vmem>>, %arg12: memref<4x1x512xf32, #tpu.memory_space<vmem>>, %arg13: memref<4x512x128xbf16, #tpu.memory_space<vmem>>, %arg14: memref<4x1x128xf32, #tpu.memory_space<vmem>>, %arg15: memref<4x1x128xf32, #tpu.memory_space<vmem>>, %arg16: memref<4x1x128xf32, #tpu.memory_space<vmem>>, %arg17: memref<4x1x128xf32, #tpu.memory_space<vmem>>, %arg18: memref<4x1x128xf32, #tpu.memory_space<vmem>>, %arg19: memref<128x128xbf16, #tpu.memory_space<vmem>>, %arg20: memref<1x128xf32, #tpu.memory_space<vmem>>, %arg21: memref<1x2x128xf32, #tpu.memory_space<vmem>>, %arg22: memref<18x128xf32, #tpu.memory_space<vmem>>) attributes {dimension_semantics = [#tpu.dimension_semantics<parallel>], iteration_bounds = array<i64: 1>, scalar_prefetch = 0 : i64, scratch_operands = 1 : i64, tpu.core_type = #tpu.core_type<tc>, window_params = [{transform_indices = @transform_0, window_bounds = array<i64: 1, 16, 16>}, {pipeline_mode = #tpu.pipeline_mode<synchronous>, transform_indices = @transform_1, window_bounds = array<i64: 16, 128>}, {pipeline_mode = #tpu.pipeline_mode<synchronous>, transform_indices = @transform_2, window_bounds = array<i64: 18, 18>}, {pipeline_mode = #tpu.pipeline_mode<synchronous>, transform_indices = @transform_3, window_bounds = array<i64: 16, 128>}, {pipeline_mode = #tpu.pipeline_mode<synchronous>, transform_indices = @transform_4, window_bounds = array<i64: 1, 128>}, {pipeline_mode = #tpu.pipeline_mode<synchronous>, transform_indices = @transform_5, window_bounds = array<i64: 1, 128>}, {pipeline_mode = #tpu.pipeline_mode<synchronous>, transform_indices = @transform_6, window_bounds = array<i64: 4, 128, 384>}, {pipeline_mode = #tpu.pipeline_mode<synchronous>, transform_indices = @transform_7, window_bounds = array<i64: 4, 1, 384>}, {pipeline_mode = #tpu.pipeline_mode<synchronous>, transform_indices = @transform_8, window_bounds = array<i64: 4, 128, 128>}, {pipeline_mode = #tpu.pipeline_mode<synchronous>, transform_indices = @transform_9, window_bounds = array<i64: 4, 1, 128>}, {pipeline_mode = #tpu.pipeline_mode<synchronous>, transform_indices = @transform_10, window_bounds = array<i64: 4, 128, 512>}, {pipeline_mode = #tpu.pipeline_mode<synchronous>, transform_indices = @transform_11, window_bounds = array<i64: 4, 1, 512>}, {pipeline_mode = #tpu.pipeline_mode<synchronous>, transform_indices = @transform_12, window_bounds = array<i64: 4, 512, 128>}, {pipeline_mode = #tpu.pipeline_mode<synchronous>, transform_indices = @transform_13, window_bounds = array<i64: 4, 1, 128>}, {pipeline_mode = #tpu.pipeline_mode<synchronous>, transform_indices = @transform_14, window_bounds = array<i64: 4, 1, 128>}, {pipeline_mode = #tpu.pipeline_mode<synchronous>, transform_indices = @transform_15, window_bounds = array<i64: 4, 1, 128>}, {pipeline_mode = #tpu.pipeline_mode<synchronous>, transform_indices = @transform_16, window_bounds = array<i64: 4, 1, 128>}, {pipeline_mode = #tpu.pipeline_mode<synchronous>, transform_indices = @transform_17, window_bounds = array<i64: 4, 1, 128>}, {pipeline_mode = #tpu.pipeline_mode<synchronous>, transform_indices = @transform_18, window_bounds = array<i64: 128, 128>}, {pipeline_mode = #tpu.pipeline_mode<synchronous>, transform_indices = @transform_19, window_bounds = array<i64: 1, 128>}, {transform_indices = @transform_20, window_bounds = array<i64: 1, 2, 128>}]} {
    %c0 = arith.constant 0 : index
    %c0_0 = arith.constant 0 : index
    %c0_1 = arith.constant 0 : index
    %0 = vector.load %arg1[%c0, %c0_0, %c0_1] : memref<1x16x16xf32, #tpu.memory_space<vmem>>, vector<1x16x16xf32>
    %1 = vector.shape_cast %0 : vector<1x16x16xf32> to vector<16x16xf32>
    %2 = arith.truncf %1 : vector<16x16xf32> to vector<16x16xbf16>
    %c0_2 = arith.constant 0 : index
    %c0_3 = arith.constant 0 : index
    %3 = vector.load %arg4[%c0_2, %c0_3] : memref<16x128xbf16, #tpu.memory_space<vmem>>, vector<16x128xbf16>
    %cst = arith.constant dense<0.000000e+00> : vector<16x128xf32>
    %4 = tpu.matmul %2, %3, %cst {dimension_numbers = #tpu.dot_dimension_numbers<[1], [0], [0], [1], [0, 0, 1, 1], [], []>} : vector<16x16xbf16>, vector<16x128xbf16>, vector<16x128xf32> -> vector<16x128xf32>
    %c0_4 = arith.constant 0 : index
    %c0_5 = arith.constant 0 : index
    %5 = vector.load %arg5[%c0_4, %c0_5] : memref<1x128xf32, #tpu.memory_space<vmem>>, vector<1x128xf32>
    %6 = vector.broadcast %5 : vector<1x128xf32> to vector<16x128xf32>
    %7 = arith.addf %4, %6 : vector<16x128xf32>
    %c0_6 = arith.constant 0 : index
    %c0_7 = arith.constant 0 : index
    %8 = vector.load %arg2[%c0_6, %c0_7] : memref<16x128xf32, #tpu.memory_space<vmem>>, vector<16x128xf32>
    %9 = arith.addf %7, %8 : vector<16x128xf32>
    %c0_8 = arith.constant 0 : index
    %c0_9 = arith.constant 0 : index
    %10 = vector.load %arg6[%c0_8, %c0_9] : memref<1x128xf32, #tpu.memory_space<vmem>>, vector<1x128xf32>
    %11 = vector.extract_strided_slice %9 {offsets = [0, 0], sizes = [8, 128], strides = [1, 1]} : vector<16x128xf32> to vector<8x128xf32>
    %c0_10 = arith.constant 0 : index
    %c0_11 = arith.constant 0 : index
    %12 = vector.load %arg22[%c0_10, %c0_11] : memref<18x128xf32, #tpu.memory_space<vmem>>, vector<8x128xf32>
    tpu.vector_store %arg22[%c0_10, %c0_11], %11 {strides = array<i32>} : memref<18x128xf32, #tpu.memory_space<vmem>>, vector<8x128xf32>,
    %c8 = arith.constant 8 : index
    %c0_12 = arith.constant 0 : index
    %13 = vector.load %arg22[%c8, %c0_12] : memref<18x128xf32, #tpu.memory_space<vmem>>, vector<1x128xf32>
    tpu.vector_store %arg22[%c8, %c0_12], %10 {strides = array<i32>} : memref<18x128xf32, #tpu.memory_space<vmem>>, vector<1x128xf32>,
    %14 = vector.extract_strided_slice %9 {offsets = [8, 0], sizes = [8, 128], strides = [1, 1]} : vector<16x128xf32> to vector<8x128xf32>
    %c9 = arith.constant 9 : index
    %c0_13 = arith.constant 0 : index
    %15 = vector.load %arg22[%c9, %c0_13] : memref<18x128xf32, #tpu.memory_space<vmem>>, vector<8x128xf32>
    tpu.vector_store %arg22[%c9, %c0_13], %14 {strides = array<i32>} : memref<18x128xf32, #tpu.memory_space<vmem>>, vector<8x128xf32>,
    %c17 = arith.constant 17 : index
    %c0_14 = arith.constant 0 : index
    %16 = vector.load %arg22[%c17, %c0_14] : memref<18x128xf32, #tpu.memory_space<vmem>>, vector<1x128xf32>
    tpu.vector_store %arg22[%c17, %c0_14], %10 {strides = array<i32>} : memref<18x128xf32, #tpu.memory_space<vmem>>, vector<1x128xf32>,
    %c0_15 = arith.constant 0 : index
    %c0_16 = arith.constant 0 : index
    %17 = vector.load %arg22[%c0_15, %c0_16] : memref<18x128xf32, #tpu.memory_space<vmem>>, vector<18x128xf32>
    %c0_17 = arith.constant 0 : index
    %c0_18 = arith.constant 0 : index
    %18 = vector.load %arg3[%c0_17, %c0_18] : memref<18x18xf32, #tpu.memory_space<vmem>>, vector<18x18xf32>
    %19 = arith.truncf %17 : vector<18x128xf32> to vector<18x128xbf16>
    %c0_19 = arith.constant 0 : index
    %c0_20 = arith.constant 0 : index
    %c0_21 = arith.constant 0 : index
    %20 = vector.load %arg7[%c0_19, %c0_20, %c0_21] : memref<4x128x384xbf16, #tpu.memory_space<vmem>>, vector<1x128x384xbf16>
    %21 = vector.shape_cast %20 : vector<1x128x384xbf16> to vector<128x384xbf16>
    %cst_22 = arith.constant dense<0.000000e+00> : vector<18x384xf32>
    %22 = tpu.matmul %19, %21, %cst_22 {dimension_numbers = #tpu.dot_dimension_numbers<[1], [0], [0], [1], [0, 0, 1, 1], [], []>} : vector<18x128xbf16>, vector<128x384xbf16>, vector<18x384xf32> -> vector<18x384xf32>
    %c0_23 = arith.constant 0 : index
    %c0_24 = arith.constant 0 : index
    %c0_25 = arith.constant 0 : index
    %23 = vector.load %arg8[%c0_23, %c0_24, %c0_25] : memref<4x1x384xf32, #tpu.memory_space<vmem>>, vector<1x1x384xf32>
    %24 = vector.shape_cast %23 : vector<1x1x384xf32> to vector<1x384xf32>
    %25 = vector.broadcast %24 : vector<1x384xf32> to vector<18x384xf32>
    %26 = arith.addf %22, %25 : vector<18x384xf32>
    %c0_26 = arith.constant 0 : index
    %c0_27 = arith.constant 0 : index
    %c0_28 = arith.constant 0 : index
    %27 = vector.load %arg9[%c0_26, %c0_27, %c0_28] : memref<4x128x128xbf16, #tpu.memory_space<vmem>>, vector<1x128x128xbf16>
    %28 = vector.shape_cast %27 : vector<1x128x128xbf16> to vector<128x128xbf16>
    %cst_29 = arith.constant 0.000000e+00 : f32
    %29 = vector.broadcast %cst_29 : f32 to vector<18x128xf32>
    %30 = vector.extract_strided_slice %26 {offsets = [0, 0], sizes = [18, 32], strides = [1, 1]} : vector<18x384xf32> to vector<18x32xf32>
    %cst_30 = arith.constant 0.176776692 : f32
    %31 = vector.broadcast %cst_30 : f32 to vector<18x32xf32>
    %32 = arith.mulf %30, %31 : vector<18x32xf32>
    %33 = arith.truncf %32 : vector<18x32xf32> to vector<18x32xbf16>
    %34 = vector.extract_strided_slice %26 {offsets = [0, 128], sizes = [18, 32], strides = [1, 1]} : vector<18x384xf32> to vector<18x32xf32>
    %35 = arith.truncf %34 : vector<18x32xf32> to vector<18x32xbf16>
    %36 = vector.extract_strided_slice %26 {offsets = [0, 256], sizes = [18, 32], strides = [1, 1]} : vector<18x384xf32> to vector<18x32xf32>
    %37 = arith.truncf %36 : vector<18x32xf32> to vector<18x32xbf16>
    %cst_31 = arith.constant dense<0.000000e+00> : vector<18x18xf32>
    %38 = tpu.matmul %33, %35, %cst_31 {dimension_numbers = #tpu.dot_dimension_numbers<[1], [1], [0], [0], [0, 0, 1, 0], [], []>} : vector<18x32xbf16>, vector<18x32xbf16>, vector<18x18xf32> -> vector<18x18xf32>
    %39 = arith.addf %38, %18 : vector<18x18xf32>
    %cst_32 = arith.constant dense<0xFF800000> : vector<18xf32>
    %40 = vector.multi_reduction <maximumf>, %39, %cst_32 [1] : vector<18x18xf32> to vector<18xf32>
    %41 = vector.shape_cast %40 : vector<18xf32> to vector<18x1xf32>
    %42 = vector.broadcast %41 : vector<18x1xf32> to vector<18x18xf32>
    %43 = arith.subf %39, %42 : vector<18x18xf32>
    %44 = math.exp %43 : vector<18x18xf32>
    %cst_33 = arith.constant dense<0.000000e+00> : vector<18xf32>
    %45 = vector.multi_reduction <add>, %44, %cst_33 [1] : vector<18x18xf32> to vector<18xf32>
    %46 = vector.shape_cast %45 : vector<18xf32> to vector<18x1xf32>
    %47 = tpu.reciprocal %46 {approx = true} : vector<18x1xf32> -> vector<18x1xf32>
    %48 = vector.broadcast %47 : vector<18x1xf32> to vector<18x18xf32>
    %49 = arith.mulf %44, %48 : vector<18x18xf32>
    %50 = arith.truncf %49 : vector<18x18xf32> to vector<18x18xbf16>
    %cst_34 = arith.constant dense<0.000000e+00> : vector<18x32xf32>
    %51 = tpu.matmul %50, %37, %cst_34 {dimension_numbers = #tpu.dot_dimension_numbers<[1], [0], [0], [1], [0, 0, 1, 1], [], []>} : vector<18x18xbf16>, vector<18x32xbf16>, vector<18x32xf32> -> vector<18x32xf32>
    %52 = arith.truncf %51 : vector<18x32xf32> to vector<18x32xbf16>
    %53 = vector.extract_strided_slice %28 {offsets = [0, 0], sizes = [32, 128], strides = [1, 1]} : vector<128x128xbf16> to vector<32x128xbf16>
    %cst_35 = arith.constant dense<0.000000e+00> : vector<18x128xf32>
    %54 = tpu.matmul %52, %53, %cst_35 {dimension_numbers = #tpu.dot_dimension_numbers<[1], [0], [0], [1], [0, 0, 1, 1], [], []>} : vector<18x32xbf16>, vector<32x128xbf16>, vector<18x128xf32> -> vector<18x128xf32>
    %55 = arith.addf %29, %54 : vector<18x128xf32>
    %56 = vector.extract_strided_slice %26 {offsets = [0, 32], sizes = [18, 32], strides = [1, 1]} : vector<18x384xf32> to vector<18x32xf32>
    %cst_36 = arith.constant 0.176776692 : f32
    %57 = vector.broadcast %cst_36 : f32 to vector<18x32xf32>
    %58 = arith.mulf %56, %57 : vector<18x32xf32>
    %59 = arith.truncf %58 : vector<18x32xf32> to vector<18x32xbf16>
    %60 = vector.extract_strided_slice %26 {offsets = [0, 160], sizes = [18, 32], strides = [1, 1]} : vector<18x384xf32> to vector<18x32xf32>
    %61 = arith.truncf %60 : vector<18x32xf32> to vector<18x32xbf16>
    %62 = vector.extract_strided_slice %26 {offsets = [0, 288], sizes = [18, 32], strides = [1, 1]} : vector<18x384xf32> to vector<18x32xf32>
    %63 = arith.truncf %62 : vector<18x32xf32> to vector<18x32xbf16>
    %cst_37 = arith.constant dense<0.000000e+00> : vector<18x18xf32>
    %64 = tpu.matmul %59, %61, %cst_37 {dimension_numbers = #tpu.dot_dimension_numbers<[1], [1], [0], [0], [0, 0, 1, 0], [], []>} : vector<18x32xbf16>, vector<18x32xbf16>, vector<18x18xf32> -> vector<18x18xf32>
    %65 = arith.addf %64, %18 : vector<18x18xf32>
    %cst_38 = arith.constant dense<0xFF800000> : vector<18xf32>
    %66 = vector.multi_reduction <maximumf>, %65, %cst_38 [1] : vector<18x18xf32> to vector<18xf32>
    %67 = vector.shape_cast %66 : vector<18xf32> to vector<18x1xf32>
    %68 = vector.broadcast %67 : vector<18x1xf32> to vector<18x18xf32>
    %69 = arith.subf %65, %68 : vector<18x18xf32>
    %70 = math.exp %69 : vector<18x18xf32>
    %cst_39 = arith.constant dense<0.000000e+00> : vector<18xf32>
    %71 = vector.multi_reduction <add>, %70, %cst_39 [1] : vector<18x18xf32> to vector<18xf32>
    %72 = vector.shape_cast %71 : vector<18xf32> to vector<18x1xf32>
    %73 = tpu.reciprocal %72 {approx = true} : vector<18x1xf32> -> vector<18x1xf32>
    %74 = vector.broadcast %73 : vector<18x1xf32> to vector<18x18xf32>
    %75 = arith.mulf %70, %74 : vector<18x18xf32>
    %76 = arith.truncf %75 : vector<18x18xf32> to vector<18x18xbf16>
    %cst_40 = arith.constant dense<0.000000e+00> : vector<18x32xf32>
    %77 = tpu.matmul %76, %63, %cst_40 {dimension_numbers = #tpu.dot_dimension_numbers<[1], [0], [0], [1], [0, 0, 1, 1], [], []>} : vector<18x18xbf16>, vector<18x32xbf16>, vector<18x32xf32> -> vector<18x32xf32>
    %78 = arith.truncf %77 : vector<18x32xf32> to vector<18x32xbf16>
    %79 = vector.extract_strided_slice %28 {offsets = [32, 0], sizes = [32, 128], strides = [1, 1]} : vector<128x128xbf16> to vector<32x128xbf16>
    %cst_41 = arith.constant dense<0.000000e+00> : vector<18x128xf32>
    %80 = tpu.matmul %78, %79, %cst_41 {dimension_numbers = #tpu.dot_dimension_numbers<[1], [0], [0], [1], [0, 0, 1, 1], [], []>} : vector<18x32xbf16>, vector<32x128xbf16>, vector<18x128xf32> -> vector<18x128xf32>
    %81 = arith.addf %55, %80 : vector<18x128xf32>
    %82 = vector.extract_strided_slice %26 {offsets = [0, 64], sizes = [18, 32], strides = [1, 1]} : vector<18x384xf32> to vector<18x32xf32>
    %cst_42 = arith.constant 0.176776692 : f32
    %83 = vector.broadcast %cst_42 : f32 to vector<18x32xf32>
    %84 = arith.mulf %82, %83 : vector<18x32xf32>
    %85 = arith.truncf %84 : vector<18x32xf32> to vector<18x32xbf16>
    %86 = vector.extract_strided_slice %26 {offsets = [0, 192], sizes = [18, 32], strides = [1, 1]} : vector<18x384xf32> to vector<18x32xf32>
    %87 = arith.truncf %86 : vector<18x32xf32> to vector<18x32xbf16>
    %88 = vector.extract_strided_slice %26 {offsets = [0, 320], sizes = [18, 32], strides = [1, 1]} : vector<18x384xf32> to vector<18x32xf32>
    %89 = arith.truncf %88 : vector<18x32xf32> to vector<18x32xbf16>
    %cst_43 = arith.constant dense<0.000000e+00> : vector<18x18xf32>
    %90 = tpu.matmul %85, %87, %cst_43 {dimension_numbers = #tpu.dot_dimension_numbers<[1], [1], [0], [0], [0, 0, 1, 0], [], []>} : vector<18x32xbf16>, vector<18x32xbf16>, vector<18x18xf32> -> vector<18x18xf32>
    %91 = arith.addf %90, %18 : vector<18x18xf32>
    %cst_44 = arith.constant dense<0xFF800000> : vector<18xf32>
    %92 = vector.multi_reduction <maximumf>, %91, %cst_44 [1] : vector<18x18xf32> to vector<18xf32>
    %93 = vector.shape_cast %92 : vector<18xf32> to vector<18x1xf32>
    %94 = vector.broadcast %93 : vector<18x1xf32> to vector<18x18xf32>
    %95 = arith.subf %91, %94 : vector<18x18xf32>
    %96 = math.exp %95 : vector<18x18xf32>
    %cst_45 = arith.constant dense<0.000000e+00> : vector<18xf32>
    %97 = vector.multi_reduction <add>, %96, %cst_45 [1] : vector<18x18xf32> to vector<18xf32>
    %98 = vector.shape_cast %97 : vector<18xf32> to vector<18x1xf32>
    %99 = tpu.reciprocal %98 {approx = true} : vector<18x1xf32> -> vector<18x1xf32>
    %100 = vector.broadcast %99 : vector<18x1xf32> to vector<18x18xf32>
    %101 = arith.mulf %96, %100 : vector<18x18xf32>
    %102 = arith.truncf %101 : vector<18x18xf32> to vector<18x18xbf16>
    %cst_46 = arith.constant dense<0.000000e+00> : vector<18x32xf32>
    %103 = tpu.matmul %102, %89, %cst_46 {dimension_numbers = #tpu.dot_dimension_numbers<[1], [0], [0], [1], [0, 0, 1, 1], [], []>} : vector<18x18xbf16>, vector<18x32xbf16>, vector<18x32xf32> -> vector<18x32xf32>
    %104 = arith.truncf %103 : vector<18x32xf32> to vector<18x32xbf16>
    %105 = vector.extract_strided_slice %28 {offsets = [64, 0], sizes = [32, 128], strides = [1, 1]} : vector<128x128xbf16> to vector<32x128xbf16>
    %cst_47 = arith.constant dense<0.000000e+00> : vector<18x128xf32>
    %106 = tpu.matmul %104, %105, %cst_47 {dimension_numbers = #tpu.dot_dimension_numbers<[1], [0], [0], [1], [0, 0, 1, 1], [], []>} : vector<18x32xbf16>, vector<32x128xbf16>, vector<18x128xf32> -> vector<18x128xf32>
    %107 = arith.addf %81, %106 : vector<18x128xf32>
    %108 = vector.extract_strided_slice %26 {offsets = [0, 96], sizes = [18, 32], strides = [1, 1]} : vector<18x384xf32> to vector<18x32xf32>
    %cst_48 = arith.constant 0.176776692 : f32
    %109 = vector.broadcast %cst_48 : f32 to vector<18x32xf32>
    %110 = arith.mulf %108, %109 : vector<18x32xf32>
    %111 = arith.truncf %110 : vector<18x32xf32> to vector<18x32xbf16>
    %112 = vector.extract_strided_slice %26 {offsets = [0, 224], sizes = [18, 32], strides = [1, 1]} : vector<18x384xf32> to vector<18x32xf32>
    %113 = arith.truncf %112 : vector<18x32xf32> to vector<18x32xbf16>
    %114 = vector.extract_strided_slice %26 {offsets = [0, 352], sizes = [18, 32], strides = [1, 1]} : vector<18x384xf32> to vector<18x32xf32>
    %115 = arith.truncf %114 : vector<18x32xf32> to vector<18x32xbf16>
    %cst_49 = arith.constant dense<0.000000e+00> : vector<18x18xf32>
    %116 = tpu.matmul %111, %113, %cst_49 {dimension_numbers = #tpu.dot_dimension_numbers<[1], [1], [0], [0], [0, 0, 1, 0], [], []>} : vector<18x32xbf16>, vector<18x32xbf16>, vector<18x18xf32> -> vector<18x18xf32>
    %117 = arith.addf %116, %18 : vector<18x18xf32>
    %cst_50 = arith.constant dense<0xFF800000> : vector<18xf32>
    %118 = vector.multi_reduction <maximumf>, %117, %cst_50 [1] : vector<18x18xf32> to vector<18xf32>
    %119 = vector.shape_cast %118 : vector<18xf32> to vector<18x1xf32>
    %120 = vector.broadcast %119 : vector<18x1xf32> to vector<18x18xf32>
    %121 = arith.subf %117, %120 : vector<18x18xf32>
    %122 = math.exp %121 : vector<18x18xf32>
    %cst_51 = arith.constant dense<0.000000e+00> : vector<18xf32>
    %123 = vector.multi_reduction <add>, %122, %cst_51 [1] : vector<18x18xf32> to vector<18xf32>
    %124 = vector.shape_cast %123 : vector<18xf32> to vector<18x1xf32>
    %125 = tpu.reciprocal %124 {approx = true} : vector<18x1xf32> -> vector<18x1xf32>
    %126 = vector.broadcast %125 : vector<18x1xf32> to vector<18x18xf32>
    %127 = arith.mulf %122, %126 : vector<18x18xf32>
    %128 = arith.truncf %127 : vector<18x18xf32> to vector<18x18xbf16>
    %cst_52 = arith.constant dense<0.000000e+00> : vector<18x32xf32>
    %129 = tpu.matmul %128, %115, %cst_52 {dimension_numbers = #tpu.dot_dimension_numbers<[1], [0], [0], [1], [0, 0, 1, 1], [], []>} : vector<18x18xbf16>, vector<18x32xbf16>, vector<18x32xf32> -> vector<18x32xf32>
    %130 = arith.truncf %129 : vector<18x32xf32> to vector<18x32xbf16>
    %131 = vector.extract_strided_slice %28 {offsets = [96, 0], sizes = [32, 128], strides = [1, 1]} : vector<128x128xbf16> to vector<32x128xbf16>
    %cst_53 = arith.constant dense<0.000000e+00> : vector<18x128xf32>
    %132 = tpu.matmul %130, %131, %cst_53 {dimension_numbers = #tpu.dot_dimension_numbers<[1], [0], [0], [1], [0, 0, 1, 1], [], []>} : vector<18x32xbf16>, vector<32x128xbf16>, vector<18x128xf32> -> vector<18x128xf32>
    %133 = arith.addf %107, %132 : vector<18x128xf32>
    %c0_54 = arith.constant 0 : index
    %c0_55 = arith.constant 0 : index
    %c0_56 = arith.constant 0 : index
    %134 = vector.load %arg10[%c0_54, %c0_55, %c0_56] : memref<4x1x128xf32, #tpu.memory_space<vmem>>, vector<1x1x128xf32>
    %135 = vector.shape_cast %134 : vector<1x1x128xf32> to vector<1x128xf32>
    %136 = vector.broadcast %135 : vector<1x128xf32> to vector<18x128xf32>
    %137 = arith.addf %133, %136 : vector<18x128xf32>
    %138 = arith.addf %17, %137 : vector<18x128xf32>
    %c0_57 = arith.constant 0 : index
    %c0_58 = arith.constant 0 : index
    %c0_59 = arith.constant 0 : index
    %139 = vector.load %arg15[%c0_57, %c0_58, %c0_59] : memref<4x1x128xf32, #tpu.memory_space<vmem>>, vector<1x1x128xf32>
    %140 = vector.shape_cast %139 : vector<1x1x128xf32> to vector<1x128xf32>
    %c0_60 = arith.constant 0 : index
    %c0_61 = arith.constant 0 : index
    %c0_62 = arith.constant 0 : index
    %141 = vector.load %arg16[%c0_60, %c0_61, %c0_62] : memref<4x1x128xf32, #tpu.memory_space<vmem>>, vector<1x1x128xf32>
    %142 = vector.shape_cast %141 : vector<1x1x128xf32> to vector<1x128xf32>
    %cst_63 = arith.constant dense<0.000000e+00> : vector<18xf32>
    %143 = vector.multi_reduction <add>, %138, %cst_63 [1] : vector<18x128xf32> to vector<18xf32>
    %144 = vector.shape_cast %143 : vector<18xf32> to vector<18x1xf32>
    %cst_64 = arith.constant 1.280000e+02 : f32
    %145 = vector.broadcast %cst_64 : f32 to vector<18x1xf32>
    %146 = arith.divf %144, %145 : vector<18x1xf32>
    %147 = vector.broadcast %146 : vector<18x1xf32> to vector<18x128xf32>
    %148 = arith.subf %138, %147 : vector<18x128xf32>
    %149 = arith.mulf %148, %148 : vector<18x128xf32>
    %cst_65 = arith.constant dense<0.000000e+00> : vector<18xf32>
    %150 = vector.multi_reduction <add>, %149, %cst_65 [1] : vector<18x128xf32> to vector<18xf32>
    %151 = vector.shape_cast %150 : vector<18xf32> to vector<18x1xf32>
    %cst_66 = arith.constant 1.280000e+02 : f32
    %152 = vector.broadcast %cst_66 : f32 to vector<18x1xf32>
    %153 = arith.divf %151, %152 : vector<18x1xf32>
    %cst_67 = arith.constant 9.99999974E-6 : f32
    %154 = vector.broadcast %cst_67 : f32 to vector<18x1xf32>
    %155 = arith.addf %153, %154 : vector<18x1xf32>
    %156 = math.rsqrt %155 : vector<18x1xf32>
    %157 = vector.broadcast %156 : vector<18x1xf32> to vector<18x128xf32>
    %158 = arith.mulf %148, %157 : vector<18x128xf32>
    %159 = vector.broadcast %140 : vector<1x128xf32> to vector<18x128xf32>
    %160 = arith.mulf %158, %159 : vector<18x128xf32>
    %161 = vector.broadcast %142 : vector<1x128xf32> to vector<18x128xf32>
    %162 = arith.addf %160, %161 : vector<18x128xf32>
    %163 = arith.truncf %162 : vector<18x128xf32> to vector<18x128xbf16>
    %c0_68 = arith.constant 0 : index
    %c0_69 = arith.constant 0 : index
    %c0_70 = arith.constant 0 : index
    %164 = vector.load %arg11[%c0_68, %c0_69, %c0_70] : memref<4x128x512xbf16, #tpu.memory_space<vmem>>, vector<1x128x512xbf16>
    %165 = vector.shape_cast %164 : vector<1x128x512xbf16> to vector<128x512xbf16>
    %cst_71 = arith.constant dense<0.000000e+00> : vector<18x512xf32>
    %166 = tpu.matmul %163, %165, %cst_71 {dimension_numbers = #tpu.dot_dimension_numbers<[1], [0], [0], [1], [0, 0, 1, 1], [], []>} : vector<18x128xbf16>, vector<128x512xbf16>, vector<18x512xf32> -> vector<18x512xf32>
    %c0_72 = arith.constant 0 : index
    %c0_73 = arith.constant 0 : index
    %c0_74 = arith.constant 0 : index
    %167 = vector.load %arg12[%c0_72, %c0_73, %c0_74] : memref<4x1x512xf32, #tpu.memory_space<vmem>>, vector<1x1x512xf32>
    %168 = vector.shape_cast %167 : vector<1x1x512xf32> to vector<1x512xf32>
    %169 = vector.broadcast %168 : vector<1x512xf32> to vector<18x512xf32>
    %170 = arith.addf %166, %169 : vector<18x512xf32>
    %cst_75 = arith.constant 0.000000e+00 : f32
    %171 = vector.broadcast %cst_75 : f32 to vector<18x512xf32>
    %172 = arith.maximumf %170, %171 : vector<18x512xf32>
    %173 = arith.truncf %172 : vector<18x512xf32> to vector<18x512xbf16>
    %c0_76 = arith.constant 0 : index
    %c0_77 = arith.constant 0 : index
    %c0_78 = arith.constant 0 : index
    %174 = vector.load %arg13[%c0_76, %c0_77, %c0_78] : memref<4x512x128xbf16, #tpu.memory_space<vmem>>, vector<1x512x128xbf16>
    %175 = vector.shape_cast %174 : vector<1x512x128xbf16> to vector<512x128xbf16>
    %cst_79 = arith.constant dense<0.000000e+00> : vector<18x128xf32>
    %176 = tpu.matmul %173, %175, %cst_79 {dimension_numbers = #tpu.dot_dimension_numbers<[1], [0], [0], [1], [0, 0, 1, 1], [], []>} : vector<18x512xbf16>, vector<512x128xbf16>, vector<18x128xf32> -> vector<18x128xf32>
    %c0_80 = arith.constant 0 : index
    %c0_81 = arith.constant 0 : index
    %c0_82 = arith.constant 0 : index
    %177 = vector.load %arg14[%c0_80, %c0_81, %c0_82] : memref<4x1x128xf32, #tpu.memory_space<vmem>>, vector<1x1x128xf32>
    %178 = vector.shape_cast %177 : vector<1x1x128xf32> to vector<1x128xf32>
    %179 = vector.broadcast %178 : vector<1x128xf32> to vector<18x128xf32>
    %180 = arith.addf %176, %179 : vector<18x128xf32>
    %181 = arith.addf %162, %180 : vector<18x128xf32>
    %c0_83 = arith.constant 0 : index
    %c0_84 = arith.constant 0 : index
    %c0_85 = arith.constant 0 : index
    %182 = vector.load %arg17[%c0_83, %c0_84, %c0_85] : memref<4x1x128xf32, #tpu.memory_space<vmem>>, vector<1x1x128xf32>
    %183 = vector.shape_cast %182 : vector<1x1x128xf32> to vector<1x128xf32>
    %c0_86 = arith.constant 0 : index
    %c0_87 = arith.constant 0 : index
    %c0_88 = arith.constant 0 : index
    %184 = vector.load %arg18[%c0_86, %c0_87, %c0_88] : memref<4x1x128xf32, #tpu.memory_space<vmem>>, vector<1x1x128xf32>
    %185 = vector.shape_cast %184 : vector<1x1x128xf32> to vector<1x128xf32>
    %cst_89 = arith.constant dense<0.000000e+00> : vector<18xf32>
    %186 = vector.multi_reduction <add>, %181, %cst_89 [1] : vector<18x128xf32> to vector<18xf32>
    %187 = vector.shape_cast %186 : vector<18xf32> to vector<18x1xf32>
    %cst_90 = arith.constant 1.280000e+02 : f32
    %188 = vector.broadcast %cst_90 : f32 to vector<18x1xf32>
    %189 = arith.divf %187, %188 : vector<18x1xf32>
    %190 = vector.broadcast %189 : vector<18x1xf32> to vector<18x128xf32>
    %191 = arith.subf %181, %190 : vector<18x128xf32>
    %192 = arith.mulf %191, %191 : vector<18x128xf32>
    %cst_91 = arith.constant dense<0.000000e+00> : vector<18xf32>
    %193 = vector.multi_reduction <add>, %192, %cst_91 [1] : vector<18x128xf32> to vector<18xf32>
    %194 = vector.shape_cast %193 : vector<18xf32> to vector<18x1xf32>
    %cst_92 = arith.constant 1.280000e+02 : f32
    %195 = vector.broadcast %cst_92 : f32 to vector<18x1xf32>
    %196 = arith.divf %194, %195 : vector<18x1xf32>
    %cst_93 = arith.constant 9.99999974E-6 : f32
    %197 = vector.broadcast %cst_93 : f32 to vector<18x1xf32>
    %198 = arith.addf %196, %197 : vector<18x1xf32>
    %199 = math.rsqrt %198 : vector<18x1xf32>
    %200 = vector.broadcast %199 : vector<18x1xf32> to vector<18x128xf32>
    %201 = arith.mulf %191, %200 : vector<18x128xf32>
    %202 = vector.broadcast %183 : vector<1x128xf32> to vector<18x128xf32>
    %203 = arith.mulf %201, %202 : vector<18x128xf32>
    %204 = vector.broadcast %185 : vector<1x128xf32> to vector<18x128xf32>
    %205 = arith.addf %203, %204 : vector<18x128xf32>
    %206 = arith.truncf %205 : vector<18x128xf32> to vector<18x128xbf16>
    %c1 = arith.constant 1 : index
    %c0_94 = arith.constant 0 : index
    %c0_95 = arith.constant 0 : index
    %207 = vector.load %arg7[%c1, %c0_94, %c0_95] : memref<4x128x384xbf16, #tpu.memory_space<vmem>>, vector<1x128x384xbf16>
    %208 = vector.shape_cast %207 : vector<1x128x384xbf16> to vector<128x384xbf16>
    %cst_96 = arith.constant dense<0.000000e+00> : vector<18x384xf32>
    %209 = tpu.matmul %206, %208, %cst_96 {dimension_numbers = #tpu.dot_dimension_numbers<[1], [0], [0], [1], [0, 0, 1, 1], [], []>} : vector<18x128xbf16>, vector<128x384xbf16>, vector<18x384xf32> -> vector<18x384xf32>
    %c1_97 = arith.constant 1 : index
    %c0_98 = arith.constant 0 : index
    %c0_99 = arith.constant 0 : index
    %210 = vector.load %arg8[%c1_97, %c0_98, %c0_99] : memref<4x1x384xf32, #tpu.memory_space<vmem>>, vector<1x1x384xf32>
    %211 = vector.shape_cast %210 : vector<1x1x384xf32> to vector<1x384xf32>
    %212 = vector.broadcast %211 : vector<1x384xf32> to vector<18x384xf32>
    %213 = arith.addf %209, %212 : vector<18x384xf32>
    %c1_100 = arith.constant 1 : index
    %c0_101 = arith.constant 0 : index
    %c0_102 = arith.constant 0 : index
    %214 = vector.load %arg9[%c1_100, %c0_101, %c0_102] : memref<4x128x128xbf16, #tpu.memory_space<vmem>>, vector<1x128x128xbf16>
    %215 = vector.shape_cast %214 : vector<1x128x128xbf16> to vector<128x128xbf16>
    %cst_103 = arith.constant 0.000000e+00 : f32
    %216 = vector.broadcast %cst_103 : f32 to vector<18x128xf32>
    %217 = vector.extract_strided_slice %213 {offsets = [0, 0], sizes = [18, 32], strides = [1, 1]} : vector<18x384xf32> to vector<18x32xf32>
    %cst_104 = arith.constant 0.176776692 : f32
    %218 = vector.broadcast %cst_104 : f32 to vector<18x32xf32>
    %219 = arith.mulf %217, %218 : vector<18x32xf32>
    %220 = arith.truncf %219 : vector<18x32xf32> to vector<18x32xbf16>
    %221 = vector.extract_strided_slice %213 {offsets = [0, 128], sizes = [18, 32], strides = [1, 1]} : vector<18x384xf32> to vector<18x32xf32>
    %222 = arith.truncf %221 : vector<18x32xf32> to vector<18x32xbf16>
    %223 = vector.extract_strided_slice %213 {offsets = [0, 256], sizes = [18, 32], strides = [1, 1]} : vector<18x384xf32> to vector<18x32xf32>
    %224 = arith.truncf %223 : vector<18x32xf32> to vector<18x32xbf16>
    %cst_105 = arith.constant dense<0.000000e+00> : vector<18x18xf32>
    %225 = tpu.matmul %220, %222, %cst_105 {dimension_numbers = #tpu.dot_dimension_numbers<[1], [1], [0], [0], [0, 0, 1, 0], [], []>} : vector<18x32xbf16>, vector<18x32xbf16>, vector<18x18xf32> -> vector<18x18xf32>
    %226 = arith.addf %225, %18 : vector<18x18xf32>
    %cst_106 = arith.constant dense<0xFF800000> : vector<18xf32>
    %227 = vector.multi_reduction <maximumf>, %226, %cst_106 [1] : vector<18x18xf32> to vector<18xf32>
    %228 = vector.shape_cast %227 : vector<18xf32> to vector<18x1xf32>
    %229 = vector.broadcast %228 : vector<18x1xf32> to vector<18x18xf32>
    %230 = arith.subf %226, %229 : vector<18x18xf32>
    %231 = math.exp %230 : vector<18x18xf32>
    %cst_107 = arith.constant dense<0.000000e+00> : vector<18xf32>
    %232 = vector.multi_reduction <add>, %231, %cst_107 [1] : vector<18x18xf32> to vector<18xf32>
    %233 = vector.shape_cast %232 : vector<18xf32> to vector<18x1xf32>
    %234 = tpu.reciprocal %233 {approx = true} : vector<18x1xf32> -> vector<18x1xf32>
    %235 = vector.broadcast %234 : vector<18x1xf32> to vector<18x18xf32>
    %236 = arith.mulf %231, %235 : vector<18x18xf32>
    %237 = arith.truncf %236 : vector<18x18xf32> to vector<18x18xbf16>
    %cst_108 = arith.constant dense<0.000000e+00> : vector<18x32xf32>
    %238 = tpu.matmul %237, %224, %cst_108 {dimension_numbers = #tpu.dot_dimension_numbers<[1], [0], [0], [1], [0, 0, 1, 1], [], []>} : vector<18x18xbf16>, vector<18x32xbf16>, vector<18x32xf32> -> vector<18x32xf32>
    %239 = arith.truncf %238 : vector<18x32xf32> to vector<18x32xbf16>
    %240 = vector.extract_strided_slice %215 {offsets = [0, 0], sizes = [32, 128], strides = [1, 1]} : vector<128x128xbf16> to vector<32x128xbf16>
    %cst_109 = arith.constant dense<0.000000e+00> : vector<18x128xf32>
    %241 = tpu.matmul %239, %240, %cst_109 {dimension_numbers = #tpu.dot_dimension_numbers<[1], [0], [0], [1], [0, 0, 1, 1], [], []>} : vector<18x32xbf16>, vector<32x128xbf16>, vector<18x128xf32> -> vector<18x128xf32>
    %242 = arith.addf %216, %241 : vector<18x128xf32>
    %243 = vector.extract_strided_slice %213 {offsets = [0, 32], sizes = [18, 32], strides = [1, 1]} : vector<18x384xf32> to vector<18x32xf32>
    %cst_110 = arith.constant 0.176776692 : f32
    %244 = vector.broadcast %cst_110 : f32 to vector<18x32xf32>
    %245 = arith.mulf %243, %244 : vector<18x32xf32>
    %246 = arith.truncf %245 : vector<18x32xf32> to vector<18x32xbf16>
    %247 = vector.extract_strided_slice %213 {offsets = [0, 160], sizes = [18, 32], strides = [1, 1]} : vector<18x384xf32> to vector<18x32xf32>
    %248 = arith.truncf %247 : vector<18x32xf32> to vector<18x32xbf16>
    %249 = vector.extract_strided_slice %213 {offsets = [0, 288], sizes = [18, 32], strides = [1, 1]} : vector<18x384xf32> to vector<18x32xf32>
    %250 = arith.truncf %249 : vector<18x32xf32> to vector<18x32xbf16>
    %cst_111 = arith.constant dense<0.000000e+00> : vector<18x18xf32>
    %251 = tpu.matmul %246, %248, %cst_111 {dimension_numbers = #tpu.dot_dimension_numbers<[1], [1], [0], [0], [0, 0, 1, 0], [], []>} : vector<18x32xbf16>, vector<18x32xbf16>, vector<18x18xf32> -> vector<18x18xf32>
    %252 = arith.addf %251, %18 : vector<18x18xf32>
    %cst_112 = arith.constant dense<0xFF800000> : vector<18xf32>
    %253 = vector.multi_reduction <maximumf>, %252, %cst_112 [1] : vector<18x18xf32> to vector<18xf32>
    %254 = vector.shape_cast %253 : vector<18xf32> to vector<18x1xf32>
    %255 = vector.broadcast %254 : vector<18x1xf32> to vector<18x18xf32>
    %256 = arith.subf %252, %255 : vector<18x18xf32>
    %257 = math.exp %256 : vector<18x18xf32>
    %cst_113 = arith.constant dense<0.000000e+00> : vector<18xf32>
    %258 = vector.multi_reduction <add>, %257, %cst_113 [1] : vector<18x18xf32> to vector<18xf32>
    %259 = vector.shape_cast %258 : vector<18xf32> to vector<18x1xf32>
    %260 = tpu.reciprocal %259 {approx = true} : vector<18x1xf32> -> vector<18x1xf32>
    %261 = vector.broadcast %260 : vector<18x1xf32> to vector<18x18xf32>
    %262 = arith.mulf %257, %261 : vector<18x18xf32>
    %263 = arith.truncf %262 : vector<18x18xf32> to vector<18x18xbf16>
    %cst_114 = arith.constant dense<0.000000e+00> : vector<18x32xf32>
    %264 = tpu.matmul %263, %250, %cst_114 {dimension_numbers = #tpu.dot_dimension_numbers<[1], [0], [0], [1], [0, 0, 1, 1], [], []>} : vector<18x18xbf16>, vector<18x32xbf16>, vector<18x32xf32> -> vector<18x32xf32>
    %265 = arith.truncf %264 : vector<18x32xf32> to vector<18x32xbf16>
    %266 = vector.extract_strided_slice %215 {offsets = [32, 0], sizes = [32, 128], strides = [1, 1]} : vector<128x128xbf16> to vector<32x128xbf16>
    %cst_115 = arith.constant dense<0.000000e+00> : vector<18x128xf32>
    %267 = tpu.matmul %265, %266, %cst_115 {dimension_numbers = #tpu.dot_dimension_numbers<[1], [0], [0], [1], [0, 0, 1, 1], [], []>} : vector<18x32xbf16>, vector<32x128xbf16>, vector<18x128xf32> -> vector<18x128xf32>
    %268 = arith.addf %242, %267 : vector<18x128xf32>
    %269 = vector.extract_strided_slice %213 {offsets = [0, 64], sizes = [18, 32], strides = [1, 1]} : vector<18x384xf32> to vector<18x32xf32>
    %cst_116 = arith.constant 0.176776692 : f32
    %270 = vector.broadcast %cst_116 : f32 to vector<18x32xf32>
    %271 = arith.mulf %269, %270 : vector<18x32xf32>
    %272 = arith.truncf %271 : vector<18x32xf32> to vector<18x32xbf16>
    %273 = vector.extract_strided_slice %213 {offsets = [0, 192], sizes = [18, 32], strides = [1, 1]} : vector<18x384xf32> to vector<18x32xf32>
    %274 = arith.truncf %273 : vector<18x32xf32> to vector<18x32xbf16>
    %275 = vector.extract_strided_slice %213 {offsets = [0, 320], sizes = [18, 32], strides = [1, 1]} : vector<18x384xf32> to vector<18x32xf32>
    %276 = arith.truncf %275 : vector<18x32xf32> to vector<18x32xbf16>
    %cst_117 = arith.constant dense<0.000000e+00> : vector<18x18xf32>
    %277 = tpu.matmul %272, %274, %cst_117 {dimension_numbers = #tpu.dot_dimension_numbers<[1], [1], [0], [0], [0, 0, 1, 0], [], []>} : vector<18x32xbf16>, vector<18x32xbf16>, vector<18x18xf32> -> vector<18x18xf32>
    %278 = arith.addf %277, %18 : vector<18x18xf32>
    %cst_118 = arith.constant dense<0xFF800000> : vector<18xf32>
    %279 = vector.multi_reduction <maximumf>, %278, %cst_118 [1] : vector<18x18xf32> to vector<18xf32>
    %280 = vector.shape_cast %279 : vector<18xf32> to vector<18x1xf32>
    %281 = vector.broadcast %280 : vector<18x1xf32> to vector<18x18xf32>
    %282 = arith.subf %278, %281 : vector<18x18xf32>
    %283 = math.exp %282 : vector<18x18xf32>
    %cst_119 = arith.constant dense<0.000000e+00> : vector<18xf32>
    %284 = vector.multi_reduction <add>, %283, %cst_119 [1] : vector<18x18xf32> to vector<18xf32>
    %285 = vector.shape_cast %284 : vector<18xf32> to vector<18x1xf32>
    %286 = tpu.reciprocal %285 {approx = true} : vector<18x1xf32> -> vector<18x1xf32>
    %287 = vector.broadcast %286 : vector<18x1xf32> to vector<18x18xf32>
    %288 = arith.mulf %283, %287 : vector<18x18xf32>
    %289 = arith.truncf %288 : vector<18x18xf32> to vector<18x18xbf16>
    %cst_120 = arith.constant dense<0.000000e+00> : vector<18x32xf32>
    %290 = tpu.matmul %289, %276, %cst_120 {dimension_numbers = #tpu.dot_dimension_numbers<[1], [0], [0], [1], [0, 0, 1, 1], [], []>} : vector<18x18xbf16>, vector<18x32xbf16>, vector<18x32xf32> -> vector<18x32xf32>
    %291 = arith.truncf %290 : vector<18x32xf32> to vector<18x32xbf16>
    %292 = vector.extract_strided_slice %215 {offsets = [64, 0], sizes = [32, 128], strides = [1, 1]} : vector<128x128xbf16> to vector<32x128xbf16>
    %cst_121 = arith.constant dense<0.000000e+00> : vector<18x128xf32>
    %293 = tpu.matmul %291, %292, %cst_121 {dimension_numbers = #tpu.dot_dimension_numbers<[1], [0], [0], [1], [0, 0, 1, 1], [], []>} : vector<18x32xbf16>, vector<32x128xbf16>, vector<18x128xf32> -> vector<18x128xf32>
    %294 = arith.addf %268, %293 : vector<18x128xf32>
    %295 = vector.extract_strided_slice %213 {offsets = [0, 96], sizes = [18, 32], strides = [1, 1]} : vector<18x384xf32> to vector<18x32xf32>
    %cst_122 = arith.constant 0.176776692 : f32
    %296 = vector.broadcast %cst_122 : f32 to vector<18x32xf32>
    %297 = arith.mulf %295, %296 : vector<18x32xf32>
    %298 = arith.truncf %297 : vector<18x32xf32> to vector<18x32xbf16>
    %299 = vector.extract_strided_slice %213 {offsets = [0, 224], sizes = [18, 32], strides = [1, 1]} : vector<18x384xf32> to vector<18x32xf32>
    %300 = arith.truncf %299 : vector<18x32xf32> to vector<18x32xbf16>
    %301 = vector.extract_strided_slice %213 {offsets = [0, 352], sizes = [18, 32], strides = [1, 1]} : vector<18x384xf32> to vector<18x32xf32>
    %302 = arith.truncf %301 : vector<18x32xf32> to vector<18x32xbf16>
    %cst_123 = arith.constant dense<0.000000e+00> : vector<18x18xf32>
    %303 = tpu.matmul %298, %300, %cst_123 {dimension_numbers = #tpu.dot_dimension_numbers<[1], [1], [0], [0], [0, 0, 1, 0], [], []>} : vector<18x32xbf16>, vector<18x32xbf16>, vector<18x18xf32> -> vector<18x18xf32>
    %304 = arith.addf %303, %18 : vector<18x18xf32>
    %cst_124 = arith.constant dense<0xFF800000> : vector<18xf32>
    %305 = vector.multi_reduction <maximumf>, %304, %cst_124 [1] : vector<18x18xf32> to vector<18xf32>
    %306 = vector.shape_cast %305 : vector<18xf32> to vector<18x1xf32>
    %307 = vector.broadcast %306 : vector<18x1xf32> to vector<18x18xf32>
    %308 = arith.subf %304, %307 : vector<18x18xf32>
    %309 = math.exp %308 : vector<18x18xf32>
    %cst_125 = arith.constant dense<0.000000e+00> : vector<18xf32>
    %310 = vector.multi_reduction <add>, %309, %cst_125 [1] : vector<18x18xf32> to vector<18xf32>
    %311 = vector.shape_cast %310 : vector<18xf32> to vector<18x1xf32>
    %312 = tpu.reciprocal %311 {approx = true} : vector<18x1xf32> -> vector<18x1xf32>
    %313 = vector.broadcast %312 : vector<18x1xf32> to vector<18x18xf32>
    %314 = arith.mulf %309, %313 : vector<18x18xf32>
    %315 = arith.truncf %314 : vector<18x18xf32> to vector<18x18xbf16>
    %cst_126 = arith.constant dense<0.000000e+00> : vector<18x32xf32>
    %316 = tpu.matmul %315, %302, %cst_126 {dimension_numbers = #tpu.dot_dimension_numbers<[1], [0], [0], [1], [0, 0, 1, 1], [], []>} : vector<18x18xbf16>, vector<18x32xbf16>, vector<18x32xf32> -> vector<18x32xf32>
    %317 = arith.truncf %316 : vector<18x32xf32> to vector<18x32xbf16>
    %318 = vector.extract_strided_slice %215 {offsets = [96, 0], sizes = [32, 128], strides = [1, 1]} : vector<128x128xbf16> to vector<32x128xbf16>
    %cst_127 = arith.constant dense<0.000000e+00> : vector<18x128xf32>
    %319 = tpu.matmul %317, %318, %cst_127 {dimension_numbers = #tpu.dot_dimension_numbers<[1], [0], [0], [1], [0, 0, 1, 1], [], []>} : vector<18x32xbf16>, vector<32x128xbf16>, vector<18x128xf32> -> vector<18x128xf32>
    %320 = arith.addf %294, %319 : vector<18x128xf32>
    %c1_128 = arith.constant 1 : index
    %c0_129 = arith.constant 0 : index
    %c0_130 = arith.constant 0 : index
    %321 = vector.load %arg10[%c1_128, %c0_129, %c0_130] : memref<4x1x128xf32, #tpu.memory_space<vmem>>, vector<1x1x128xf32>
    %322 = vector.shape_cast %321 : vector<1x1x128xf32> to vector<1x128xf32>
    %323 = vector.broadcast %322 : vector<1x128xf32> to vector<18x128xf32>
    %324 = arith.addf %320, %323 : vector<18x128xf32>
    %325 = arith.addf %205, %324 : vector<18x128xf32>
    %c1_131 = arith.constant 1 : index
    %c0_132 = arith.constant 0 : index
    %c0_133 = arith.constant 0 : index
    %326 = vector.load %arg15[%c1_131, %c0_132, %c0_133] : memref<4x1x128xf32, #tpu.memory_space<vmem>>, vector<1x1x128xf32>
    %327 = vector.shape_cast %326 : vector<1x1x128xf32> to vector<1x128xf32>
    %c1_134 = arith.constant 1 : index
    %c0_135 = arith.constant 0 : index
    %c0_136 = arith.constant 0 : index
    %328 = vector.load %arg16[%c1_134, %c0_135, %c0_136] : memref<4x1x128xf32, #tpu.memory_space<vmem>>, vector<1x1x128xf32>
    %329 = vector.shape_cast %328 : vector<1x1x128xf32> to vector<1x128xf32>
    %cst_137 = arith.constant dense<0.000000e+00> : vector<18xf32>
    %330 = vector.multi_reduction <add>, %325, %cst_137 [1] : vector<18x128xf32> to vector<18xf32>
    %331 = vector.shape_cast %330 : vector<18xf32> to vector<18x1xf32>
    %cst_138 = arith.constant 1.280000e+02 : f32
    %332 = vector.broadcast %cst_138 : f32 to vector<18x1xf32>
    %333 = arith.divf %331, %332 : vector<18x1xf32>
    %334 = vector.broadcast %333 : vector<18x1xf32> to vector<18x128xf32>
    %335 = arith.subf %325, %334 : vector<18x128xf32>
    %336 = arith.mulf %335, %335 : vector<18x128xf32>
    %cst_139 = arith.constant dense<0.000000e+00> : vector<18xf32>
    %337 = vector.multi_reduction <add>, %336, %cst_139 [1] : vector<18x128xf32> to vector<18xf32>
    %338 = vector.shape_cast %337 : vector<18xf32> to vector<18x1xf32>
    %cst_140 = arith.constant 1.280000e+02 : f32
    %339 = vector.broadcast %cst_140 : f32 to vector<18x1xf32>
    %340 = arith.divf %338, %339 : vector<18x1xf32>
    %cst_141 = arith.constant 9.99999974E-6 : f32
    %341 = vector.broadcast %cst_141 : f32 to vector<18x1xf32>
    %342 = arith.addf %340, %341 : vector<18x1xf32>
    %343 = math.rsqrt %342 : vector<18x1xf32>
    %344 = vector.broadcast %343 : vector<18x1xf32> to vector<18x128xf32>
    %345 = arith.mulf %335, %344 : vector<18x128xf32>
    %346 = vector.broadcast %327 : vector<1x128xf32> to vector<18x128xf32>
    %347 = arith.mulf %345, %346 : vector<18x128xf32>
    %348 = vector.broadcast %329 : vector<1x128xf32> to vector<18x128xf32>
    %349 = arith.addf %347, %348 : vector<18x128xf32>
    %350 = arith.truncf %349 : vector<18x128xf32> to vector<18x128xbf16>
    %c1_142 = arith.constant 1 : index
    %c0_143 = arith.constant 0 : index
    %c0_144 = arith.constant 0 : index
    %351 = vector.load %arg11[%c1_142, %c0_143, %c0_144] : memref<4x128x512xbf16, #tpu.memory_space<vmem>>, vector<1x128x512xbf16>
    %352 = vector.shape_cast %351 : vector<1x128x512xbf16> to vector<128x512xbf16>
    %cst_145 = arith.constant dense<0.000000e+00> : vector<18x512xf32>
    %353 = tpu.matmul %350, %352, %cst_145 {dimension_numbers = #tpu.dot_dimension_numbers<[1], [0], [0], [1], [0, 0, 1, 1], [], []>} : vector<18x128xbf16>, vector<128x512xbf16>, vector<18x512xf32> -> vector<18x512xf32>
    %c1_146 = arith.constant 1 : index
    %c0_147 = arith.constant 0 : index
    %c0_148 = arith.constant 0 : index
    %354 = vector.load %arg12[%c1_146, %c0_147, %c0_148] : memref<4x1x512xf32, #tpu.memory_space<vmem>>, vector<1x1x512xf32>
    %355 = vector.shape_cast %354 : vector<1x1x512xf32> to vector<1x512xf32>
    %356 = vector.broadcast %355 : vector<1x512xf32> to vector<18x512xf32>
    %357 = arith.addf %353, %356 : vector<18x512xf32>
    %cst_149 = arith.constant 0.000000e+00 : f32
    %358 = vector.broadcast %cst_149 : f32 to vector<18x512xf32>
    %359 = arith.maximumf %357, %358 : vector<18x512xf32>
    %360 = arith.truncf %359 : vector<18x512xf32> to vector<18x512xbf16>
    %c1_150 = arith.constant 1 : index
    %c0_151 = arith.constant 0 : index
    %c0_152 = arith.constant 0 : index
    %361 = vector.load %arg13[%c1_150, %c0_151, %c0_152] : memref<4x512x128xbf16, #tpu.memory_space<vmem>>, vector<1x512x128xbf16>
    %362 = vector.shape_cast %361 : vector<1x512x128xbf16> to vector<512x128xbf16>
    %cst_153 = arith.constant dense<0.000000e+00> : vector<18x128xf32>
    %363 = tpu.matmul %360, %362, %cst_153 {dimension_numbers = #tpu.dot_dimension_numbers<[1], [0], [0], [1], [0, 0, 1, 1], [], []>} : vector<18x512xbf16>, vector<512x128xbf16>, vector<18x128xf32> -> vector<18x128xf32>
    %c1_154 = arith.constant 1 : index
    %c0_155 = arith.constant 0 : index
    %c0_156 = arith.constant 0 : index
    %364 = vector.load %arg14[%c1_154, %c0_155, %c0_156] : memref<4x1x128xf32, #tpu.memory_space<vmem>>, vector<1x1x128xf32>
    %365 = vector.shape_cast %364 : vector<1x1x128xf32> to vector<1x128xf32>
    %366 = vector.broadcast %365 : vector<1x128xf32> to vector<18x128xf32>
    %367 = arith.addf %363, %366 : vector<18x128xf32>
    %368 = arith.addf %349, %367 : vector<18x128xf32>
    %c1_157 = arith.constant 1 : index
    %c0_158 = arith.constant 0 : index
    %c0_159 = arith.constant 0 : index
    %369 = vector.load %arg17[%c1_157, %c0_158, %c0_159] : memref<4x1x128xf32, #tpu.memory_space<vmem>>, vector<1x1x128xf32>
    %370 = vector.shape_cast %369 : vector<1x1x128xf32> to vector<1x128xf32>
    %c1_160 = arith.constant 1 : index
    %c0_161 = arith.constant 0 : index
    %c0_162 = arith.constant 0 : index
    %371 = vector.load %arg18[%c1_160, %c0_161, %c0_162] : memref<4x1x128xf32, #tpu.memory_space<vmem>>, vector<1x1x128xf32>
    %372 = vector.shape_cast %371 : vector<1x1x128xf32> to vector<1x128xf32>
    %cst_163 = arith.constant dense<0.000000e+00> : vector<18xf32>
    %373 = vector.multi_reduction <add>, %368, %cst_163 [1] : vector<18x128xf32> to vector<18xf32>
    %374 = vector.shape_cast %373 : vector<18xf32> to vector<18x1xf32>
    %cst_164 = arith.constant 1.280000e+02 : f32
    %375 = vector.broadcast %cst_164 : f32 to vector<18x1xf32>
    %376 = arith.divf %374, %375 : vector<18x1xf32>
    %377 = vector.broadcast %376 : vector<18x1xf32> to vector<18x128xf32>
    %378 = arith.subf %368, %377 : vector<18x128xf32>
    %379 = arith.mulf %378, %378 : vector<18x128xf32>
    %cst_165 = arith.constant dense<0.000000e+00> : vector<18xf32>
    %380 = vector.multi_reduction <add>, %379, %cst_165 [1] : vector<18x128xf32> to vector<18xf32>
    %381 = vector.shape_cast %380 : vector<18xf32> to vector<18x1xf32>
    %cst_166 = arith.constant 1.280000e+02 : f32
    %382 = vector.broadcast %cst_166 : f32 to vector<18x1xf32>
    %383 = arith.divf %381, %382 : vector<18x1xf32>
    %cst_167 = arith.constant 9.99999974E-6 : f32
    %384 = vector.broadcast %cst_167 : f32 to vector<18x1xf32>
    %385 = arith.addf %383, %384 : vector<18x1xf32>
    %386 = math.rsqrt %385 : vector<18x1xf32>
    %387 = vector.broadcast %386 : vector<18x1xf32> to vector<18x128xf32>
    %388 = arith.mulf %378, %387 : vector<18x128xf32>
    %389 = vector.broadcast %370 : vector<1x128xf32> to vector<18x128xf32>
    %390 = arith.mulf %388, %389 : vector<18x128xf32>
    %391 = vector.broadcast %372 : vector<1x128xf32> to vector<18x128xf32>
    %392 = arith.addf %390, %391 : vector<18x128xf32>
    %393 = arith.truncf %392 : vector<18x128xf32> to vector<18x128xbf16>
    %c2 = arith.constant 2 : index
    %c0_168 = arith.constant 0 : index
    %c0_169 = arith.constant 0 : index
    %394 = vector.load %arg7[%c2, %c0_168, %c0_169] : memref<4x128x384xbf16, #tpu.memory_space<vmem>>, vector<1x128x384xbf16>
    %395 = vector.shape_cast %394 : vector<1x128x384xbf16> to vector<128x384xbf16>
    %cst_170 = arith.constant dense<0.000000e+00> : vector<18x384xf32>
    %396 = tpu.matmul %393, %395, %cst_170 {dimension_numbers = #tpu.dot_dimension_numbers<[1], [0], [0], [1], [0, 0, 1, 1], [], []>} : vector<18x128xbf16>, vector<128x384xbf16>, vector<18x384xf32> -> vector<18x384xf32>
    %c2_171 = arith.constant 2 : index
    %c0_172 = arith.constant 0 : index
    %c0_173 = arith.constant 0 : index
    %397 = vector.load %arg8[%c2_171, %c0_172, %c0_173] : memref<4x1x384xf32, #tpu.memory_space<vmem>>, vector<1x1x384xf32>
    %398 = vector.shape_cast %397 : vector<1x1x384xf32> to vector<1x384xf32>
    %399 = vector.broadcast %398 : vector<1x384xf32> to vector<18x384xf32>
    %400 = arith.addf %396, %399 : vector<18x384xf32>
    %c2_174 = arith.constant 2 : index
    %c0_175 = arith.constant 0 : index
    %c0_176 = arith.constant 0 : index
    %401 = vector.load %arg9[%c2_174, %c0_175, %c0_176] : memref<4x128x128xbf16, #tpu.memory_space<vmem>>, vector<1x128x128xbf16>
    %402 = vector.shape_cast %401 : vector<1x128x128xbf16> to vector<128x128xbf16>
    %cst_177 = arith.constant 0.000000e+00 : f32
    %403 = vector.broadcast %cst_177 : f32 to vector<18x128xf32>
    %404 = vector.extract_strided_slice %400 {offsets = [0, 0], sizes = [18, 32], strides = [1, 1]} : vector<18x384xf32> to vector<18x32xf32>
    %cst_178 = arith.constant 0.176776692 : f32
    %405 = vector.broadcast %cst_178 : f32 to vector<18x32xf32>
    %406 = arith.mulf %404, %405 : vector<18x32xf32>
    %407 = arith.truncf %406 : vector<18x32xf32> to vector<18x32xbf16>
    %408 = vector.extract_strided_slice %400 {offsets = [0, 128], sizes = [18, 32], strides = [1, 1]} : vector<18x384xf32> to vector<18x32xf32>
    %409 = arith.truncf %408 : vector<18x32xf32> to vector<18x32xbf16>
    %410 = vector.extract_strided_slice %400 {offsets = [0, 256], sizes = [18, 32], strides = [1, 1]} : vector<18x384xf32> to vector<18x32xf32>
    %411 = arith.truncf %410 : vector<18x32xf32> to vector<18x32xbf16>
    %cst_179 = arith.constant dense<0.000000e+00> : vector<18x18xf32>
    %412 = tpu.matmul %407, %409, %cst_179 {dimension_numbers = #tpu.dot_dimension_numbers<[1], [1], [0], [0], [0, 0, 1, 0], [], []>} : vector<18x32xbf16>, vector<18x32xbf16>, vector<18x18xf32> -> vector<18x18xf32>
    %413 = arith.addf %412, %18 : vector<18x18xf32>
    %cst_180 = arith.constant dense<0xFF800000> : vector<18xf32>
    %414 = vector.multi_reduction <maximumf>, %413, %cst_180 [1] : vector<18x18xf32> to vector<18xf32>
    %415 = vector.shape_cast %414 : vector<18xf32> to vector<18x1xf32>
    %416 = vector.broadcast %415 : vector<18x1xf32> to vector<18x18xf32>
    %417 = arith.subf %413, %416 : vector<18x18xf32>
    %418 = math.exp %417 : vector<18x18xf32>
    %cst_181 = arith.constant dense<0.000000e+00> : vector<18xf32>
    %419 = vector.multi_reduction <add>, %418, %cst_181 [1] : vector<18x18xf32> to vector<18xf32>
    %420 = vector.shape_cast %419 : vector<18xf32> to vector<18x1xf32>
    %421 = tpu.reciprocal %420 {approx = true} : vector<18x1xf32> -> vector<18x1xf32>
    %422 = vector.broadcast %421 : vector<18x1xf32> to vector<18x18xf32>
    %423 = arith.mulf %418, %422 : vector<18x18xf32>
    %424 = arith.truncf %423 : vector<18x18xf32> to vector<18x18xbf16>
    %cst_182 = arith.constant dense<0.000000e+00> : vector<18x32xf32>
    %425 = tpu.matmul %424, %411, %cst_182 {dimension_numbers = #tpu.dot_dimension_numbers<[1], [0], [0], [1], [0, 0, 1, 1], [], []>} : vector<18x18xbf16>, vector<18x32xbf16>, vector<18x32xf32> -> vector<18x32xf32>
    %426 = arith.truncf %425 : vector<18x32xf32> to vector<18x32xbf16>
    %427 = vector.extract_strided_slice %402 {offsets = [0, 0], sizes = [32, 128], strides = [1, 1]} : vector<128x128xbf16> to vector<32x128xbf16>
    %cst_183 = arith.constant dense<0.000000e+00> : vector<18x128xf32>
    %428 = tpu.matmul %426, %427, %cst_183 {dimension_numbers = #tpu.dot_dimension_numbers<[1], [0], [0], [1], [0, 0, 1, 1], [], []>} : vector<18x32xbf16>, vector<32x128xbf16>, vector<18x128xf32> -> vector<18x128xf32>
    %429 = arith.addf %403, %428 : vector<18x128xf32>
    %430 = vector.extract_strided_slice %400 {offsets = [0, 32], sizes = [18, 32], strides = [1, 1]} : vector<18x384xf32> to vector<18x32xf32>
    %cst_184 = arith.constant 0.176776692 : f32
    %431 = vector.broadcast %cst_184 : f32 to vector<18x32xf32>
    %432 = arith.mulf %430, %431 : vector<18x32xf32>
    %433 = arith.truncf %432 : vector<18x32xf32> to vector<18x32xbf16>
    %434 = vector.extract_strided_slice %400 {offsets = [0, 160], sizes = [18, 32], strides = [1, 1]} : vector<18x384xf32> to vector<18x32xf32>
    %435 = arith.truncf %434 : vector<18x32xf32> to vector<18x32xbf16>
    %436 = vector.extract_strided_slice %400 {offsets = [0, 288], sizes = [18, 32], strides = [1, 1]} : vector<18x384xf32> to vector<18x32xf32>
    %437 = arith.truncf %436 : vector<18x32xf32> to vector<18x32xbf16>
    %cst_185 = arith.constant dense<0.000000e+00> : vector<18x18xf32>
    %438 = tpu.matmul %433, %435, %cst_185 {dimension_numbers = #tpu.dot_dimension_numbers<[1], [1], [0], [0], [0, 0, 1, 0], [], []>} : vector<18x32xbf16>, vector<18x32xbf16>, vector<18x18xf32> -> vector<18x18xf32>
    %439 = arith.addf %438, %18 : vector<18x18xf32>
    %cst_186 = arith.constant dense<0xFF800000> : vector<18xf32>
    %440 = vector.multi_reduction <maximumf>, %439, %cst_186 [1] : vector<18x18xf32> to vector<18xf32>
    %441 = vector.shape_cast %440 : vector<18xf32> to vector<18x1xf32>
    %442 = vector.broadcast %441 : vector<18x1xf32> to vector<18x18xf32>
    %443 = arith.subf %439, %442 : vector<18x18xf32>
    %444 = math.exp %443 : vector<18x18xf32>
    %cst_187 = arith.constant dense<0.000000e+00> : vector<18xf32>
    %445 = vector.multi_reduction <add>, %444, %cst_187 [1] : vector<18x18xf32> to vector<18xf32>
    %446 = vector.shape_cast %445 : vector<18xf32> to vector<18x1xf32>
    %447 = tpu.reciprocal %446 {approx = true} : vector<18x1xf32> -> vector<18x1xf32>
    %448 = vector.broadcast %447 : vector<18x1xf32> to vector<18x18xf32>
    %449 = arith.mulf %444, %448 : vector<18x18xf32>
    %450 = arith.truncf %449 : vector<18x18xf32> to vector<18x18xbf16>
    %cst_188 = arith.constant dense<0.000000e+00> : vector<18x32xf32>
    %451 = tpu.matmul %450, %437, %cst_188 {dimension_numbers = #tpu.dot_dimension_numbers<[1], [0], [0], [1], [0, 0, 1, 1], [], []>} : vector<18x18xbf16>, vector<18x32xbf16>, vector<18x32xf32> -> vector<18x32xf32>
    %452 = arith.truncf %451 : vector<18x32xf32> to vector<18x32xbf16>
    %453 = vector.extract_strided_slice %402 {offsets = [32, 0], sizes = [32, 128], strides = [1, 1]} : vector<128x128xbf16> to vector<32x128xbf16>
    %cst_189 = arith.constant dense<0.000000e+00> : vector<18x128xf32>
    %454 = tpu.matmul %452, %453, %cst_189 {dimension_numbers = #tpu.dot_dimension_numbers<[1], [0], [0], [1], [0, 0, 1, 1], [], []>} : vector<18x32xbf16>, vector<32x128xbf16>, vector<18x128xf32> -> vector<18x128xf32>
    %455 = arith.addf %429, %454 : vector<18x128xf32>
    %456 = vector.extract_strided_slice %400 {offsets = [0, 64], sizes = [18, 32], strides = [1, 1]} : vector<18x384xf32> to vector<18x32xf32>
    %cst_190 = arith.constant 0.176776692 : f32
    %457 = vector.broadcast %cst_190 : f32 to vector<18x32xf32>
    %458 = arith.mulf %456, %457 : vector<18x32xf32>
    %459 = arith.truncf %458 : vector<18x32xf32> to vector<18x32xbf16>
    %460 = vector.extract_strided_slice %400 {offsets = [0, 192], sizes = [18, 32], strides = [1, 1]} : vector<18x384xf32> to vector<18x32xf32>
    %461 = arith.truncf %460 : vector<18x32xf32> to vector<18x32xbf16>
    %462 = vector.extract_strided_slice %400 {offsets = [0, 320], sizes = [18, 32], strides = [1, 1]} : vector<18x384xf32> to vector<18x32xf32>
    %463 = arith.truncf %462 : vector<18x32xf32> to vector<18x32xbf16>
    %cst_191 = arith.constant dense<0.000000e+00> : vector<18x18xf32>
    %464 = tpu.matmul %459, %461, %cst_191 {dimension_numbers = #tpu.dot_dimension_numbers<[1], [1], [0], [0], [0, 0, 1, 0], [], []>} : vector<18x32xbf16>, vector<18x32xbf16>, vector<18x18xf32> -> vector<18x18xf32>
    %465 = arith.addf %464, %18 : vector<18x18xf32>
    %cst_192 = arith.constant dense<0xFF800000> : vector<18xf32>
    %466 = vector.multi_reduction <maximumf>, %465, %cst_192 [1] : vector<18x18xf32> to vector<18xf32>
    %467 = vector.shape_cast %466 : vector<18xf32> to vector<18x1xf32>
    %468 = vector.broadcast %467 : vector<18x1xf32> to vector<18x18xf32>
    %469 = arith.subf %465, %468 : vector<18x18xf32>
    %470 = math.exp %469 : vector<18x18xf32>
    %cst_193 = arith.constant dense<0.000000e+00> : vector<18xf32>
    %471 = vector.multi_reduction <add>, %470, %cst_193 [1] : vector<18x18xf32> to vector<18xf32>
    %472 = vector.shape_cast %471 : vector<18xf32> to vector<18x1xf32>
    %473 = tpu.reciprocal %472 {approx = true} : vector<18x1xf32> -> vector<18x1xf32>
    %474 = vector.broadcast %473 : vector<18x1xf32> to vector<18x18xf32>
    %475 = arith.mulf %470, %474 : vector<18x18xf32>
    %476 = arith.truncf %475 : vector<18x18xf32> to vector<18x18xbf16>
    %cst_194 = arith.constant dense<0.000000e+00> : vector<18x32xf32>
    %477 = tpu.matmul %476, %463, %cst_194 {dimension_numbers = #tpu.dot_dimension_numbers<[1], [0], [0], [1], [0, 0, 1, 1], [], []>} : vector<18x18xbf16>, vector<18x32xbf16>, vector<18x32xf32> -> vector<18x32xf32>
    %478 = arith.truncf %477 : vector<18x32xf32> to vector<18x32xbf16>
    %479 = vector.extract_strided_slice %402 {offsets = [64, 0], sizes = [32, 128], strides = [1, 1]} : vector<128x128xbf16> to vector<32x128xbf16>
    %cst_195 = arith.constant dense<0.000000e+00> : vector<18x128xf32>
    %480 = tpu.matmul %478, %479, %cst_195 {dimension_numbers = #tpu.dot_dimension_numbers<[1], [0], [0], [1], [0, 0, 1, 1], [], []>} : vector<18x32xbf16>, vector<32x128xbf16>, vector<18x128xf32> -> vector<18x128xf32>
    %481 = arith.addf %455, %480 : vector<18x128xf32>
    %482 = vector.extract_strided_slice %400 {offsets = [0, 96], sizes = [18, 32], strides = [1, 1]} : vector<18x384xf32> to vector<18x32xf32>
    %cst_196 = arith.constant 0.176776692 : f32
    %483 = vector.broadcast %cst_196 : f32 to vector<18x32xf32>
    %484 = arith.mulf %482, %483 : vector<18x32xf32>
    %485 = arith.truncf %484 : vector<18x32xf32> to vector<18x32xbf16>
    %486 = vector.extract_strided_slice %400 {offsets = [0, 224], sizes = [18, 32], strides = [1, 1]} : vector<18x384xf32> to vector<18x32xf32>
    %487 = arith.truncf %486 : vector<18x32xf32> to vector<18x32xbf16>
    %488 = vector.extract_strided_slice %400 {offsets = [0, 352], sizes = [18, 32], strides = [1, 1]} : vector<18x384xf32> to vector<18x32xf32>
    %489 = arith.truncf %488 : vector<18x32xf32> to vector<18x32xbf16>
    %cst_197 = arith.constant dense<0.000000e+00> : vector<18x18xf32>
    %490 = tpu.matmul %485, %487, %cst_197 {dimension_numbers = #tpu.dot_dimension_numbers<[1], [1], [0], [0], [0, 0, 1, 0], [], []>} : vector<18x32xbf16>, vector<18x32xbf16>, vector<18x18xf32> -> vector<18x18xf32>
    %491 = arith.addf %490, %18 : vector<18x18xf32>
    %cst_198 = arith.constant dense<0xFF800000> : vector<18xf32>
    %492 = vector.multi_reduction <maximumf>, %491, %cst_198 [1] : vector<18x18xf32> to vector<18xf32>
    %493 = vector.shape_cast %492 : vector<18xf32> to vector<18x1xf32>
    %494 = vector.broadcast %493 : vector<18x1xf32> to vector<18x18xf32>
    %495 = arith.subf %491, %494 : vector<18x18xf32>
    %496 = math.exp %495 : vector<18x18xf32>
    %cst_199 = arith.constant dense<0.000000e+00> : vector<18xf32>
    %497 = vector.multi_reduction <add>, %496, %cst_199 [1] : vector<18x18xf32> to vector<18xf32>
    %498 = vector.shape_cast %497 : vector<18xf32> to vector<18x1xf32>
    %499 = tpu.reciprocal %498 {approx = true} : vector<18x1xf32> -> vector<18x1xf32>
    %500 = vector.broadcast %499 : vector<18x1xf32> to vector<18x18xf32>
    %501 = arith.mulf %496, %500 : vector<18x18xf32>
    %502 = arith.truncf %501 : vector<18x18xf32> to vector<18x18xbf16>
    %cst_200 = arith.constant dense<0.000000e+00> : vector<18x32xf32>
    %503 = tpu.matmul %502, %489, %cst_200 {dimension_numbers = #tpu.dot_dimension_numbers<[1], [0], [0], [1], [0, 0, 1, 1], [], []>} : vector<18x18xbf16>, vector<18x32xbf16>, vector<18x32xf32> -> vector<18x32xf32>
    %504 = arith.truncf %503 : vector<18x32xf32> to vector<18x32xbf16>
    %505 = vector.extract_strided_slice %402 {offsets = [96, 0], sizes = [32, 128], strides = [1, 1]} : vector<128x128xbf16> to vector<32x128xbf16>
    %cst_201 = arith.constant dense<0.000000e+00> : vector<18x128xf32>
    %506 = tpu.matmul %504, %505, %cst_201 {dimension_numbers = #tpu.dot_dimension_numbers<[1], [0], [0], [1], [0, 0, 1, 1], [], []>} : vector<18x32xbf16>, vector<32x128xbf16>, vector<18x128xf32> -> vector<18x128xf32>
    %507 = arith.addf %481, %506 : vector<18x128xf32>
    %c2_202 = arith.constant 2 : index
    %c0_203 = arith.constant 0 : index
    %c0_204 = arith.constant 0 : index
    %508 = vector.load %arg10[%c2_202, %c0_203, %c0_204] : memref<4x1x128xf32, #tpu.memory_space<vmem>>, vector<1x1x128xf32>
    %509 = vector.shape_cast %508 : vector<1x1x128xf32> to vector<1x128xf32>
    %510 = vector.broadcast %509 : vector<1x128xf32> to vector<18x128xf32>
    %511 = arith.addf %507, %510 : vector<18x128xf32>
    %512 = arith.addf %392, %511 : vector<18x128xf32>
    %c2_205 = arith.constant 2 : index
    %c0_206 = arith.constant 0 : index
    %c0_207 = arith.constant 0 : index
    %513 = vector.load %arg15[%c2_205, %c0_206, %c0_207] : memref<4x1x128xf32, #tpu.memory_space<vmem>>, vector<1x1x128xf32>
    %514 = vector.shape_cast %513 : vector<1x1x128xf32> to vector<1x128xf32>
    %c2_208 = arith.constant 2 : index
    %c0_209 = arith.constant 0 : index
    %c0_210 = arith.constant 0 : index
    %515 = vector.load %arg16[%c2_208, %c0_209, %c0_210] : memref<4x1x128xf32, #tpu.memory_space<vmem>>, vector<1x1x128xf32>
    %516 = vector.shape_cast %515 : vector<1x1x128xf32> to vector<1x128xf32>
    %cst_211 = arith.constant dense<0.000000e+00> : vector<18xf32>
    %517 = vector.multi_reduction <add>, %512, %cst_211 [1] : vector<18x128xf32> to vector<18xf32>
    %518 = vector.shape_cast %517 : vector<18xf32> to vector<18x1xf32>
    %cst_212 = arith.constant 1.280000e+02 : f32
    %519 = vector.broadcast %cst_212 : f32 to vector<18x1xf32>
    %520 = arith.divf %518, %519 : vector<18x1xf32>
    %521 = vector.broadcast %520 : vector<18x1xf32> to vector<18x128xf32>
    %522 = arith.subf %512, %521 : vector<18x128xf32>
    %523 = arith.mulf %522, %522 : vector<18x128xf32>
    %cst_213 = arith.constant dense<0.000000e+00> : vector<18xf32>
    %524 = vector.multi_reduction <add>, %523, %cst_213 [1] : vector<18x128xf32> to vector<18xf32>
    %525 = vector.shape_cast %524 : vector<18xf32> to vector<18x1xf32>
    %cst_214 = arith.constant 1.280000e+02 : f32
    %526 = vector.broadcast %cst_214 : f32 to vector<18x1xf32>
    %527 = arith.divf %525, %526 : vector<18x1xf32>
    %cst_215 = arith.constant 9.99999974E-6 : f32
    %528 = vector.broadcast %cst_215 : f32 to vector<18x1xf32>
    %529 = arith.addf %527, %528 : vector<18x1xf32>
    %530 = math.rsqrt %529 : vector<18x1xf32>
    %531 = vector.broadcast %530 : vector<18x1xf32> to vector<18x128xf32>
    %532 = arith.mulf %522, %531 : vector<18x128xf32>
    %533 = vector.broadcast %514 : vector<1x128xf32> to vector<18x128xf32>
    %534 = arith.mulf %532, %533 : vector<18x128xf32>
    %535 = vector.broadcast %516 : vector<1x128xf32> to vector<18x128xf32>
    %536 = arith.addf %534, %535 : vector<18x128xf32>
    %537 = arith.truncf %536 : vector<18x128xf32> to vector<18x128xbf16>
    %c2_216 = arith.constant 2 : index
    %c0_217 = arith.constant 0 : index
    %c0_218 = arith.constant 0 : index
    %538 = vector.load %arg11[%c2_216, %c0_217, %c0_218] : memref<4x128x512xbf16, #tpu.memory_space<vmem>>, vector<1x128x512xbf16>
    %539 = vector.shape_cast %538 : vector<1x128x512xbf16> to vector<128x512xbf16>
    %cst_219 = arith.constant dense<0.000000e+00> : vector<18x512xf32>
    %540 = tpu.matmul %537, %539, %cst_219 {dimension_numbers = #tpu.dot_dimension_numbers<[1], [0], [0], [1], [0, 0, 1, 1], [], []>} : vector<18x128xbf16>, vector<128x512xbf16>, vector<18x512xf32> -> vector<18x512xf32>
    %c2_220 = arith.constant 2 : index
    %c0_221 = arith.constant 0 : index
    %c0_222 = arith.constant 0 : index
    %541 = vector.load %arg12[%c2_220, %c0_221, %c0_222] : memref<4x1x512xf32, #tpu.memory_space<vmem>>, vector<1x1x512xf32>
    %542 = vector.shape_cast %541 : vector<1x1x512xf32> to vector<1x512xf32>
    %543 = vector.broadcast %542 : vector<1x512xf32> to vector<18x512xf32>
    %544 = arith.addf %540, %543 : vector<18x512xf32>
    %cst_223 = arith.constant 0.000000e+00 : f32
    %545 = vector.broadcast %cst_223 : f32 to vector<18x512xf32>
    %546 = arith.maximumf %544, %545 : vector<18x512xf32>
    %547 = arith.truncf %546 : vector<18x512xf32> to vector<18x512xbf16>
    %c2_224 = arith.constant 2 : index
    %c0_225 = arith.constant 0 : index
    %c0_226 = arith.constant 0 : index
    %548 = vector.load %arg13[%c2_224, %c0_225, %c0_226] : memref<4x512x128xbf16, #tpu.memory_space<vmem>>, vector<1x512x128xbf16>
    %549 = vector.shape_cast %548 : vector<1x512x128xbf16> to vector<512x128xbf16>
    %cst_227 = arith.constant dense<0.000000e+00> : vector<18x128xf32>
    %550 = tpu.matmul %547, %549, %cst_227 {dimension_numbers = #tpu.dot_dimension_numbers<[1], [0], [0], [1], [0, 0, 1, 1], [], []>} : vector<18x512xbf16>, vector<512x128xbf16>, vector<18x128xf32> -> vector<18x128xf32>
    %c2_228 = arith.constant 2 : index
    %c0_229 = arith.constant 0 : index
    %c0_230 = arith.constant 0 : index
    %551 = vector.load %arg14[%c2_228, %c0_229, %c0_230] : memref<4x1x128xf32, #tpu.memory_space<vmem>>, vector<1x1x128xf32>
    %552 = vector.shape_cast %551 : vector<1x1x128xf32> to vector<1x128xf32>
    %553 = vector.broadcast %552 : vector<1x128xf32> to vector<18x128xf32>
    %554 = arith.addf %550, %553 : vector<18x128xf32>
    %555 = arith.addf %536, %554 : vector<18x128xf32>
    %c2_231 = arith.constant 2 : index
    %c0_232 = arith.constant 0 : index
    %c0_233 = arith.constant 0 : index
    %556 = vector.load %arg17[%c2_231, %c0_232, %c0_233] : memref<4x1x128xf32, #tpu.memory_space<vmem>>, vector<1x1x128xf32>
    %557 = vector.shape_cast %556 : vector<1x1x128xf32> to vector<1x128xf32>
    %c2_234 = arith.constant 2 : index
    %c0_235 = arith.constant 0 : index
    %c0_236 = arith.constant 0 : index
    %558 = vector.load %arg18[%c2_234, %c0_235, %c0_236] : memref<4x1x128xf32, #tpu.memory_space<vmem>>, vector<1x1x128xf32>
    %559 = vector.shape_cast %558 : vector<1x1x128xf32> to vector<1x128xf32>
    %cst_237 = arith.constant dense<0.000000e+00> : vector<18xf32>
    %560 = vector.multi_reduction <add>, %555, %cst_237 [1] : vector<18x128xf32> to vector<18xf32>
    %561 = vector.shape_cast %560 : vector<18xf32> to vector<18x1xf32>
    %cst_238 = arith.constant 1.280000e+02 : f32
    %562 = vector.broadcast %cst_238 : f32 to vector<18x1xf32>
    %563 = arith.divf %561, %562 : vector<18x1xf32>
    %564 = vector.broadcast %563 : vector<18x1xf32> to vector<18x128xf32>
    %565 = arith.subf %555, %564 : vector<18x128xf32>
    %566 = arith.mulf %565, %565 : vector<18x128xf32>
    %cst_239 = arith.constant dense<0.000000e+00> : vector<18xf32>
    %567 = vector.multi_reduction <add>, %566, %cst_239 [1] : vector<18x128xf32> to vector<18xf32>
    %568 = vector.shape_cast %567 : vector<18xf32> to vector<18x1xf32>
    %cst_240 = arith.constant 1.280000e+02 : f32
    %569 = vector.broadcast %cst_240 : f32 to vector<18x1xf32>
    %570 = arith.divf %568, %569 : vector<18x1xf32>
    %cst_241 = arith.constant 9.99999974E-6 : f32
    %571 = vector.broadcast %cst_241 : f32 to vector<18x1xf32>
    %572 = arith.addf %570, %571 : vector<18x1xf32>
    %573 = math.rsqrt %572 : vector<18x1xf32>
    %574 = vector.broadcast %573 : vector<18x1xf32> to vector<18x128xf32>
    %575 = arith.mulf %565, %574 : vector<18x128xf32>
    %576 = vector.broadcast %557 : vector<1x128xf32> to vector<18x128xf32>
    %577 = arith.mulf %575, %576 : vector<18x128xf32>
    %578 = vector.broadcast %559 : vector<1x128xf32> to vector<18x128xf32>
    %579 = arith.addf %577, %578 : vector<18x128xf32>
    %580 = arith.truncf %579 : vector<18x128xf32> to vector<18x128xbf16>
    %c3 = arith.constant 3 : index
    %c0_242 = arith.constant 0 : index
    %c0_243 = arith.constant 0 : index
    %581 = vector.load %arg7[%c3, %c0_242, %c0_243] : memref<4x128x384xbf16, #tpu.memory_space<vmem>>, vector<1x128x384xbf16>
    %582 = vector.shape_cast %581 : vector<1x128x384xbf16> to vector<128x384xbf16>
    %cst_244 = arith.constant dense<0.000000e+00> : vector<18x384xf32>
    %583 = tpu.matmul %580, %582, %cst_244 {dimension_numbers = #tpu.dot_dimension_numbers<[1], [0], [0], [1], [0, 0, 1, 1], [], []>} : vector<18x128xbf16>, vector<128x384xbf16>, vector<18x384xf32> -> vector<18x384xf32>
    %c3_245 = arith.constant 3 : index
    %c0_246 = arith.constant 0 : index
    %c0_247 = arith.constant 0 : index
    %584 = vector.load %arg8[%c3_245, %c0_246, %c0_247] : memref<4x1x384xf32, #tpu.memory_space<vmem>>, vector<1x1x384xf32>
    %585 = vector.shape_cast %584 : vector<1x1x384xf32> to vector<1x384xf32>
    %586 = vector.broadcast %585 : vector<1x384xf32> to vector<18x384xf32>
    %587 = arith.addf %583, %586 : vector<18x384xf32>
    %c3_248 = arith.constant 3 : index
    %c0_249 = arith.constant 0 : index
    %c0_250 = arith.constant 0 : index
    %588 = vector.load %arg9[%c3_248, %c0_249, %c0_250] : memref<4x128x128xbf16, #tpu.memory_space<vmem>>, vector<1x128x128xbf16>
    %589 = vector.shape_cast %588 : vector<1x128x128xbf16> to vector<128x128xbf16>
    %cst_251 = arith.constant 0.000000e+00 : f32
    %590 = vector.broadcast %cst_251 : f32 to vector<18x128xf32>
    %591 = vector.extract_strided_slice %587 {offsets = [0, 0], sizes = [18, 32], strides = [1, 1]} : vector<18x384xf32> to vector<18x32xf32>
    %cst_252 = arith.constant 0.176776692 : f32
    %592 = vector.broadcast %cst_252 : f32 to vector<18x32xf32>
    %593 = arith.mulf %591, %592 : vector<18x32xf32>
    %594 = arith.truncf %593 : vector<18x32xf32> to vector<18x32xbf16>
    %595 = vector.extract_strided_slice %587 {offsets = [0, 128], sizes = [18, 32], strides = [1, 1]} : vector<18x384xf32> to vector<18x32xf32>
    %596 = arith.truncf %595 : vector<18x32xf32> to vector<18x32xbf16>
    %597 = vector.extract_strided_slice %587 {offsets = [0, 256], sizes = [18, 32], strides = [1, 1]} : vector<18x384xf32> to vector<18x32xf32>
    %598 = arith.truncf %597 : vector<18x32xf32> to vector<18x32xbf16>
    %cst_253 = arith.constant dense<0.000000e+00> : vector<18x18xf32>
    %599 = tpu.matmul %594, %596, %cst_253 {dimension_numbers = #tpu.dot_dimension_numbers<[1], [1], [0], [0], [0, 0, 1, 0], [], []>} : vector<18x32xbf16>, vector<18x32xbf16>, vector<18x18xf32> -> vector<18x18xf32>
    %600 = arith.addf %599, %18 : vector<18x18xf32>
    %cst_254 = arith.constant dense<0xFF800000> : vector<18xf32>
    %601 = vector.multi_reduction <maximumf>, %600, %cst_254 [1] : vector<18x18xf32> to vector<18xf32>
    %602 = vector.shape_cast %601 : vector<18xf32> to vector<18x1xf32>
    %603 = vector.broadcast %602 : vector<18x1xf32> to vector<18x18xf32>
    %604 = arith.subf %600, %603 : vector<18x18xf32>
    %605 = math.exp %604 : vector<18x18xf32>
    %cst_255 = arith.constant dense<0.000000e+00> : vector<18xf32>
    %606 = vector.multi_reduction <add>, %605, %cst_255 [1] : vector<18x18xf32> to vector<18xf32>
    %607 = vector.shape_cast %606 : vector<18xf32> to vector<18x1xf32>
    %608 = tpu.reciprocal %607 {approx = true} : vector<18x1xf32> -> vector<18x1xf32>
    %609 = vector.broadcast %608 : vector<18x1xf32> to vector<18x18xf32>
    %610 = arith.mulf %605, %609 : vector<18x18xf32>
    %611 = arith.truncf %610 : vector<18x18xf32> to vector<18x18xbf16>
    %cst_256 = arith.constant dense<0.000000e+00> : vector<18x32xf32>
    %612 = tpu.matmul %611, %598, %cst_256 {dimension_numbers = #tpu.dot_dimension_numbers<[1], [0], [0], [1], [0, 0, 1, 1], [], []>} : vector<18x18xbf16>, vector<18x32xbf16>, vector<18x32xf32> -> vector<18x32xf32>
    %613 = arith.truncf %612 : vector<18x32xf32> to vector<18x32xbf16>
    %614 = vector.extract_strided_slice %589 {offsets = [0, 0], sizes = [32, 128], strides = [1, 1]} : vector<128x128xbf16> to vector<32x128xbf16>
    %cst_257 = arith.constant dense<0.000000e+00> : vector<18x128xf32>
    %615 = tpu.matmul %613, %614, %cst_257 {dimension_numbers = #tpu.dot_dimension_numbers<[1], [0], [0], [1], [0, 0, 1, 1], [], []>} : vector<18x32xbf16>, vector<32x128xbf16>, vector<18x128xf32> -> vector<18x128xf32>
    %616 = arith.addf %590, %615 : vector<18x128xf32>
    %617 = vector.extract_strided_slice %587 {offsets = [0, 32], sizes = [18, 32], strides = [1, 1]} : vector<18x384xf32> to vector<18x32xf32>
    %cst_258 = arith.constant 0.176776692 : f32
    %618 = vector.broadcast %cst_258 : f32 to vector<18x32xf32>
    %619 = arith.mulf %617, %618 : vector<18x32xf32>
    %620 = arith.truncf %619 : vector<18x32xf32> to vector<18x32xbf16>
    %621 = vector.extract_strided_slice %587 {offsets = [0, 160], sizes = [18, 32], strides = [1, 1]} : vector<18x384xf32> to vector<18x32xf32>
    %622 = arith.truncf %621 : vector<18x32xf32> to vector<18x32xbf16>
    %623 = vector.extract_strided_slice %587 {offsets = [0, 288], sizes = [18, 32], strides = [1, 1]} : vector<18x384xf32> to vector<18x32xf32>
    %624 = arith.truncf %623 : vector<18x32xf32> to vector<18x32xbf16>
    %cst_259 = arith.constant dense<0.000000e+00> : vector<18x18xf32>
    %625 = tpu.matmul %620, %622, %cst_259 {dimension_numbers = #tpu.dot_dimension_numbers<[1], [1], [0], [0], [0, 0, 1, 0], [], []>} : vector<18x32xbf16>, vector<18x32xbf16>, vector<18x18xf32> -> vector<18x18xf32>
    %626 = arith.addf %625, %18 : vector<18x18xf32>
    %cst_260 = arith.constant dense<0xFF800000> : vector<18xf32>
    %627 = vector.multi_reduction <maximumf>, %626, %cst_260 [1] : vector<18x18xf32> to vector<18xf32>
    %628 = vector.shape_cast %627 : vector<18xf32> to vector<18x1xf32>
    %629 = vector.broadcast %628 : vector<18x1xf32> to vector<18x18xf32>
    %630 = arith.subf %626, %629 : vector<18x18xf32>
    %631 = math.exp %630 : vector<18x18xf32>
    %cst_261 = arith.constant dense<0.000000e+00> : vector<18xf32>
    %632 = vector.multi_reduction <add>, %631, %cst_261 [1] : vector<18x18xf32> to vector<18xf32>
    %633 = vector.shape_cast %632 : vector<18xf32> to vector<18x1xf32>
    %634 = tpu.reciprocal %633 {approx = true} : vector<18x1xf32> -> vector<18x1xf32>
    %635 = vector.broadcast %634 : vector<18x1xf32> to vector<18x18xf32>
    %636 = arith.mulf %631, %635 : vector<18x18xf32>
    %637 = arith.truncf %636 : vector<18x18xf32> to vector<18x18xbf16>
    %cst_262 = arith.constant dense<0.000000e+00> : vector<18x32xf32>
    %638 = tpu.matmul %637, %624, %cst_262 {dimension_numbers = #tpu.dot_dimension_numbers<[1], [0], [0], [1], [0, 0, 1, 1], [], []>} : vector<18x18xbf16>, vector<18x32xbf16>, vector<18x32xf32> -> vector<18x32xf32>
    %639 = arith.truncf %638 : vector<18x32xf32> to vector<18x32xbf16>
    %640 = vector.extract_strided_slice %589 {offsets = [32, 0], sizes = [32, 128], strides = [1, 1]} : vector<128x128xbf16> to vector<32x128xbf16>
    %cst_263 = arith.constant dense<0.000000e+00> : vector<18x128xf32>
    %641 = tpu.matmul %639, %640, %cst_263 {dimension_numbers = #tpu.dot_dimension_numbers<[1], [0], [0], [1], [0, 0, 1, 1], [], []>} : vector<18x32xbf16>, vector<32x128xbf16>, vector<18x128xf32> -> vector<18x128xf32>
    %642 = arith.addf %616, %641 : vector<18x128xf32>
    %643 = vector.extract_strided_slice %587 {offsets = [0, 64], sizes = [18, 32], strides = [1, 1]} : vector<18x384xf32> to vector<18x32xf32>
    %cst_264 = arith.constant 0.176776692 : f32
    %644 = vector.broadcast %cst_264 : f32 to vector<18x32xf32>
    %645 = arith.mulf %643, %644 : vector<18x32xf32>
    %646 = arith.truncf %645 : vector<18x32xf32> to vector<18x32xbf16>
    %647 = vector.extract_strided_slice %587 {offsets = [0, 192], sizes = [18, 32], strides = [1, 1]} : vector<18x384xf32> to vector<18x32xf32>
    %648 = arith.truncf %647 : vector<18x32xf32> to vector<18x32xbf16>
    %649 = vector.extract_strided_slice %587 {offsets = [0, 320], sizes = [18, 32], strides = [1, 1]} : vector<18x384xf32> to vector<18x32xf32>
    %650 = arith.truncf %649 : vector<18x32xf32> to vector<18x32xbf16>
    %cst_265 = arith.constant dense<0.000000e+00> : vector<18x18xf32>
    %651 = tpu.matmul %646, %648, %cst_265 {dimension_numbers = #tpu.dot_dimension_numbers<[1], [1], [0], [0], [0, 0, 1, 0], [], []>} : vector<18x32xbf16>, vector<18x32xbf16>, vector<18x18xf32> -> vector<18x18xf32>
    %652 = arith.addf %651, %18 : vector<18x18xf32>
    %cst_266 = arith.constant dense<0xFF800000> : vector<18xf32>
    %653 = vector.multi_reduction <maximumf>, %652, %cst_266 [1] : vector<18x18xf32> to vector<18xf32>
    %654 = vector.shape_cast %653 : vector<18xf32> to vector<18x1xf32>
    %655 = vector.broadcast %654 : vector<18x1xf32> to vector<18x18xf32>
    %656 = arith.subf %652, %655 : vector<18x18xf32>
    %657 = math.exp %656 : vector<18x18xf32>
    %cst_267 = arith.constant dense<0.000000e+00> : vector<18xf32>
    %658 = vector.multi_reduction <add>, %657, %cst_267 [1] : vector<18x18xf32> to vector<18xf32>
    %659 = vector.shape_cast %658 : vector<18xf32> to vector<18x1xf32>
    %660 = tpu.reciprocal %659 {approx = true} : vector<18x1xf32> -> vector<18x1xf32>
    %661 = vector.broadcast %660 : vector<18x1xf32> to vector<18x18xf32>
    %662 = arith.mulf %657, %661 : vector<18x18xf32>
    %663 = arith.truncf %662 : vector<18x18xf32> to vector<18x18xbf16>
    %cst_268 = arith.constant dense<0.000000e+00> : vector<18x32xf32>
    %664 = tpu.matmul %663, %650, %cst_268 {dimension_numbers = #tpu.dot_dimension_numbers<[1], [0], [0], [1], [0, 0, 1, 1], [], []>} : vector<18x18xbf16>, vector<18x32xbf16>, vector<18x32xf32> -> vector<18x32xf32>
    %665 = arith.truncf %664 : vector<18x32xf32> to vector<18x32xbf16>
    %666 = vector.extract_strided_slice %589 {offsets = [64, 0], sizes = [32, 128], strides = [1, 1]} : vector<128x128xbf16> to vector<32x128xbf16>
    %cst_269 = arith.constant dense<0.000000e+00> : vector<18x128xf32>
    %667 = tpu.matmul %665, %666, %cst_269 {dimension_numbers = #tpu.dot_dimension_numbers<[1], [0], [0], [1], [0, 0, 1, 1], [], []>} : vector<18x32xbf16>, vector<32x128xbf16>, vector<18x128xf32> -> vector<18x128xf32>
    %668 = arith.addf %642, %667 : vector<18x128xf32>
    %669 = vector.extract_strided_slice %587 {offsets = [0, 96], sizes = [18, 32], strides = [1, 1]} : vector<18x384xf32> to vector<18x32xf32>
    %cst_270 = arith.constant 0.176776692 : f32
    %670 = vector.broadcast %cst_270 : f32 to vector<18x32xf32>
    %671 = arith.mulf %669, %670 : vector<18x32xf32>
    %672 = arith.truncf %671 : vector<18x32xf32> to vector<18x32xbf16>
    %673 = vector.extract_strided_slice %587 {offsets = [0, 224], sizes = [18, 32], strides = [1, 1]} : vector<18x384xf32> to vector<18x32xf32>
    %674 = arith.truncf %673 : vector<18x32xf32> to vector<18x32xbf16>
    %675 = vector.extract_strided_slice %587 {offsets = [0, 352], sizes = [18, 32], strides = [1, 1]} : vector<18x384xf32> to vector<18x32xf32>
    %676 = arith.truncf %675 : vector<18x32xf32> to vector<18x32xbf16>
    %cst_271 = arith.constant dense<0.000000e+00> : vector<18x18xf32>
    %677 = tpu.matmul %672, %674, %cst_271 {dimension_numbers = #tpu.dot_dimension_numbers<[1], [1], [0], [0], [0, 0, 1, 0], [], []>} : vector<18x32xbf16>, vector<18x32xbf16>, vector<18x18xf32> -> vector<18x18xf32>
    %678 = arith.addf %677, %18 : vector<18x18xf32>
    %cst_272 = arith.constant dense<0xFF800000> : vector<18xf32>
    %679 = vector.multi_reduction <maximumf>, %678, %cst_272 [1] : vector<18x18xf32> to vector<18xf32>
    %680 = vector.shape_cast %679 : vector<18xf32> to vector<18x1xf32>
    %681 = vector.broadcast %680 : vector<18x1xf32> to vector<18x18xf32>
    %682 = arith.subf %678, %681 : vector<18x18xf32>
    %683 = math.exp %682 : vector<18x18xf32>
    %cst_273 = arith.constant dense<0.000000e+00> : vector<18xf32>
    %684 = vector.multi_reduction <add>, %683, %cst_273 [1] : vector<18x18xf32> to vector<18xf32>
    %685 = vector.shape_cast %684 : vector<18xf32> to vector<18x1xf32>
    %686 = tpu.reciprocal %685 {approx = true} : vector<18x1xf32> -> vector<18x1xf32>
    %687 = vector.broadcast %686 : vector<18x1xf32> to vector<18x18xf32>
    %688 = arith.mulf %683, %687 : vector<18x18xf32>
    %689 = arith.truncf %688 : vector<18x18xf32> to vector<18x18xbf16>
    %cst_274 = arith.constant dense<0.000000e+00> : vector<18x32xf32>
    %690 = tpu.matmul %689, %676, %cst_274 {dimension_numbers = #tpu.dot_dimension_numbers<[1], [0], [0], [1], [0, 0, 1, 1], [], []>} : vector<18x18xbf16>, vector<18x32xbf16>, vector<18x32xf32> -> vector<18x32xf32>
    %691 = arith.truncf %690 : vector<18x32xf32> to vector<18x32xbf16>
    %692 = vector.extract_strided_slice %589 {offsets = [96, 0], sizes = [32, 128], strides = [1, 1]} : vector<128x128xbf16> to vector<32x128xbf16>
    %cst_275 = arith.constant dense<0.000000e+00> : vector<18x128xf32>
    %693 = tpu.matmul %691, %692, %cst_275 {dimension_numbers = #tpu.dot_dimension_numbers<[1], [0], [0], [1], [0, 0, 1, 1], [], []>} : vector<18x32xbf16>, vector<32x128xbf16>, vector<18x128xf32> -> vector<18x128xf32>
    %694 = arith.addf %668, %693 : vector<18x128xf32>
    %c3_276 = arith.constant 3 : index
    %c0_277 = arith.constant 0 : index
    %c0_278 = arith.constant 0 : index
    %695 = vector.load %arg10[%c3_276, %c0_277, %c0_278] : memref<4x1x128xf32, #tpu.memory_space<vmem>>, vector<1x1x128xf32>
    %696 = vector.shape_cast %695 : vector<1x1x128xf32> to vector<1x128xf32>
    %697 = vector.broadcast %696 : vector<1x128xf32> to vector<18x128xf32>
    %698 = arith.addf %694, %697 : vector<18x128xf32>
    %699 = arith.addf %579, %698 : vector<18x128xf32>
    %c3_279 = arith.constant 3 : index
    %c0_280 = arith.constant 0 : index
    %c0_281 = arith.constant 0 : index
    %700 = vector.load %arg15[%c3_279, %c0_280, %c0_281] : memref<4x1x128xf32, #tpu.memory_space<vmem>>, vector<1x1x128xf32>
    %701 = vector.shape_cast %700 : vector<1x1x128xf32> to vector<1x128xf32>
    %c3_282 = arith.constant 3 : index
    %c0_283 = arith.constant 0 : index
    %c0_284 = arith.constant 0 : index
    %702 = vector.load %arg16[%c3_282, %c0_283, %c0_284] : memref<4x1x128xf32, #tpu.memory_space<vmem>>, vector<1x1x128xf32>
    %703 = vector.shape_cast %702 : vector<1x1x128xf32> to vector<1x128xf32>
    %cst_285 = arith.constant dense<0.000000e+00> : vector<18xf32>
    %704 = vector.multi_reduction <add>, %699, %cst_285 [1] : vector<18x128xf32> to vector<18xf32>
    %705 = vector.shape_cast %704 : vector<18xf32> to vector<18x1xf32>
    %cst_286 = arith.constant 1.280000e+02 : f32
    %706 = vector.broadcast %cst_286 : f32 to vector<18x1xf32>
    %707 = arith.divf %705, %706 : vector<18x1xf32>
    %708 = vector.broadcast %707 : vector<18x1xf32> to vector<18x128xf32>
    %709 = arith.subf %699, %708 : vector<18x128xf32>
    %710 = arith.mulf %709, %709 : vector<18x128xf32>
    %cst_287 = arith.constant dense<0.000000e+00> : vector<18xf32>
    %711 = vector.multi_reduction <add>, %710, %cst_287 [1] : vector<18x128xf32> to vector<18xf32>
    %712 = vector.shape_cast %711 : vector<18xf32> to vector<18x1xf32>
    %cst_288 = arith.constant 1.280000e+02 : f32
    %713 = vector.broadcast %cst_288 : f32 to vector<18x1xf32>
    %714 = arith.divf %712, %713 : vector<18x1xf32>
    %cst_289 = arith.constant 9.99999974E-6 : f32
    %715 = vector.broadcast %cst_289 : f32 to vector<18x1xf32>
    %716 = arith.addf %714, %715 : vector<18x1xf32>
    %717 = math.rsqrt %716 : vector<18x1xf32>
    %718 = vector.broadcast %717 : vector<18x1xf32> to vector<18x128xf32>
    %719 = arith.mulf %709, %718 : vector<18x128xf32>
    %720 = vector.broadcast %701 : vector<1x128xf32> to vector<18x128xf32>
    %721 = arith.mulf %719, %720 : vector<18x128xf32>
    %722 = vector.broadcast %703 : vector<1x128xf32> to vector<18x128xf32>
    %723 = arith.addf %721, %722 : vector<18x128xf32>
    %724 = arith.truncf %723 : vector<18x128xf32> to vector<18x128xbf16>
    %c3_290 = arith.constant 3 : index
    %c0_291 = arith.constant 0 : index
    %c0_292 = arith.constant 0 : index
    %725 = vector.load %arg11[%c3_290, %c0_291, %c0_292] : memref<4x128x512xbf16, #tpu.memory_space<vmem>>, vector<1x128x512xbf16>
    %726 = vector.shape_cast %725 : vector<1x128x512xbf16> to vector<128x512xbf16>
    %cst_293 = arith.constant dense<0.000000e+00> : vector<18x512xf32>
    %727 = tpu.matmul %724, %726, %cst_293 {dimension_numbers = #tpu.dot_dimension_numbers<[1], [0], [0], [1], [0, 0, 1, 1], [], []>} : vector<18x128xbf16>, vector<128x512xbf16>, vector<18x512xf32> -> vector<18x512xf32>
    %c3_294 = arith.constant 3 : index
    %c0_295 = arith.constant 0 : index
    %c0_296 = arith.constant 0 : index
    %728 = vector.load %arg12[%c3_294, %c0_295, %c0_296] : memref<4x1x512xf32, #tpu.memory_space<vmem>>, vector<1x1x512xf32>
    %729 = vector.shape_cast %728 : vector<1x1x512xf32> to vector<1x512xf32>
    %730 = vector.broadcast %729 : vector<1x512xf32> to vector<18x512xf32>
    %731 = arith.addf %727, %730 : vector<18x512xf32>
    %cst_297 = arith.constant 0.000000e+00 : f32
    %732 = vector.broadcast %cst_297 : f32 to vector<18x512xf32>
    %733 = arith.maximumf %731, %732 : vector<18x512xf32>
    %734 = arith.truncf %733 : vector<18x512xf32> to vector<18x512xbf16>
    %c3_298 = arith.constant 3 : index
    %c0_299 = arith.constant 0 : index
    %c0_300 = arith.constant 0 : index
    %735 = vector.load %arg13[%c3_298, %c0_299, %c0_300] : memref<4x512x128xbf16, #tpu.memory_space<vmem>>, vector<1x512x128xbf16>
    %736 = vector.shape_cast %735 : vector<1x512x128xbf16> to vector<512x128xbf16>
    %cst_301 = arith.constant dense<0.000000e+00> : vector<18x128xf32>
    %737 = tpu.matmul %734, %736, %cst_301 {dimension_numbers = #tpu.dot_dimension_numbers<[1], [0], [0], [1], [0, 0, 1, 1], [], []>} : vector<18x512xbf16>, vector<512x128xbf16>, vector<18x128xf32> -> vector<18x128xf32>
    %c3_302 = arith.constant 3 : index
    %c0_303 = arith.constant 0 : index
    %c0_304 = arith.constant 0 : index
    %738 = vector.load %arg14[%c3_302, %c0_303, %c0_304] : memref<4x1x128xf32, #tpu.memory_space<vmem>>, vector<1x1x128xf32>
    %739 = vector.shape_cast %738 : vector<1x1x128xf32> to vector<1x128xf32>
    %740 = vector.broadcast %739 : vector<1x128xf32> to vector<18x128xf32>
    %741 = arith.addf %737, %740 : vector<18x128xf32>
    %742 = arith.addf %723, %741 : vector<18x128xf32>
    %c3_305 = arith.constant 3 : index
    %c0_306 = arith.constant 0 : index
    %c0_307 = arith.constant 0 : index
    %743 = vector.load %arg17[%c3_305, %c0_306, %c0_307] : memref<4x1x128xf32, #tpu.memory_space<vmem>>, vector<1x1x128xf32>
    %744 = vector.shape_cast %743 : vector<1x1x128xf32> to vector<1x128xf32>
    %c3_308 = arith.constant 3 : index
    %c0_309 = arith.constant 0 : index
    %c0_310 = arith.constant 0 : index
    %745 = vector.load %arg18[%c3_308, %c0_309, %c0_310] : memref<4x1x128xf32, #tpu.memory_space<vmem>>, vector<1x1x128xf32>
    %746 = vector.shape_cast %745 : vector<1x1x128xf32> to vector<1x128xf32>
    %cst_311 = arith.constant dense<0.000000e+00> : vector<18xf32>
    %747 = vector.multi_reduction <add>, %742, %cst_311 [1] : vector<18x128xf32> to vector<18xf32>
    %748 = vector.shape_cast %747 : vector<18xf32> to vector<18x1xf32>
    %cst_312 = arith.constant 1.280000e+02 : f32
    %749 = vector.broadcast %cst_312 : f32 to vector<18x1xf32>
    %750 = arith.divf %748, %749 : vector<18x1xf32>
    %751 = vector.broadcast %750 : vector<18x1xf32> to vector<18x128xf32>
    %752 = arith.subf %742, %751 : vector<18x128xf32>
    %753 = arith.mulf %752, %752 : vector<18x128xf32>
    %cst_313 = arith.constant dense<0.000000e+00> : vector<18xf32>
    %754 = vector.multi_reduction <add>, %753, %cst_313 [1] : vector<18x128xf32> to vector<18xf32>
    %755 = vector.shape_cast %754 : vector<18xf32> to vector<18x1xf32>
    %cst_314 = arith.constant 1.280000e+02 : f32
    %756 = vector.broadcast %cst_314 : f32 to vector<18x1xf32>
    %757 = arith.divf %755, %756 : vector<18x1xf32>
    %cst_315 = arith.constant 9.99999974E-6 : f32
    %758 = vector.broadcast %cst_315 : f32 to vector<18x1xf32>
    %759 = arith.addf %757, %758 : vector<18x1xf32>
    %760 = math.rsqrt %759 : vector<18x1xf32>
    %761 = vector.broadcast %760 : vector<18x1xf32> to vector<18x128xf32>
    %762 = arith.mulf %752, %761 : vector<18x128xf32>
    %763 = vector.broadcast %744 : vector<1x128xf32> to vector<18x128xf32>
    %764 = arith.mulf %762, %763 : vector<18x128xf32>
    %765 = vector.broadcast %746 : vector<1x128xf32> to vector<18x128xf32>
    %766 = arith.addf %764, %765 : vector<18x128xf32>
    %767 = vector.extract_strided_slice %766 {offsets = [8, 0], sizes = [1, 128], strides = [1, 1]} : vector<18x128xf32> to vector<1x128xf32>
    %c0_316 = arith.constant 0 : index
    %c0_317 = arith.constant 0 : index
    %768 = vector.load %arg22[%c0_316, %c0_317] : memref<18x128xf32, #tpu.memory_space<vmem>>, vector<1x128xf32>
    tpu.vector_store %arg22[%c0_316, %c0_317], %767 {strides = array<i32>} : memref<18x128xf32, #tpu.memory_space<vmem>>, vector<1x128xf32>,
    %769 = vector.extract_strided_slice %766 {offsets = [17, 0], sizes = [1, 128], strides = [1, 1]} : vector<18x128xf32> to vector<1x128xf32>
    %c1_318 = arith.constant 1 : index
    %c0_319 = arith.constant 0 : index
    %770 = vector.load %arg22[%c1_318, %c0_319] : memref<18x128xf32, #tpu.memory_space<vmem>>, vector<1x128xf32>
    tpu.vector_store %arg22[%c1_318, %c0_319], %769 {strides = array<i32>} : memref<18x128xf32, #tpu.memory_space<vmem>>, vector<1x128xf32>,
    %c0_320 = arith.constant 0 : index
    %c0_321 = arith.constant 0 : index
    %771 = vector.load %arg22[%c0_320, %c0_321] : memref<18x128xf32, #tpu.memory_space<vmem>>, vector<2x128xf32>
    %772 = arith.truncf %771 : vector<2x128xf32> to vector<2x128xbf16>
    %c0_322 = arith.constant 0 : index
    %c0_323 = arith.constant 0 : index
    %773 = vector.load %arg19[%c0_322, %c0_323] : memref<128x128xbf16, #tpu.memory_space<vmem>>, vector<128x128xbf16>
    %cst_324 = arith.constant dense<0.000000e+00> : vector<2x128xf32>
    %774 = tpu.matmul %772, %773, %cst_324 {dimension_numbers = #tpu.dot_dimension_numbers<[1], [0], [0], [1], [0, 0, 1, 1], [], []>} : vector<2x128xbf16>, vector<128x128xbf16>, vector<2x128xf32> -> vector<2x128xf32>
    %c0_325 = arith.constant 0 : index
    %c0_326 = arith.constant 0 : index
    %775 = vector.load %arg20[%c0_325, %c0_326] : memref<1x128xf32, #tpu.memory_space<vmem>>, vector<1x128xf32>
    %776 = vector.broadcast %775 : vector<1x128xf32> to vector<2x128xf32>
    %777 = arith.addf %774, %776 : vector<2x128xf32>
    %c0_327 = arith.constant 0 : index
    %c0_328 = arith.constant 0 : index
    %c0_329 = arith.constant 0 : index
    %778 = vector.load %arg21[%c0_327, %c0_328, %c0_329] : memref<1x2x128xf32, #tpu.memory_space<vmem>>, vector<1x2x128xf32>
    %779 = vector.shape_cast %778 : vector<1x2x128xf32> to vector<2x128xf32>
    %780 = vector.shape_cast %777 : vector<2x128xf32> to vector<1x2x128xf32>
    tpu.vector_store %arg21[%c0_327, %c0_328, %c0_329], %780 {strides = array<i32>} : memref<1x2x128xf32, #tpu.memory_space<vmem>>, vector<1x2x128xf32>,
    return
  }
  func.func @transform_0(%arg0: i32) -> (i32, i32, i32) {
    %c0_i32 = arith.constant 0 : i32
    %c0_i32_0 = arith.constant 0 : i32
    %c0_i32_1 = arith.constant 0 : i32
    return %arg0, %c0_i32, %c0_i32_0 : i32, i32, i32
  }
  func.func @transform_1(%arg0: i32) -> (i32, i32) {
    %c0_i32 = arith.constant 0 : i32
    %c0_i32_0 = arith.constant 0 : i32
    %c0_i32_1 = arith.constant 0 : i32
    return %c0_i32, %c0_i32_0 : i32, i32
  }
  func.func @transform_2(%arg0: i32) -> (i32, i32) {
    %c0_i32 = arith.constant 0 : i32
    %c0_i32_0 = arith.constant 0 : i32
    %c0_i32_1 = arith.constant 0 : i32
    return %c0_i32, %c0_i32_0 : i32, i32
  }
  func.func @transform_3(%arg0: i32) -> (i32, i32) {
    %c0_i32 = arith.constant 0 : i32
    %c0_i32_0 = arith.constant 0 : i32
    %c0_i32_1 = arith.constant 0 : i32
    return %c0_i32, %c0_i32_0 : i32, i32
  }
  func.func @transform_4(%arg0: i32) -> (i32, i32) {
    %c0_i32 = arith.constant 0 : i32
    %c0_i32_0 = arith.constant 0 : i32
    %c0_i32_1 = arith.constant 0 : i32
    return %c0_i32, %c0_i32_0 : i32, i32
  }
  func.func @transform_5(%arg0: i32) -> (i32, i32) {
    %c0_i32 = arith.constant 0 : i32
    %c0_i32_0 = arith.constant 0 : i32
    %c0_i32_1 = arith.constant 0 : i32
    return %c0_i32, %c0_i32_0 : i32, i32
  }
  func.func @transform_6(%arg0: i32) -> (i32, i32, i32) {
    %c0_i32 = arith.constant 0 : i32
    %c0_i32_0 = arith.constant 0 : i32
    %c0_i32_1 = arith.constant 0 : i32
    %c0_i32_2 = arith.constant 0 : i32
    return %c0_i32, %c0_i32_0, %c0_i32_1 : i32, i32, i32
  }
  func.func @transform_7(%arg0: i32) -> (i32, i32, i32) {
    %c0_i32 = arith.constant 0 : i32
    %c0_i32_0 = arith.constant 0 : i32
    %c0_i32_1 = arith.constant 0 : i32
    %c0_i32_2 = arith.constant 0 : i32
    return %c0_i32, %c0_i32_0, %c0_i32_1 : i32, i32, i32
  }
  func.func @transform_8(%arg0: i32) -> (i32, i32, i32) {
    %c0_i32 = arith.constant 0 : i32
    %c0_i32_0 = arith.constant 0 : i32
    %c0_i32_1 = arith.constant 0 : i32
    %c0_i32_2 = arith.constant 0 : i32
    return %c0_i32, %c0_i32_0, %c0_i32_1 : i32, i32, i32
  }
  func.func @transform_9(%arg0: i32) -> (i32, i32, i32) {
    %c0_i32 = arith.constant 0 : i32
    %c0_i32_0 = arith.constant 0 : i32
    %c0_i32_1 = arith.constant 0 : i32
    %c0_i32_2 = arith.constant 0 : i32
    return %c0_i32, %c0_i32_0, %c0_i32_1 : i32, i32, i32
  }
  func.func @transform_10(%arg0: i32) -> (i32, i32, i32) {
    %c0_i32 = arith.constant 0 : i32
    %c0_i32_0 = arith.constant 0 : i32
    %c0_i32_1 = arith.constant 0 : i32
    %c0_i32_2 = arith.constant 0 : i32
    return %c0_i32, %c0_i32_0, %c0_i32_1 : i32, i32, i32
  }
  func.func @transform_11(%arg0: i32) -> (i32, i32, i32) {
    %c0_i32 = arith.constant 0 : i32
    %c0_i32_0 = arith.constant 0 : i32
    %c0_i32_1 = arith.constant 0 : i32
    %c0_i32_2 = arith.constant 0 : i32
    return %c0_i32, %c0_i32_0, %c0_i32_1 : i32, i32, i32
  }
  func.func @transform_12(%arg0: i32) -> (i32, i32, i32) {
    %c0_i32 = arith.constant 0 : i32
    %c0_i32_0 = arith.constant 0 : i32
    %c0_i32_1 = arith.constant 0 : i32
    %c0_i32_2 = arith.constant 0 : i32
    return %c0_i32, %c0_i32_0, %c0_i32_1 : i32, i32, i32
  }
  func.func @transform_13(%arg0: i32) -> (i32, i32, i32) {
    %c0_i32 = arith.constant 0 : i32
    %c0_i32_0 = arith.constant 0 : i32
    %c0_i32_1 = arith.constant 0 : i32
    %c0_i32_2 = arith.constant 0 : i32
    return %c0_i32, %c0_i32_0, %c0_i32_1 : i32, i32, i32
  }
  func.func @transform_14(%arg0: i32) -> (i32, i32, i32) {
    %c0_i32 = arith.constant 0 : i32
    %c0_i32_0 = arith.constant 0 : i32
    %c0_i32_1 = arith.constant 0 : i32
    %c0_i32_2 = arith.constant 0 : i32
    return %c0_i32, %c0_i32_0, %c0_i32_1 : i32, i32, i32
  }
  func.func @transform_15(%arg0: i32) -> (i32, i32, i32) {
    %c0_i32 = arith.constant 0 : i32
    %c0_i32_0 = arith.constant 0 : i32
    %c0_i32_1 = arith.constant 0 : i32
    %c0_i32_2 = arith.constant 0 : i32
    return %c0_i32, %c0_i32_0, %c0_i32_1 : i32, i32, i32
  }
  func.func @transform_16(%arg0: i32) -> (i32, i32, i32) {
    %c0_i32 = arith.constant 0 : i32
    %c0_i32_0 = arith.constant 0 : i32
    %c0_i32_1 = arith.constant 0 : i32
    %c0_i32_2 = arith.constant 0 : i32
    return %c0_i32, %c0_i32_0, %c0_i32_1 : i32, i32, i32
  }
  func.func @transform_17(%arg0: i32) -> (i32, i32, i32) {
    %c0_i32 = arith.constant 0 : i32
    %c0_i32_0 = arith.constant 0 : i32
    %c0_i32_1 = arith.constant 0 : i32
    %c0_i32_2 = arith.constant 0 : i32
    return %c0_i32, %c0_i32_0, %c0_i32_1 : i32, i32, i32
  }
  func.func @transform_18(%arg0: i32) -> (i32, i32) {
    %c0_i32 = arith.constant 0 : i32
    %c0_i32_0 = arith.constant 0 : i32
    %c0_i32_1 = arith.constant 0 : i32
    return %c0_i32, %c0_i32_0 : i32, i32
  }
  func.func @transform_19(%arg0: i32) -> (i32, i32) {
    %c0_i32 = arith.constant 0 : i32
    %c0_i32_0 = arith.constant 0 : i32
    %c0_i32_1 = arith.constant 0 : i32
    return %c0_i32, %c0_i32_0 : i32, i32
  }
  func.func @transform_20(%arg0: i32) -> (i32, i32, i32) {
    %c0_i32 = arith.constant 0 : i32
    %c0_i32_0 = arith.constant 0 : i32
    %c0_i32_1 = arith.constant 0 : i32
    return %arg0, %c0_i32, %c0_i32_0 : i32, i32, i32
  }
}

</mosaic_0001>

<llo_original>
// kernel: cls4_forward.1
$region0: #{cls4_forward.1}
  #allocation0 [shape = 'u32[]', space=smem, size = 0x4, offset = 0x4, fixed_abs, tag = 'smem constant byte address 0x4 - core index']
  #allocation1 [shape = 'u32[144,128]{1,0:T(1,128)}', space=vmem, size = 0x12000, scoped, tag = 'internal scratch']
  #allocation2 [shape = 'f32[18,128]{1,0:T(8,128)}', space=vmem, size = 0x3000, scoped, tag = 'scratch operand']
  %s0 = inlined_call_operand.vmem [shape: f32[1,16,16], index: 0, kind: input, shape index: {}]
  %s1 = inlined_call_operand.vmem [shape: f32[16,128], index: 1, kind: input, shape index: {}]
  %s2 = inlined_call_operand.vmem [shape: f32[18,18], index: 2, kind: input, shape index: {}]
  %s3 = inlined_call_operand.vmem [shape: bf16[16,128], index: 3, kind: input, shape index: {}]
  %s4 = inlined_call_operand.vmem [shape: f32[1,128], index: 4, kind: input, shape index: {}]
  %s5 = inlined_call_operand.vmem [shape: f32[1,128], index: 5, kind: input, shape index: {}]
  %s6 = inlined_call_operand.vmem [shape: bf16[4,128,384], index: 6, kind: input, shape index: {}]
  %s7 = inlined_call_operand.vmem [shape: f32[4,1,384], index: 7, kind: input, shape index: {}]
  %s8 = inlined_call_operand.vmem [shape: bf16[4,128,128], index: 8, kind: input, shape index: {}]
  %s9 = inlined_call_operand.vmem [shape: f32[4,1,128], index: 9, kind: input, shape index: {}]
  %s10 = inlined_call_operand.vmem [shape: bf16[4,128,512], index: 10, kind: input, shape index: {}]
  %s11 = inlined_call_operand.vmem [shape: f32[4,1,512], index: 11, kind: input, shape index: {}]
  %s12 = inlined_call_operand.vmem [shape: bf16[4,512,128], index: 12, kind: input, shape index: {}]
  %s13 = inlined_call_operand.vmem [shape: f32[4,1,128], index: 13, kind: input, shape index: {}]
  %s14 = inlined_call_operand.vmem [shape: f32[4,1,128], index: 14, kind: input, shape index: {}]
  %s15 = inlined_call_operand.vmem [shape: f32[4,1,128], index: 15, kind: input, shape index: {}]
  %s16 = inlined_call_operand.vmem [shape: f32[4,1,128], index: 16, kind: input, shape index: {}]
  %s17 = inlined_call_operand.vmem [shape: f32[4,1,128], index: 17, kind: input, shape index: {}]
  %s18 = inlined_call_operand.vmem [shape: bf16[128,128], index: 18, kind: input, shape index: {}]
  %s19 = inlined_call_operand.vmem [shape: f32[1,128], index: 19, kind: input, shape index: {}]
  %s20 = inlined_call_operand.hbm [shape: f32[1,2,128], index: 20, kind: output, shape index: {}]
  %s21 = sld [smem:[#allocation0]]
  $region90: #{cls4_forward.1} parent=0
    _
  %s23 = ssub.s32 1, %s21
  %s24 = scalar_select 0, %s23, %s21
  $region1: #{cls4_forward.1} parent=0
    #allocation3 [shape = 'u8[1024]{0}', space=vmem, size = 0x400, scoped, tag = 'output window, operand 0, single buffered']
    #allocation4 [shape = 's32[1]{0}', space=sflag, size = 0x4, scoped, tag = 'scoped memory for cls4_forward.1']
    %25 = vsyncpa [#allocation4], 0
    // Predicated region
    $region2: #{cls4_forward.1} parent=1 // pred_check
      _
    $region3: #{cls4_forward.1} parent=1 // pred_check_branch
      %27 = sbr.rel (0) target = $region5
    $region4: #{cls4_forward.1} parent=1 // pred_region
      _
    $region5: #{cls4_forward.1} parent=1 // pred_fallthru
      _
    // Predicated region
    $region6: #{cls4_forward.1} parent=1 // pred_check
      _
    $region7: #{cls4_forward.1} parent=1 // pred_check_branch
      %29 = sbr.rel (0) target = $region9
    $region8: #{cls4_forward.1} parent=1 // pred_region
      _
    $region9: #{cls4_forward.1} parent=1 // pred_fallthru
      _
    // Predicated region
    $region10: #{cls4_forward.1} parent=1 // pred_check
      _
    $region11: #{cls4_forward.1} parent=1 // pred_check_branch
      %31 = sbr.rel (0) target = $region13
    $region12: #{cls4_forward.1} parent=1 // pred_region
      _
    $region13: #{cls4_forward.1} parent=1 // pred_fallthru
      _
    // Predicated region
    $region14: #{cls4_forward.1} parent=1 // pred_check
      _
    $region15: #{cls4_forward.1} parent=1 // pred_check_branch
      %33 = sbr.rel (0) target = $region17
    $region16: #{cls4_forward.1} parent=1 // pred_region
      _
    $region17: #{cls4_forward.1} parent=1 // pred_fallthru
      _
    // Predicated region
    $region18: #{cls4_forward.1} parent=1 // pred_check
      _
    $region19: #{cls4_forward.1} parent=1 // pred_check_branch
      %35 = sbr.rel (0) target = $region21
    $region20: #{cls4_forward.1} parent=1 // pred_region
      _
    $region21: #{cls4_forward.1} parent=1 // pred_fallthru
      _
    // Predicated region
    $region22: #{cls4_forward.1} parent=1 // pred_check
      _
    $region23: #{cls4_forward.1} parent=1 // pred_check_branch
      %37 = sbr.rel (0) target = $region25
    $region24: #{cls4_forward.1} parent=1 // pred_region
      _
    $region25: #{cls4_forward.1} parent=1 // pred_fallthru
      _
    // Predicated region
    $region26: #{cls4_forward.1} parent=1 // pred_check
      _
    $region27: #{cls4_forward.1} parent=1 // pred_check_branch
      %39 = sbr.rel (0) target = $region29
    $region28: #{cls4_forward.1} parent=1 // pred_region
      _
    $region29: #{cls4_forward.1} parent=1 // pred_fallthru
      _
    // Predicated region
    $region30: #{cls4_forward.1} parent=1 // pred_check
      _
    $region31: #{cls4_forward.1} parent=1 // pred_check_branch
      %41 = sbr.rel (0) target = $region33
    $region32: #{cls4_forward.1} parent=1 // pred_region
      _
    $region33: #{cls4_forward.1} parent=1 // pred_fallthru
      _
    // Predicated region
    $region34: #{cls4_forward.1} parent=1 // pred_check
      _
    $region35: #{cls4_forward.1} parent=1 // pred_check_branch
      %43 = sbr.rel (0) target = $region37
    $region36: #{cls4_forward.1} parent=1 // pred_region
      _
    $region37: #{cls4_forward.1} parent=1 // pred_fallthru
      _
    // Predicated region
    $region38: #{cls4_forward.1} parent=1 // pred_check
      _
    $region39: #{cls4_forward.1} parent=1 // pred_check_branch
      %45 = sbr.rel (0) target = $region41
    $region40: #{cls4_forward.1} parent=1 // pred_region
      _
    $region41: #{cls4_forward.1} parent=1 // pred_fallthru
      _
    // Predicated region
    $region42: #{cls4_forward.1} parent=1 // pred_check
      _
    $region43: #{cls4_forward.1} parent=1 // pred_check_branch
      %47 = sbr.rel (0) target = $region45
    $region44: #{cls4_forward.1} parent=1 // pred_region
      _
    $region45: #{cls4_forward.1} parent=1 // pred_fallthru
      _
    // Predicated region
    $region46: #{cls4_forward.1} parent=1 // pred_check
      _
    $region47: #{cls4_forward.1} parent=1 // pred_check_branch
      %49 = sbr.rel (0) target = $region49
    $region48: #{cls4_forward.1} parent=1 // pred_region
      _
    $region49: #{cls4_forward.1} parent=1 // pred_fallthru
      _
    // Predicated region
    $region50: #{cls4_forward.1} parent=1 // pred_check
      _
    $region51: #{cls4_forward.1} parent=1 // pred_check_branch
      %51 = sbr.rel (0) target = $region53
    $region52: #{cls4_forward.1} parent=1 // pred_region
      _
    $region53: #{cls4_forward.1} parent=1 // pred_fallthru
      _
    // Predicated region
    $region54: #{cls4_forward.1} parent=1 // pred_check
      _
    $region55: #{cls4_forward.1} parent=1 // pred_check_branch
      %53 = sbr.rel (0) target = $region57
    $region56: #{cls4_forward.1} parent=1 // pred_region
      _
    $region57: #{cls4_forward.1} parent=1 // pred_fallthru
      _
    // Predicated region
    $region58: #{cls4_forward.1} parent=1 // pred_check
      _
    $region59: #{cls4_forward.1} parent=1 // pred_check_branch
      %55 = sbr.rel (0) target = $region61
    $region60: #{cls4_forward.1} parent=1 // pred_region
      _
    $region61: #{cls4_forward.1} parent=1 // pred_fallthru
      _
    // Predicated region
    $region62: #{cls4_forward.1} parent=1 // pred_check
      _
    $region63: #{cls4_forward.1} parent=1 // pred_check_branch
      %57 = sbr.rel (0) target = $region65
    $region64: #{cls4_forward.1} parent=1 // pred_region
      _
    $region65: #{cls4_forward.1} parent=1 // pred_fallthru
      _
    // Predicated region
    $region66: #{cls4_forward.1} parent=1 // pred_check
      _
    $region67: #{cls4_forward.1} parent=1 // pred_check_branch
      %59 = sbr.rel (0) target = $region69
    $region68: #{cls4_forward.1} parent=1 // pred_region
      _
    $region69: #{cls4_forward.1} parent=1 // pred_fallthru
      _
    // Predicated region
    $region70: #{cls4_forward.1} parent=1 // pred_check
      _
    $region71: #{cls4_forward.1} parent=1 // pred_check_branch
      %61 = sbr.rel (0) target = $region73
    $region72: #{cls4_forward.1} parent=1 // pred_region
      _
    $region73: #{cls4_forward.1} parent=1 // pred_fallthru
      _
    // Predicated region
    $region74: #{cls4_forward.1} parent=1 // pred_check
      _
    $region75: #{cls4_forward.1} parent=1 // pred_check_branch
      %63 = sbr.rel (0) target = $region77
    $region76: #{cls4_forward.1} parent=1 // pred_region
      _
    $region77: #{cls4_forward.1} parent=1 // pred_fallthru
      _
    // Predicated region
    $region78: #{cls4_forward.1} parent=1 // pred_check
      _
    $region79: #{cls4_forward.1} parent=1 // pred_check_branch
      %65 = sbr.rel (0) target = $region81
    $region80: #{cls4_forward.1} parent=1 // pred_region
      _
    $region81: #{cls4_forward.1} parent=1 // pred_fallthru
      _
    %v67 = vld [vmem:[%s0] sm:$0xff]
    %v68 = vld [vmem:[%s0 + $0x8] sm:$0xff]
    %v69 = vpack.c.bf16 %v68, %v67
    %v70 = vld [vmem:[%s3] sm:$0xf]
    %v71 = vld [vmem:[%s3 + $0x4] sm:$0xf]
    %v72 = vld [vmem:[%s4] sm:$0x1]
    %v74 = vlaneseq
    %v75 = vshrl.u32 %v74, 7
    %v76 = vsub.s32 0, %v75
    %v77 = vrot.slane %v72, %v76
    %v81 = vunpack.c.l.b16 %v70
    %v82 = vunpack.c.l.b16 %v71
    %v83 = vpack.c.b16 %v82, %v81
    %vm85 = vcmask 130048
    %v87 = vsel %vm85, %v69, 0
    %89 = vmatprep.subr.bf16.mxu0 0
    %90 = vmatpush1.bf16.msra.mxu0 %v83
    %91 = vmatprep.subr.bf16.mxu0 0
    %92 = vmatpush1.bf16.msra.mxu0 0
    %93 = vmatprep.subr.bf16.mxu0 0
    %94 = vmatpush1.bf16.msra.mxu0 0
    %95 = vmatprep.subr.bf16.mxu0 0
    %96 = vmatpush1.bf16.msra.mxu0 0
    %97 = vmatprep.subr.bf16.mxu0 0
    %98 = vmatpush1.bf16.msra.mxu0 0
    %99 = vmatprep.subr.bf16.mxu0 0
    %100 = vmatpush1.bf16.msra.mxu0 0
    %101 = vmatprep.subr.bf16.mxu0 0
    %102 = vmatpush1.bf16.msra.mxu0 0
    %103 = vmatprep.subr.bf16.mxu0 0
    %104 = vmatpush1.bf16.msra.mxu0 0
    %105 = vmatprep.subr.bf16.mxu0 0
    %106 = vmatpush1.bf16.msra.mxu0 0
    %107 = vmatprep.subr.bf16.mxu0 0
    %108 = vmatpush1.bf16.msra.mxu0 0
    %109 = vmatprep.subr.bf16.mxu0 0
    %110 = vmatpush1.bf16.msra.mxu0 0
    %111 = vmatprep.subr.bf16.mxu0 0
    %112 = vmatpush1.bf16.msra.mxu0 0
    %113 = vmatprep.subr.bf16.mxu0 0
    %114 = vmatpush1.bf16.msra.mxu0 0
    %115 = vmatprep.subr.bf16.mxu0 0
    %116 = vmatpush1.bf16.msra.mxu0 0
    %117 = vmatprep.subr.bf16.mxu0 0
    %118 = vmatpush1.bf16.msra.mxu0 0
    %119 = vmatprep.subr.bf16.mxu0 0
    %120 = vmatpush1.bf16.msra.mxu0 0
    %121 = vmatprep.mubr.bf16.mxu0 0
    %122 = vmatmul.mubr.bf16.gmra.mrb[0].mxu0 %v87
    %v123 = vpop.f32.mrb[0].mxu0
    %v124 = vadd.f32 %v77, %v123
    %v125 = vpop.f32.mrb[0].mxu0
    %v126 = vpop.f32.mrb[0].mxu0
    %v127 = vadd.f32 %v77, %v126
    %v128 = vpop.f32.mrb[0].mxu0
    %129 = vdwg.mxu0
    %v130 = vld [vmem:[%s1] sm:$0xff]
    %v131 = vld [vmem:[%s1 + $0x8] sm:$0xff]
    %v132 = vadd.f32 %v124, %v130
    %v133 = vadd.f32 %v127, %v131
    %v134 = vld [vmem:[%s5] sm:$0x1]
    %135 = vst [vmem:[#allocation2] sm:$0xff] %v132
    %136 = vst [vmem:[#allocation2 + $0x8] sm:$0x1] %v134
    %137 = vst [vmem:[#allocation2 + $0x9] sm:$0xff] %v133
    %138 = vst [vmem:[#allocation2 + $0x11] sm:$0x1] %v134
    %v139 = vld [vmem:[#allocation2] sm:$0xff]
    %v140 = vld [vmem:[#allocation2 + $0x8] sm:$0xff]
    %v141 = vld [vmem:[#allocation2 + $0x10] sm:$0x3]
    %v142 = vld [vmem:[%s2] sm:$0xff]
    %v143 = vld [vmem:[%s2 + $0x8] sm:$0xff]
    %v144 = vld [vmem:[%s2 + $0x10] sm:$0x3]
    %v145 = vpack.c.bf16 %v140, %v139
    %v146 = vpack.c.bf16 %v141, %v141
    %v147 = vld [vmem:[%s6] sm:$0xff]
    %v148 = vld [vmem:[%s6 + $0x8] sm:$0xf]
    %v149 = vld [vmem:[%s6 + $0xc] sm:$0xff]
    %v150 = vld [vmem:[%s6 + $0x14] sm:$0xf]
    %v151 = vld [vmem:[%s6 + $0x18] sm:$0xff]
    %v152 = vld [vmem:[%s6 + $0x20] sm:$0xf]
    %v153 = vld [vmem:[%s6 + $0x24] sm:$0xff]
    %v154 = vld [vmem:[%s6 + $0x2c] sm:$0xf]
    %v155 = vld [vmem:[%s6 + $0x30] sm:$0xff]
    %v156 = vld [vmem:[%s6 + $0x38] sm:$0xf]
    %v157 = vld [vmem:[%s6 + $0x3c] sm:$0xff]
    %v158 = vld [vmem:[%s6 + $0x44] sm:$0xf]
    %v159 = vld [vmem:[%s6 + $0x48] sm:$0xff]
    %v160 = vld [vmem:[%s6 + $0x50] sm:$0xf]
    %v161 = vld [vmem:[%s6 + $0x54] sm:$0xff]
    %v162 = vld [vmem:[%s6 + $0x5c] sm:$0xf]
    %v163 = vld [vmem:[%s6 + $0x60] sm:$0xff]
    %v164 = vld [vmem:[%s6 + $0x68] sm:$0xf]
    %v165 = vld [vmem:[%s6 + $0x6c] sm:$0xff]
    %v166 = vld [vmem:[%s6 + $0x74] sm:$0xf]
    %v167 = vld [vmem:[%s6 + $0x78] sm:$0xff]
    %v168 = vld [vmem:[%s6 + $0x80] sm:$0xf]
    %v169 = vld [vmem:[%s6 + $0x84] sm:$0xff]
    %v170 = vld [vmem:[%s6 + $0x8c] sm:$0xf]
    %v171 = vld [vmem:[%s6 + $0x90] sm:$0xff]
    %v172 = vld [vmem:[%s6 + $0x98] sm:$0xf]
    %v173 = vld [vmem:[%s6 + $0x9c] sm:$0xff]
    %v174 = vld [vmem:[%s6 + $0xa4] sm:$0xf]
    %v175 = vld [vmem:[%s6 + $0xa8] sm:$0xff]
    %v176 = vld [vmem:[%s6 + $0xb0] sm:$0xf]
    %v177 = vld [vmem:[%s6 + $0xb4] sm:$0xff]
    %v178 = vld [vmem:[%s6 + $0xbc] sm:$0xf]
    %v179 = vld [vmem:[%s7] sm:$0x7]
    %v181 = vlaneseq
    %v182 = vshrl.u32 %v181, 7
    %v183 = vsub.s32 0, %v182
    %v184 = vrot.slane %v179, %v183
    %v185 = vlaneseq
    %v186 = vshrl.u32 %v185, 7
    %v187 = vsub.s32 1, %v186
    %v188 = vrot.slane %v179, %v187
    %v189 = vlaneseq
    %v190 = vshrl.u32 %v189, 7
    %v191 = vsub.s32 2, %v190
    %v192 = vrot.slane %v179, %v191
    %v228 = vunpack.c.l.b16 %v147
    %v229 = vunpack.c.h.b16 %v147
    %v230 = vunpack.c.l.b16 %v148
    %v231 = vunpack.c.l.b16 %v149
    %v232 = vunpack.c.h.b16 %v149
    %v233 = vunpack.c.l.b16 %v150
    %v234 = vunpack.c.l.b16 %v151
    %v235 = vunpack.c.h.b16 %v151
    %v236 = vunpack.c.l.b16 %v152
    %v237 = vunpack.c.l.b16 %v153
    %v238 = vunpack.c.h.b16 %v153
    %v239 = vunpack.c.l.b16 %v154
    %v240 = vunpack.c.l.b16 %v155
    %v241 = vunpack.c.h.b16 %v155
    %v242 = vunpack.c.l.b16 %v156
    %v243 = vunpack.c.l.b16 %v157
    %v244 = vunpack.c.h.b16 %v157
    %v245 = vunpack.c.l.b16 %v158
    %v246 = vunpack.c.l.b16 %v159
    %v247 = vunpack.c.h.b16 %v159
    %v248 = vunpack.c.l.b16 %v160
    %v249 = vunpack.c.l.b16 %v161
    %v250 = vunpack.c.h.b16 %v161
    %v251 = vunpack.c.l.b16 %v162
    %v252 = vunpack.c.l.b16 %v163
    %v253 = vunpack.c.h.b16 %v163
    %v254 = vunpack.c.l.b16 %v164
    %v255 = vunpack.c.l.b16 %v165
    %v256 = vunpack.c.h.b16 %v165
    %v257 = vunpack.c.l.b16 %v166
    %v258 = vunpack.c.l.b16 %v167
    %v259 = vunpack.c.h.b16 %v167
    %v260 = vunpack.c.l.b16 %v168
    %v261 = vunpack.c.l.b16 %v169
    %v262 = vunpack.c.h.b16 %v169
    %v263 = vunpack.c.l.b16 %v170
    %v264 = vunpack.c.l.b16 %v171
    %v265 = vunpack.c.h.b16 %v171
    %v266 = vunpack.c.l.b16 %v172
    %v267 = vunpack.c.l.b16 %v173
    %v268 = vunpack.c.h.b16 %v173
    %v269 = vunpack.c.l.b16 %v174
    %v270 = vunpack.c.l.b16 %v175
    %v271 = vunpack.c.h.b16 %v175
    %v272 = vunpack.c.l.b16 %v176
    %v273 = vunpack.c.l.b16 %v177
    %v274 = vunpack.c.h.b16 %v177
    %v275 = vunpack.c.l.b16 %v178
    %v276 = vpack.c.b16 %v231, %v228
    %v277 = vpack.c.b16 %v232, %v229
    %v278 = vpack.c.b16 %v233, %v230
    %v279 = vpack.c.b16 %v237, %v234
    %v280 = vpack.c.b16 %v238, %v235
    %v281 = vpack.c.b16 %v239, %v236
    %v282 = vpack.c.b16 %v243, %v240
    %v283 = vpack.c.b16 %v244, %v241
    %v284 = vpack.c.b16 %v245, %v242
    %v285 = vpack.c.b16 %v249, %v246
    %v286 = vpack.c.b16 %v250, %v247
    %v287 = vpack.c.b16 %v251, %v248
    %v288 = vpack.c.b16 %v255, %v252
    %v289 = vpack.c.b16 %v256, %v253
    %v290 = vpack.c.b16 %v257, %v254
    %v291 = vpack.c.b16 %v261, %v258
    %v292 = vpack.c.b16 %v262, %v259
    %v293 = vpack.c.b16 %v263, %v260
    %v294 = vpack.c.b16 %v267, %v264
    %v295 = vpack.c.b16 %v268, %v265
    %v296 = vpack.c.b16 %v269, %v266
    %v297 = vpack.c.b16 %v273, %v270
    %v298 = vpack.c.b16 %v274, %v271
    %v299 = vpack.c.b16 %v275, %v272
    %324 = vmatprep.subr.bf16.mxu0 %v277
    %325 = vmatpush1.bf16.msra.mxu0 %v276
    %326 = vmatprep.subr.bf16.mxu0 %v280
    %327 = vmatpush1.bf16.msra.mxu0 %v279
    %328 = vmatprep.subr.bf16.mxu0 %v283
    %329 = vmatpush1.bf16.msra.mxu0 %v282
    %330 = vmatprep.subr.bf16.mxu0 %v286
    %331 = vmatpush1.bf16.msra.mxu0 %v285
    %332 = vmatprep.subr.bf16.mxu0 %v289
    %333 = vmatpush1.bf16.msra.mxu0 %v288
    %334 = vmatprep.subr.bf16.mxu0 %v292
    %335 = vmatpush1.bf16.msra.mxu0 %v291
    %336 = vmatprep.subr.bf16.mxu0 %v295
    %337 = vmatpush1.bf16.msra.mxu0 %v294
    %338 = vmatprep.subr.bf16.mxu0 %v298
    %339 = vmatpush1.bf16.msra.mxu0 %v297
    %340 = vmatprep.subr.bf16.mxu0 0
    %341 = vmatpush1.bf16.msra.mxu0 0
    %342 = vmatprep.subr.bf16.mxu0 0
    %343 = vmatpush1.bf16.msra.mxu0 0
    %344 = vmatprep.subr.bf16.mxu0 0
    %345 = vmatpush1.bf16.msra.mxu0 0
    %346 = vmatprep.subr.bf16.mxu0 0
    %347 = vmatpush1.bf16.msra.mxu0 0
    %348 = vmatprep.subr.bf16.mxu0 0
    %349 = vmatpush1.bf16.msra.mxu0 0
    %350 = vmatprep.subr.bf16.mxu0 0
    %351 = vmatpush1.bf16.msra.mxu0 0
    %352 = vmatprep.subr.bf16.mxu0 0
    %353 = vmatpush1.bf16.msra.mxu0 0
    %354 = vmatprep.subr.bf16.mxu0 0
    %355 = vmatpush1.bf16.msra.mxu0 0
    %356 = vmatprep.mubr.bf16.mxu0 0
    %357 = vmatmul.mubr.bf16.gmra.mrb[0].mxu0 %v145
    %v358 = vpop.f32.mrb[0].mxu0
    %v359 = vadd.f32 %v184, %v358
    %v360 = vpop.f32.mrb[0].mxu0
    %v361 = vadd.f32 %v188, %v360
    %v362 = vpop.f32.mrb[0].mxu0
    %v363 = vadd.f32 %v184, %v362
    %v364 = vpop.f32.mrb[0].mxu0
    %v365 = vadd.f32 %v188, %v364
    %366 = vmatprep.mubr.bf16.mxu0 0
    %367 = vmatmul.mubr.bf16.gmra.mrb[0].mxu0 %v146
    %v368 = vpop.f32.mrb[0].mxu0
    %v369 = vadd.f32 %v184, %v368
    %v370 = vpop.f32.mrb[0].mxu0
    %v371 = vadd.f32 %v188, %v370
    %v372 = vpop.f32.mrb[0].mxu0
    %v373 = vpop.f32.mrb[0].mxu0
    %374 = vdwg.mxu0
    %375 = vmatprep.subr.bf16.mxu0 0
    %376 = vmatpush1.bf16.msra.mxu0 %v278
    %377 = vmatprep.subr.bf16.mxu0 0
    %378 = vmatpush1.bf16.msra.mxu0 %v281
    %379 = vmatprep.subr.bf16.mxu0 0
    %380 = vmatpush1.bf16.msra.mxu0 %v284
    %381 = vmatprep.subr.bf16.mxu0 0
    %382 = vmatpush1.bf16.msra.mxu0 %v287
    %383 = vmatprep.subr.bf16.mxu0 0
    %384 = vmatpush1.bf16.msra.mxu0 %v290
    %385 = vmatprep.subr.bf16.mxu0 0
    %386 = vmatpush1.bf16.msra.mxu0 %v293
    %387 = vmatprep.subr.bf16.mxu0 0
    %388 = vmatpush1.bf16.msra.mxu0 %v296
    %389 = vmatprep.subr.bf16.mxu0 0
    %390 = vmatpush1.bf16.msra.mxu0 %v299
    %391 = vmatprep.subr.bf16.mxu0 0
    %392 = vmatpush1.bf16.msra.mxu0 0
    %393 = vmatprep.subr.bf16.mxu0 0
    %394 = vmatpush1.bf16.msra.mxu0 0
    %395 = vmatprep.subr.bf16.mxu0 0
    %396 = vmatpush1.bf16.msra.mxu0 0
    %397 = vmatprep.subr.bf16.mxu0 0
    %398 = vmatpush1.bf16.msra.mxu0 0
    %399 = vmatprep.subr.bf16.mxu0 0
    %400 = vmatpush1.bf16.msra.mxu0 0
    %401 = vmatprep.subr.bf16.mxu0 0
    %402 = vmatpush1.bf16.msra.mxu0 0
    %403 = vmatprep.subr.bf16.mxu0 0
    %404 = vmatpush1.bf16.msra.mxu0 0
    %405 = vmatprep.subr.bf16.mxu0 0
    %406 = vmatpush1.bf16.msra.mxu0 0
    %407 = vmatprep.mubr.bf16.mxu0 0
    %408 = vmatmul.mubr.bf16.gmra.mrb[0].mxu0 %v145
    %v409 = vpop.f32.mrb[0].mxu0
    %v410 = vadd.f32 %v192, %v409
    %v411 = vpop.f32.mrb[0].mxu0
    %v412 = vpop.f32.mrb[0].mxu0
    %v413 = vadd.f32 %v192, %v412
    %v414 = vpop.f32.mrb[0].mxu0
    %415 = vmatprep.mubr.bf16.mxu0 0
    %416 = vmatmul.mubr.bf16.gmra.mrb[0].mxu0 %v146
    %v417 = vpop.f32.mrb[0].mxu0
    %v418 = vadd.f32 %v192, %v417
    %v419 = vpop.f32.mrb[0].mxu0
    %v420 = vpop.f32.mrb[0].mxu0
    %v421 = vpop.f32.mrb[0].mxu0
    %422 = vdwg.mxu0
    %v423 = vld [vmem:[%s8] sm:$0xf]
    %v424 = vld [vmem:[%s8 + $0x4] sm:$0xf]
    %v425 = vld [vmem:[%s8 + $0x8] sm:$0xf]
    %v426 = vld [vmem:[%s8 + $0xc] sm:$0xf]
    %v427 = vld [vmem:[%s8 + $0x10] sm:$0xf]
    %v428 = vld [vmem:[%s8 + $0x14] sm:$0xf]
    %v429 = vld [vmem:[%s8 + $0x18] sm:$0xf]
    %v430 = vld [vmem:[%s8 + $0x1c] sm:$0xf]
    %v431 = vld [vmem:[%s8 + $0x20] sm:$0xf]
    %v432 = vld [vmem:[%s8 + $0x24] sm:$0xf]
    %v433 = vld [vmem:[%s8 + $0x28] sm:$0xf]
    %v434 = vld [vmem:[%s8 + $0x2c] sm:$0xf]
    %v435 = vld [vmem:[%s8 + $0x30] sm:$0xf]
    %v436 = vld [vmem:[%s8 + $0x34] sm:$0xf]
    %v437 = vld [vmem:[%s8 + $0x38] sm:$0xf]
    %v438 = vld [vmem:[%s8 + $0x3c] sm:$0xf]
    %v439 = vmul.f32 %v359, 0.17677669
    %v440 = vmul.f32 %v363, 0.17677669
    %v441 = vmul.f32 %v369, 0.17677669
    %v442 = vpack.c.bf16 %v440, %v439
    %v443 = vpack.c.bf16 %v441, %v441
    %v444 = vpack.c.bf16 %v365, %v361
    %v445 = vpack.c.bf16 %v371, %v371
    %v446 = vpack.c.bf16 %v413, %v410
    %v447 = vpack.c.bf16 %v418, %v418
    %vm448 = vcmask 261120
    %v450 = vsel %vm448, %v442, 0
    %v453 = vsel %vm448, %v443, 0
    %v456 = vsel %vm448, %v444, 0
    %v459 = vsel %vm448, %v445, 0
    %461 = vmatprep.subr.bf16.mxu0 0
    %462 = vmatpush1.bf16.xpose.msra.mxu0 %v456
    %463 = vmatprep.subr.bf16.mxu0 0
    %464 = vmatpush1.bf16.xpose.msra.mxu0 %v459
    %465 = vmatprep.subr.bf16.mxu0 0
    %466 = vmatpush1.bf16.xpose.msra.mxu0 0
    %467 = vmatprep.subr.bf16.mxu0 0
    %468 = vmatpush1.bf16.xpose.msra.mxu0 0
    %469 = vmatprep.subr.bf16.mxu0 0
    %470 = vmatpush1.bf16.xpose.msra.mxu0 0
    %471 = vmatprep.subr.bf16.mxu0 0
    %472 = vmatpush1.bf16.xpose.msra.mxu0 0
    %473 = vmatprep.subr.bf16.mxu0 0
    %474 = vmatpush1.bf16.xpose.msra.mxu0 0
    %475 = vmatprep.subr.bf16.mxu0 0
    %476 = vmatpush1.bf16.xpose.msra.mxu0 0
    %477 = vmatprep.subr.bf16.mxu0 0
    %478 = vmatpush1.bf16.xpose.msra.mxu0 0
    %479 = vmatprep.subr.bf16.mxu0 0
    %480 = vmatpush1.bf16.xpose.msra.mxu0 0
    %481 = vmatprep.subr.bf16.mxu0 0
    %482 = vmatpush1.bf16.xpose.msra.mxu0 0
    %483 = vmatprep.subr.bf16.mxu0 0
    %484 = vmatpush1.bf16.xpose.msra.mxu0 0
    %485 = vmatprep.subr.bf16.mxu0 0
    %486 = vmatpush1.bf16.xpose.msra.mxu0 0
    %487 = vmatprep.subr.bf16.mxu0 0
    %488 = vmatpush1.bf16.xpose.msra.mxu0 0
    %489 = vmatprep.subr.bf16.mxu0 0
    %490 = vmatpush1.bf16.xpose.msra.mxu0 0
    %491 = vmatprep.subr.bf16.mxu0 0
    %492 = vmatpush1.bf16.xpose.msra.mxu0 0
    %493 = vmatprep.mubr.bf16.mxu0 0
    %494 = vmatmul.mubr.bf16.gmra.mrb[0].mxu0 %v450
    %v495 = vpop.f32.mrb[0].mxu0
    %v496 = vadd.f32 %v142, %v495
    %v497 = vpop.f32.mrb[0].mxu0
    %v498 = vpop.f32.mrb[0].mxu0
    %v499 = vadd.f32 %v143, %v498
    %v500 = vpop.f32.mrb[0].mxu0
    %501 = vmatprep.mubr.bf16.mxu0 0
    %502 = vmatmul.mubr.bf16.gmra.mrb[0].mxu0 %v453
    %v503 = vpop.f32.mrb[0].mxu0
    %v504 = vadd.f32 %v144, %v503
    %v505 = vpop.f32.mrb[0].mxu0
    %v506 = vpop.f32.mrb[0].mxu0
    %v507 = vpop.f32.mrb[0].mxu0
    %508 = vdwg.mxu0
    %vm509 = vcmask 146432
    %v510 = vsel %vm509, %v496, -inf
    %511 = vmax.xlane.f32.xlu0 %v510
    %v512 = vpop.xlane.xlu0 %511
    %v513 = vsel %vm509, %v499, -inf
    %514 = vmax.xlane.f32.xlu0 %v513
    %v515 = vpop.xlane.xlu0 %514
    %vm516 = vcmask 140288
    %v517 = vsel %vm516, %v504, -inf
    %518 = vmax.xlane.f32.xlu0 %v517
    %v519 = vpop.xlane.xlu0 %518
    %v520 = vsub.f32 %v496, %v512
    %v521 = vsub.f32 %v499, %v515
    %v522 = vsub.f32 %v504, %v519
    %v523 = vmul.f32 %v520, 1.442695
    %v524 = vpow.pop %v523
    %v525 = vmul.f32 %v521, 1.442695
    %v526 = vpow.pop %v525
    %v527 = vmul.f32 %v522, 1.442695
    %v528 = vpow.pop %v527
    %v529 = vsel %vm509, %v524, 0.0
    %530 = vadd.xlane.f32.xlu0 %v529
    %v531 = vpop.xlane.xlu0 %530
    %v532 = vsel %vm509, %v526, 0.0
    %533 = vadd.xlane.f32.xlu0 %v532
    %v534 = vpop.xlane.xlu0 %533
    %v535 = vsel %vm516, %v528, 0.0
    %536 = vadd.xlane.f32.xlu0 %v535
    %v537 = vpop.xlane.xlu0 %536
    %v538 = vrcp.pop %v531
    %v539 = vrcp.pop %v534
    %v540 = vrcp.pop %v537
    %v541 = vmul.f32 %v524, %v538
    %v542 = vmul.f32 %v526, %v539
    %v543 = vmul.f32 %v528, %v540
    %v544 = vpack.c.bf16 %v542, %v541
    %v545 = vpack.c.bf16 %v543, %v543
    %v547 = vsel %vm509, %v544, 0
    %v550 = vsel %vm509, %v545, 0
    %vm552 = vcmask 1040384
    %v554 = vsel %vm552, %v447, 0
    %556 = vmatprep.subr.bf16.mxu0 0
    %557 = vmatpush1.bf16.msra.mxu0 %v446
    %558 = vmatprep.subr.bf16.mxu0 0
    %559 = vmatpush1.bf16.msra.mxu0 %v554
    %560 = vmatprep.subr.bf16.mxu0 0
    %561 = vmatpush1.bf16.msra.mxu0 0
    %562 = vmatprep.subr.bf16.mxu0 0
    %563 = vmatpush1.bf16.msra.mxu0 0
    %564 = vmatprep.subr.bf16.mxu0 0
    %565 = vmatpush1.bf16.msra.mxu0 0
    %566 = vmatprep.subr.bf16.mxu0 0
    %567 = vmatpush1.bf16.msra.mxu0 0
    %568 = vmatprep.subr.bf16.mxu0 0
    %569 = vmatpush1.bf16.msra.mxu0 0
    %570 = vmatprep.subr.bf16.mxu0 0
    %571 = vmatpush1.bf16.msra.mxu0 0
    %572 = vmatprep.subr.bf16.mxu0 0
    %573 = vmatpush1.bf16.msra.mxu0 0
    %574 = vmatprep.subr.bf16.mxu0 0
    %575 = vmatpush1.bf16.msra.mxu0 0
    %576 = vmatprep.subr.bf16.mxu0 0
    %577 = vmatpush1.bf16.msra.mxu0 0
    %578 = vmatprep.subr.bf16.mxu0 0
    %579 = vmatpush1.bf16.msra.mxu0 0
    %580 = vmatprep.subr.bf16.mxu0 0
    %581 = vmatpush1.bf16.msra.mxu0 0
    %582 = vmatprep.subr.bf16.mxu0 0
    %583 = vmatpush1.bf16.msra.mxu0 0
    %584 = vmatprep.subr.bf16.mxu0 0
    %585 = vmatpush1.bf16.msra.mxu0 0
    %586 = vmatprep.subr.bf16.mxu0 0
    %587 = vmatpush1.bf16.msra.mxu0 0
    %588 = vmatprep.mubr.bf16.mxu0 0
    %589 = vmatmul.mubr.bf16.gmra.mrb[0].mxu0 %v547
    %v590 = vpop.f32.mrb[0].mxu0
    %v591 = vadd.f32 0.0, %v590
    %v592 = vpop.f32.mrb[0].mxu0
    %v593 = vpop.f32.mrb[0].mxu0
    %v594 = vadd.f32 0.0, %v593
    %v595 = vpop.f32.mrb[0].mxu0
    %596 = vmatprep.mubr.bf16.mxu0 0
    %597 = vmatmul.mubr.bf16.gmra.mrb[0].mxu0 %v550
    %v598 = vpop.f32.mrb[0].mxu0
    %v599 = vadd.f32 0.0, %v598
    %v600 = vpop.f32.mrb[0].mxu0
    %v601 = vpop.f32.mrb[0].mxu0
    %v602 = vpop.f32.mrb[0].mxu0
    %603 = vdwg.mxu0
    %v604 = vpack.c.bf16 %v594, %v591
    %v605 = vpack.c.bf16 %v599, %v599
    %608 = vrot.lane.b32.xlu0 %v442, 96
    %v609 = vpop.permute.xlu0 %608
    %610 = vrot.lane.b32.xlu0 %v443, 96
    %v611 = vpop.permute.xlu0 %610
    %614 = vrot.lane.b32.xlu0 %v444, 96
    %v615 = vpop.permute.xlu0 %614
    %616 = vrot.lane.b32.xlu0 %v445, 96
    %v617 = vpop.permute.xlu0 %616
    %v619 = vsel %vm448, %v609, 0
    %v622 = vsel %vm448, %v611, 0
    %v625 = vsel %vm448, %v615, 0
    %v628 = vsel %vm448, %v617, 0
    %630 = vmatprep.subr.bf16.mxu0 0
    %631 = vmatpush1.bf16.xpose.msra.mxu0 %v625
    %632 = vmatprep.subr.bf16.mxu0 0
    %633 = vmatpush1.bf16.xpose.msra.mxu0 %v628
    %634 = vmatprep.subr.bf16.mxu0 0
    %635 = vmatpush1.bf16.xpose.msra.mxu0 0
    %636 = vmatprep.subr.bf16.mxu0 0
    %637 = vmatpush1.bf16.xpose.msra.mxu0 0
    %638 = vmatprep.subr.bf16.mxu0 0
    %639 = vmatpush1.bf16.xpose.msra.mxu0 0
    %640 = vmatprep.subr.bf16.mxu0 0
    %641 = vmatpush1.bf16.xpose.msra.mxu0 0
    %642 = vmatprep.subr.bf16.mxu0 0
    %643 = vmatpush1.bf16.xpose.msra.mxu0 0
    %644 = vmatprep.subr.bf16.mxu0 0
    %645 = vmatpush1.bf16.xpose.msra.mxu0 0
    %646 = vmatprep.subr.bf16.mxu0 0
    %647 = vmatpush1.bf16.xpose.msra.mxu0 0
    %648 = vmatprep.subr.bf16.mxu0 0
    %649 = vmatpush1.bf16.xpose.msra.mxu0 0
    %650 = vmatprep.subr.bf16.mxu0 0
    %651 = vmatpush1.bf16.xpose.msra.mxu0 0
    %652 = vmatprep.subr.bf16.mxu0 0
    %653 = vmatpush1.bf16.xpose.msra.mxu0 0
    %654 = vmatprep.subr.bf16.mxu0 0
    %655 = vmatpush1.bf16.xpose.msra.mxu0 0
    %656 = vmatprep.subr.bf16.mxu0 0
    %657 = vmatpush1.bf16.xpose.msra.mxu0 0
    %658 = vmatprep.subr.bf16.mxu0 0
    %659 = vmatpush1.bf16.xpose.msra.mxu0 0
    %660 = vmatprep.subr.bf16.mxu0 0
    %661 = vmatpush1.bf16.xpose.msra.mxu0 0
    %662 = vmatprep.mubr.bf16.mxu0 0
    %663 = vmatmul.mubr.bf16.gmra.mrb[0].mxu0 %v619
    %v664 = vpop.f32.mrb[0].mxu0
    %v665 = vadd.f32 %v142, %v664
    %v666 = vpop.f32.mrb[0].mxu0
    %v667 = vpop.f32.mrb[0].mxu0
    %v668 = vadd.f32 %v143, %v667
    %v669 = vpop.f32.mrb[0].mxu0
    %670 = vmatprep.mubr.bf16.mxu0 0
    %671 = vmatmul.mubr.bf16.gmra.mrb[0].mxu0 %v622
    %v672 = vpop.f32.mrb[0].mxu0
    %v673 = vadd.f32 %v144, %v672
    %v674 = vpop.f32.mrb[0].mxu0
    %v675 = vpop.f32.mrb[0].mxu0
    %v676 = vpop.f32.mrb[0].mxu0
    %677 = vdwg.mxu0
    %v678 = vsel %vm509, %v665, -inf
    %679 = vmax.xlane.f32.xlu0 %v678
    %v680 = vpop.xlane.xlu0 %679
    %v681 = vsel %vm509, %v668, -inf
    %682 = vmax.xlane.f32.xlu0 %v681
    %v683 = vpop.xlane.xlu0 %682
    %v684 = vsel %vm516, %v673, -inf
    %685 = vmax.xlane.f32.xlu0 %v684
    %v686 = vpop.xlane.xlu0 %685
    %v687 = vsub.f32 %v665, %v680
    %v688 = vsub.f32 %v668, %v683
    %v689 = vsub.f32 %v673, %v686
    %v690 = vmul.f32 %v687, 1.442695
    %v691 = vpow.pop %v690
    %v692 = vmul.f32 %v688, 1.442695
    %v693 = vpow.pop %v692
    %v694 = vmul.f32 %v689, 1.442695
    %v695 = vpow.pop %v694
    %v696 = vsel %vm509, %v691, 0.0
    %697 = vadd.xlane.f32.xlu0 %v696
    %v698 = vpop.xlane.xlu0 %697
    %v699 = vsel %vm509, %v693, 0.0
    %700 = vadd.xlane.f32.xlu0 %v699
    %v701 = vpop.xlane.xlu0 %700
    %v702 = vsel %vm516, %v695, 0.0
    %703 = vadd.xlane.f32.xlu0 %v702
    %v704 = vpop.xlane.xlu0 %703
    %v705 = vrcp.pop %v698
    %v706 = vrcp.pop %v701
    %v707 = vrcp.pop %v704
    %v708 = vmul.f32 %v691, %v705
    %v709 = vmul.f32 %v693, %v706
    %v710 = vmul.f32 %v695, %v707
    %v711 = vpack.c.bf16 %v709, %v708
    %v712 = vpack.c.bf16 %v710, %v710
    %715 = vrot.lane.b32.xlu0 %v446, 96
    %v716 = vpop.permute.xlu0 %715
    %717 = vrot.lane.b32.xlu0 %v447, 96
    %v718 = vpop.permute.xlu0 %717
    %v721 = vsel %vm509, %v711, 0
    %v724 = vsel %vm509, %v712, 0
    %v727 = vsel %vm552, %v718, 0
    %729 = vmatprep.subr.bf16.mxu0 0
    %730 = vmatpush1.bf16.msra.mxu0 %v716
    %731 = vmatprep.subr.bf16.mxu0 0
    %732 = vmatpush1.bf16.msra.mxu0 %v727
    %733 = vmatprep.subr.bf16.mxu0 0
    %734 = vmatpush1.bf16.msra.mxu0 0
    %735 = vmatprep.subr.bf16.mxu0 0
    %736 = vmatpush1.bf16.msra.mxu0 0
    %737 = vmatprep.subr.bf16.mxu0 0
    %738 = vmatpush1.bf16.msra.mxu0 0
    %739 = vmatprep.subr.bf16.mxu0 0
    %740 = vmatpush1.bf16.msra.mxu0 0
    %741 = vmatprep.subr.bf16.mxu0 0
    %742 = vmatpush1.bf16.msra.mxu0 0
    %743 = vmatprep.subr.bf16.mxu0 0
    %744 = vmatpush1.bf16.msra.mxu0 0
    %745 = vmatprep.subr.bf16.mxu0 0
    %746 = vmatpush1.bf16.msra.mxu0 0
    %747 = vmatprep.subr.bf16.mxu0 0
    %748 = vmatpush1.bf16.msra.mxu0 0
    %749 = vmatprep.subr.bf16.mxu0 0
    %750 = vmatpush1.bf16.msra.mxu0 0
    %751 = vmatprep.subr.bf16.mxu0 0
    %752 = vmatpush1.bf16.msra.mxu0 0
    %753 = vmatprep.subr.bf16.mxu0 0
    %754 = vmatpush1.bf16.msra.mxu0 0
    %755 = vmatprep.subr.bf16.mxu0 0
    %756 = vmatpush1.bf16.msra.mxu0 0
    %757 = vmatprep.subr.bf16.mxu0 0
    %758 = vmatpush1.bf16.msra.mxu0 0
    %759 = vmatprep.subr.bf16.mxu0 0
    %760 = vmatpush1.bf16.msra.mxu0 0
    %761 = vmatprep.mubr.bf16.mxu0 0
    %762 = vmatmul.mubr.bf16.gmra.mrb[0].mxu0 %v721
    %v763 = vpop.f32.mrb[0].mxu0
    %v764 = vadd.f32 0.0, %v763
    %v765 = vpop.f32.mrb[0].mxu0
    %v766 = vpop.f32.mrb[0].mxu0
    %v767 = vadd.f32 0.0, %v766
    %v768 = vpop.f32.mrb[0].mxu0
    %769 = vmatprep.mubr.bf16.mxu0 0
    %770 = vmatmul.mubr.bf16.gmra.mrb[0].mxu0 %v724
    %v771 = vpop.f32.mrb[0].mxu0
    %v772 = vadd.f32 0.0, %v771
    %v773 = vpop.f32.mrb[0].mxu0
    %v774 = vpop.f32.mrb[0].mxu0
    %v775 = vpop.f32.mrb[0].mxu0
    %776 = vdwg.mxu0
    %v777 = vpack.c.bf16 %v767, %v764
    %v778 = vpack.c.bf16 %v772, %v772
    %v783 = vunpack.c.l.b16 %v427
    %v784 = vunpack.c.l.b16 %v428
    %v785 = vunpack.c.l.b16 %v429
    %v786 = vunpack.c.l.b16 %v430
    %v787 = vpack.c.b16 %v784, %v783
    %v788 = vpack.c.b16 %v786, %v785
    %v792 = vsel %vm448, %v777, 0
    %v795 = vsel %vm448, %v778, 0
    %797 = vmatprep.subr.bf16.mxu0 0
    %798 = vmatpush1.bf16.msra.mxu0 %v787
    %799 = vmatprep.subr.bf16.mxu0 0
    %800 = vmatpush1.bf16.msra.mxu0 %v788
    %801 = vmatprep.subr.bf16.mxu0 0
    %802 = vmatpush1.bf16.msra.mxu0 0
    %803 = vmatprep.subr.bf16.mxu0 0
    %804 = vmatpush1.bf16.msra.mxu0 0
    %805 = vmatprep.subr.bf16.mxu0 0
    %806 = vmatpush1.bf16.msra.mxu0 0
    %807 = vmatprep.subr.bf16.mxu0 0
    %808 = vmatpush1.bf16.msra.mxu0 0
    %809 = vmatprep.subr.bf16.mxu0 0
    %810 = vmatpush1.bf16.msra.mxu0 0
    %811 = vmatprep.subr.bf16.mxu0 0
    %812 = vmatpush1.bf16.msra.mxu0 0
    %813 = vmatprep.subr.bf16.mxu0 0
    %814 = vmatpush1.bf16.msra.mxu0 0
    %815 = vmatprep.subr.bf16.mxu0 0
    %816 = vmatpush1.bf16.msra.mxu0 0
    %817 = vmatprep.subr.bf16.mxu0 0
    %818 = vmatpush1.bf16.msra.mxu0 0
    %819 = vmatprep.subr.bf16.mxu0 0
    %820 = vmatpush1.bf16.msra.mxu0 0
    %821 = vmatprep.subr.bf16.mxu0 0
    %822 = vmatpush1.bf16.msra.mxu0 0
    %823 = vmatprep.subr.bf16.mxu0 0
    %824 = vmatpush1.bf16.msra.mxu0 0
    %825 = vmatprep.subr.bf16.mxu0 0
    %826 = vmatpush1.bf16.msra.mxu0 0
    %827 = vmatprep.subr.bf16.mxu0 0
    %828 = vmatpush1.bf16.msra.mxu0 0
    %829 = vmatprep.mubr.bf16.mxu0 0
    %830 = vmatmul.mubr.bf16.gmra.mrb[0].mxu0 %v792
    %v831 = vpop.f32.mrb[0].mxu0
    %v832 = vadd.f32 0.0, %v831
    %v833 = vpop.f32.mrb[0].mxu0
    %v834 = vpop.f32.mrb[0].mxu0
    %v835 = vadd.f32 0.0, %v834
    %v836 = vpop.f32.mrb[0].mxu0
    %837 = vmatprep.mubr.bf16.mxu0 0
    %838 = vmatmul.mubr.bf16.gmra.mrb[0].mxu0 %v795
    %v839 = vpop.f32.mrb[0].mxu0
    %v840 = vadd.f32 0.0, %v839
    %v841 = vpop.f32.mrb[0].mxu0
    %v842 = vpop.f32.mrb[0].mxu0
    %v843 = vpop.f32.mrb[0].mxu0
    %844 = vdwg.mxu0
    %v849 = vunpack.c.l.b16 %v423
    %v850 = vunpack.c.l.b16 %v424
    %v851 = vunpack.c.l.b16 %v425
    %v852 = vunpack.c.l.b16 %v426
    %v853 = vpack.c.b16 %v850, %v849
    %v854 = vpack.c.b16 %v852, %v851
    %v858 = vsel %vm448, %v604, 0
    %v861 = vsel %vm448, %v605, 0
    %863 = vmatprep.subr.bf16.mxu0 0
    %864 = vmatpush1.bf16.msra.mxu0 %v853
    %865 = vmatprep.subr.bf16.mxu0 0
    %866 = vmatpush1.bf16.msra.mxu0 %v854
    %867 = vmatprep.subr.bf16.mxu0 0
    %868 = vmatpush1.bf16.msra.mxu0 0
    %869 = vmatprep.subr.bf16.mxu0 0
    %870 = vmatpush1.bf16.msra.mxu0 0
    %871 = vmatprep.subr.bf16.mxu0 0
    %872 = vmatpush1.bf16.msra.mxu0 0
    %873 = vmatprep.subr.bf16.mxu0 0
    %874 = vmatpush1.bf16.msra.mxu0 0
    %875 = vmatprep.subr.bf16.mxu0 0
    %876 = vmatpush1.bf16.msra.mxu0 0
    %877 = vmatprep.subr.bf16.mxu0 0
    %878 = vmatpush1.bf16.msra.mxu0 0
    %879 = vmatprep.subr.bf16.mxu0 0
    %880 = vmatpush1.bf16.msra.mxu0 0
    %881 = vmatprep.subr.bf16.mxu0 0
    %882 = vmatpush1.bf16.msra.mxu0 0
    %883 = vmatprep.subr.bf16.mxu0 0
    %884 = vmatpush1.bf16.msra.mxu0 0
    %885 = vmatprep.subr.bf16.mxu0 0
    %886 = vmatpush1.bf16.msra.mxu0 0
    %887 = vmatprep.subr.bf16.mxu0 0
    %888 = vmatpush1.bf16.msra.mxu0 0
    %889 = vmatprep.subr.bf16.mxu0 0
    %890 = vmatpush1.bf16.msra.mxu0 0
    %891 = vmatprep.subr.bf16.mxu0 0
    %892 = vmatpush1.bf16.msra.mxu0 0
    %893 = vmatprep.subr.bf16.mxu0 0
    %894 = vmatpush1.bf16.msra.mxu0 0
    %895 = vmatprep.mubr.bf16.mxu0 0
    %896 = vmatmul.mubr.bf16.gmra.mrb[0].mxu0 %v858
    %v897 = vpop.f32.mrb[0].mxu0
    %v898 = vadd.f32 %v832, %v897
    %v899 = vpop.f32.mrb[0].mxu0
    %v900 = vpop.f32.mrb[0].mxu0
    %v901 = vadd.f32 %v835, %v900
    %v902 = vpop.f32.mrb[0].mxu0
    %903 = vmatprep.mubr.bf16.mxu0 0
    %904 = vmatmul.mubr.bf16.gmra.mrb[0].mxu0 %v861
    %v905 = vpop.f32.mrb[0].mxu0
    %v906 = vadd.f32 %v840, %v905
    %v907 = vpop.f32.mrb[0].mxu0
    %v908 = vpop.f32.mrb[0].mxu0
    %v909 = vpop.f32.mrb[0].mxu0
    %910 = vdwg.mxu0
    %911 = vrot.lane.b32.xlu0 %v442, 64
    %v912 = vpop.permute.xlu0 %911
    %913 = vrot.lane.b32.xlu0 %v443, 64
    %v914 = vpop.permute.xlu0 %913
    %915 = vrot.lane.b32.xlu0 %v444, 64
    %v916 = vpop.permute.xlu0 %915
    %917 = vrot.lane.b32.xlu0 %v445, 64
    %v918 = vpop.permute.xlu0 %917
    %v920 = vsel %vm448, %v912, 0
    %v923 = vsel %vm448, %v914, 0
    %v926 = vsel %vm448, %v916, 0
    %v929 = vsel %vm448, %v918, 0
    %931 = vmatprep.subr.bf16.mxu0 0
    %932 = vmatpush1.bf16.xpose.msra.mxu0 %v926
    %933 = vmatprep.subr.bf16.mxu0 0
    %934 = vmatpush1.bf16.xpose.msra.mxu0 %v929
    %935 = vmatprep.subr.bf16.mxu0 0
    %936 = vmatpush1.bf16.xpose.msra.mxu0 0
    %937 = vmatprep.subr.bf16.mxu0 0
    %938 = vmatpush1.bf16.xpose.msra.mxu0 0
    %939 = vmatprep.subr.bf16.mxu0 0
    %940 = vmatpush1.bf16.xpose.msra.mxu0 0
    %941 = vmatprep.subr.bf16.mxu0 0
    %942 = vmatpush1.bf16.xpose.msra.mxu0 0
    %943 = vmatprep.subr.bf16.mxu0 0
    %944 = vmatpush1.bf16.xpose.msra.mxu0 0
    %945 = vmatprep.subr.bf16.mxu0 0
    %946 = vmatpush1.bf16.xpose.msra.mxu0 0
    %947 = vmatprep.subr.bf16.mxu0 0
    %948 = vmatpush1.bf16.xpose.msra.mxu0 0
    %949 = vmatprep.subr.bf16.mxu0 0
    %950 = vmatpush1.bf16.xpose.msra.mxu0 0
    %951 = vmatprep.subr.bf16.mxu0 0
    %952 = vmatpush1.bf16.xpose.msra.mxu0 0
    %953 = vmatprep.subr.bf16.mxu0 0
    %954 = vmatpush1.bf16.xpose.msra.mxu0 0
    %955 = vmatprep.subr.bf16.mxu0 0
    %956 = vmatpush1.bf16.xpose.msra.mxu0 0
    %957 = vmatprep.subr.bf16.mxu0 0
    %958 = vmatpush1.bf16.xpose.msra.mxu0 0
    %959 = vmatprep.subr.bf16.mxu0 0
    %960 = vmatpush1.bf16.xpose.msra.mxu0 0
    %961 = vmatprep.subr.bf16.mxu0 0
    %962 = vmatpush1.bf16.xpose.msra.mxu0 0
    %963 = vmatprep.mubr.bf16.mxu0 0
    %964 = vmatmul.mubr.bf16.gmra.mrb[0].mxu0 %v920
    %v965 = vpop.f32.mrb[0].mxu0
    %v966 = vadd.f32 %v142, %v965
    %v967 = vpop.f32.mrb[0].mxu0
    %v968 = vpop.f32.mrb[0].mxu0
    %v969 = vadd.f32 %v143, %v968
    %v970 = vpop.f32.mrb[0].mxu0
    %971 = vmatprep.mubr.bf16.mxu0 0
    %972 = vmatmul.mubr.bf16.gmra.mrb[0].mxu0 %v923
    %v973 = vpop.f32.mrb[0].mxu0
    %v974 = vadd.f32 %v144, %v973
    %v975 = vpop.f32.mrb[0].mxu0
    %v976 = vpop.f32.mrb[0].mxu0
    %v977 = vpop.f32.mrb[0].mxu0
    %978 = vdwg.mxu0
    %v979 = vsel %vm509, %v966, -inf
    %980 = vmax.xlane.f32.xlu0 %v979
    %v981 = vpop.xlane.xlu0 %980
    %v982 = vsel %vm509, %v969, -inf
    %983 = vmax.xlane.f32.xlu0 %v982
    %v984 = vpop.xlane.xlu0 %983
    %v985 = vsel %vm516, %v974, -inf
    %986 = vmax.xlane.f32.xlu0 %v985
    %v987 = vpop.xlane.xlu0 %986
    %v988 = vsub.f32 %v966, %v981
    %v989 = vsub.f32 %v969, %v984
    %v990 = vsub.f32 %v974, %v987
    %v991 = vmul.f32 %v988, 1.442695
    %v992 = vpow.pop %v991
    %v993 = vmul.f32 %v989, 1.442695
    %v994 = vpow.pop %v993
    %v995 = vmul.f32 %v990, 1.442695
    %v996 = vpow.pop %v995
    %v997 = vsel %vm509, %v992, 0.0
    %998 = vadd.xlane.f32.xlu0 %v997
    %v999 = vpop.xlane.xlu0 %998
    %v1000 = vsel %vm509, %v994, 0.0
    %1001 = vadd.xlane.f32.xlu0 %v1000
    %v1002 = vpop.xlane.xlu0 %1001
    %v1003 = vsel %vm516, %v996, 0.0
    %1004 = vadd.xlane.f32.xlu0 %v1003
    %v1005 = vpop.xlane.xlu0 %1004
    %v1006 = vrcp.pop %v999
    %v1007 = vrcp.pop %v1002
    %v1008 = vrcp.pop %v1005
    %v1009 = vmul.f32 %v992, %v1006
    %v1010 = vmul.f32 %v994, %v1007
    %v1011 = vmul.f32 %v996, %v1008
    %v1012 = vpack.c.bf16 %v1010, %v1009
    %v1013 = vpack.c.bf16 %v1011, %v1011
    %1014 = vrot.lane.b32.xlu0 %v446, 64
    %v1015 = vpop.permute.xlu0 %1014
    %1016 = vrot.lane.b32.xlu0 %v447, 64
    %v1017 = vpop.permute.xlu0 %1016
    %v1020 = vsel %vm509, %v1012, 0
    %v1023 = vsel %vm509, %v1013, 0
    %v1026 = vsel %vm552, %v1017, 0
    %1028 = vmatprep.subr.bf16.mxu0 0
    %1029 = vmatpush1.bf16.msra.mxu0 %v1015
    %1030 = vmatprep.subr.bf16.mxu0 0
    %1031 = vmatpush1.bf16.msra.mxu0 %v1026
    %1032 = vmatprep.subr.bf16.mxu0 0
    %1033 = vmatpush1.bf16.msra.mxu0 0
    %1034 = vmatprep.subr.bf16.mxu0 0
    %1035 = vmatpush1.bf16.msra.mxu0 0
    %1036 = vmatprep.subr.bf16.mxu0 0
    %1037 = vmatpush1.bf16.msra.mxu0 0
    %1038 = vmatprep.subr.bf16.mxu0 0
    %1039 = vmatpush1.bf16.msra.mxu0 0
    %1040 = vmatprep.subr.bf16.mxu0 0
    %1041 = vmatpush1.bf16.msra.mxu0 0
    %1042 = vmatprep.subr.bf16.mxu0 0
    %1043 = vmatpush1.bf16.msra.mxu0 0
    %1044 = vmatprep.subr.bf16.mxu0 0
    %1045 = vmatpush1.bf16.msra.mxu0 0
    %1046 = vmatprep.subr.bf16.mxu0 0
    %1047 = vmatpush1.bf16.msra.mxu0 0
    %1048 = vmatprep.subr.bf16.mxu0 0
    %1049 = vmatpush1.bf16.msra.mxu0 0
    %1050 = vmatprep.subr.bf16.mxu0 0
    %1051 = vmatpush1.bf16.msra.mxu0 0
    %1052 = vmatprep.subr.bf16.mxu0 0
    %1053 = vmatpush1.bf16.msra.mxu0 0
    %1054 = vmatprep.subr.bf16.mxu0 0
    %1055 = vmatpush1.bf16.msra.mxu0 0
    %1056 = vmatprep.subr.bf16.mxu0 0
    %1057 = vmatpush1.bf16.msra.mxu0 0
    %1058 = vmatprep.subr.bf16.mxu0 0
    %1059 = vmatpush1.bf16.msra.mxu0 0
    %1060 = vmatprep.mubr.bf16.mxu0 0
    %1061 = vmatmul.mubr.bf16.gmra.mrb[0].mxu0 %v1020
    %v1062 = vpop.f32.mrb[0].mxu0
    %v1063 = vadd.f32 0.0, %v1062
    %v1064 = vpop.f32.mrb[0].mxu0
    %v1065 = vpop.f32.mrb[0].mxu0
    %v1066 = vadd.f32 0.0, %v1065
    %v1067 = vpop.f32.mrb[0].mxu0
    %1068 = vmatprep.mubr.bf16.mxu0 0
    %1069 = vmatmul.mubr.bf16.gmra.mrb[0].mxu0 %v1023
    %v1070 = vpop.f32.mrb[0].mxu0
    %v1071 = vadd.f32 0.0, %v1070
    %v1072 = vpop.f32.mrb[0].mxu0
    %v1073 = vpop.f32.mrb[0].mxu0
    %v1074 = vpop.f32.mrb[0].mxu0
    %1075 = vdwg.mxu0
    %v1076 = vpack.c.bf16 %v1066, %v1063
    %v1077 = vpack.c.bf16 %v1071, %v1071
    %v1082 = vunpack.c.l.b16 %v431
    %v1083 = vunpack.c.l.b16 %v432
    %v1084 = vunpack.c.l.b16 %v433
    %v1085 = vunpack.c.l.b16 %v434
    %v1086 = vpack.c.b16 %v1083, %v1082
    %v1087 = vpack.c.b16 %v1085, %v1084
    %v1091 = vsel %vm448, %v1076, 0
    %v1094 = vsel %vm448, %v1077, 0
    %1096 = vmatprep.subr.bf16.mxu0 0
    %1097 = vmatpush1.bf16.msra.mxu0 %v1086
    %1098 = vmatprep.subr.bf16.mxu0 0
    %1099 = vmatpush1.bf16.msra.mxu0 %v1087
    %1100 = vmatprep.subr.bf16.mxu0 0
    %1101 = vmatpush1.bf16.msra.mxu0 0
    %1102 = vmatprep.subr.bf16.mxu0 0
    %1103 = vmatpush1.bf16.msra.mxu0 0
    %1104 = vmatprep.subr.bf16.mxu0 0
    %1105 = vmatpush1.bf16.msra.mxu0 0
    %1106 = vmatprep.subr.bf16.mxu0 0
    %1107 = vmatpush1.bf16.msra.mxu0 0
    %1108 = vmatprep.subr.bf16.mxu0 0
    %1109 = vmatpush1.bf16.msra.mxu0 0
    %1110 = vmatprep.subr.bf16.mxu0 0
    %1111 = vmatpush1.bf16.msra.mxu0 0
    %1112 = vmatprep.subr.bf16.mxu0 0
    %1113 = vmatpush1.bf16.msra.mxu0 0
    %1114 = vmatprep.subr.bf16.mxu0 0
    %1115 = vmatpush1.bf16.msra.mxu0 0
    %1116 = vmatprep.subr.bf16.mxu0 0
    %1117 = vmatpush1.bf16.msra.mxu0 0
    %1118 = vmatprep.subr.bf16.mxu0 0
    %1119 = vmatpush1.bf16.msra.mxu0 0
    %1120 = vmatprep.subr.bf16.mxu0 0
    %1121 = vmatpush1.bf16.msra.mxu0 0
    %1122 = vmatprep.subr.bf16.mxu0 0
    %1123 = vmatpush1.bf16.msra.mxu0 0
    %1124 = vmatprep.subr.bf16.mxu0 0
    %1125 = vmatpush1.bf16.msra.mxu0 0
    %1126 = vmatprep.subr.bf16.mxu0 0
    %1127 = vmatpush1.bf16.msra.mxu0 0
    %1128 = vmatprep.mubr.bf16.mxu0 0
    %1129 = vmatmul.mubr.bf16.gmra.mrb[0].mxu0 %v1091
    %v1130 = vpop.f32.mrb[0].mxu0
    %v1131 = vadd.f32 0.0, %v1130
    %v1132 = vpop.f32.mrb[0].mxu0
    %v1133 = vpop.f32.mrb[0].mxu0
    %v1134 = vadd.f32 0.0, %v1133
    %v1135 = vpop.f32.mrb[0].mxu0
    %1136 = vmatprep.mubr.bf16.mxu0 0
    %1137 = vmatmul.mubr.bf16.gmra.mrb[0].mxu0 %v1094
    %v1138 = vpop.f32.mrb[0].mxu0
    %v1139 = vadd.f32 0.0, %v1138
    %v1140 = vpop.f32.mrb[0].mxu0
    %v1141 = vpop.f32.mrb[0].mxu0
    %v1142 = vpop.f32.mrb[0].mxu0
    %1143 = vdwg.mxu0
    %v1144 = vadd.f32 %v898, %v1131
    %v1145 = vadd.f32 %v901, %v1134
    %v1146 = vadd.f32 %v906, %v1139
    %1147 = vrot.lane.b32.xlu0 %v442, 32
    %v1148 = vpop.permute.xlu0 %1147
    %1149 = vrot.lane.b32.xlu0 %v443, 32
    %v1150 = vpop.permute.xlu0 %1149
    %1151 = vrot.lane.b32.xlu0 %v444, 32
    %v1152 = vpop.permute.xlu0 %1151
    %1153 = vrot.lane.b32.xlu0 %v445, 32
    %v1154 = vpop.permute.xlu0 %1153
    %v1156 = vsel %vm448, %v1148, 0
    %v1159 = vsel %vm448, %v1150, 0
    %v1162 = vsel %vm448, %v1152, 0
    %v1165 = vsel %vm448, %v1154, 0
    %1167 = vmatprep.subr.bf16.mxu0 0
    %1168 = vmatpush1.bf16.xpose.msra.mxu0 %v1162
    %1169 = vmatprep.subr.bf16.mxu0 0
    %1170 = vmatpush1.bf16.xpose.msra.mxu0 %v1165
    %1171 = vmatprep.subr.bf16.mxu0 0
    %1172 = vmatpush1.bf16.xpose.msra.mxu0 0
    %1173 = vmatprep.subr.bf16.mxu0 0
    %1174 = vmatpush1.bf16.xpose.msra.mxu0 0
    %1175 = vmatprep.subr.bf16.mxu0 0
    %1176 = vmatpush1.bf16.xpose.msra.mxu0 0
    %1177 = vmatprep.subr.bf16.mxu0 0
    %1178 = vmatpush1.bf16.xpose.msra.mxu0 0
    %1179 = vmatprep.subr.bf16.mxu0 0
    %1180 = vmatpush1.bf16.xpose.msra.mxu0 0
    %1181 = vmatprep.subr.bf16.mxu0 0
    %1182 = vmatpush1.bf16.xpose.msra.mxu0 0
    %1183 = vmatprep.subr.bf16.mxu0 0
    %1184 = vmatpush1.bf16.xpose.msra.mxu0 0
    %1185 = vmatprep.subr.bf16.mxu0 0
    %1186 = vmatpush1.bf16.xpose.msra.mxu0 0
    %1187 = vmatprep.subr.bf16.mxu0 0
    %1188 = vmatpush1.bf16.xpose.msra.mxu0 0
    %1189 = vmatprep.subr.bf16.mxu0 0
    %1190 = vmatpush1.bf16.xpose.msra.mxu0 0
    %1191 = vmatprep.subr.bf16.mxu0 0
    %1192 = vmatpush1.bf16.xpose.msra.mxu0 0
    %1193 = vmatprep.subr.bf16.mxu0 0
    %1194 = vmatpush1.bf16.xpose.msra.mxu0 0
    %1195 = vmatprep.subr.bf16.mxu0 0
    %1196 = vmatpush1.bf16.xpose.msra.mxu0 0
    %1197 = vmatprep.subr.bf16.mxu0 0
    %1198 = vmatpush1.bf16.xpose.msra.mxu0 0
    %1199 = vmatprep.mubr.bf16.mxu0 0
    %1200 = vmatmul.mubr.bf16.gmra.mrb[0].mxu0 %v1156
    %v1201 = vpop.f32.mrb[0].mxu0
    %v1202 = vadd.f32 %v142, %v1201
    %v1203 = vpop.f32.mrb[0].mxu0
    %v1204 = vpop.f32.mrb[0].mxu0
    %v1205 = vadd.f32 %v143, %v1204
    %v1206 = vpop.f32.mrb[0].mxu0
    %1207 = vmatprep.mubr.bf16.mxu0 0
    %1208 = vmatmul.mubr.bf16.gmra.mrb[0].mxu0 %v1159
    %v1209 = vpop.f32.mrb[0].mxu0
    %v1210 = vadd.f32 %v144, %v1209
    %v1211 = vpop.f32.mrb[0].mxu0
    %v1212 = vpop.f32.mrb[0].mxu0
    %v1213 = vpop.f32.mrb[0].mxu0
    %1214 = vdwg.mxu0
    %v1215 = vsel %vm509, %v1202, -inf
    %1216 = vmax.xlane.f32.xlu0 %v1215
    %v1217 = vpop.xlane.xlu0 %1216
    %v1218 = vsel %vm509, %v1205, -inf
    %1219 = vmax.xlane.f32.xlu0 %v1218
    %v1220 = vpop.xlane.xlu0 %1219
    %v1221 = vsel %vm516, %v1210, -inf
    %1222 = vmax.xlane.f32.xlu0 %v1221
    %v1223 = vpop.xlane.xlu0 %1222
    %v1224 = vsub.f32 %v1202, %v1217
    %v1225 = vsub.f32 %v1205, %v1220
    %v1226 = vsub.f32 %v1210, %v1223
    %v1227 = vmul.f32 %v1224, 1.442695
    %v1228 = vpow.pop %v1227
    %v1229 = vmul.f32 %v1225, 1.442695
    %v1230 = vpow.pop %v1229
    %v1231 = vmul.f32 %v1226, 1.442695
    %v1232 = vpow.pop %v1231
    %v1233 = vsel %vm509, %v1228, 0.0
    %1234 = vadd.xlane.f32.xlu0 %v1233
    %v1235 = vpop.xlane.xlu0 %1234
    %v1236 = vsel %vm509, %v1230, 0.0
    %1237 = vadd.xlane.f32.xlu0 %v1236
    %v1238 = vpop.xlane.xlu0 %1237
    %v1239 = vsel %vm516, %v1232, 0.0
    %1240 = vadd.xlane.f32.xlu0 %v1239
    %v1241 = vpop.xlane.xlu0 %1240
    %v1242 = vrcp.pop %v1235
    %v1243 = vrcp.pop %v1238
    %v1244 = vrcp.pop %v1241
    %v1245 = vmul.f32 %v1228, %v1242
    %v1246 = vmul.f32 %v1230, %v1243
    %v1247 = vmul.f32 %v1232, %v1244
    %v1248 = vpack.c.bf16 %v1246, %v1245
    %v1249 = vpack.c.bf16 %v1247, %v1247
    %1250 = vrot.lane.b32.xlu0 %v446, 32
    %v1251 = vpop.permute.xlu0 %1250
    %1252 = vrot.lane.b32.xlu0 %v447, 32
    %v1253 = vpop.permute.xlu0 %1252
    %v1256 = vsel %vm509, %v1248, 0
    %v1259 = vsel %vm509, %v1249, 0
    %v1262 = vsel %vm552, %v1253, 0
    %1264 = vmatprep.subr.bf16.mxu0 0
    %1265 = vmatpush1.bf16.msra.mxu0 %v1251
    %1266 = vmatprep.subr.bf16.mxu0 0
    %1267 = vmatpush1.bf16.msra.mxu0 %v1262
    %1268 = vmatprep.subr.bf16.mxu0 0
    %1269 = vmatpush1.bf16.msra.mxu0 0
    %1270 = vmatprep.subr.bf16.mxu0 0
    %1271 = vmatpush1.bf16.msra.mxu0 0
    %1272 = vmatprep.subr.bf16.mxu0 0
    %1273 = vmatpush1.bf16.msra.mxu0 0
    %1274 = vmatprep.subr.bf16.mxu0 0
    %1275 = vmatpush1.bf16.msra.mxu0 0
    %1276 = vmatprep.subr.bf16.mxu0 0
    %1277 = vmatpush1.bf16.msra.mxu0 0
    %1278 = vmatprep.subr.bf16.mxu0 0
    %1279 = vmatpush1.bf16.msra.mxu0 0
    %1280 = vmatprep.subr.bf16.mxu0 0
    %1281 = vmatpush1.bf16.msra.mxu0 0
    %1282 = vmatprep.subr.bf16.mxu0 0
    %1283 = vmatpush1.bf16.msra.mxu0 0
    %1284 = vmatprep.subr.bf16.mxu0 0
    %1285 = vmatpush1.bf16.msra.mxu0 0
    %1286 = vmatprep.subr.bf16.mxu0 0
    %1287 = vmatpush1.bf16.msra.mxu0 0
    %1288 = vmatprep.subr.bf16.mxu0 0
    %1289 = vmatpush1.bf16.msra.mxu0 0
    %1290 = vmatprep.subr.bf16.mxu0 0
    %1291 = vmatpush1.bf16.msra.mxu0 0
    %1292 = vmatprep.subr.bf16.mxu0 0
    %1293 = vmatpush1.bf16.msra.mxu0 0
    %1294 = vmatprep.subr.bf16.mxu0 0
    %1295 = vmatpush1.bf16.msra.mxu0 0
    %1296 = vmatprep.mubr.bf16.mxu0 0
    %1297 = vmatmul.mubr.bf16.gmra.mrb[0].mxu0 %v1256
    %v1298 = vpop.f32.mrb[0].mxu0
    %v1299 = vadd.f32 0.0, %v1298
    %v1300 = vpop.f32.mrb[0].mxu0
    %v1301 = vpop.f32.mrb[0].mxu0
    %v1302 = vadd.f32 0.0, %v1301
    %v1303 = vpop.f32.mrb[0].mxu0
    %1304 = vmatprep.mubr.bf16.mxu0 0
    %1305 = vmatmul.mubr.bf16.gmra.mrb[0].mxu0 %v1259
    %v1306 = vpop.f32.mrb[0].mxu0
    %v1307 = vadd.f32 0.0, %v1306
    %v1308 = vpop.f32.mrb[0].mxu0
    %v1309 = vpop.f32.mrb[0].mxu0
    %v1310 = vpop.f32.mrb[0].mxu0
    %1311 = vdwg.mxu0
    %v1312 = vpack.c.bf16 %v1302, %v1299
    %v1313 = vpack.c.bf16 %v1307, %v1307
    %v1318 = vunpack.c.l.b16 %v435
    %v1319 = vunpack.c.l.b16 %v436
    %v1320 = vunpack.c.l.b16 %v437
    %v1321 = vunpack.c.l.b16 %v438
    %v1322 = vpack.c.b16 %v1319, %v1318
    %v1323 = vpack.c.b16 %v1321, %v1320
    %v1327 = vsel %vm448, %v1312, 0
    %v1330 = vsel %vm448, %v1313, 0
    %1332 = vmatprep.subr.bf16.mxu0 0
    %1333 = vmatpush1.bf16.msra.mxu0 %v1322
    %1334 = vmatprep.subr.bf16.mxu0 0
    %1335 = vmatpush1.bf16.msra.mxu0 %v1323
    %1336 = vmatprep.subr.bf16.mxu0 0
    %1337 = vmatpush1.bf16.msra.mxu0 0
    %1338 = vmatprep.subr.bf16.mxu0 0
    %1339 = vmatpush1.bf16.msra.mxu0 0
    %1340 = vmatprep.subr.bf16.mxu0 0
    %1341 = vmatpush1.bf16.msra.mxu0 0
    %1342 = vmatprep.subr.bf16.mxu0 0
    %1343 = vmatpush1.bf16.msra.mxu0 0
    %1344 = vmatprep.subr.bf16.mxu0 0
    %1345 = vmatpush1.bf16.msra.mxu0 0
    %1346 = vmatprep.subr.bf16.mxu0 0
    %1347 = vmatpush1.bf16.msra.mxu0 0
    %1348 = vmatprep.subr.bf16.mxu0 0
    %1349 = vmatpush1.bf16.msra.mxu0 0
    %1350 = vmatprep.subr.bf16.mxu0 0
    %1351 = vmatpush1.bf16.msra.mxu0 0
    %1352 = vmatprep.subr.bf16.mxu0 0
    %1353 = vmatpush1.bf16.msra.mxu0 0
    %1354 = vmatprep.subr.bf16.mxu0 0
    %1355 = vmatpush1.bf16.msra.mxu0 0
    %1356 = vmatprep.subr.bf16.mxu0 0
    %1357 = vmatpush1.bf16.msra.mxu0 0
    %1358 = vmatprep.subr.bf16.mxu0 0
    %1359 = vmatpush1.bf16.msra.mxu0 0
    %1360 = vmatprep.subr.bf16.mxu0 0
    %1361 = vmatpush1.bf16.msra.mxu0 0
    %1362 = vmatprep.subr.bf16.mxu0 0
    %1363 = vmatpush1.bf16.msra.mxu0 0
    %1364 = vmatprep.mubr.bf16.mxu0 0
    %1365 = vmatmul.mubr.bf16.gmra.mrb[0].mxu0 %v1327
    %v1366 = vpop.f32.mrb[0].mxu0
    %v1367 = vadd.f32 0.0, %v1366
    %v1368 = vpop.f32.mrb[0].mxu0
    %v1369 = vpop.f32.mrb[0].mxu0
    %v1370 = vadd.f32 0.0, %v1369
    %v1371 = vpop.f32.mrb[0].mxu0
    %1372 = vmatprep.mubr.bf16.mxu0 0
    %1373 = vmatmul.mubr.bf16.gmra.mrb[0].mxu0 %v1330
    %v1374 = vpop.f32.mrb[0].mxu0
    %v1375 = vadd.f32 0.0, %v1374
    %v1376 = vpop.f32.mrb[0].mxu0
    %v1377 = vpop.f32.mrb[0].mxu0
    %v1378 = vpop.f32.mrb[0].mxu0
    %1379 = vdwg.mxu0
    %v1380 = vadd.f32 %v1144, %v1367
    %v1381 = vadd.f32 %v1145, %v1370
    %v1382 = vadd.f32 %v1146, %v1375
    %v1383 = vld [vmem:[%s9] sm:$0x1]
    %v1385 = vlaneseq
    %v1386 = vshrl.u32 %v1385, 7
    %v1387 = vsub.s32 0, %v1386
    %v1388 = vrot.slane %v1383, %v1387
    %v1390 = vadd.f32 %v1380, %v1388
    %v1391 = vadd.f32 %v1381, %v1388
    %v1392 = vadd.f32 %v1382, %v1388
    %v1393 = vadd.f32 %v139, %v1390
    %v1394 = vadd.f32 %v140, %v1391
    %v1395 = vadd.f32 %v141, %v1392
    %v1396 = vld [vmem:[%s14] sm:$0x1]
    %v1397 = vld [vmem:[%s15] sm:$0x1]
    %1398 = vadd.xlane.f32.xlu0 %v1393
    %v1399 = vpop.xlane.xlu0 %1398
    %1400 = vadd.xlane.f32.xlu0 %v1394
    %v1401 = vpop.xlane.xlu0 %1400
    %vm1402 = vcmask 1041408
    %v1403 = vsel %vm1402, %v1395, 0.0
    %1404 = vadd.xlane.f32.xlu0 %v1403
    %v1405 = vpop.xlane.xlu0 %1404
    %v1406 = vrcp.pop 128.0
    %v1407 = vmul.f32 %v1399, %v1406
    %v1408 = vmul.f32 %v1401, %v1406
    %v1409 = vmul.f32 %v1405, %v1406
    %v1410 = vsub.f32 %v1393, %v1407
    %v1411 = vsub.f32 %v1394, %v1408
    %v1412 = vsub.f32 %v1395, %v1409
    %v1413 = vmul.f32 %v1410, %v1410
    %v1414 = vmul.f32 %v1411, %v1411
    %v1415 = vmul.f32 %v1412, %v1412
    %1416 = vadd.xlane.f32.xlu0 %v1413
    %v1417 = vpop.xlane.xlu0 %1416
    %1418 = vadd.xlane.f32.xlu0 %v1414
    %v1419 = vpop.xlane.xlu0 %1418
    %v1420 = vsel %vm1402, %v1415, 0.0
    %1421 = vadd.xlane.f32.xlu0 %v1420
    %v1422 = vpop.xlane.xlu0 %1421
    %v1423 = vmul.f32 %v1417, %v1406
    %v1424 = vmul.f32 %v1419, %v1406
    %v1425 = vmul.f32 %v1422, %v1406
    %v1426 = vadd.f32 %v1423, 1e-05
    %v1427 = vadd.f32 %v1424, 1e-05
    %v1428 = vadd.f32 %v1425, 1e-05
    %v1429 = vrsqrt.pop %v1426
    %v1430 = vrsqrt.pop %v1427
    %v1431 = vrsqrt.pop %v1428
    %v1432 = vmul.f32 %v1410, %v1429
    %v1433 = vmul.f32 %v1411, %v1430
    %v1434 = vmul.f32 %v1412, %v1431
    %v1436 = vlaneseq
    %v1437 = vshrl.u32 %v1436, 7
    %v1438 = vsub.s32 0, %v1437
    %v1439 = vrot.slane %v1396, %v1438
    %v1441 = vmul.f32 %v1432, %v1439
    %v1442 = vmul.f32 %v1433, %v1439
    %v1443 = vmul.f32 %v1434, %v1439
    %v1445 = vlaneseq
    %v1446 = vshrl.u32 %v1445, 7
    %v1447 = vsub.s32 0, %v1446
    %v1448 = vrot.slane %v1397, %v1447
    %v1450 = vadd.f32 %v1441, %v1448
    %v1451 = vadd.f32 %v1442, %v1448
    %v1452 = vadd.f32 %v1443, %v1448
    %v1453 = vpack.c.bf16 %v1451, %v1450
    %v1454 = vpack.c.bf16 %v1452, %v1452
    %v1455 = vld [vmem:[%s10] sm:$0xff]
    %v1456 = vld [vmem:[%s10 + $0x8] sm:$0xff]
    %v1457 = vld [vmem:[%s10 + $0x10] sm:$0xff]
    %v1458 = vld [vmem:[%s10 + $0x18] sm:$0xff]
    %v1459 = vld [vmem:[%s10 + $0x20] sm:$0xff]
    %v1460 = vld [vmem:[%s10 + $0x28] sm:$0xff]
    %v1461 = vld [vmem:[%s10 + $0x30] sm:$0xff]
    %v1462 = vld [vmem:[%s10 + $0x38] sm:$0xff]
    %v1463 = vld [vmem:[%s10 + $0x40] sm:$0xff]
    %v1464 = vld [vmem:[%s10 + $0x48] sm:$0xff]
    %v1465 = vld [vmem:[%s10 + $0x50] sm:$0xff]
    %v1466 = vld [vmem:[%s10 + $0x58] sm:$0xff]
    %v1467 = vld [vmem:[%s10 + $0x60] sm:$0xff]
    %v1468 = vld [vmem:[%s10 + $0x68] sm:$0xff]
    %v1469 = vld [vmem:[%s10 + $0x70] sm:$0xff]
    %v1470 = vld [vmem:[%s10 + $0x78] sm:$0xff]
    %v1471 = vld [vmem:[%s10 + $0x80] sm:$0xff]
    %v1472 = vld [vmem:[%s10 + $0x88] sm:$0xff]
    %v1473 = vld [vmem:[%s10 + $0x90] sm:$0xff]
    %v1474 = vld [vmem:[%s10 + $0x98] sm:$0xff]
    %v1475 = vld [vmem:[%s10 + $0xa0] sm:$0xff]
    %v1476 = vld [vmem:[%s10 + $0xa8] sm:$0xff]
    %v1477 = vld [vmem:[%s10 + $0xb0] sm:$0xff]
    %v1478 = vld [vmem:[%s10 + $0xb8] sm:$0xff]
    %v1479 = vld [vmem:[%s10 + $0xc0] sm:$0xff]
    %v1480 = vld [vmem:[%s10 + $0xc8] sm:$0xff]
    %v1481 = vld [vmem:[%s10 + $0xd0] sm:$0xff]
    %v1482 = vld [vmem:[%s10 + $0xd8] sm:$0xff]
    %v1483 = vld [vmem:[%s10 + $0xe0] sm:$0xff]
    %v1484 = vld [vmem:[%s10 + $0xe8] sm:$0xff]
    %v1485 = vld [vmem:[%s10 + $0xf0] sm:$0xff]
    %v1486 = vld [vmem:[%s10 + $0xf8] sm:$0xff]
    %v1487 = vld [vmem:[%s11] sm:$0xf]
    %v1489 = vlaneseq
    %v1490 = vshrl.u32 %v1489, 7
    %v1491 = vsub.s32 0, %v1490
    %v1492 = vrot.slane %v1487, %v1491
    %v1493 = vlaneseq
    %v1494 = vshrl.u32 %v1493, 7
    %v1495 = vsub.s32 1, %v1494
    %v1496 = vrot.slane %v1487, %v1495
    %v1497 = vlaneseq
    %v1498 = vshrl.u32 %v1497, 7
    %v1499 = vsub.s32 2, %v1498
    %v1500 = vrot.slane %v1487, %v1499
    %v1501 = vlaneseq
    %v1502 = vshrl.u32 %v1501, 7
    %v1503 = vsub.s32 3, %v1502
    %v1504 = vrot.slane %v1487, %v1503
    %v1541 = vunpack.c.l.b16 %v1455
    %v1542 = vunpack.c.h.b16 %v1455
    %v1543 = vunpack.c.l.b16 %v1456
    %v1544 = vunpack.c.h.b16 %v1456
    %v1545 = vunpack.c.l.b16 %v1457
    %v1546 = vunpack.c.h.b16 %v1457
    %v1547 = vunpack.c.l.b16 %v1458
    %v1548 = vunpack.c.h.b16 %v1458
    %v1549 = vunpack.c.l.b16 %v1459
    %v1550 = vunpack.c.h.b16 %v1459
    %v1551 = vunpack.c.l.b16 %v1460
    %v1552 = vunpack.c.h.b16 %v1460
    %v1553 = vunpack.c.l.b16 %v1461
    %v1554 = vunpack.c.h.b16 %v1461
    %v1555 = vunpack.c.l.b16 %v1462
    %v1556 = vunpack.c.h.b16 %v1462
    %v1557 = vunpack.c.l.b16 %v1463
    %v1558 = vunpack.c.h.b16 %v1463
    %v1559 = vunpack.c.l.b16 %v1464
    %v1560 = vunpack.c.h.b16 %v1464
    %v1561 = vunpack.c.l.b16 %v1465
    %v1562 = vunpack.c.h.b16 %v1465
    %v1563 = vunpack.c.l.b16 %v1466
    %v1564 = vunpack.c.h.b16 %v1466
    %v1565 = vunpack.c.l.b16 %v1467
    %v1566 = vunpack.c.h.b16 %v1467
    %v1567 = vunpack.c.l.b16 %v1468
    %v1568 = vunpack.c.h.b16 %v1468
    %v1569 = vunpack.c.l.b16 %v1469
    %v1570 = vunpack.c.h.b16 %v1469
    %v1571 = vunpack.c.l.b16 %v1470
    %v1572 = vunpack.c.h.b16 %v1470
    %v1573 = vunpack.c.l.b16 %v1471
    %v1574 = vunpack.c.h.b16 %v1471
    %v1575 = vunpack.c.l.b16 %v1472
    %v1576 = vunpack.c.h.b16 %v1472
    %v1577 = vunpack.c.l.b16 %v1473
    %v1578 = vunpack.c.h.b16 %v1473
    %v1579 = vunpack.c.l.b16 %v1474
    %v1580 = vunpack.c.h.b16 %v1474
    %v1581 = vunpack.c.l.b16 %v1475
    %v1582 = vunpack.c.h.b16 %v1475
    %v1583 = vunpack.c.l.b16 %v1476
    %v1584 = vunpack.c.h.b16 %v1476
    %v1585 = vunpack.c.l.b16 %v1477
    %v1586 = vunpack.c.h.b16 %v1477
    %v1587 = vunpack.c.l.b16 %v1478
    %v1588 = vunpack.c.h.b16 %v1478
    %v1589 = vunpack.c.l.b16 %v1479
    %v1590 = vunpack.c.h.b16 %v1479
    %v1591 = vunpack.c.l.b16 %v1480
    %v1592 = vunpack.c.h.b16 %v1480
    %v1593 = vunpack.c.l.b16 %v1481
    %v1594 = vunpack.c.h.b16 %v1481
    %v1595 = vunpack.c.l.b16 %v1482
    %v1596 = vunpack.c.h.b16 %v1482
    %v1597 = vunpack.c.l.b16 %v1483
    %v1598 = vunpack.c.h.b16 %v1483
    %v1599 = vunpack.c.l.b16 %v1484
    %v1600 = vunpack.c.h.b16 %v1484
    %v1601 = vunpack.c.l.b16 %v1485
    %v1602 = vunpack.c.h.b16 %v1485
    %v1603 = vunpack.c.l.b16 %v1486
    %v1604 = vunpack.c.h.b16 %v1486
    %v1605 = vpack.c.b16 %v1545, %v1541
    %v1606 = vpack.c.b16 %v1546, %v1542
    %v1607 = vpack.c.b16 %v1547, %v1543
    %v1608 = vpack.c.b16 %v1548, %v1544
    %v1609 = vpack.c.b16 %v1553, %v1549
    %v1610 = vpack.c.b16 %v1554, %v1550
    %v1611 = vpack.c.b16 %v1555, %v1551
    %v1612 = vpack.c.b16 %v1556, %v1552
    %v1613 = vpack.c.b16 %v1561, %v1557
    %v1614 = vpack.c.b16 %v1562, %v1558
    %v1615 = vpack.c.b16 %v1563, %v1559
    %v1616 = vpack.c.b16 %v1564, %v1560
    %v1617 = vpack.c.b16 %v1569, %v1565
    %v1618 = vpack.c.b16 %v1570, %v1566
    %v1619 = vpack.c.b16 %v1571, %v1567
    %v1620 = vpack.c.b16 %v1572, %v1568
    %v1621 = vpack.c.b16 %v1577, %v1573
    %v1622 = vpack.c.b16 %v1578, %v1574
    %v1623 = vpack.c.b16 %v1579, %v1575
    %v1624 = vpack.c.b16 %v1580, %v1576
    %v1625 = vpack.c.b16 %v1585, %v1581
    %v1626 = vpack.c.b16 %v1586, %v1582
    %v1627 = vpack.c.b16 %v1587, %v1583
    %v1628 = vpack.c.b16 %v1588, %v1584
    %v1629 = vpack.c.b16 %v1593, %v1589
    %v1630 = vpack.c.b16 %v1594, %v1590
    %v1631 = vpack.c.b16 %v1595, %v1591
    %v1632 = vpack.c.b16 %v1596, %v1592
    %v1633 = vpack.c.b16 %v1601, %v1597
    %v1634 = vpack.c.b16 %v1602, %v1598
    %v1635 = vpack.c.b16 %v1603, %v1599
    %v1636 = vpack.c.b16 %v1604, %v1600
    %1669 = vmatprep.subr.bf16.mxu0 %v1606
    %1670 = vmatpush1.bf16.msra.mxu0 %v1605
    %1671 = vmatprep.subr.bf16.mxu0 %v1610
    %1672 = vmatpush1.bf16.msra.mxu0 %v1609
    %1673 = vmatprep.subr.bf16.mxu0 %v1614
    %1674 = vmatpush1.bf16.msra.mxu0 %v1613
    %1675 = vmatprep.subr.bf16.mxu0 %v1618
    %1676 = vmatpush1.bf16.msra.mxu0 %v1617
    %1677 = vmatprep.subr.bf16.mxu0 %v1622
    %1678 = vmatpush1.bf16.msra.mxu0 %v1621
    %1679 = vmatprep.subr.bf16.mxu0 %v1626
    %1680 = vmatpush1.bf16.msra.mxu0 %v1625
    %1681 = vmatprep.subr.bf16.mxu0 %v1630
    %1682 = vmatpush1.bf16.msra.mxu0 %v1629
    %1683 = vmatprep.subr.bf16.mxu0 %v1634
    %1684 = vmatpush1.bf16.msra.mxu0 %v1633
    %1685 = vmatprep.subr.bf16.mxu0 0
    %1686 = vmatpush1.bf16.msra.mxu0 0
    %1687 = vmatprep.subr.bf16.mxu0 0
    %1688 = vmatpush1.bf16.msra.mxu0 0
    %1689 = vmatprep.subr.bf16.mxu0 0
    %1690 = vmatpush1.bf16.msra.mxu0 0
    %1691 = vmatprep.subr.bf16.mxu0 0
    %1692 = vmatpush1.bf16.msra.mxu0 0
    %1693 = vmatprep.subr.bf16.mxu0 0
    %1694 = vmatpush1.bf16.msra.mxu0 0
    %1695 = vmatprep.subr.bf16.mxu0 0
    %1696 = vmatpush1.bf16.msra.mxu0 0
    %1697 = vmatprep.subr.bf16.mxu0 0
    %1698 = vmatpush1.bf16.msra.mxu0 0
    %1699 = vmatprep.subr.bf16.mxu0 0
    %1700 = vmatpush1.bf16.msra.mxu0 0
    %1701 = vmatprep.mubr.bf16.mxu0 0
    %1702 = vmatmul.mubr.bf16.gmra.mrb[0].mxu0 %v1453
    %v1703 = vpop.f32.mrb[0].mxu0
    %v1704 = vadd.f32 %v1492, %v1703
    %v1705 = vpop.f32.mrb[0].mxu0
    %v1706 = vadd.f32 %v1496, %v1705
    %v1707 = vpop.f32.mrb[0].mxu0
    %v1708 = vadd.f32 %v1492, %v1707
    %v1709 = vpop.f32.mrb[0].mxu0
    %v1710 = vadd.f32 %v1496, %v1709
    %1711 = vmatprep.mubr.bf16.mxu0 0
    %1712 = vmatmul.mubr.bf16.gmra.mrb[0].mxu0 %v1454
    %v1713 = vpop.f32.mrb[0].mxu0
    %v1714 = vadd.f32 %v1492, %v1713
    %v1715 = vpop.f32.mrb[0].mxu0
    %v1716 = vadd.f32 %v1496, %v1715
    %v1717 = vpop.f32.mrb[0].mxu0
    %v1718 = vpop.f32.mrb[0].mxu0
    %1719 = vdwg.mxu0
    %1720 = vmatprep.subr.bf16.mxu0 %v1608
    %1721 = vmatpush1.bf16.msra.mxu0 %v1607
    %1722 = vmatprep.subr.bf16.mxu0 %v1612
    %1723 = vmatpush1.bf16.msra.mxu0 %v1611
    %1724 = vmatprep.subr.bf16.mxu0 %v1616
    %1725 = vmatpush1.bf16.msra.mxu0 %v1615
    %1726 = vmatprep.subr.bf16.mxu0 %v1620
    %1727 = vmatpush1.bf16.msra.mxu0 %v1619
    %1728 = vmatprep.subr.bf16.mxu0 %v1624
    %1729 = vmatpush1.bf16.msra.mxu0 %v1623
    %1730 = vmatprep.subr.bf16.mxu0 %v1628
    %1731 = vmatpush1.bf16.msra.mxu0 %v1627
    %1732 = vmatprep.subr.bf16.mxu0 %v1632
    %1733 = vmatpush1.bf16.msra.mxu0 %v1631
    %1734 = vmatprep.subr.bf16.mxu0 %v1636
    %1735 = vmatpush1.bf16.msra.mxu0 %v1635
    %1736 = vmatprep.subr.bf16.mxu0 0
    %1737 = vmatpush1.bf16.msra.mxu0 0
    %1738 = vmatprep.subr.bf16.mxu0 0
    %1739 = vmatpush1.bf16.msra.mxu0 0
    %1740 = vmatprep.subr.bf16.mxu0 0
    %1741 = vmatpush1.bf16.msra.mxu0 0
    %1742 = vmatprep.subr.bf16.mxu0 0
    %1743 = vmatpush1.bf16.msra.mxu0 0
    %1744 = vmatprep.subr.bf16.mxu0 0
    %1745 = vmatpush1.bf16.msra.mxu0 0
    %1746 = vmatprep.subr.bf16.mxu0 0
    %1747 = vmatpush1.bf16.msra.mxu0 0
    %1748 = vmatprep.subr.bf16.mxu0 0
    %1749 = vmatpush1.bf16.msra.mxu0 0
    %1750 = vmatprep.subr.bf16.mxu0 0
    %1751 = vmatpush1.bf16.msra.mxu0 0
    %1752 = vmatprep.mubr.bf16.mxu0 0
    %1753 = vmatmul.mubr.bf16.gmra.mrb[0].mxu0 %v1453
    %v1754 = vpop.f32.mrb[0].mxu0
    %v1755 = vadd.f32 %v1500, %v1754
    %v1756 = vpop.f32.mrb[0].mxu0
    %v1757 = vadd.f32 %v1504, %v1756
    %v1758 = vpop.f32.mrb[0].mxu0
    %v1759 = vadd.f32 %v1500, %v1758
    %v1760 = vpop.f32.mrb[0].mxu0
    %v1761 = vadd.f32 %v1504, %v1760
    %1762 = vmatprep.mubr.bf16.mxu0 0
    %1763 = vmatmul.mubr.bf16.gmra.mrb[0].mxu0 %v1454
    %v1764 = vpop.f32.mrb[0].mxu0
    %v1765 = vadd.f32 %v1500, %v1764
    %v1766 = vpop.f32.mrb[0].mxu0
    %v1767 = vadd.f32 %v1504, %v1766
    %v1768 = vpop.f32.mrb[0].mxu0
    %v1769 = vpop.f32.mrb[0].mxu0
    %1770 = vdwg.mxu0
    %v1771 = vmax.f32 %v1704, 0.0
    %v1772 = vmax.f32 %v1706, 0.0
    %v1773 = vmax.f32 %v1755, 0.0
    %v1774 = vmax.f32 %v1757, 0.0
    %v1775 = vmax.f32 %v1708, 0.0
    %v1776 = vmax.f32 %v1710, 0.0
    %v1777 = vmax.f32 %v1759, 0.0
    %v1778 = vmax.f32 %v1761, 0.0
    %v1779 = vmax.f32 %v1714, 0.0
    %v1780 = vmax.f32 %v1716, 0.0
    %v1781 = vmax.f32 %v1765, 0.0
    %v1782 = vmax.f32 %v1767, 0.0
    %v1783 = vpack.c.bf16 %v1775, %v1771
    %v1784 = vpack.c.bf16 %v1776, %v1772
    %v1785 = vpack.c.bf16 %v1777, %v1773
    %v1786 = vpack.c.bf16 %v1778, %v1774
    %v1787 = vpack.c.bf16 %v1779, %v1779
    %v1788 = vpack.c.bf16 %v1780, %v1780
    %v1789 = vpack.c.bf16 %v1781, %v1781
    %v1790 = vpack.c.bf16 %v1782, %v1782
    %v1791 = vld [vmem:[%s12] sm:$0xf]
    %v1792 = vld [vmem:[%s12 + $0x4] sm:$0xf]
    %v1793 = vld [vmem:[%s12 + $0x8] sm:$0xf]
    %v1794 = vld [vmem:[%s12 + $0xc] sm:$0xf]
    %v1795 = vld [vmem:[%s12 + $0x10] sm:$0xf]
    %v1796 = vld [vmem:[%s12 + $0x14] sm:$0xf]
    %v1797 = vld [vmem:[%s12 + $0x18] sm:$0xf]
    %v1798 = vld [vmem:[%s12 + $0x1c] sm:$0xf]
    %v1799 = vld [vmem:[%s12 + $0x20] sm:$0xf]
    %v1800 = vld [vmem:[%s12 + $0x24] sm:$0xf]
    %v1801 = vld [vmem:[%s12 + $0x28] sm:$0xf]
    %v1802 = vld [vmem:[%s12 + $0x2c] sm:$0xf]
    %v1803 = vld [vmem:[%s12 + $0x30] sm:$0xf]
    %v1804 = vld [vmem:[%s12 + $0x34] sm:$0xf]
    %v1805 = vld [vmem:[%s12 + $0x38] sm:$0xf]
    %v1806 = vld [vmem:[%s12 + $0x3c] sm:$0xf]
    %v1807 = vld [vmem:[%s12 + $0x40] sm:$0xf]
    %v1808 = vld [vmem:[%s12 + $0x44] sm:$0xf]
    %v1809 = vld [vmem:[%s12 + $0x48] sm:$0xf]
    %v1810 = vld [vmem:[%s12 + $0x4c] sm:$0xf]
    %v1811 = vld [vmem:[%s12 + $0x50] sm:$0xf]
    %v1812 = vld [vmem:[%s12 + $0x54] sm:$0xf]
    %v1813 = vld [vmem:[%s12 + $0x58] sm:$0xf]
    %v1814 = vld [vmem:[%s12 + $0x5c] sm:$0xf]
    %v1815 = vld [vmem:[%s12 + $0x60] sm:$0xf]
    %v1816 = vld [vmem:[%s12 + $0x64] sm:$0xf]
    %v1817 = vld [vmem:[%s12 + $0x68] sm:$0xf]
    %v1818 = vld [vmem:[%s12 + $0x6c] sm:$0xf]
    %v1819 = vld [vmem:[%s12 + $0x70] sm:$0xf]
    %v1820 = vld [vmem:[%s12 + $0x74] sm:$0xf]
    %v1821 = vld [vmem:[%s12 + $0x78] sm:$0xf]
    %v1822 = vld [vmem:[%s12 + $0x7c] sm:$0xf]
    %v1823 = vld [vmem:[%s12 + $0x80] sm:$0xf]
    %v1824 = vld [vmem:[%s12 + $0x84] sm:$0xf]
    %v1825 = vld [vmem:[%s12 + $0x88] sm:$0xf]
    %v1826 = vld [vmem:[%s12 + $0x8c] sm:$0xf]
    %v1827 = vld [vmem:[%s12 + $0x90] sm:$0xf]
    %v1828 = vld [vmem:[%s12 + $0x94] sm:$0xf]
    %v1829 = vld [vmem:[%s12 + $0x98] sm:$0xf]
    %v1830 = vld [vmem:[%s12 + $0x9c] sm:$0xf]
    %v1831 = vld [vmem:[%s12 + $0xa0] sm:$0xf]
    %v1832 = vld [vmem:[%s12 + $0xa4] sm:$0xf]
    %v1833 = vld [vmem:[%s12 + $0xa8] sm:$0xf]
    %v1834 = vld [vmem:[%s12 + $0xac] sm:$0xf]
    %v1835 = vld [vmem:[%s12 + $0xb0] sm:$0xf]
    %v1836 = vld [vmem:[%s12 + $0xb4] sm:$0xf]
    %v1837 = vld [vmem:[%s12 + $0xb8] sm:$0xf]
    %v1838 = vld [vmem:[%s12 + $0xbc] sm:$0xf]
    %v1839 = vld [vmem:[%s12 + $0xc0] sm:$0xf]
    %v1840 = vld [vmem:[%s12 + $0xc4] sm:$0xf]
    %v1841 = vld [vmem:[%s12 + $0xc8] sm:$0xf]
    %v1842 = vld [vmem:[%s12 + $0xcc] sm:$0xf]
    %v1843 = vld [vmem:[%s12 + $0xd0] sm:$0xf]
    %v1844 = vld [vmem:[%s12 + $0xd4] sm:$0xf]
    %v1845 = vld [vmem:[%s12 + $0xd8] sm:$0xf]
    %v1846 = vld [vmem:[%s12 + $0xdc] sm:$0xf]
    %v1847 = vld [vmem:[%s12 + $0xe0] sm:$0xf]
    %v1848 = vld [vmem:[%s12 + $0xe4] sm:$0xf]
    %v1849 = vld [vmem:[%s12 + $0xe8] sm:$0xf]
    %v1850 = vld [vmem:[%s12 + $0xec] sm:$0xf]
    %v1851 = vld [vmem:[%s12 + $0xf0] sm:$0xf]
    %v1852 = vld [vmem:[%s12 + $0xf4] sm:$0xf]
    %v1853 = vld [vmem:[%s12 + $0xf8] sm:$0xf]
    %v1854 = vld [vmem:[%s12 + $0xfc] sm:$0xf]
    %v1855 = vld [vmem:[%s13] sm:$0x1]
    %v1857 = vlaneseq
    %v1858 = vshrl.u32 %v1857, 7
    %v1859 = vsub.s32 0, %v1858
    %v1860 = vrot.slane %v1855, %v1859
    %v1926 = vunpack.c.l.b16 %v1791
    %v1927 = vunpack.c.l.b16 %v1792
    %v1928 = vunpack.c.l.b16 %v1793
    %v1929 = vunpack.c.l.b16 %v1794
    %v1930 = vunpack.c.l.b16 %v1795
    %v1931 = vunpack.c.l.b16 %v1796
    %v1932 = vunpack.c.l.b16 %v1797
    %v1933 = vunpack.c.l.b16 %v1798
    %v1934 = vunpack.c.l.b16 %v1799
    %v1935 = vunpack.c.l.b16 %v1800
    %v1936 = vunpack.c.l.b16 %v1801
    %v1937 = vunpack.c.l.b16 %v1802
    %v1938 = vunpack.c.l.b16 %v1803
    %v1939 = vunpack.c.l.b16 %v1804
    %v1940 = vunpack.c.l.b16 %v1805
    %v1941 = vunpack.c.l.b16 %v1806
    %v1942 = vunpack.c.l.b16 %v1807
    %v1943 = vunpack.c.l.b16 %v1808
    %v1944 = vunpack.c.l.b16 %v1809
    %v1945 = vunpack.c.l.b16 %v1810
    %v1946 = vunpack.c.l.b16 %v1811
    %v1947 = vunpack.c.l.b16 %v1812
    %v1948 = vunpack.c.l.b16 %v1813
    %v1949 = vunpack.c.l.b16 %v1814
    %v1950 = vunpack.c.l.b16 %v1815
    %v1951 = vunpack.c.l.b16 %v1816
    %v1952 = vunpack.c.l.b16 %v1817
    %v1953 = vunpack.c.l.b16 %v1818
    %v1954 = vunpack.c.l.b16 %v1819
    %v1955 = vunpack.c.l.b16 %v1820
    %v1956 = vunpack.c.l.b16 %v1821
    %v1957 = vunpack.c.l.b16 %v1822
    %v1958 = vunpack.c.l.b16 %v1823
    %v1959 = vunpack.c.l.b16 %v1824
    %v1960 = vunpack.c.l.b16 %v1825
    %v1961 = vunpack.c.l.b16 %v1826
    %v1962 = vunpack.c.l.b16 %v1827
    %v1963 = vunpack.c.l.b16 %v1828
    %v1964 = vunpack.c.l.b16 %v1829
    %v1965 = vunpack.c.l.b16 %v1830
    %v1966 = vunpack.c.l.b16 %v1831
    %v1967 = vunpack.c.l.b16 %v1832
    %v1968 = vunpack.c.l.b16 %v1833
    %v1969 = vunpack.c.l.b16 %v1834
    %v1970 = vunpack.c.l.b16 %v1835
    %v1971 = vunpack.c.l.b16 %v1836
    %v1972 = vunpack.c.l.b16 %v1837
    %v1973 = vunpack.c.l.b16 %v1838
    %v1974 = vunpack.c.l.b16 %v1839
    %v1975 = vunpack.c.l.b16 %v1840
    %v1976 = vunpack.c.l.b16 %v1841
    %v1977 = vunpack.c.l.b16 %v1842
    %v1978 = vunpack.c.l.b16 %v1843
    %v1979 = vunpack.c.l.b16 %v1844
    %v1980 = vunpack.c.l.b16 %v1845
    %v1981 = vunpack.c.l.b16 %v1846
    %v1982 = vunpack.c.l.b16 %v1847
    %v1983 = vunpack.c.l.b16 %v1848
    %v1984 = vunpack.c.l.b16 %v1849
    %v1985 = vunpack.c.l.b16 %v1850
    %v1986 = vunpack.c.l.b16 %v1851
    %v1987 = vunpack.c.l.b16 %v1852
    %v1988 = vunpack.c.l.b16 %v1853
    %v1989 = vunpack.c.l.b16 %v1854
    %v1990 = vpack.c.b16 %v1927, %v1926
    %v1991 = vpack.c.b16 %v1929, %v1928
    %v1992 = vpack.c.b16 %v1931, %v1930
    %v1993 = vpack.c.b16 %v1933, %v1932
    %v1994 = vpack.c.b16 %v1935, %v1934
    %v1995 = vpack.c.b16 %v1937, %v1936
    %v1996 = vpack.c.b16 %v1939, %v1938
    %v1997 = vpack.c.b16 %v1941, %v1940
    %v1998 = vpack.c.b16 %v1943, %v1942
    %v1999 = vpack.c.b16 %v1945, %v1944
    %v2000 = vpack.c.b16 %v1947, %v1946
    %v2001 = vpack.c.b16 %v1949, %v1948
    %v2002 = vpack.c.b16 %v1951, %v1950
    %v2003 = vpack.c.b16 %v1953, %v1952
    %v2004 = vpack.c.b16 %v1955, %v1954
    %v2005 = vpack.c.b16 %v1957, %v1956
    %v2006 = vpack.c.b16 %v1959, %v1958
    %v2007 = vpack.c.b16 %v1961, %v1960
    %v2008 = vpack.c.b16 %v1963, %v1962
    %v2009 = vpack.c.b16 %v1965, %v1964
    %v2010 = vpack.c.b16 %v1967, %v1966
    %v2011 = vpack.c.b16 %v1969, %v1968
    %v2012 = vpack.c.b16 %v1971, %v1970
    %v2013 = vpack.c.b16 %v1973, %v1972
    %v2014 = vpack.c.b16 %v1975, %v1974
    %v2015 = vpack.c.b16 %v1977, %v1976
    %v2016 = vpack.c.b16 %v1979, %v1978
    %v2017 = vpack.c.b16 %v1981, %v1980
    %v2018 = vpack.c.b16 %v1983, %v1982
    %v2019 = vpack.c.b16 %v1985, %v1984
    %v2020 = vpack.c.b16 %v1987, %v1986
    %v2021 = vpack.c.b16 %v1989, %v1988
    %2054 = vmatprep.subr.bf16.mxu0 0
    %2055 = vmatpush1.bf16.msra.mxu0 %v1990
    %2056 = vmatprep.subr.bf16.mxu0 0
    %2057 = vmatpush1.bf16.msra.mxu0 %v1991
    %2058 = vmatprep.subr.bf16.mxu0 0
    %2059 = vmatpush1.bf16.msra.mxu0 %v1992
    %2060 = vmatprep.subr.bf16.mxu0 0
    %2061 = vmatpush1.bf16.msra.mxu0 %v1993
    %2062 = vmatprep.subr.bf16.mxu0 0
    %2063 = vmatpush1.bf16.msra.mxu0 %v1994
    %2064 = vmatprep.subr.bf16.mxu0 0
    %2065 = vmatpush1.bf16.msra.mxu0 %v1995
    %2066 = vmatprep.subr.bf16.mxu0 0
    %2067 = vmatpush1.bf16.msra.mxu0 %v1996
    %2068 = vmatprep.subr.bf16.mxu0 0
    %2069 = vmatpush1.bf16.msra.mxu0 %v1997
    %2070 = vmatprep.subr.bf16.mxu0 0
    %2071 = vmatpush1.bf16.msra.mxu0 %v1998
    %2072 = vmatprep.subr.bf16.mxu0 0
    %2073 = vmatpush1.bf16.msra.mxu0 %v1999
    %2074 = vmatprep.subr.bf16.mxu0 0
    %2075 = vmatpush1.bf16.msra.mxu0 %v2000
    %2076 = vmatprep.subr.bf16.mxu0 0
    %2077 = vmatpush1.bf16.msra.mxu0 %v2001
    %2078 = vmatprep.subr.bf16.mxu0 0
    %2079 = vmatpush1.bf16.msra.mxu0 %v2002
    %2080 = vmatprep.subr.bf16.mxu0 0
    %2081 = vmatpush1.bf16.msra.mxu0 %v2003
    %2082 = vmatprep.subr.bf16.mxu0 0
    %2083 = vmatpush1.bf16.msra.mxu0 %v2004
    %2084 = vmatprep.subr.bf16.mxu0 0
    %2085 = vmatpush1.bf16.msra.mxu0 %v2005
    %2086 = vmatprep.mubr.bf16.mxu0 %v1784
    %2087 = vmatmul.mubr.bf16.gmra.mrb[0].mxu0 %v1783
    %v2088 = vpop.f32.mrb[0].mxu0
    %v2089 = vadd.f32 %v1860, %v2088
    %v2090 = vpop.f32.mrb[0].mxu0
    %v2091 = vpop.f32.mrb[0].mxu0
    %v2092 = vadd.f32 %v1860, %v2091
    %v2093 = vpop.f32.mrb[0].mxu0
    %2094 = vmatprep.mubr.bf16.mxu0 %v1788
    %2095 = vmatmul.mubr.bf16.gmra.mrb[0].mxu0 %v1787
    %v2096 = vpop.f32.mrb[0].mxu0
    %v2097 = vadd.f32 %v1860, %v2096
    %v2098 = vpop.f32.mrb[0].mxu0
    %v2099 = vpop.f32.mrb[0].mxu0
    %v2100 = vpop.f32.mrb[0].mxu0
    %2101 = vdwg.mxu0
    %2102 = vmatprep.subr.bf16.mxu0 0
    %2103 = vmatpush1.bf16.msra.mxu0 %v2006
    %2104 = vmatprep.subr.bf16.mxu0 0
    %2105 = vmatpush1.bf16.msra.mxu0 %v2007
    %2106 = vmatprep.subr.bf16.mxu0 0
    %2107 = vmatpush1.bf16.msra.mxu0 %v2008
    %2108 = vmatprep.subr.bf16.mxu0 0
    %2109 = vmatpush1.bf16.msra.mxu0 %v2009
    %2110 = vmatprep.subr.bf16.mxu0 0
    %2111 = vmatpush1.bf16.msra.mxu0 %v2010
    %2112 = vmatprep.subr.bf16.mxu0 0
    %2113 = vmatpush1.bf16.msra.mxu0 %v2011
    %2114 = vmatprep.subr.bf16.mxu0 0
    %2115 = vmatpush1.bf16.msra.mxu0 %v2012
    %2116 = vmatprep.subr.bf16.mxu0 0
    %2117 = vmatpush1.bf16.msra.mxu0 %v2013
    %2118 = vmatprep.subr.bf16.mxu0 0
    %2119 = vmatpush1.bf16.msra.mxu0 %v2014
    %2120 = vmatprep.subr.bf16.mxu0 0
    %2121 = vmatpush1.bf16.msra.mxu0 %v2015
    %2122 = vmatprep.subr.bf16.mxu0 0
    %2123 = vmatpush1.bf16.msra.mxu0 %v2016
    %2124 = vmatprep.subr.bf16.mxu0 0
    %2125 = vmatpush1.bf16.msra.mxu0 %v2017
    %2126 = vmatprep.subr.bf16.mxu0 0
    %2127 = vmatpush1.bf16.msra.mxu0 %v2018
    %2128 = vmatprep.subr.bf16.mxu0 0
    %2129 = vmatpush1.bf16.msra.mxu0 %v2019
    %2130 = vmatprep.subr.bf16.mxu0 0
    %2131 = vmatpush1.bf16.msra.mxu0 %v2020
    %2132 = vmatprep.subr.bf16.mxu0 0
    %2133 = vmatpush1.bf16.msra.mxu0 %v2021
    %2134 = vmatprep.mubr.bf16.mxu0 %v1786
    %2135 = vmatmul.mubr.bf16.gmra.mrb[0].mxu0 %v1785
    %v2136 = vpop.f32.mrb[0].mxu0
    %v2137 = vadd.f32 %v2089, %v2136
    %v2138 = vpop.f32.mrb[0].mxu0
    %v2139 = vpop.f32.mrb[0].mxu0
    %v2140 = vadd.f32 %v2092, %v2139
    %v2141 = vpop.f32.mrb[0].mxu0
    %2142 = vmatprep.mubr.bf16.mxu0 %v1790
    %2143 = vmatmul.mubr.bf16.gmra.mrb[0].mxu0 %v1789
    %v2144 = vpop.f32.mrb[0].mxu0
    %v2145 = vadd.f32 %v2097, %v2144
    %v2146 = vpop.f32.mrb[0].mxu0
    %v2147 = vpop.f32.mrb[0].mxu0
    %v2148 = vpop.f32.mrb[0].mxu0
    %2149 = vdwg.mxu0
    %v2150 = vadd.f32 %v1450, %v2137
    %v2151 = vadd.f32 %v1451, %v2140
    %v2152 = vadd.f32 %v1452, %v2145
    %v2153 = vld [vmem:[%s16] sm:$0x1]
    %v2154 = vld [vmem:[%s17] sm:$0x1]
    %2155 = vadd.xlane.f32.xlu0 %v2150
    %v2156 = vpop.xlane.xlu0 %2155
    %2157 = vadd.xlane.f32.xlu0 %v2151
    %v2158 = vpop.xlane.xlu0 %2157
    %v2159 = vsel %vm1402, %v2152, 0.0
    %2160 = vadd.xlane.f32.xlu0 %v2159
    %v2161 = vpop.xlane.xlu0 %2160
    %v2162 = vmul.f32 %v2156, %v1406
    %v2163 = vmul.f32 %v2158, %v1406
    %v2164 = vmul.f32 %v2161, %v1406
    %v2165 = vsub.f32 %v2150, %v2162
    %v2166 = vsub.f32 %v2151, %v2163
    %v2167 = vsub.f32 %v2152, %v2164
    %v2168 = vmul.f32 %v2165, %v2165
    %v2169 = vmul.f32 %v2166, %v2166
    %v2170 = vmul.f32 %v2167, %v2167
    %2171 = vadd.xlane.f32.xlu0 %v2168
    %v2172 = vpop.xlane.xlu0 %2171
    %2173 = vadd.xlane.f32.xlu0 %v2169
    %v2174 = vpop.xlane.xlu0 %2173
    %v2175 = vsel %vm1402, %v2170, 0.0
    %2176 = vadd.xlane.f32.xlu0 %v2175
    %v2177 = vpop.xlane.xlu0 %2176
    %v2178 = vmul.f32 %v2172, %v1406
    %v2179 = vmul.f32 %v2174, %v1406
    %v2180 = vmul.f32 %v2177, %v1406
    %v2181 = vadd.f32 %v2178, 1e-05
    %v2182 = vadd.f32 %v2179, 1e-05
    %v2183 = vadd.f32 %v2180, 1e-05
    %v2184 = vrsqrt.pop %v2181
    %v2185 = vrsqrt.pop %v2182
    %v2186 = vrsqrt.pop %v2183
    %v2187 = vmul.f32 %v2165, %v2184
    %v2188 = vmul.f32 %v2166, %v2185
    %v2189 = vmul.f32 %v2167, %v2186
    %v2191 = vlaneseq
    %v2192 = vshrl.u32 %v2191, 7
    %v2193 = vsub.s32 0, %v2192
    %v2194 = vrot.slane %v2153, %v2193
    %v2196 = vmul.f32 %v2187, %v2194
    %v2197 = vmul.f32 %v2188, %v2194
    %v2198 = vmul.f32 %v2189, %v2194
    %v2200 = vlaneseq
    %v2201 = vshrl.u32 %v2200, 7
    %v2202 = vsub.s32 0, %v2201
    %v2203 = vrot.slane %v2154, %v2202
    %v2205 = vadd.f32 %v2196, %v2203
    %v2206 = vadd.f32 %v2197, %v2203
    %v2207 = vadd.f32 %v2198, %v2203
    %v2208 = vpack.c.bf16 %v2206, %v2205
    %v2209 = vpack.c.bf16 %v2207, %v2207
    %s2210 = scalar_lea.vmem %s6, 192
    %v2211 = vld [vmem:[%s2210] sm:$0xff]
    %v2212 = vld [vmem:[%s2210 + $0x8] sm:$0xf]
    %v2213 = vld [vmem:[%s2210 + $0xc] sm:$0xff]
    %v2214 = vld [vmem:[%s2210 + $0x14] sm:$0xf]
    %v2215 = vld [vmem:[%s2210 + $0x18] sm:$0xff]
    %v2216 = vld [vmem:[%s2210 + $0x20] sm:$0xf]
    %v2217 = vld [vmem:[%s2210 + $0x24] sm:$0xff]
    %v2218 = vld [vmem:[%s2210 + $0x2c] sm:$0xf]
    %v2219 = vld [vmem:[%s2210 + $0x30] sm:$0xff]
    %v2220 = vld [vmem:[%s2210 + $0x38] sm:$0xf]
    %v2221 = vld [vmem:[%s2210 + $0x3c] sm:$0xff]
    %v2222 = vld [vmem:[%s2210 + $0x44] sm:$0xf]
    %v2223 = vld [vmem:[%s2210 + $0x48] sm:$0xff]
    %v2224 = vld [vmem:[%s2210 + $0x50] sm:$0xf]
    %v2225 = vld [vmem:[%s2210 + $0x54] sm:$0xff]
    %v2226 = vld [vmem:[%s2210 + $0x5c] sm:$0xf]
    %v2227 = vld [vmem:[%s2210 + $0x60] sm:$0xff]
    %v2228 = vld [vmem:[%s2210 + $0x68] sm:$0xf]
    %v2229 = vld [vmem:[%s2210 + $0x6c] sm:$0xff]
    %v2230 = vld [vmem:[%s2210 + $0x74] sm:$0xf]
    %v2231 = vld [vmem:[%s2210 + $0x78] sm:$0xff]
    %v2232 = vld [vmem:[%s2210 + $0x80] sm:$0xf]
    %v2233 = vld [vmem:[%s2210 + $0x84] sm:$0xff]
    %v2234 = vld [vmem:[%s2210 + $0x8c] sm:$0xf]
    %v2235 = vld [vmem:[%s2210 + $0x90] sm:$0xff]
    %v2236 = vld [vmem:[%s2210 + $0x98] sm:$0xf]
    %v2237 = vld [vmem:[%s2210 + $0x9c] sm:$0xff]
    %v2238 = vld [vmem:[%s2210 + $0xa4] sm:$0xf]
    %v2239 = vld [vmem:[%s2210 + $0xa8] sm:$0xff]
    %v2240 = vld [vmem:[%s2210 + $0xb0] sm:$0xf]
    %v2241 = vld [vmem:[%s2210 + $0xb4] sm:$0xff]
    %v2242 = vld [vmem:[%s2210 + $0xbc] sm:$0xf]
    %s2243 = scalar_lea.vmem %s7, 3
    %v2244 = vld [vmem:[%s2243] sm:$0x7]
    %v2246 = vlaneseq
    %v2247 = vshrl.u32 %v2246, 7
    %v2248 = vsub.s32 0, %v2247
    %v2249 = vrot.slane %v2244, %v2248
    %v2250 = vlaneseq
    %v2251 = vshrl.u32 %v2250, 7
    %v2252 = vsub.s32 1, %v2251
    %v2253 = vrot.slane %v2244, %v2252
    %v2254 = vlaneseq
    %v2255 = vshrl.u32 %v2254, 7
    %v2256 = vsub.s32 2, %v2255
    %v2257 = vrot.slane %v2244, %v2256
    %v2293 = vunpack.c.l.b16 %v2211
    %v2294 = vunpack.c.h.b16 %v2211
    %v2295 = vunpack.c.l.b16 %v2212
    %v2296 = vunpack.c.l.b16 %v2213
    %v2297 = vunpack.c.h.b16 %v2213
    %v2298 = vunpack.c.l.b16 %v2214
    %v2299 = vunpack.c.l.b16 %v2215
    %v2300 = vunpack.c.h.b16 %v2215
    %v2301 = vunpack.c.l.b16 %v2216
    %v2302 = vunpack.c.l.b16 %v2217
    %v2303 = vunpack.c.h.b16 %v2217
    %v2304 = vunpack.c.l.b16 %v2218
    %v2305 = vunpack.c.l.b16 %v2219
    %v2306 = vunpack.c.h.b16 %v2219
    %v2307 = vunpack.c.l.b16 %v2220
    %v2308 = vunpack.c.l.b16 %v2221
    %v2309 = vunpack.c.h.b16 %v2221
    %v2310 = vunpack.c.l.b16 %v2222
    %v2311 = vunpack.c.l.b16 %v2223
    %v2312 = vunpack.c.h.b16 %v2223
    %v2313 = vunpack.c.l.b16 %v2224
    %v2314 = vunpack.c.l.b16 %v2225
    %v2315 = vunpack.c.h.b16 %v2225
    %v2316 = vunpack.c.l.b16 %v2226
    %v2317 = vunpack.c.l.b16 %v2227
    %v2318 = vunpack.c.h.b16 %v2227
    %v2319 = vunpack.c.l.b16 %v2228
    %v2320 = vunpack.c.l.b16 %v2229
    %v2321 = vunpack.c.h.b16 %v2229
    %v2322 = vunpack.c.l.b16 %v2230
    %v2323 = vunpack.c.l.b16 %v2231
    %v2324 = vunpack.c.h.b16 %v2231
    %v2325 = vunpack.c.l.b16 %v2232
    %v2326 = vunpack.c.l.b16 %v2233
    %v2327 = vunpack.c.h.b16 %v2233
    %v2328 = vunpack.c.l.b16 %v2234
    %v2329 = vunpack.c.l.b16 %v2235
    %v2330 = vunpack.c.h.b16 %v2235
    %v2331 = vunpack.c.l.b16 %v2236
    %v2332 = vunpack.c.l.b16 %v2237
    %v2333 = vunpack.c.h.b16 %v2237
    %v2334 = vunpack.c.l.b16 %v2238
    %v2335 = vunpack.c.l.b16 %v2239
    %v2336 = vunpack.c.h.b16 %v2239
    %v2337 = vunpack.c.l.b16 %v2240
    %v2338 = vunpack.c.l.b16 %v2241
    %v2339 = vunpack.c.h.b16 %v2241
    %v2340 = vunpack.c.l.b16 %v2242
    %v2341 = vpack.c.b16 %v2296, %v2293
    %v2342 = vpack.c.b16 %v2297, %v2294
    %v2343 = vpack.c.b16 %v2298, %v2295
    %v2344 = vpack.c.b16 %v2302, %v2299
    %v2345 = vpack.c.b16 %v2303, %v2300
    %v2346 = vpack.c.b16 %v2304, %v2301
    %v2347 = vpack.c.b16 %v2308, %v2305
    %v2348 = vpack.c.b16 %v2309, %v2306
    %v2349 = vpack.c.b16 %v2310, %v2307
    %v2350 = vpack.c.b16 %v2314, %v2311
    %v2351 = vpack.c.b16 %v2315, %v2312
    %v2352 = vpack.c.b16 %v2316, %v2313
    %v2353 = vpack.c.b16 %v2320, %v2317
    %v2354 = vpack.c.b16 %v2321, %v2318
    %v2355 = vpack.c.b16 %v2322, %v2319
    %v2356 = vpack.c.b16 %v2326, %v2323
    %v2357 = vpack.c.b16 %v2327, %v2324
    %v2358 = vpack.c.b16 %v2328, %v2325
    %v2359 = vpack.c.b16 %v2332, %v2329
    %v2360 = vpack.c.b16 %v2333, %v2330
    %v2361 = vpack.c.b16 %v2334, %v2331
    %v2362 = vpack.c.b16 %v2338, %v2335
    %v2363 = vpack.c.b16 %v2339, %v2336
    %v2364 = vpack.c.b16 %v2340, %v2337
    %2389 = vmatprep.subr.bf16.mxu0 %v2342
    %2390 = vmatpush1.bf16.msra.mxu0 %v2341
    %2391 = vmatprep.subr.bf16.mxu0 %v2345
    %2392 = vmatpush1.bf16.msra.mxu0 %v2344
    %2393 = vmatprep.subr.bf16.mxu0 %v2348
    %2394 = vmatpush1.bf16.msra.mxu0 %v2347
    %2395 = vmatprep.subr.bf16.mxu0 %v2351
    %2396 = vmatpush1.bf16.msra.mxu0 %v2350
    %2397 = vmatprep.subr.bf16.mxu0 %v2354
    %2398 = vmatpush1.bf16.msra.mxu0 %v2353
    %2399 = vmatprep.subr.bf16.mxu0 %v2357
    %2400 = vmatpush1.bf16.msra.mxu0 %v2356
    %2401 = vmatprep.subr.bf16.mxu0 %v2360
    %2402 = vmatpush1.bf16.msra.mxu0 %v2359
    %2403 = vmatprep.subr.bf16.mxu0 %v2363
    %2404 = vmatpush1.bf16.msra.mxu0 %v2362
    %2405 = vmatprep.subr.bf16.mxu0 0
    %2406 = vmatpush1.bf16.msra.mxu0 0
    %2407 = vmatprep.subr.bf16.mxu0 0
    %2408 = vmatpush1.bf16.msra.mxu0 0
    %2409 = vmatprep.subr.bf16.mxu0 0
    %2410 = vmatpush1.bf16.msra.mxu0 0
    %2411 = vmatprep.subr.bf16.mxu0 0
    %2412 = vmatpush1.bf16.msra.mxu0 0
    %2413 = vmatprep.subr.bf16.mxu0 0
    %2414 = vmatpush1.bf16.msra.mxu0 0
    %2415 = vmatprep.subr.bf16.mxu0 0
    %2416 = vmatpush1.bf16.msra.mxu0 0
    %2417 = vmatprep.subr.bf16.mxu0 0
    %2418 = vmatpush1.bf16.msra.mxu0 0
    %2419 = vmatprep.subr.bf16.mxu0 0
    %2420 = vmatpush1.bf16.msra.mxu0 0
    %2421 = vmatprep.mubr.bf16.mxu0 0
    %2422 = vmatmul.mubr.bf16.gmra.mrb[0].mxu0 %v2208
    %v2423 = vpop.f32.mrb[0].mxu0
    %v2424 = vadd.f32 %v2249, %v2423
    %v2425 = vpop.f32.mrb[0].mxu0
    %v2426 = vadd.f32 %v2253, %v2425
    %v2427 = vpop.f32.mrb[0].mxu0
    %v2428 = vadd.f32 %v2249, %v2427
    %v2429 = vpop.f32.mrb[0].mxu0
    %v2430 = vadd.f32 %v2253, %v2429
    %2431 = vmatprep.mubr.bf16.mxu0 0
    %2432 = vmatmul.mubr.bf16.gmra.mrb[0].mxu0 %v2209
    %v2433 = vpop.f32.mrb[0].mxu0
    %v2434 = vadd.f32 %v2249, %v2433
    %v2435 = vpop.f32.mrb[0].mxu0
    %v2436 = vadd.f32 %v2253, %v2435
    %v2437 = vpop.f32.mrb[0].mxu0
    %v2438 = vpop.f32.mrb[0].mxu0
    %2439 = vdwg.mxu0
    %2440 = vmatprep.subr.bf16.mxu0 0
    %2441 = vmatpush1.bf16.msra.mxu0 %v2343
    %2442 = vmatprep.subr.bf16.mxu0 0
    %2443 = vmatpush1.bf16.msra.mxu0 %v2346
    %2444 = vmatprep.subr.bf16.mxu0 0
    %2445 = vmatpush1.bf16.msra.mxu0 %v2349
    %2446 = vmatprep.subr.bf16.mxu0 0
    %2447 = vmatpush1.bf16.msra.mxu0 %v2352
    %2448 = vmatprep.subr.bf16.mxu0 0
    %2449 = vmatpush1.bf16.msra.mxu0 %v2355
    %2450 = vmatprep.subr.bf16.mxu0 0
    %2451 = vmatpush1.bf16.msra.mxu0 %v2358
    %2452 = vmatprep.subr.bf16.mxu0 0
    %2453 = vmatpush1.bf16.msra.mxu0 %v2361
    %2454 = vmatprep.subr.bf16.mxu0 0
    %2455 = vmatpush1.bf16.msra.mxu0 %v2364
    %2456 = vmatprep.subr.bf16.mxu0 0
    %2457 = vmatpush1.bf16.msra.mxu0 0
    %2458 = vmatprep.subr.bf16.mxu0 0
    %2459 = vmatpush1.bf16.msra.mxu0 0
    %2460 = vmatprep.subr.bf16.mxu0 0
    %2461 = vmatpush1.bf16.msra.mxu0 0
    %2462 = vmatprep.subr.bf16.mxu0 0
    %2463 = vmatpush1.bf16.msra.mxu0 0
    %2464 = vmatprep.subr.bf16.mxu0 0
    %2465 = vmatpush1.bf16.msra.mxu0 0
    %2466 = vmatprep.subr.bf16.mxu0 0
    %2467 = vmatpush1.bf16.msra.mxu0 0
    %2468 = vmatprep.subr.bf16.mxu0 0
    %2469 = vmatpush1.bf16.msra.mxu0 0
    %2470 = vmatprep.subr.bf16.mxu0 0
    %2471 = vmatpush1.bf16.msra.mxu0 0
    %2472 = vmatprep.mubr.bf16.mxu0 0
    %2473 = vmatmul.mubr.bf16.gmra.mrb[0].mxu0 %v2208
    %v2474 = vpop.f32.mrb[0].mxu0
    %v2475 = vadd.f32 %v2257, %v2474
    %v2476 = vpop.f32.mrb[0].mxu0
    %v2477 = vpop.f32.mrb[0].mxu0
    %v2478 = vadd.f32 %v2257, %v2477
    %v2479 = vpop.f32.mrb[0].mxu0
    %2480 = vmatprep.mubr.bf16.mxu0 0
    %2481 = vmatmul.mubr.bf16.gmra.mrb[0].mxu0 %v2209
    %v2482 = vpop.f32.mrb[0].mxu0
    %v2483 = vadd.f32 %v2257, %v2482
    %v2484 = vpop.f32.mrb[0].mxu0
    %v2485 = vpop.f32.mrb[0].mxu0
    %v2486 = vpop.f32.mrb[0].mxu0
    %2487 = vdwg.mxu0
    %s2488 = scalar_lea.vmem %s8, 64
    %v2489 = vld [vmem:[%s2488] sm:$0xf]
    %v2490 = vld [vmem:[%s2488 + $0x4] sm:$0xf]
    %v2491 = vld [vmem:[%s2488 + $0x8] sm:$0xf]
    %v2492 = vld [vmem:[%s2488 + $0xc] sm:$0xf]
    %v2493 = vld [vmem:[%s2488 + $0x10] sm:$0xf]
    %v2494 = vld [vmem:[%s2488 + $0x14] sm:$0xf]
    %v2495 = vld [vmem:[%s2488 + $0x18] sm:$0xf]
    %v2496 = vld [vmem:[%s2488 + $0x1c] sm:$0xf]
    %v2497 = vld [vmem:[%s2488 + $0x20] sm:$0xf]
    %v2498 = vld [vmem:[%s2488 + $0x24] sm:$0xf]
    %v2499 = vld [vmem:[%s2488 + $0x28] sm:$0xf]
    %v2500 = vld [vmem:[%s2488 + $0x2c] sm:$0xf]
    %v2501 = vld [vmem:[%s2488 + $0x30] sm:$0xf]
    %v2502 = vld [vmem:[%s2488 + $0x34] sm:$0xf]
    %v2503 = vld [vmem:[%s2488 + $0x38] sm:$0xf]
    %v2504 = vld [vmem:[%s2488 + $0x3c] sm:$0xf]
    %v2505 = vmul.f32 %v2424, 0.17677669
    %v2506 = vmul.f32 %v2428, 0.17677669
    %v2507 = vmul.f32 %v2434, 0.17677669
    %v2508 = vpack.c.bf16 %v2506, %v2505
    %v2509 = vpack.c.bf16 %v2507, %v2507
    %v2510 = vpack.c.bf16 %v2430, %v2426
    %v2511 = vpack.c.bf16 %v2436, %v2436
    %v2512 = vpack.c.bf16 %v2478, %v2475
    %v2513 = vpack.c.bf16 %v2483, %v2483
    %v2515 = vsel %vm448, %v2508, 0
    %v2518 = vsel %vm448, %v2509, 0
    %v2521 = vsel %vm448, %v2510, 0
    %v2524 = vsel %vm448, %v2511, 0
    %2526 = vmatprep.subr.bf16.mxu0 0
    %2527 = vmatpush1.bf16.xpose.msra.mxu0 %v2521
    %2528 = vmatprep.subr.bf16.mxu0 0
    %2529 = vmatpush1.bf16.xpose.msra.mxu0 %v2524
    %2530 = vmatprep.subr.bf16.mxu0 0
    %2531 = vmatpush1.bf16.xpose.msra.mxu0 0
    %2532 = vmatprep.subr.bf16.mxu0 0
    %2533 = vmatpush1.bf16.xpose.msra.mxu0 0
    %2534 = vmatprep.subr.bf16.mxu0 0
    %2535 = vmatpush1.bf16.xpose.msra.mxu0 0
    %2536 = vmatprep.subr.bf16.mxu0 0
    %2537 = vmatpush1.bf16.xpose.msra.mxu0 0
    %2538 = vmatprep.subr.bf16.mxu0 0
    %2539 = vmatpush1.bf16.xpose.msra.mxu0 0
    %2540 = vmatprep.subr.bf16.mxu0 0
    %2541 = vmatpush1.bf16.xpose.msra.mxu0 0
    %2542 = vmatprep.subr.bf16.mxu0 0
    %2543 = vmatpush1.bf16.xpose.msra.mxu0 0
    %2544 = vmatprep.subr.bf16.mxu0 0
    %2545 = vmatpush1.bf16.xpose.msra.mxu0 0
    %2546 = vmatprep.subr.bf16.mxu0 0
    %2547 = vmatpush1.bf16.xpose.msra.mxu0 0
    %2548 = vmatprep.subr.bf16.mxu0 0
    %2549 = vmatpush1.bf16.xpose.msra.mxu0 0
    %2550 = vmatprep.subr.bf16.mxu0 0
    %2551 = vmatpush1.bf16.xpose.msra.mxu0 0
    %2552 = vmatprep.subr.bf16.mxu0 0
    %2553 = vmatpush1.bf16.xpose.msra.mxu0 0
    %2554 = vmatprep.subr.bf16.mxu0 0
    %2555 = vmatpush1.bf16.xpose.msra.mxu0 0
    %2556 = vmatprep.subr.bf16.mxu0 0
    %2557 = vmatpush1.bf16.xpose.msra.mxu0 0
    %2558 = vmatprep.mubr.bf16.mxu0 0
    %2559 = vmatmul.mubr.bf16.gmra.mrb[0].mxu0 %v2515
    %v2560 = vpop.f32.mrb[0].mxu0
    %v2561 = vadd.f32 %v142, %v2560
    %v2562 = vpop.f32.mrb[0].mxu0
    %v2563 = vpop.f32.mrb[0].mxu0
    %v2564 = vadd.f32 %v143, %v2563
    %v2565 = vpop.f32.mrb[0].mxu0
    %2566 = vmatprep.mubr.bf16.mxu0 0
    %2567 = vmatmul.mubr.bf16.gmra.mrb[0].mxu0 %v2518
    %v2568 = vpop.f32.mrb[0].mxu0
    %v2569 = vadd.f32 %v144, %v2568
    %v2570 = vpop.f32.mrb[0].mxu0
    %v2571 = vpop.f32.mrb[0].mxu0
    %v2572 = vpop.f32.mrb[0].mxu0
    %2573 = vdwg.mxu0
    %v2574 = vsel %vm509, %v2561, -inf
    %2575 = vmax.xlane.f32.xlu0 %v2574
    %v2576 = vpop.xlane.xlu0 %2575
    %v2577 = vsel %vm509, %v2564, -inf
    %2578 = vmax.xlane.f32.xlu0 %v2577
    %v2579 = vpop.xlane.xlu0 %2578
    %v2580 = vsel %vm516, %v2569, -inf
    %2581 = vmax.xlane.f32.xlu0 %v2580
    %v2582 = vpop.xlane.xlu0 %2581
    %v2583 = vsub.f32 %v2561, %v2576
    %v2584 = vsub.f32 %v2564, %v2579
    %v2585 = vsub.f32 %v2569, %v2582
    %v2586 = vmul.f32 %v2583, 1.442695
    %v2587 = vpow.pop %v2586
    %v2588 = vmul.f32 %v2584, 1.442695
    %v2589 = vpow.pop %v2588
    %v2590 = vmul.f32 %v2585, 1.442695
    %v2591 = vpow.pop %v2590
    %v2592 = vsel %vm509, %v2587, 0.0
    %2593 = vadd.xlane.f32.xlu0 %v2592
    %v2594 = vpop.xlane.xlu0 %2593
    %v2595 = vsel %vm509, %v2589, 0.0
    %2596 = vadd.xlane.f32.xlu0 %v2595
    %v2597 = vpop.xlane.xlu0 %2596
    %v2598 = vsel %vm516, %v2591, 0.0
    %2599 = vadd.xlane.f32.xlu0 %v2598
    %v2600 = vpop.xlane.xlu0 %2599
    %v2601 = vrcp.pop %v2594
    %v2602 = vrcp.pop %v2597
    %v2603 = vrcp.pop %v2600
    %v2604 = vmul.f32 %v2587, %v2601
    %v2605 = vmul.f32 %v2589, %v2602
    %v2606 = vmul.f32 %v2591, %v2603
    %v2607 = vpack.c.bf16 %v2605, %v2604
    %v2608 = vpack.c.bf16 %v2606, %v2606
    %v2610 = vsel %vm509, %v2607, 0
    %v2613 = vsel %vm509, %v2608, 0
    %v2616 = vsel %vm552, %v2513, 0
    %2618 = vmatprep.subr.bf16.mxu0 0
    %2619 = vmatpush1.bf16.msra.mxu0 %v2512
    %2620 = vmatprep.subr.bf16.mxu0 0
    %2621 = vmatpush1.bf16.msra.mxu0 %v2616
    %2622 = vmatprep.subr.bf16.mxu0 0
    %2623 = vmatpush1.bf16.msra.mxu0 0
    %2624 = vmatprep.subr.bf16.mxu0 0
    %2625 = vmatpush1.bf16.msra.mxu0 0
    %2626 = vmatprep.subr.bf16.mxu0 0
    %2627 = vmatpush1.bf16.msra.mxu0 0
    %2628 = vmatprep.subr.bf16.mxu0 0
    %2629 = vmatpush1.bf16.msra.mxu0 0
    %2630 = vmatprep.subr.bf16.mxu0 0
    %2631 = vmatpush1.bf16.msra.mxu0 0
    %2632 = vmatprep.subr.bf16.mxu0 0
    %2633 = vmatpush1.bf16.msra.mxu0 0
    %2634 = vmatprep.subr.bf16.mxu0 0
    %2635 = vmatpush1.bf16.msra.mxu0 0
    %2636 = vmatprep.subr.bf16.mxu0 0
    %2637 = vmatpush1.bf16.msra.mxu0 0
    %2638 = vmatprep.subr.bf16.mxu0 0
    %2639 = vmatpush1.bf16.msra.mxu0 0
    %2640 = vmatprep.subr.bf16.mxu0 0
    %2641 = vmatpush1.bf16.msra.mxu0 0
    %2642 = vmatprep.subr.bf16.mxu0 0
    %2643 = vmatpush1.bf16.msra.mxu0 0
    %2644 = vmatprep.subr.bf16.mxu0 0
    %2645 = vmatpush1.bf16.msra.mxu0 0
    %2646 = vmatprep.subr.bf16.mxu0 0
    %2647 = vmatpush1.bf16.msra.mxu0 0
    %2648 = vmatprep.subr.bf16.mxu0 0
    %2649 = vmatpush1.bf16.msra.mxu0 0
    %2650 = vmatprep.mubr.bf16.mxu0 0
    %2651 = vmatmul.mubr.bf16.gmra.mrb[0].mxu0 %v2610
    %v2652 = vpop.f32.mrb[0].mxu0
    %v2653 = vadd.f32 0.0, %v2652
    %v2654 = vpop.f32.mrb[0].mxu0
    %v2655 = vpop.f32.mrb[0].mxu0
    %v2656 = vadd.f32 0.0, %v2655
    %v2657 = vpop.f32.mrb[0].mxu0
    %2658 = vmatprep.mubr.bf16.mxu0 0
    %2659 = vmatmul.mubr.bf16.gmra.mrb[0].mxu0 %v2613
    %v2660 = vpop.f32.mrb[0].mxu0
    %v2661 = vadd.f32 0.0, %v2660
    %v2662 = vpop.f32.mrb[0].mxu0
    %v2663 = vpop.f32.mrb[0].mxu0
    %v2664 = vpop.f32.mrb[0].mxu0
    %2665 = vdwg.mxu0
    %v2666 = vpack.c.bf16 %v2656, %v2653
    %v2667 = vpack.c.bf16 %v2661, %v2661
    %2670 = vrot.lane.b32.xlu0 %v2508, 96
    %v2671 = vpop.permute.xlu0 %2670
    %2672 = vrot.lane.b32.xlu0 %v2509, 96
    %v2673 = vpop.permute.xlu0 %2672
    %2676 = vrot.lane.b32.xlu0 %v2510, 96
    %v2677 = vpop.permute.xlu0 %2676
    %2678 = vrot.lane.b32.xlu0 %v2511, 96
    %v2679 = vpop.permute.xlu0 %2678
    %v2681 = vsel %vm448, %v2671, 0
    %v2684 = vsel %vm448, %v2673, 0
    %v2687 = vsel %vm448, %v2677, 0
    %v2690 = vsel %vm448, %v2679, 0
    %2692 = vmatprep.subr.bf16.mxu0 0
    %2693 = vmatpush1.bf16.xpose.msra.mxu0 %v2687
    %2694 = vmatprep.subr.bf16.mxu0 0
    %2695 = vmatpush1.bf16.xpose.msra.mxu0 %v2690
    %2696 = vmatprep.subr.bf16.mxu0 0
    %2697 = vmatpush1.bf16.xpose.msra.mxu0 0
    %2698 = vmatprep.subr.bf16.mxu0 0
    %2699 = vmatpush1.bf16.xpose.msra.mxu0 0
    %2700 = vmatprep.subr.bf16.mxu0 0
    %2701 = vmatpush1.bf16.xpose.msra.mxu0 0
    %2702 = vmatprep.subr.bf16.mxu0 0
    %2703 = vmatpush1.bf16.xpose.msra.mxu0 0
    %2704 = vmatprep.subr.bf16.mxu0 0
    %2705 = vmatpush1.bf16.xpose.msra.mxu0 0
    %2706 = vmatprep.subr.bf16.mxu0 0
    %2707 = vmatpush1.bf16.xpose.msra.mxu0 0
    %2708 = vmatprep.subr.bf16.mxu0 0
    %2709 = vmatpush1.bf16.xpose.msra.mxu0 0
    %2710 = vmatprep.subr.bf16.mxu0 0
    %2711 = vmatpush1.bf16.xpose.msra.mxu0 0
    %2712 = vmatprep.subr.bf16.mxu0 0
    %2713 = vmatpush1.bf16.xpose.msra.mxu0 0
    %2714 = vmatprep.subr.bf16.mxu0 0
    %2715 = vmatpush1.bf16.xpose.msra.mxu0 0
    %2716 = vmatprep.subr.bf16.mxu0 0
    %2717 = vmatpush1.bf16.xpose.msra.mxu0 0
    %2718 = vmatprep.subr.bf16.mxu0 0
    %2719 = vmatpush1.bf16.xpose.msra.mxu0 0
    %2720 = vmatprep.subr.bf16.mxu0 0
    %2721 = vmatpush1.bf16.xpose.msra.mxu0 0
    %2722 = vmatprep.subr.bf16.mxu0 0
    %2723 = vmatpush1.bf16.xpose.msra.mxu0 0
    %2724 = vmatprep.mubr.bf16.mxu0 0
    %2725 = vmatmul.mubr.bf16.gmra.mrb[0].mxu0 %v2681
    %v2726 = vpop.f32.mrb[0].mxu0
    %v2727 = vadd.f32 %v142, %v2726
    %v2728 = vpop.f32.mrb[0].mxu0
    %v2729 = vpop.f32.mrb[0].mxu0
    %v2730 = vadd.f32 %v143, %v2729
    %v2731 = vpop.f32.mrb[0].mxu0
    %2732 = vmatprep.mubr.bf16.mxu0 0
    %2733 = vmatmul.mubr.bf16.gmra.mrb[0].mxu0 %v2684
    %v2734 = vpop.f32.mrb[0].mxu0
    %v2735 = vadd.f32 %v144, %v2734
    %v2736 = vpop.f32.mrb[0].mxu0
    %v2737 = vpop.f32.mrb[0].mxu0
    %v2738 = vpop.f32.mrb[0].mxu0
    %2739 = vdwg.mxu0
    %v2740 = vsel %vm509, %v2727, -inf
    %2741 = vmax.xlane.f32.xlu0 %v2740
    %v2742 = vpop.xlane.xlu0 %2741
    %v2743 = vsel %vm509, %v2730, -inf
    %2744 = vmax.xlane.f32.xlu0 %v2743
    %v2745 = vpop.xlane.xlu0 %2744
    %v2746 = vsel %vm516, %v2735, -inf
    %2747 = vmax.xlane.f32.xlu0 %v2746
    %v2748 = vpop.xlane.xlu0 %2747
    %v2749 = vsub.f32 %v2727, %v2742
    %v2750 = vsub.f32 %v2730, %v2745
    %v2751 = vsub.f32 %v2735, %v2748
    %v2752 = vmul.f32 %v2749, 1.442695
    %v2753 = vpow.pop %v2752
    %v2754 = vmul.f32 %v2750, 1.442695
    %v2755 = vpow.pop %v2754
    %v2756 = vmul.f32 %v2751, 1.442695
    %v2757 = vpow.pop %v2756
    %v2758 = vsel %vm509, %v2753, 0.0
    %2759 = vadd.xlane.f32.xlu0 %v2758
    %v2760 = vpop.xlane.xlu0 %2759
    %v2761 = vsel %vm509, %v2755, 0.0
    %2762 = vadd.xlane.f32.xlu0 %v2761
    %v2763 = vpop.xlane.xlu0 %2762
    %v2764 = vsel %vm516, %v2757, 0.0
    %2765 = vadd.xlane.f32.xlu0 %v2764
    %v2766 = vpop.xlane.xlu0 %2765
    %v2767 = vrcp.pop %v2760
    %v2768 = vrcp.pop %v2763
    %v2769 = vrcp.pop %v2766
    %v2770 = vmul.f32 %v2753, %v2767
    %v2771 = vmul.f32 %v2755, %v2768
    %v2772 = vmul.f32 %v2757, %v2769
    %v2773 = vpack.c.bf16 %v2771, %v2770
    %v2774 = vpack.c.bf16 %v2772, %v2772
    %2777 = vrot.lane.b32.xlu0 %v2512, 96
    %v2778 = vpop.permute.xlu0 %2777
    %2779 = vrot.lane.b32.xlu0 %v2513, 96
    %v2780 = vpop.permute.xlu0 %2779
    %v2783 = vsel %vm509, %v2773, 0
    %v2786 = vsel %vm509, %v2774, 0
    %v2789 = vsel %vm552, %v2780, 0
    %2791 = vmatprep.subr.bf16.mxu0 0
    %2792 = vmatpush1.bf16.msra.mxu0 %v2778
    %2793 = vmatprep.subr.bf16.mxu0 0
    %2794 = vmatpush1.bf16.msra.mxu0 %v2789
    %2795 = vmatprep.subr.bf16.mxu0 0
    %2796 = vmatpush1.bf16.msra.mxu0 0
    %2797 = vmatprep.subr.bf16.mxu0 0
    %2798 = vmatpush1.bf16.msra.mxu0 0
    %2799 = vmatprep.subr.bf16.mxu0 0
    %2800 = vmatpush1.bf16.msra.mxu0 0
    %2801 = vmatprep.subr.bf16.mxu0 0
    %2802 = vmatpush1.bf16.msra.mxu0 0
    %2803 = vmatprep.subr.bf16.mxu0 0
    %2804 = vmatpush1.bf16.msra.mxu0 0
    %2805 = vmatprep.subr.bf16.mxu0 0
    %2806 = vmatpush1.bf16.msra.mxu0 0
    %2807 = vmatprep.subr.bf16.mxu0 0
    %2808 = vmatpush1.bf16.msra.mxu0 0
    %2809 = vmatprep.subr.bf16.mxu0 0
    %2810 = vmatpush1.bf16.msra.mxu0 0
    %2811 = vmatprep.subr.bf16.mxu0 0
    %2812 = vmatpush1.bf16.msra.mxu0 0
    %2813 = vmatprep.subr.bf16.mxu0 0
    %2814 = vmatpush1.bf16.msra.mxu0 0
    %2815 = vmatprep.subr.bf16.mxu0 0
    %2816 = vmatpush1.bf16.msra.mxu0 0
    %2817 = vmatprep.subr.bf16.mxu0 0
    %2818 = vmatpush1.bf16.msra.mxu0 0
    %2819 = vmatprep.subr.bf16.mxu0 0
    %2820 = vmatpush1.bf16.msra.mxu0 0
    %2821 = vmatprep.subr.bf16.mxu0 0
    %2822 = vmatpush1.bf16.msra.mxu0 0
    %2823 = vmatprep.mubr.bf16.mxu0 0
    %2824 = vmatmul.mubr.bf16.gmra.mrb[0].mxu0 %v2783
    %v2825 = vpop.f32.mrb[0].mxu0
    %v2826 = vadd.f32 0.0, %v2825
    %v2827 = vpop.f32.mrb[0].mxu0
    %v2828 = vpop.f32.mrb[0].mxu0
    %v2829 = vadd.f32 0.0, %v2828
    %v2830 = vpop.f32.mrb[0].mxu0
    %2831 = vmatprep.mubr.bf16.mxu0 0
    %2832 = vmatmul.mubr.bf16.gmra.mrb[0].mxu0 %v2786
    %v2833 = vpop.f32.mrb[0].mxu0
    %v2834 = vadd.f32 0.0, %v2833
    %v2835 = vpop.f32.mrb[0].mxu0
    %v2836 = vpop.f32.mrb[0].mxu0
    %v2837 = vpop.f32.mrb[0].mxu0
    %2838 = vdwg.mxu0
    %v2839 = vpack.c.bf16 %v2829, %v2826
    %v2840 = vpack.c.bf16 %v2834, %v2834
    %v2845 = vunpack.c.l.b16 %v2493
    %v2846 = vunpack.c.l.b16 %v2494
    %v2847 = vunpack.c.l.b16 %v2495
    %v2848 = vunpack.c.l.b16 %v2496
    %v2849 = vpack.c.b16 %v2846, %v2845
    %v2850 = vpack.c.b16 %v2848, %v2847
    %v2854 = vsel %vm448, %v2839, 0
    %v2857 = vsel %vm448, %v2840, 0
    %2859 = vmatprep.subr.bf16.mxu0 0
    %2860 = vmatpush1.bf16.msra.mxu0 %v2849
    %2861 = vmatprep.subr.bf16.mxu0 0
    %2862 = vmatpush1.bf16.msra.mxu0 %v2850
    %2863 = vmatprep.subr.bf16.mxu0 0
    %2864 = vmatpush1.bf16.msra.mxu0 0
    %2865 = vmatprep.subr.bf16.mxu0 0
    %2866 = vmatpush1.bf16.msra.mxu0 0
    %2867 = vmatprep.subr.bf16.mxu0 0
    %2868 = vmatpush1.bf16.msra.mxu0 0
    %2869 = vmatprep.subr.bf16.mxu0 0
    %2870 = vmatpush1.bf16.msra.mxu0 0
    %2871 = vmatprep.subr.bf16.mxu0 0
    %2872 = vmatpush1.bf16.msra.mxu0 0
    %2873 = vmatprep.subr.bf16.mxu0 0
    %2874 = vmatpush1.bf16.msra.mxu0 0
    %2875 = vmatprep.subr.bf16.mxu0 0
    %2876 = vmatpush1.bf16.msra.mxu0 0
    %2877 = vmatprep.subr.bf16.mxu0 0
    %2878 = vmatpush1.bf16.msra.mxu0 0
    %2879 = vmatprep.subr.bf16.mxu0 0
    %2880 = vmatpush1.bf16.msra.mxu0 0
    %2881 = vmatprep.subr.bf16.mxu0 0
    %2882 = vmatpush1.bf16.msra.mxu0 0
    %2883 = vmatprep.subr.bf16.mxu0 0
    %2884 = vmatpush1.bf16.msra.mxu0 0
    %2885 = vmatprep.subr.bf16.mxu0 0
    %2886 = vmatpush1.bf16.msra.mxu0 0
    %2887 = vmatprep.subr.bf16.mxu0 0
    %2888 = vmatpush1.bf16.msra.mxu0 0
    %2889 = vmatprep.subr.bf16.mxu0 0
    %2890 = vmatpush1.bf16.msra.mxu0 0
    %2891 = vmatprep.mubr.bf16.mxu0 0
    %2892 = vmatmul.mubr.bf16.gmra.mrb[0].mxu0 %v2854
    %v2893 = vpop.f32.mrb[0].mxu0
    %v2894 = vadd.f32 0.0, %v2893
    %v2895 = vpop.f32.mrb[0].mxu0
    %v2896 = vpop.f32.mrb[0].mxu0
    %v2897 = vadd.f32 0.0, %v2896
    %v2898 = vpop.f32.mrb[0].mxu0
    %2899 = vmatprep.mubr.bf16.mxu0 0
    %2900 = vmatmul.mubr.bf16.gmra.mrb[0].mxu0 %v2857
    %v2901 = vpop.f32.mrb[0].mxu0
    %v2902 = vadd.f32 0.0, %v2901
    %v2903 = vpop.f32.mrb[0].mxu0
    %v2904 = vpop.f32.mrb[0].mxu0
    %v2905 = vpop.f32.mrb[0].mxu0
    %2906 = vdwg.mxu0
    %v2911 = vunpack.c.l.b16 %v2489
    %v2912 = vunpack.c.l.b16 %v2490
    %v2913 = vunpack.c.l.b16 %v2491
    %v2914 = vunpack.c.l.b16 %v2492
    %v2915 = vpack.c.b16 %v2912, %v2911
    %v2916 = vpack.c.b16 %v2914, %v2913
    %v2920 = vsel %vm448, %v2666, 0
    %v2923 = vsel %vm448, %v2667, 0
    %2925 = vmatprep.subr.bf16.mxu0 0
    %2926 = vmatpush1.bf16.msra.mxu0 %v2915
    %2927 = vmatprep.subr.bf16.mxu0 0
    %2928 = vmatpush1.bf16.msra.mxu0 %v2916
    %2929 = vmatprep.subr.bf16.mxu0 0
    %2930 = vmatpush1.bf16.msra.mxu0 0
    %2931 = vmatprep.subr.bf16.mxu0 0
    %2932 = vmatpush1.bf16.msra.mxu0 0
    %2933 = vmatprep.subr.bf16.mxu0 0
    %2934 = vmatpush1.bf16.msra.mxu0 0
    %2935 = vmatprep.subr.bf16.mxu0 0
    %2936 = vmatpush1.bf16.msra.mxu0 0
    %2937 = vmatprep.subr.bf16.mxu0 0
    %2938 = vmatpush1.bf16.msra.mxu0 0
    %2939 = vmatprep.subr.bf16.mxu0 0
    %2940 = vmatpush1.bf16.msra.mxu0 0
    %2941 = vmatprep.subr.bf16.mxu0 0
    %2942 = vmatpush1.bf16.msra.mxu0 0
    %2943 = vmatprep.subr.bf16.mxu0 0
    %2944 = vmatpush1.bf16.msra.mxu0 0
    %2945 = vmatprep.subr.bf16.mxu0 0
    %2946 = vmatpush1.bf16.msra.mxu0 0
    %2947 = vmatprep.subr.bf16.mxu0 0
    %2948 = vmatpush1.bf16.msra.mxu0 0
    %2949 = vmatprep.subr.bf16.mxu0 0
    %2950 = vmatpush1.bf16.msra.mxu0 0
    %2951 = vmatprep.subr.bf16.mxu0 0
    %2952 = vmatpush1.bf16.msra.mxu0 0
    %2953 = vmatprep.subr.bf16.mxu0 0
    %2954 = vmatpush1.bf16.msra.mxu0 0
    %2955 = vmatprep.subr.bf16.mxu0 0
    %2956 = vmatpush1.bf16.msra.mxu0 0
    %2957 = vmatprep.mubr.bf16.mxu0 0
    %2958 = vmatmul.mubr.bf16.gmra.mrb[0].mxu0 %v2920
    %v2959 = vpop.f32.mrb[0].mxu0
    %v2960 = vadd.f32 %v2894, %v2959
    %v2961 = vpop.f32.mrb[0].mxu0
    %v2962 = vpop.f32.mrb[0].mxu0
    %v2963 = vadd.f32 %v2897, %v2962
    %v2964 = vpop.f32.mrb[0].mxu0
    %2965 = vmatprep.mubr.bf16.mxu0 0
    %2966 = vmatmul.mubr.bf16.gmra.mrb[0].mxu0 %v2923
    %v2967 = vpop.f32.mrb[0].mxu0
    %v2968 = vadd.f32 %v2902, %v2967
    %v2969 = vpop.f32.mrb[0].mxu0
    %v2970 = vpop.f32.mrb[0].mxu0
    %v2971 = vpop.f32.mrb[0].mxu0
    %2972 = vdwg.mxu0
    %2973 = vrot.lane.b32.xlu0 %v2508, 64
    %v2974 = vpop.permute.xlu0 %2973
    %2975 = vrot.lane.b32.xlu0 %v2509, 64
    %v2976 = vpop.permute.xlu0 %2975
    %2977 = vrot.lane.b32.xlu0 %v2510, 64
    %v2978 = vpop.permute.xlu0 %2977
    %2979 = vrot.lane.b32.xlu0 %v2511, 64
    %v2980 = vpop.permute.xlu0 %2979
    %v2982 = vsel %vm448, %v2974, 0
    %v2985 = vsel %vm448, %v2976, 0
    %v2988 = vsel %vm448, %v2978, 0
    %v2991 = vsel %vm448, %v2980, 0
    %2993 = vmatprep.subr.bf16.mxu0 0
    %2994 = vmatpush1.bf16.xpose.msra.mxu0 %v2988
    %2995 = vmatprep.subr.bf16.mxu0 0
    %2996 = vmatpush1.bf16.xpose.msra.mxu0 %v2991
    %2997 = vmatprep.subr.bf16.mxu0 0
    %2998 = vmatpush1.bf16.xpose.msra.mxu0 0
    %2999 = vmatprep.subr.bf16.mxu0 0
    %3000 = vmatpush1.bf16.xpose.msra.mxu0 0
    %3001 = vmatprep.subr.bf16.mxu0 0
    %3002 = vmatpush1.bf16.xpose.msra.mxu0 0
    %3003 = vmatprep.subr.bf16.mxu0 0
    %3004 = vmatpush1.bf16.xpose.msra.mxu0 0
    %3005 = vmatprep.subr.bf16.mxu0 0
    %3006 = vmatpush1.bf16.xpose.msra.mxu0 0
    %3007 = vmatprep.subr.bf16.mxu0 0
    %3008 = vmatpush1.bf16.xpose.msra.mxu0 0
    %3009 = vmatprep.subr.bf16.mxu0 0
    %3010 = vmatpush1.bf16.xpose.msra.mxu0 0
    %3011 = vmatprep.subr.bf16.mxu0 0
    %3012 = vmatpush1.bf16.xpose.msra.mxu0 0
    %3013 = vmatprep.subr.bf16.mxu0 0
    %3014 = vmatpush1.bf16.xpose.msra.mxu0 0
    %3015 = vmatprep.subr.bf16.mxu0 0
    %3016 = vmatpush1.bf16.xpose.msra.mxu0 0
    %3017 = vmatprep.subr.bf16.mxu0 0
    %3018 = vmatpush1.bf16.xpose.msra.mxu0 0
    %3019 = vmatprep.subr.bf16.mxu0 0
    %3020 = vmatpush1.bf16.xpose.msra.mxu0 0
    %3021 = vmatprep.subr.bf16.mxu0 0
    %3022 = vmatpush1.bf16.xpose.msra.mxu0 0
    %3023 = vmatprep.subr.bf16.mxu0 0
    %3024 = vmatpush1.bf16.xpose.msra.mxu0 0
    %3025 = vmatprep.mubr.bf16.mxu0 0
    %3026 = vmatmul.mubr.bf16.gmra.mrb[0].mxu0 %v2982
    %v3027 = vpop.f32.mrb[0].mxu0
    %v3028 = vadd.f32 %v142, %v3027
    %v3029 = vpop.f32.mrb[0].mxu0
    %v3030 = vpop.f32.mrb[0].mxu0
    %v3031 = vadd.f32 %v143, %v3030
    %v3032 = vpop.f32.mrb[0].mxu0
    %3033 = vmatprep.mubr.bf16.mxu0 0
    %3034 = vmatmul.mubr.bf16.gmra.mrb[0].mxu0 %v2985
    %v3035 = vpop.f32.mrb[0].mxu0
    %v3036 = vadd.f32 %v144, %v3035
    %v3037 = vpop.f32.mrb[0].mxu0
    %v3038 = vpop.f32.mrb[0].mxu0
    %v3039 = vpop.f32.mrb[0].mxu0
    %3040 = vdwg.mxu0
    %v3041 = vsel %vm509, %v3028, -inf
    %3042 = vmax.xlane.f32.xlu0 %v3041
    %v3043 = vpop.xlane.xlu0 %3042
    %v3044 = vsel %vm509, %v3031, -inf
    %3045 = vmax.xlane.f32.xlu0 %v3044
    %v3046 = vpop.xlane.xlu0 %3045
    %v3047 = vsel %vm516, %v3036, -inf
    %3048 = vmax.xlane.f32.xlu0 %v3047
    %v3049 = vpop.xlane.xlu0 %3048
    %v3050 = vsub.f32 %v3028, %v3043
    %v3051 = vsub.f32 %v3031, %v3046
    %v3052 = vsub.f32 %v3036, %v3049
    %v3053 = vmul.f32 %v3050, 1.442695
    %v3054 = vpow.pop %v3053
    %v3055 = vmul.f32 %v3051, 1.442695
    %v3056 = vpow.pop %v3055
    %v3057 = vmul.f32 %v3052, 1.442695
    %v3058 = vpow.pop %v3057
    %v3059 = vsel %vm509, %v3054, 0.0
    %3060 = vadd.xlane.f32.xlu0 %v3059
    %v3061 = vpop.xlane.xlu0 %3060
    %v3062 = vsel %vm509, %v3056, 0.0
    %3063 = vadd.xlane.f32.xlu0 %v3062
    %v3064 = vpop.xlane.xlu0 %3063
    %v3065 = vsel %vm516, %v3058, 0.0
    %3066 = vadd.xlane.f32.xlu0 %v3065
    %v3067 = vpop.xlane.xlu0 %3066
    %v3068 = vrcp.pop %v3061
    %v3069 = vrcp.pop %v3064
    %v3070 = vrcp.pop %v3067
    %v3071 = vmul.f32 %v3054, %v3068
    %v3072 = vmul.f32 %v3056, %v3069
    %v3073 = vmul.f32 %v3058, %v3070
    %v3074 = vpack.c.bf16 %v3072, %v3071
    %v3075 = vpack.c.bf16 %v3073, %v3073
    %3076 = vrot.lane.b32.xlu0 %v2512, 64
    %v3077 = vpop.permute.xlu0 %3076
    %3078 = vrot.lane.b32.xlu0 %v2513, 64
    %v3079 = vpop.permute.xlu0 %3078
    %v3082 = vsel %vm509, %v3074, 0
    %v3085 = vsel %vm509, %v3075, 0
    %v3088 = vsel %vm552, %v3079, 0
    %3090 = vmatprep.subr.bf16.mxu0 0
    %3091 = vmatpush1.bf16.msra.mxu0 %v3077
    %3092 = vmatprep.subr.bf16.mxu0 0
    %3093 = vmatpush1.bf16.msra.mxu0 %v3088
    %3094 = vmatprep.subr.bf16.mxu0 0
    %3095 = vmatpush1.bf16.msra.mxu0 0
    %3096 = vmatprep.subr.bf16.mxu0 0
    %3097 = vmatpush1.bf16.msra.mxu0 0
    %3098 = vmatprep.subr.bf16.mxu0 0
    %3099 = vmatpush1.bf16.msra.mxu0 0
    %3100 = vmatprep.subr.bf16.mxu0 0
    %3101 = vmatpush1.bf16.msra.mxu0 0
    %3102 = vmatprep.subr.bf16.mxu0 0
    %3103 = vmatpush1.bf16.msra.mxu0 0
    %3104 = vmatprep.subr.bf16.mxu0 0
    %3105 = vmatpush1.bf16.msra.mxu0 0
    %3106 = vmatprep.subr.bf16.mxu0 0
    %3107 = vmatpush1.bf16.msra.mxu0 0
    %3108 = vmatprep.subr.bf16.mxu0 0
    %3109 = vmatpush1.bf16.msra.mxu0 0
    %3110 = vmatprep.subr.bf16.mxu0 0
    %3111 = vmatpush1.bf16.msra.mxu0 0
    %3112 = vmatprep.subr.bf16.mxu0 0
    %3113 = vmatpush1.bf16.msra.mxu0 0
    %3114 = vmatprep.subr.bf16.mxu0 0
    %3115 = vmatpush1.bf16.msra.mxu0 0
    %3116 = vmatprep.subr.bf16.mxu0 0
    %3117 = vmatpush1.bf16.msra.mxu0 0
    %3118 = vmatprep.subr.bf16.mxu0 0
    %3119 = vmatpush1.bf16.msra.mxu0 0
    %3120 = vmatprep.subr.bf16.mxu0 0
    %3121 = vmatpush1.bf16.msra.mxu0 0
    %3122 = vmatprep.mubr.bf16.mxu0 0
    %3123 = vmatmul.mubr.bf16.gmra.mrb[0].mxu0 %v3082
    %v3124 = vpop.f32.mrb[0].mxu0
    %v3125 = vadd.f32 0.0, %v3124
    %v3126 = vpop.f32.mrb[0].mxu0
    %v3127 = vpop.f32.mrb[0].mxu0
    %v3128 = vadd.f32 0.0, %v3127
    %v3129 = vpop.f32.mrb[0].mxu0
    %3130 = vmatprep.mubr.bf16.mxu0 0
    %3131 = vmatmul.mubr.bf16.gmra.mrb[0].mxu0 %v3085
    %v3132 = vpop.f32.mrb[0].mxu0
    %v3133 = vadd.f32 0.0, %v3132
    %v3134 = vpop.f32.mrb[0].mxu0
    %v3135 = vpop.f32.mrb[0].mxu0
    %v3136 = vpop.f32.mrb[0].mxu0
    %3137 = vdwg.mxu0
    %v3138 = vpack.c.bf16 %v3128, %v3125
    %v3139 = vpack.c.bf16 %v3133, %v3133
    %v3144 = vunpack.c.l.b16 %v2497
    %v3145 = vunpack.c.l.b16 %v2498
    %v3146 = vunpack.c.l.b16 %v2499
    %v3147 = vunpack.c.l.b16 %v2500
    %v3148 = vpack.c.b16 %v3145, %v3144
    %v3149 = vpack.c.b16 %v3147, %v3146
    %v3153 = vsel %vm448, %v3138, 0
    %v3156 = vsel %vm448, %v3139, 0
    %3158 = vmatprep.subr.bf16.mxu0 0
    %3159 = vmatpush1.bf16.msra.mxu0 %v3148
    %3160 = vmatprep.subr.bf16.mxu0 0
    %3161 = vmatpush1.bf16.msra.mxu0 %v3149
    %3162 = vmatprep.subr.bf16.mxu0 0
    %3163 = vmatpush1.bf16.msra.mxu0 0
    %3164 = vmatprep.subr.bf16.mxu0 0
    %3165 = vmatpush1.bf16.msra.mxu0 0
    %3166 = vmatprep.subr.bf16.mxu0 0
    %3167 = vmatpush1.bf16.msra.mxu0 0
    %3168 = vmatprep.subr.bf16.mxu0 0
    %3169 = vmatpush1.bf16.msra.mxu0 0
    %3170 = vmatprep.subr.bf16.mxu0 0
    %3171 = vmatpush1.bf16.msra.mxu0 0
    %3172 = vmatprep.subr.bf16.mxu0 0
    %3173 = vmatpush1.bf16.msra.mxu0 0
    %3174 = vmatprep.subr.bf16.mxu0 0
    %3175 = vmatpush1.bf16.msra.mxu0 0
    %3176 = vmatprep.subr.bf16.mxu0 0
    %3177 = vmatpush1.bf16.msra.mxu0 0
    %3178 = vmatprep.subr.bf16.mxu0 0
    %3179 = vmatpush1.bf16.msra.mxu0 0
    %3180 = vmatprep.subr.bf16.mxu0 0
    %3181 = vmatpush1.bf16.msra.mxu0 0
    %3182 = vmatprep.subr.bf16.mxu0 0
    %3183 = vmatpush1.bf16.msra.mxu0 0
    %3184 = vmatprep.subr.bf16.mxu0 0
    %3185 = vmatpush1.bf16.msra.mxu0 0
    %3186 = vmatprep.subr.bf16.mxu0 0
    %3187 = vmatpush1.bf16.msra.mxu0 0
    %3188 = vmatprep.subr.bf16.mxu0 0
    %3189 = vmatpush1.bf16.msra.mxu0 0
    %3190 = vmatprep.mubr.bf16.mxu0 0
    %3191 = vmatmul.mubr.bf16.gmra.mrb[0].mxu0 %v3153
    %v3192 = vpop.f32.mrb[0].mxu0
    %v3193 = vadd.f32 0.0, %v3192
    %v3194 = vpop.f32.mrb[0].mxu0
    %v3195 = vpop.f32.mrb[0].mxu0
    %v3196 = vadd.f32 0.0, %v3195
    %v3197 = vpop.f32.mrb[0].mxu0
    %3198 = vmatprep.mubr.bf16.mxu0 0
    %3199 = vmatmul.mubr.bf16.gmra.mrb[0].mxu0 %v3156
    %v3200 = vpop.f32.mrb[0].mxu0
    %v3201 = vadd.f32 0.0, %v3200
    %v3202 = vpop.f32.mrb[0].mxu0
    %v3203 = vpop.f32.mrb[0].mxu0
    %v3204 = vpop.f32.mrb[0].mxu0
    %3205 = vdwg.mxu0
    %v3206 = vadd.f32 %v2960, %v3193
    %v3207 = vadd.f32 %v2963, %v3196
    %v3208 = vadd.f32 %v2968, %v3201
    %3209 = vrot.lane.b32.xlu0 %v2508, 32
    %v3210 = vpop.permute.xlu0 %3209
    %3211 = vrot.lane.b32.xlu0 %v2509, 32
    %v3212 = vpop.permute.xlu0 %3211
    %3213 = vrot.lane.b32.xlu0 %v2510, 32
    %v3214 = vpop.permute.xlu0 %3213
    %3215 = vrot.lane.b32.xlu0 %v2511, 32
    %v3216 = vpop.permute.xlu0 %3215
    %v3218 = vsel %vm448, %v3210, 0
    %v3221 = vsel %vm448, %v3212, 0
    %v3224 = vsel %vm448, %v3214, 0
    %v3227 = vsel %vm448, %v3216, 0
    %3229 = vmatprep.subr.bf16.mxu0 0
    %3230 = vmatpush1.bf16.xpose.msra.mxu0 %v3224
    %3231 = vmatprep.subr.bf16.mxu0 0
    %3232 = vmatpush1.bf16.xpose.msra.mxu0 %v3227
    %3233 = vmatprep.subr.bf16.mxu0 0
    %3234 = vmatpush1.bf16.xpose.msra.mxu0 0
    %3235 = vmatprep.subr.bf16.mxu0 0
    %3236 = vmatpush1.bf16.xpose.msra.mxu0 0
    %3237 = vmatprep.subr.bf16.mxu0 0
    %3238 = vmatpush1.bf16.xpose.msra.mxu0 0
    %3239 = vmatprep.subr.bf16.mxu0 0
    %3240 = vmatpush1.bf16.xpose.msra.mxu0 0
    %3241 = vmatprep.subr.bf16.mxu0 0
    %3242 = vmatpush1.bf16.xpose.msra.mxu0 0
    %3243 = vmatprep.subr.bf16.mxu0 0
    %3244 = vmatpush1.bf16.xpose.msra.mxu0 0
    %3245 = vmatprep.subr.bf16.mxu0 0
    %3246 = vmatpush1.bf16.xpose.msra.mxu0 0
    %3247 = vmatprep.subr.bf16.mxu0 0
    %3248 = vmatpush1.bf16.xpose.msra.mxu0 0
    %3249 = vmatprep.subr.bf16.mxu0 0
    %3250 = vmatpush1.bf16.xpose.msra.mxu0 0
    %3251 = vmatprep.subr.bf16.mxu0 0
    %3252 = vmatpush1.bf16.xpose.msra.mxu0 0
    %3253 = vmatprep.subr.bf16.mxu0 0
    %3254 = vmatpush1.bf16.xpose.msra.mxu0 0
    %3255 = vmatprep.subr.bf16.mxu0 0
    %3256 = vmatpush1.bf16.xpose.msra.mxu0 0
    %3257 = vmatprep.subr.bf16.mxu0 0
    %3258 = vmatpush1.bf16.xpose.msra.mxu0 0
    %3259 = vmatprep.subr.bf16.mxu0 0
    %3260 = vmatpush1.bf16.xpose.msra.mxu0 0
    %3261 = vmatprep.mubr.bf16.mxu0 0
    %3262 = vmatmul.mubr.bf16.gmra.mrb[0].mxu0 %v3218
    %v3263 = vpop.f32.mrb[0].mxu0
    %v3264 = vadd.f32 %v142, %v3263
    %v3265 = vpop.f32.mrb[0].mxu0
    %v3266 = vpop.f32.mrb[0].mxu0
    %v3267 = vadd.f32 %v143, %v3266
    %v3268 = vpop.f32.mrb[0].mxu0
    %3269 = vmatprep.mubr.bf16.mxu0 0
    %3270 = vmatmul.mubr.bf16.gmra.mrb[0].mxu0 %v3221
    %v3271 = vpop.f32.mrb[0].mxu0
    %v3272 = vadd.f32 %v144, %v3271
    %v3273 = vpop.f32.mrb[0].mxu0
    %v3274 = vpop.f32.mrb[0].mxu0
    %v3275 = vpop.f32.mrb[0].mxu0
    %3276 = vdwg.mxu0
    %v3277 = vsel %vm509, %v3264, -inf
    %3278 = vmax.xlane.f32.xlu0 %v3277
    %v3279 = vpop.xlane.xlu0 %3278
    %v3280 = vsel %vm509, %v3267, -inf
    %3281 = vmax.xlane.f32.xlu0 %v3280
    %v3282 = vpop.xlane.xlu0 %3281
    %v3283 = vsel %vm516, %v3272, -inf
    %3284 = vmax.xlane.f32.xlu0 %v3283
    %v3285 = vpop.xlane.xlu0 %3284
    %v3286 = vsub.f32 %v3264, %v3279
    %v3287 = vsub.f32 %v3267, %v3282
    %v3288 = vsub.f32 %v3272, %v3285
    %v3289 = vmul.f32 %v3286, 1.442695
    %v3290 = vpow.pop %v3289
    %v3291 = vmul.f32 %v3287, 1.442695
    %v3292 = vpow.pop %v3291
    %v3293 = vmul.f32 %v3288, 1.442695
    %v3294 = vpow.pop %v3293
    %v3295 = vsel %vm509, %v3290, 0.0
    %3296 = vadd.xlane.f32.xlu0 %v3295
    %v3297 = vpop.xlane.xlu0 %3296
    %v3298 = vsel %vm509, %v3292, 0.0
    %3299 = vadd.xlane.f32.xlu0 %v3298
    %v3300 = vpop.xlane.xlu0 %3299
    %v3301 = vsel %vm516, %v3294, 0.0
    %3302 = vadd.xlane.f32.xlu0 %v3301
    %v3303 = vpop.xlane.xlu0 %3302
    %v3304 = vrcp.pop %v3297
    %v3305 = vrcp.pop %v3300
    %v3306 = vrcp.pop %v3303
    %v3307 = vmul.f32 %v3290, %v3304
    %v3308 = vmul.f32 %v3292, %v3305
    %v3309 = vmul.f32 %v3294, %v3306
    %v3310 = vpack.c.bf16 %v3308, %v3307
    %v3311 = vpack.c.bf16 %v3309, %v3309
    %3312 = vrot.lane.b32.xlu0 %v2512, 32
    %v3313 = vpop.permute.xlu0 %3312
    %3314 = vrot.lane.b32.xlu0 %v2513, 32
    %v3315 = vpop.permute.xlu0 %3314
    %v3318 = vsel %vm509, %v3310, 0
    %v3321 = vsel %vm509, %v3311, 0
    %v3324 = vsel %vm552, %v3315, 0
    %3326 = vmatprep.subr.bf16.mxu0 0
    %3327 = vmatpush1.bf16.msra.mxu0 %v3313
    %3328 = vmatprep.subr.bf16.mxu0 0
    %3329 = vmatpush1.bf16.msra.mxu0 %v3324
    %3330 = vmatprep.subr.bf16.mxu0 0
    %3331 = vmatpush1.bf16.msra.mxu0 0
    %3332 = vmatprep.subr.bf16.mxu0 0
    %3333 = vmatpush1.bf16.msra.mxu0 0
    %3334 = vmatprep.subr.bf16.mxu0 0
    %3335 = vmatpush1.bf16.msra.mxu0 0
    %3336 = vmatprep.subr.bf16.mxu0 0
    %3337 = vmatpush1.bf16.msra.mxu0 0
    %3338 = vmatprep.subr.bf16.mxu0 0
    %3339 = vmatpush1.bf16.msra.mxu0 0
    %3340 = vmatprep.subr.bf16.mxu0 0
    %3341 = vmatpush1.bf16.msra.mxu0 0
    %3342 = vmatprep.subr.bf16.mxu0 0
    %3343 = vmatpush1.bf16.msra.mxu0 0
    %3344 = vmatprep.subr.bf16.mxu0 0
    %3345 = vmatpush1.bf16.msra.mxu0 0
    %3346 = vmatprep.subr.bf16.mxu0 0
    %3347 = vmatpush1.bf16.msra.mxu0 0
    %3348 = vmatprep.subr.bf16.mxu0 0
    %3349 = vmatpush1.bf16.msra.mxu0 0
    %3350 = vmatprep.subr.bf16.mxu0 0
    %3351 = vmatpush1.bf16.msra.mxu0 0
    %3352 = vmatprep.subr.bf16.mxu0 0
    %3353 = vmatpush1.bf16.msra.mxu0 0
    %3354 = vmatprep.subr.bf16.mxu0 0
    %3355 = vmatpush1.bf16.msra.mxu0 0
    %3356 = vmatprep.subr.bf16.mxu0 0
    %3357 = vmatpush1.bf16.msra.mxu0 0
    %3358 = vmatprep.mubr.bf16.mxu0 0
    %3359 = vmatmul.mubr.bf16.gmra.mrb[0].mxu0 %v3318
    %v3360 = vpop.f32.mrb[0].mxu0
    %v3361 = vadd.f32 0.0, %v3360
    %v3362 = vpop.f32.mrb[0].mxu0
    %v3363 = vpop.f32.mrb[0].mxu0
    %v3364 = vadd.f32 0.0, %v3363
    %v3365 = vpop.f32.mrb[0].mxu0
    %3366 = vmatprep.mubr.bf16.mxu0 0
    %3367 = vmatmul.mubr.bf16.gmra.mrb[0].mxu0 %v3321
    %v3368 = vpop.f32.mrb[0].mxu0
    %v3369 = vadd.f32 0.0, %v3368
    %v3370 = vpop.f32.mrb[0].mxu0
    %v3371 = vpop.f32.mrb[0].mxu0
    %v3372 = vpop.f32.mrb[0].mxu0
    %3373 = vdwg.mxu0
    %v3374 = vpack.c.bf16 %v3364, %v3361
    %v3375 = vpack.c.bf16 %v3369, %v3369
    %v3380 = vunpack.c.l.b16 %v2501
    %v3381 = vunpack.c.l.b16 %v2502
    %v3382 = vunpack.c.l.b16 %v2503
    %v3383 = vunpack.c.l.b16 %v2504
    %v3384 = vpack.c.b16 %v3381, %v3380
    %v3385 = vpack.c.b16 %v3383, %v3382
    %v3389 = vsel %vm448, %v3374, 0
    %v3392 = vsel %vm448, %v3375, 0
    %3394 = vmatprep.subr.bf16.mxu0 0
    %3395 = vmatpush1.bf16.msra.mxu0 %v3384
    %3396 = vmatprep.subr.bf16.mxu0 0
    %3397 = vmatpush1.bf16.msra.mxu0 %v3385
    %3398 = vmatprep.subr.bf16.mxu0 0
    %3399 = vmatpush1.bf16.msra.mxu0 0
    %3400 = vmatprep.subr.bf16.mxu0 0
    %3401 = vmatpush1.bf16.msra.mxu0 0
    %3402 = vmatprep.subr.bf16.mxu0 0
    %3403 = vmatpush1.bf16.msra.mxu0 0
    %3404 = vmatprep.subr.bf16.mxu0 0
    %3405 = vmatpush1.bf16.msra.mxu0 0
    %3406 = vmatprep.subr.bf16.mxu0 0
    %3407 = vmatpush1.bf16.msra.mxu0 0
    %3408 = vmatprep.subr.bf16.mxu0 0
    %3409 = vmatpush1.bf16.msra.mxu0 0
    %3410 = vmatprep.subr.bf16.mxu0 0
    %3411 = vmatpush1.bf16.msra.mxu0 0
    %3412 = vmatprep.subr.bf16.mxu0 0
    %3413 = vmatpush1.bf16.msra.mxu0 0
    %3414 = vmatprep.subr.bf16.mxu0 0
    %3415 = vmatpush1.bf16.msra.mxu0 0
    %3416 = vmatprep.subr.bf16.mxu0 0
    %3417 = vmatpush1.bf16.msra.mxu0 0
    %3418 = vmatprep.subr.bf16.mxu0 0
    %3419 = vmatpush1.bf16.msra.mxu0 0
    %3420 = vmatprep.subr.bf16.mxu0 0
    %3421 = vmatpush1.bf16.msra.mxu0 0
    %3422 = vmatprep.subr.bf16.mxu0 0
    %3423 = vmatpush1.bf16.msra.mxu0 0
    %3424 = vmatprep.subr.bf16.mxu0 0
    %3425 = vmatpush1.bf16.msra.mxu0 0
    %3426 = vmatprep.mubr.bf16.mxu0 0
    %3427 = vmatmul.mubr.bf16.gmra.mrb[0].mxu0 %v3389
    %v3428 = vpop.f32.mrb[0].mxu0
    %v3429 = vadd.f32 0.0, %v3428
    %v3430 = vpop.f32.mrb[0].mxu0
    %v3431 = vpop.f32.mrb[0].mxu0
    %v3432 = vadd.f32 0.0, %v3431
    %v3433 = vpop.f32.mrb[0].mxu0
    %3434 = vmatprep.mubr.bf16.mxu0 0
    %3435 = vmatmul.mubr.bf16.gmra.mrb[0].mxu0 %v3392
    %v3436 = vpop.f32.mrb[0].mxu0
    %v3437 = vadd.f32 0.0, %v3436
    %v3438 = vpop.f32.mrb[0].mxu0
    %v3439 = vpop.f32.mrb[0].mxu0
    %v3440 = vpop.f32.mrb[0].mxu0
    %3441 = vdwg.mxu0
    %v3442 = vadd.f32 %v3206, %v3429
    %v3443 = vadd.f32 %v3207, %v3432
    %v3444 = vadd.f32 %v3208, %v3437
    %s3445 = scalar_lea.vmem %s9, 1
    %v3446 = vld [vmem:[%s3445] sm:$0x1]
    %v3448 = vlaneseq
    %v3449 = vshrl.u32 %v3448, 7
    %v3450 = vsub.s32 0, %v3449
    %v3451 = vrot.slane %v3446, %v3450
    %v3453 = vadd.f32 %v3442, %v3451
    %v3454 = vadd.f32 %v3443, %v3451
    %v3455 = vadd.f32 %v3444, %v3451
    %v3456 = vadd.f32 %v2205, %v3453
    %v3457 = vadd.f32 %v2206, %v3454
    %v3458 = vadd.f32 %v2207, %v3455
    %s3459 = scalar_lea.vmem %s14, 1
    %v3460 = vld [vmem:[%s3459] sm:$0x1]
    %s3461 = scalar_lea.vmem %s15, 1
    %v3462 = vld [vmem:[%s3461] sm:$0x1]
    %3463 = vadd.xlane.f32.xlu0 %v3456
    %v3464 = vpop.xlane.xlu0 %3463
    %3465 = vadd.xlane.f32.xlu0 %v3457
    %v3466 = vpop.xlane.xlu0 %3465
    %v3467 = vsel %vm1402, %v3458, 0.0
    %3468 = vadd.xlane.f32.xlu0 %v3467
    %v3469 = vpop.xlane.xlu0 %3468
    %v3470 = vmul.f32 %v3464, %v1406
    %v3471 = vmul.f32 %v3466, %v1406
    %v3472 = vmul.f32 %v3469, %v1406
    %v3473 = vsub.f32 %v3456, %v3470
    %v3474 = vsub.f32 %v3457, %v3471
    %v3475 = vsub.f32 %v3458, %v3472
    %v3476 = vmul.f32 %v3473, %v3473
    %v3477 = vmul.f32 %v3474, %v3474
    %v3478 = vmul.f32 %v3475, %v3475
    %3479 = vadd.xlane.f32.xlu0 %v3476
    %v3480 = vpop.xlane.xlu0 %3479
    %3481 = vadd.xlane.f32.xlu0 %v3477
    %v3482 = vpop.xlane.xlu0 %3481
    %v3483 = vsel %vm1402, %v3478, 0.0
    %3484 = vadd.xlane.f32.xlu0 %v3483
    %v3485 = vpop.xlane.xlu0 %3484
    %v3486 = vmul.f32 %v3480, %v1406
    %v3487 = vmul.f32 %v3482, %v1406
    %v3488 = vmul.f32 %v3485, %v1406
    %v3489 = vadd.f32 %v3486, 1e-05
    %v3490 = vadd.f32 %v3487, 1e-05
    %v3491 = vadd.f32 %v3488, 1e-05
    %v3492 = vrsqrt.pop %v3489
    %v3493 = vrsqrt.pop %v3490
    %v3494 = vrsqrt.pop %v3491
    %v3495 = vmul.f32 %v3473, %v3492
    %v3496 = vmul.f32 %v3474, %v3493
    %v3497 = vmul.f32 %v3475, %v3494
    %v3499 = vlaneseq
    %v3500 = vshrl.u32 %v3499, 7
    %v3501 = vsub.s32 0, %v3500
    %v3502 = vrot.slane %v3460, %v3501
    %v3504 = vmul.f32 %v3495, %v3502
    %v3505 = vmul.f32 %v3496, %v3502
    %v3506 = vmul.f32 %v3497, %v3502
    %v3508 = vlaneseq
    %v3509 = vshrl.u32 %v3508, 7
    %v3510 = vsub.s32 0, %v3509
    %v3511 = vrot.slane %v3462, %v3510
    %v3513 = vadd.f32 %v3504, %v3511
    %v3514 = vadd.f32 %v3505, %v3511
    %v3515 = vadd.f32 %v3506, %v3511
    %v3516 = vpack.c.bf16 %v3514, %v3513
    %v3517 = vpack.c.bf16 %v3515, %v3515
    %s3518 = scalar_lea.vmem %s10, 256
    %v3519 = vld [vmem:[%s3518] sm:$0xff]
    %v3520 = vld [vmem:[%s3518 + $0x8] sm:$0xff]
    %v3521 = vld [vmem:[%s3518 + $0x10] sm:$0xff]
    %v3522 = vld [vmem:[%s3518 + $0x18] sm:$0xff]
    %v3523 = vld [vmem:[%s3518 + $0x20] sm:$0xff]
    %v3524 = vld [vmem:[%s3518 + $0x28] sm:$0xff]
    %v3525 = vld [vmem:[%s3518 + $0x30] sm:$0xff]
    %v3526 = vld [vmem:[%s3518 + $0x38] sm:$0xff]
    %v3527 = vld [vmem:[%s3518 + $0x40] sm:$0xff]
    %v3528 = vld [vmem:[%s3518 + $0x48] sm:$0xff]
    %v3529 = vld [vmem:[%s3518 + $0x50] sm:$0xff]
    %v3530 = vld [vmem:[%s3518 + $0x58] sm:$0xff]
    %v3531 = vld [vmem:[%s3518 + $0x60] sm:$0xff]
    %v3532 = vld [vmem:[%s3518 + $0x68] sm:$0xff]
    %v3533 = vld [vmem:[%s3518 + $0x70] sm:$0xff]
    %v3534 = vld [vmem:[%s3518 + $0x78] sm:$0xff]
    %v3535 = vld [vmem:[%s3518 + $0x80] sm:$0xff]
    %v3536 = vld [vmem:[%s3518 + $0x88] sm:$0xff]
    %v3537 = vld [vmem:[%s3518 + $0x90] sm:$0xff]
    %v3538 = vld [vmem:[%s3518 + $0x98] sm:$0xff]
    %v3539 = vld [vmem:[%s3518 + $0xa0] sm:$0xff]
    %v3540 = vld [vmem:[%s3518 + $0xa8] sm:$0xff]
    %v3541 = vld [vmem:[%s3518 + $0xb0] sm:$0xff]
    %v3542 = vld [vmem:[%s3518 + $0xb8] sm:$0xff]
    %v3543 = vld [vmem:[%s3518 + $0xc0] sm:$0xff]
    %v3544 = vld [vmem:[%s3518 + $0xc8] sm:$0xff]
    %v3545 = vld [vmem:[%s3518 + $0xd0] sm:$0xff]
    %v3546 = vld [vmem:[%s3518 + $0xd8] sm:$0xff]
    %v3547 = vld [vmem:[%s3518 + $0xe0] sm:$0xff]
    %v3548 = vld [vmem:[%s3518 + $0xe8] sm:$0xff]
    %v3549 = vld [vmem:[%s3518 + $0xf0] sm:$0xff]
    %v3550 = vld [vmem:[%s3518 + $0xf8] sm:$0xff]
    %s3551 = scalar_lea.vmem %s11, 4
    %v3552 = vld [vmem:[%s3551] sm:$0xf]
    %v3554 = vlaneseq
    %v3555 = vshrl.u32 %v3554, 7
    %v3556 = vsub.s32 0, %v3555
    %v3557 = vrot.slane %v3552, %v3556
    %v3558 = vlaneseq
    %v3559 = vshrl.u32 %v3558, 7
    %v3560 = vsub.s32 1, %v3559
    %v3561 = vrot.slane %v3552, %v3560
    %v3562 = vlaneseq
    %v3563 = vshrl.u32 %v3562, 7
    %v3564 = vsub.s32 2, %v3563
    %v3565 = vrot.slane %v3552, %v3564
    %v3566 = vlaneseq
    %v3567 = vshrl.u32 %v3566, 7
    %v3568 = vsub.s32 3, %v3567
    %v3569 = vrot.slane %v3552, %v3568
    %v3606 = vunpack.c.l.b16 %v3519
    %v3607 = vunpack.c.h.b16 %v3519
    %v3608 = vunpack.c.l.b16 %v3520
    %v3609 = vunpack.c.h.b16 %v3520
    %v3610 = vunpack.c.l.b16 %v3521
    %v3611 = vunpack.c.h.b16 %v3521
    %v3612 = vunpack.c.l.b16 %v3522
    %v3613 = vunpack.c.h.b16 %v3522
    %v3614 = vunpack.c.l.b16 %v3523
    %v3615 = vunpack.c.h.b16 %v3523
    %v3616 = vunpack.c.l.b16 %v3524
    %v3617 = vunpack.c.h.b16 %v3524
    %v3618 = vunpack.c.l.b16 %v3525
    %v3619 = vunpack.c.h.b16 %v3525
    %v3620 = vunpack.c.l.b16 %v3526
    %v3621 = vunpack.c.h.b16 %v3526
    %v3622 = vunpack.c.l.b16 %v3527
    %v3623 = vunpack.c.h.b16 %v3527
    %v3624 = vunpack.c.l.b16 %v3528
    %v3625 = vunpack.c.h.b16 %v3528
    %v3626 = vunpack.c.l.b16 %v3529
    %v3627 = vunpack.c.h.b16 %v3529
    %v3628 = vunpack.c.l.b16 %v3530
    %v3629 = vunpack.c.h.b16 %v3530
    %v3630 = vunpack.c.l.b16 %v3531
    %v3631 = vunpack.c.h.b16 %v3531
    %v3632 = vunpack.c.l.b16 %v3532
    %v3633 = vunpack.c.h.b16 %v3532
    %v3634 = vunpack.c.l.b16 %v3533
    %v3635 = vunpack.c.h.b16 %v3533
    %v3636 = vunpack.c.l.b16 %v3534
    %v3637 = vunpack.c.h.b16 %v3534
    %v3638 = vunpack.c.l.b16 %v3535
    %v3639 = vunpack.c.h.b16 %v3535
    %v3640 = vunpack.c.l.b16 %v3536
    %v3641 = vunpack.c.h.b16 %v3536
    %v3642 = vunpack.c.l.b16 %v3537
    %v3643 = vunpack.c.h.b16 %v3537
    %v3644 = vunpack.c.l.b16 %v3538
    %v3645 = vunpack.c.h.b16 %v3538
    %v3646 = vunpack.c.l.b16 %v3539
    %v3647 = vunpack.c.h.b16 %v3539
    %v3648 = vunpack.c.l.b16 %v3540
    %v3649 = vunpack.c.h.b16 %v3540
    %v3650 = vunpack.c.l.b16 %v3541
    %v3651 = vunpack.c.h.b16 %v3541
    %v3652 = vunpack.c.l.b16 %v3542
    %v3653 = vunpack.c.h.b16 %v3542
    %v3654 = vunpack.c.l.b16 %v3543
    %v3655 = vunpack.c.h.b16 %v3543
    %v3656 = vunpack.c.l.b16 %v3544
    %v3657 = vunpack.c.h.b16 %v3544
    %v3658 = vunpack.c.l.b16 %v3545
    %v3659 = vunpack.c.h.b16 %v3545
    %v3660 = vunpack.c.l.b16 %v3546
    %v3661 = vunpack.c.h.b16 %v3546
    %v3662 = vunpack.c.l.b16 %v3547
    %v3663 = vunpack.c.h.b16 %v3547
    %v3664 = vunpack.c.l.b16 %v3548
    %v3665 = vunpack.c.h.b16 %v3548
    %v3666 = vunpack.c.l.b16 %v3549
    %v3667 = vunpack.c.h.b16 %v3549
    %v3668 = vunpack.c.l.b16 %v3550
    %v3669 = vunpack.c.h.b16 %v3550
    %v3670 = vpack.c.b16 %v3610, %v3606
    %v3671 = vpack.c.b16 %v3611, %v3607
    %v3672 = vpack.c.b16 %v3612, %v3608
    %v3673 = vpack.c.b16 %v3613, %v3609
    %v3674 = vpack.c.b16 %v3618, %v3614
    %v3675 = vpack.c.b16 %v3619, %v3615
    %v3676 = vpack.c.b16 %v3620, %v3616
    %v3677 = vpack.c.b16 %v3621, %v3617
    %v3678 = vpack.c.b16 %v3626, %v3622
    %v3679 = vpack.c.b16 %v3627, %v3623
    %v3680 = vpack.c.b16 %v3628, %v3624
    %v3681 = vpack.c.b16 %v3629, %v3625
    %v3682 = vpack.c.b16 %v3634, %v3630
    %v3683 = vpack.c.b16 %v3635, %v3631
    %v3684 = vpack.c.b16 %v3636, %v3632
    %v3685 = vpack.c.b16 %v3637, %v3633
    %v3686 = vpack.c.b16 %v3642, %v3638
    %v3687 = vpack.c.b16 %v3643, %v3639
    %v3688 = vpack.c.b16 %v3644, %v3640
    %v3689 = vpack.c.b16 %v3645, %v3641
    %v3690 = vpack.c.b16 %v3650, %v3646
    %v3691 = vpack.c.b16 %v3651, %v3647
    %v3692 = vpack.c.b16 %v3652, %v3648
    %v3693 = vpack.c.b16 %v3653, %v3649
    %v3694 = vpack.c.b16 %v3658, %v3654
    %v3695 = vpack.c.b16 %v3659, %v3655
    %v3696 = vpack.c.b16 %v3660, %v3656
    %v3697 = vpack.c.b16 %v3661, %v3657
    %v3698 = vpack.c.b16 %v3666, %v3662
    %v3699 = vpack.c.b16 %v3667, %v3663
    %v3700 = vpack.c.b16 %v3668, %v3664
    %v3701 = vpack.c.b16 %v3669, %v3665
    %3734 = vmatprep.subr.bf16.mxu0 %v3671
    %3735 = vmatpush1.bf16.msra.mxu0 %v3670
    %3736 = vmatprep.subr.bf16.mxu0 %v3675
    %3737 = vmatpush1.bf16.msra.mxu0 %v3674
    %3738 = vmatprep.subr.bf16.mxu0 %v3679
    %3739 = vmatpush1.bf16.msra.mxu0 %v3678
    %3740 = vmatprep.subr.bf16.mxu0 %v3683
    %3741 = vmatpush1.bf16.msra.mxu0 %v3682
    %3742 = vmatprep.subr.bf16.mxu0 %v3687
    %3743 = vmatpush1.bf16.msra.mxu0 %v3686
    %3744 = vmatprep.subr.bf16.mxu0 %v3691
    %3745 = vmatpush1.bf16.msra.mxu0 %v3690
    %3746 = vmatprep.subr.bf16.mxu0 %v3695
    %3747 = vmatpush1.bf16.msra.mxu0 %v3694
    %3748 = vmatprep.subr.bf16.mxu0 %v3699
    %3749 = vmatpush1.bf16.msra.mxu0 %v3698
    %3750 = vmatprep.subr.bf16.mxu0 0
    %3751 = vmatpush1.bf16.msra.mxu0 0
    %3752 = vmatprep.subr.bf16.mxu0 0
    %3753 = vmatpush1.bf16.msra.mxu0 0
    %3754 = vmatprep.subr.bf16.mxu0 0
    %3755 = vmatpush1.bf16.msra.mxu0 0
    %3756 = vmatprep.subr.bf16.mxu0 0
    %3757 = vmatpush1.bf16.msra.mxu0 0
    %3758 = vmatprep.subr.bf16.mxu0 0
    %3759 = vmatpush1.bf16.msra.mxu0 0
    %3760 = vmatprep.subr.bf16.mxu0 0
    %3761 = vmatpush1.bf16.msra.mxu0 0
    %3762 = vmatprep.subr.bf16.mxu0 0
    %3763 = vmatpush1.bf16.msra.mxu0 0
    %3764 = vmatprep.subr.bf16.mxu0 0
    %3765 = vmatpush1.bf16.msra.mxu0 0
    %3766 = vmatprep.mubr.bf16.mxu0 0
    %3767 = vmatmul.mubr.bf16.gmra.mrb[0].mxu0 %v3516
    %v3768 = vpop.f32.mrb[0].mxu0
    %v3769 = vadd.f32 %v3557, %v3768
    %v3770 = vpop.f32.mrb[0].mxu0
    %v3771 = vadd.f32 %v3561, %v3770
    %v3772 = vpop.f32.mrb[0].mxu0
    %v3773 = vadd.f32 %v3557, %v3772
    %v3774 = vpop.f32.mrb[0].mxu0
    %v3775 = vadd.f32 %v3561, %v3774
    %3776 = vmatprep.mubr.bf16.mxu0 0
    %3777 = vmatmul.mubr.bf16.gmra.mrb[0].mxu0 %v3517
    %v3778 = vpop.f32.mrb[0].mxu0
    %v3779 = vadd.f32 %v3557, %v3778
    %v3780 = vpop.f32.mrb[0].mxu0
    %v3781 = vadd.f32 %v3561, %v3780
    %v3782 = vpop.f32.mrb[0].mxu0
    %v3783 = vpop.f32.mrb[0].mxu0
    %3784 = vdwg.mxu0
    %3785 = vmatprep.subr.bf16.mxu0 %v3673
    %3786 = vmatpush1.bf16.msra.mxu0 %v3672
    %3787 = vmatprep.subr.bf16.mxu0 %v3677
    %3788 = vmatpush1.bf16.msra.mxu0 %v3676
    %3789 = vmatprep.subr.bf16.mxu0 %v3681
    %3790 = vmatpush1.bf16.msra.mxu0 %v3680
    %3791 = vmatprep.subr.bf16.mxu0 %v3685
    %3792 = vmatpush1.bf16.msra.mxu0 %v3684
    %3793 = vmatprep.subr.bf16.mxu0 %v3689
    %3794 = vmatpush1.bf16.msra.mxu0 %v3688
    %3795 = vmatprep.subr.bf16.mxu0 %v3693
    %3796 = vmatpush1.bf16.msra.mxu0 %v3692
    %3797 = vmatprep.subr.bf16.mxu0 %v3697
    %3798 = vmatpush1.bf16.msra.mxu0 %v3696
    %3799 = vmatprep.subr.bf16.mxu0 %v3701
    %3800 = vmatpush1.bf16.msra.mxu0 %v3700
    %3801 = vmatprep.subr.bf16.mxu0 0
    %3802 = vmatpush1.bf16.msra.mxu0 0
    %3803 = vmatprep.subr.bf16.mxu0 0
    %3804 = vmatpush1.bf16.msra.mxu0 0
    %3805 = vmatprep.subr.bf16.mxu0 0
    %3806 = vmatpush1.bf16.msra.mxu0 0
    %3807 = vmatprep.subr.bf16.mxu0 0
    %3808 = vmatpush1.bf16.msra.mxu0 0
    %3809 = vmatprep.subr.bf16.mxu0 0
    %3810 = vmatpush1.bf16.msra.mxu0 0
    %3811 = vmatprep.subr.bf16.mxu0 0
    %3812 = vmatpush1.bf16.msra.mxu0 0
    %3813 = vmatprep.subr.bf16.mxu0 0
    %3814 = vmatpush1.bf16.msra.mxu0 0
    %3815 = vmatprep.subr.bf16.mxu0 0
    %3816 = vmatpush1.bf16.msra.mxu0 0
    %3817 = vmatprep.mubr.bf16.mxu0 0
    %3818 = vmatmul.mubr.bf16.gmra.mrb[0].mxu0 %v3516
    %v3819 = vpop.f32.mrb[0].mxu0
    %v3820 = vadd.f32 %v3565, %v3819
    %v3821 = vpop.f32.mrb[0].mxu0
    %v3822 = vadd.f32 %v3569, %v3821
    %v3823 = vpop.f32.mrb[0].mxu0
    %v3824 = vadd.f32 %v3565, %v3823
    %v3825 = vpop.f32.mrb[0].mxu0
    %v3826 = vadd.f32 %v3569, %v3825
    %3827 = vmatprep.mubr.bf16.mxu0 0
    %3828 = vmatmul.mubr.bf16.gmra.mrb[0].mxu0 %v3517
    %v3829 = vpop.f32.mrb[0].mxu0
    %v3830 = vadd.f32 %v3565, %v3829
    %v3831 = vpop.f32.mrb[0].mxu0
    %v3832 = vadd.f32 %v3569, %v3831
    %v3833 = vpop.f32.mrb[0].mxu0
    %v3834 = vpop.f32.mrb[0].mxu0
    %3835 = vdwg.mxu0
    %v3836 = vmax.f32 %v3769, 0.0
    %v3837 = vmax.f32 %v3771, 0.0
    %v3838 = vmax.f32 %v3820, 0.0
    %v3839 = vmax.f32 %v3822, 0.0
    %v3840 = vmax.f32 %v3773, 0.0
    %v3841 = vmax.f32 %v3775, 0.0
    %v3842 = vmax.f32 %v3824, 0.0
    %v3843 = vmax.f32 %v3826, 0.0
    %v3844 = vmax.f32 %v3779, 0.0
    %v3845 = vmax.f32 %v3781, 0.0
    %v3846 = vmax.f32 %v3830, 0.0
    %v3847 = vmax.f32 %v3832, 0.0
    %v3848 = vpack.c.bf16 %v3840, %v3836
    %v3849 = vpack.c.bf16 %v3841, %v3837
    %v3850 = vpack.c.bf16 %v3842, %v3838
    %v3851 = vpack.c.bf16 %v3843, %v3839
    %v3852 = vpack.c.bf16 %v3844, %v3844
    %v3853 = vpack.c.bf16 %v3845, %v3845
    %v3854 = vpack.c.bf16 %v3846, %v3846
    %v3855 = vpack.c.bf16 %v3847, %v3847
    %s3856 = scalar_lea.vmem %s12, 256
    %v3857 = vld [vmem:[%s3856] sm:$0xf]
    %v3858 = vld [vmem:[%s3856 + $0x4] sm:$0xf]
    %v3859 = vld [vmem:[%s3856 + $0x8] sm:$0xf]
    %v3860 = vld [vmem:[%s3856 + $0xc] sm:$0xf]
    %v3861 = vld [vmem:[%s3856 + $0x10] sm:$0xf]
    %v3862 = vld [vmem:[%s3856 + $0x14] sm:$0xf]
    %v3863 = vld [vmem:[%s3856 + $0x18] sm:$0xf]
    %v3864 = vld [vmem:[%s3856 + $0x1c] sm:$0xf]
    %v3865 = vld [vmem:[%s3856 + $0x20] sm:$0xf]
    %v3866 = vld [vmem:[%s3856 + $0x24] sm:$0xf]
    %v3867 = vld [vmem:[%s3856 + $0x28] sm:$0xf]
    %v3868 = vld [vmem:[%s3856 + $0x2c] sm:$0xf]
    %v3869 = vld [vmem:[%s3856 + $0x30] sm:$0xf]
    %v3870 = vld [vmem:[%s3856 + $0x34] sm:$0xf]
    %v3871 = vld [vmem:[%s3856 + $0x38] sm:$0xf]
    %v3872 = vld [vmem:[%s3856 + $0x3c] sm:$0xf]
    %v3873 = vld [vmem:[%s3856 + $0x40] sm:$0xf]
    %v3874 = vld [vmem:[%s3856 + $0x44] sm:$0xf]
    %v3875 = vld [vmem:[%s3856 + $0x48] sm:$0xf]
    %v3876 = vld [vmem:[%s3856 + $0x4c] sm:$0xf]
    %v3877 = vld [vmem:[%s3856 + $0x50] sm:$0xf]
    %v3878 = vld [vmem:[%s3856 + $0x54] sm:$0xf]
    %v3879 = vld [vmem:[%s3856 + $0x58] sm:$0xf]
    %v3880 = vld [vmem:[%s3856 + $0x5c] sm:$0xf]
    %v3881 = vld [vmem:[%s3856 + $0x60] sm:$0xf]
    %v3882 = vld [vmem:[%s3856 + $0x64] sm:$0xf]
    %v3883 = vld [vmem:[%s3856 + $0x68] sm:$0xf]
    %v3884 = vld [vmem:[%s3856 + $0x6c] sm:$0xf]
    %v3885 = vld [vmem:[%s3856 + $0x70] sm:$0xf]
    %v3886 = vld [vmem:[%s3856 + $0x74] sm:$0xf]
    %v3887 = vld [vmem:[%s3856 + $0x78] sm:$0xf]
    %v3888 = vld [vmem:[%s3856 + $0x7c] sm:$0xf]
    %v3889 = vld [vmem:[%s3856 + $0x80] sm:$0xf]
    %v3890 = vld [vmem:[%s3856 + $0x84] sm:$0xf]
    %v3891 = vld [vmem:[%s3856 + $0x88] sm:$0xf]
    %v3892 = vld [vmem:[%s3856 + $0x8c] sm:$0xf]
    %v3893 = vld [vmem:[%s3856 + $0x90] sm:$0xf]
    %v3894 = vld [vmem:[%s3856 + $0x94] sm:$0xf]
    %v3895 = vld [vmem:[%s3856 + $0x98] sm:$0xf]
    %v3896 = vld [vmem:[%s3856 + $0x9c] sm:$0xf]
    %v3897 = vld [vmem:[%s3856 + $0xa0] sm:$0xf]
    %v3898 = vld [vmem:[%s3856 + $0xa4] sm:$0xf]
    %v3899 = vld [vmem:[%s3856 + $0xa8] sm:$0xf]
    %v3900 = vld [vmem:[%s3856 + $0xac] sm:$0xf]
    %v3901 = vld [vmem:[%s3856 + $0xb0] sm:$0xf]
    %v3902 = vld [vmem:[%s3856 + $0xb4] sm:$0xf]
    %v3903 = vld [vmem:[%s3856 + $0xb8] sm:$0xf]
    %v3904 = vld [vmem:[%s3856 + $0xbc] sm:$0xf]
    %v3905 = vld [vmem:[%s3856 + $0xc0] sm:$0xf]
    %v3906 = vld [vmem:[%s3856 + $0xc4] sm:$0xf]
    %v3907 = vld [vmem:[%s3856 + $0xc8] sm:$0xf]
    %v3908 = vld [vmem:[%s3856 + $0xcc] sm:$0xf]
    %v3909 = vld [vmem:[%s3856 + $0xd0] sm:$0xf]
    %v3910 = vld [vmem:[%s3856 + $0xd4] sm:$0xf]
    %v3911 = vld [vmem:[%s3856 + $0xd8] sm:$0xf]
    %v3912 = vld [vmem:[%s3856 + $0xdc] sm:$0xf]
    %v3913 = vld [vmem:[%s3856 + $0xe0] sm:$0xf]
    %v3914 = vld [vmem:[%s3856 + $0xe4] sm:$0xf]
    %v3915 = vld [vmem:[%s3856 + $0xe8] sm:$0xf]
    %v3916 = vld [vmem:[%s3856 + $0xec] sm:$0xf]
    %v3917 = vld [vmem:[%s3856 + $0xf0] sm:$0xf]
    %v3918 = vld [vmem:[%s3856 + $0xf4] sm:$0xf]
    %v3919 = vld [vmem:[%s3856 + $0xf8] sm:$0xf]
    %v3920 = vld [vmem:[%s3856 + $0xfc] sm:$0xf]
    %s3921 = scalar_lea.vmem %s13, 1
    %v3922 = vld [vmem:[%s3921] sm:$0x1]
    %v3924 = vlaneseq
    %v3925 = vshrl.u32 %v3924, 7
    %v3926 = vsub.s32 0, %v3925
    %v3927 = vrot.slane %v3922, %v3926
    %v3993 = vunpack.c.l.b16 %v3857
    %v3994 = vunpack.c.l.b16 %v3858
    %v3995 = vunpack.c.l.b16 %v3859
    %v3996 = vunpack.c.l.b16 %v3860
    %v3997 = vunpack.c.l.b16 %v3861
    %v3998 = vunpack.c.l.b16 %v3862
    %v3999 = vunpack.c.l.b16 %v3863
    %v4000 = vunpack.c.l.b16 %v3864
    %v4001 = vunpack.c.l.b16 %v3865
    %v4002 = vunpack.c.l.b16 %v3866
    %v4003 = vunpack.c.l.b16 %v3867
    %v4004 = vunpack.c.l.b16 %v3868
    %v4005 = vunpack.c.l.b16 %v3869
    %v4006 = vunpack.c.l.b16 %v3870
    %v4007 = vunpack.c.l.b16 %v3871
    %v4008 = vunpack.c.l.b16 %v3872
    %v4009 = vunpack.c.l.b16 %v3873
    %v4010 = vunpack.c.l.b16 %v3874
    %v4011 = vunpack.c.l.b16 %v3875
    %v4012 = vunpack.c.l.b16 %v3876
    %v4013 = vunpack.c.l.b16 %v3877
    %v4014 = vunpack.c.l.b16 %v3878
    %v4015 = vunpack.c.l.b16 %v3879
    %v4016 = vunpack.c.l.b16 %v3880
    %v4017 = vunpack.c.l.b16 %v3881
    %v4018 = vunpack.c.l.b16 %v3882
    %v4019 = vunpack.c.l.b16 %v3883
    %v4020 = vunpack.c.l.b16 %v3884
    %v4021 = vunpack.c.l.b16 %v3885
    %v4022 = vunpack.c.l.b16 %v3886
    %v4023 = vunpack.c.l.b16 %v3887
    %v4024 = vunpack.c.l.b16 %v3888
    %v4025 = vunpack.c.l.b16 %v3889
    %v4026 = vunpack.c.l.b16 %v3890
    %v4027 = vunpack.c.l.b16 %v3891
    %v4028 = vunpack.c.l.b16 %v3892
    %v4029 = vunpack.c.l.b16 %v3893
    %v4030 = vunpack.c.l.b16 %v3894
    %v4031 = vunpack.c.l.b16 %v3895
    %v4032 = vunpack.c.l.b16 %v3896
    %v4033 = vunpack.c.l.b16 %v3897
    %v4034 = vunpack.c.l.b16 %v3898
    %v4035 = vunpack.c.l.b16 %v3899
    %v4036 = vunpack.c.l.b16 %v3900
    %v4037 = vunpack.c.l.b16 %v3901
    %v4038 = vunpack.c.l.b16 %v3902
    %v4039 = vunpack.c.l.b16 %v3903
    %v4040 = vunpack.c.l.b16 %v3904
    %v4041 = vunpack.c.l.b16 %v3905
    %v4042 = vunpack.c.l.b16 %v3906
    %v4043 = vunpack.c.l.b16 %v3907
    %v4044 = vunpack.c.l.b16 %v3908
    %v4045 = vunpack.c.l.b16 %v3909
    %v4046 = vunpack.c.l.b16 %v3910
    %v4047 = vunpack.c.l.b16 %v3911
    %v4048 = vunpack.c.l.b16 %v3912
    %v4049 = vunpack.c.l.b16 %v3913
    %v4050 = vunpack.c.l.b16 %v3914
    %v4051 = vunpack.c.l.b16 %v3915
    %v4052 = vunpack.c.l.b16 %v3916
    %v4053 = vunpack.c.l.b16 %v3917
    %v4054 = vunpack.c.l.b16 %v3918
    %v4055 = vunpack.c.l.b16 %v3919
    %v4056 = vunpack.c.l.b16 %v3920
    %v4057 = vpack.c.b16 %v3994, %v3993
    %v4058 = vpack.c.b16 %v3996, %v3995
    %v4059 = vpack.c.b16 %v3998, %v3997
    %v4060 = vpack.c.b16 %v4000, %v3999
    %v4061 = vpack.c.b16 %v4002, %v4001
    %v4062 = vpack.c.b16 %v4004, %v4003
    %v4063 = vpack.c.b16 %v4006, %v4005
    %v4064 = vpack.c.b16 %v4008, %v4007
    %v4065 = vpack.c.b16 %v4010, %v4009
    %v4066 = vpack.c.b16 %v4012, %v4011
    %v4067 = vpack.c.b16 %v4014, %v4013
    %v4068 = vpack.c.b16 %v4016, %v4015
    %v4069 = vpack.c.b16 %v4018, %v4017
    %v4070 = vpack.c.b16 %v4020, %v4019
    %v4071 = vpack.c.b16 %v4022, %v4021
    %v4072 = vpack.c.b16 %v4024, %v4023
    %v4073 = vpack.c.b16 %v4026, %v4025
    %v4074 = vpack.c.b16 %v4028, %v4027
    %v4075 = vpack.c.b16 %v4030, %v4029
    %v4076 = vpack.c.b16 %v4032, %v4031
    %v4077 = vpack.c.b16 %v4034, %v4033
    %v4078 = vpack.c.b16 %v4036, %v4035
    %v4079 = vpack.c.b16 %v4038, %v4037
    %v4080 = vpack.c.b16 %v4040, %v4039
    %v4081 = vpack.c.b16 %v4042, %v4041
    %v4082 = vpack.c.b16 %v4044, %v4043
    %v4083 = vpack.c.b16 %v4046, %v4045
    %v4084 = vpack.c.b16 %v4048, %v4047
    %v4085 = vpack.c.b16 %v4050, %v4049
    %v4086 = vpack.c.b16 %v4052, %v4051
    %v4087 = vpack.c.b16 %v4054, %v4053
    %v4088 = vpack.c.b16 %v4056, %v4055
    %4121 = vmatprep.subr.bf16.mxu0 0
    %4122 = vmatpush1.bf16.msra.mxu0 %v4057
    %4123 = vmatprep.subr.bf16.mxu0 0
    %4124 = vmatpush1.bf16.msra.mxu0 %v4058
    %4125 = vmatprep.subr.bf16.mxu0 0
    %4126 = vmatpush1.bf16.msra.mxu0 %v4059
    %4127 = vmatprep.subr.bf16.mxu0 0
    %4128 = vmatpush1.bf16.msra.mxu0 %v4060
    %4129 = vmatprep.subr.bf16.mxu0 0
    %4130 = vmatpush1.bf16.msra.mxu0 %v4061
    %4131 = vmatprep.subr.bf16.mxu0 0
    %4132 = vmatpush1.bf16.msra.mxu0 %v4062
    %4133 = vmatprep.subr.bf16.mxu0 0
    %4134 = vmatpush1.bf16.msra.mxu0 %v4063
    %4135 = vmatprep.subr.bf16.mxu0 0
    %4136 = vmatpush1.bf16.msra.mxu0 %v4064
    %4137 = vmatprep.subr.bf16.mxu0 0
    %4138 = vmatpush1.bf16.msra.mxu0 %v4065
    %4139 = vmatprep.subr.bf16.mxu0 0
    %4140 = vmatpush1.bf16.msra.mxu0 %v4066
    %4141 = vmatprep.subr.bf16.mxu0 0
    %4142 = vmatpush1.bf16.msra.mxu0 %v4067
    %4143 = vmatprep.subr.bf16.mxu0 0
    %4144 = vmatpush1.bf16.msra.mxu0 %v4068
    %4145 = vmatprep.subr.bf16.mxu0 0
    %4146 = vmatpush1.bf16.msra.mxu0 %v4069
    %4147 = vmatprep.subr.bf16.mxu0 0
    %4148 = vmatpush1.bf16.msra.mxu0 %v4070
    %4149 = vmatprep.subr.bf16.mxu0 0
    %4150 = vmatpush1.bf16.msra.mxu0 %v4071
    %4151 = vmatprep.subr.bf16.mxu0 0
    %4152 = vmatpush1.bf16.msra.mxu0 %v4072
    %4153 = vmatprep.mubr.bf16.mxu0 %v3849
    %4154 = vmatmul.mubr.bf16.gmra.mrb[0].mxu0 %v3848
    %v4155 = vpop.f32.mrb[0].mxu0
    %v4156 = vadd.f32 %v3927, %v4155
    %v4157 = vpop.f32.mrb[0].mxu0
    %v4158 = vpop.f32.mrb[0].mxu0
    %v4159 = vadd.f32 %v3927, %v4158
    %v4160 = vpop.f32.mrb[0].mxu0
    %4161 = vmatprep.mubr.bf16.mxu0 %v3853
    %4162 = vmatmul.mubr.bf16.gmra.mrb[0].mxu0 %v3852
    %v4163 = vpop.f32.mrb[0].mxu0
    %v4164 = vadd.f32 %v3927, %v4163
    %v4165 = vpop.f32.mrb[0].mxu0
    %v4166 = vpop.f32.mrb[0].mxu0
    %v4167 = vpop.f32.mrb[0].mxu0
    %4168 = vdwg.mxu0
    %4169 = vmatprep.subr.bf16.mxu0 0
    %4170 = vmatpush1.bf16.msra.mxu0 %v4073
    %4171 = vmatprep.subr.bf16.mxu0 0
    %4172 = vmatpush1.bf16.msra.mxu0 %v4074
    %4173 = vmatprep.subr.bf16.mxu0 0
    %4174 = vmatpush1.bf16.msra.mxu0 %v4075
    %4175 = vmatprep.subr.bf16.mxu0 0
    %4176 = vmatpush1.bf16.msra.mxu0 %v4076
    %4177 = vmatprep.subr.bf16.mxu0 0
    %4178 = vmatpush1.bf16.msra.mxu0 %v4077
    %4179 = vmatprep.subr.bf16.mxu0 0
    %4180 = vmatpush1.bf16.msra.mxu0 %v4078
    %4181 = vmatprep.subr.bf16.mxu0 0
    %4182 = vmatpush1.bf16.msra.mxu0 %v4079
    %4183 = vmatprep.subr.bf16.mxu0 0
    %4184 = vmatpush1.bf16.msra.mxu0 %v4080
    %4185 = vmatprep.subr.bf16.mxu0 0
    %4186 = vmatpush1.bf16.msra.mxu0 %v4081
    %4187 = vmatprep.subr.bf16.mxu0 0
    %4188 = vmatpush1.bf16.msra.mxu0 %v4082
    %4189 = vmatprep.subr.bf16.mxu0 0
    %4190 = vmatpush1.bf16.msra.mxu0 %v4083
    %4191 = vmatprep.subr.bf16.mxu0 0
    %4192 = vmatpush1.bf16.msra.mxu0 %v4084
    %4193 = vmatprep.subr.bf16.mxu0 0
    %4194 = vmatpush1.bf16.msra.mxu0 %v4085
    %4195 = vmatprep.subr.bf16.mxu0 0
    %4196 = vmatpush1.bf16.msra.mxu0 %v4086
    %4197 = vmatprep.subr.bf16.mxu0 0
    %4198 = vmatpush1.bf16.msra.mxu0 %v4087
    %4199 = vmatprep.subr.bf16.mxu0 0
    %4200 = vmatpush1.bf16.msra.mxu0 %v4088
    %4201 = vmatprep.mubr.bf16.mxu0 %v3851
    %4202 = vmatmul.mubr.bf16.gmra.mrb[0].mxu0 %v3850
    %v4203 = vpop.f32.mrb[0].mxu0
    %v4204 = vadd.f32 %v4156, %v4203
    %v4205 = vpop.f32.mrb[0].mxu0
    %v4206 = vpop.f32.mrb[0].mxu0
    %v4207 = vadd.f32 %v4159, %v4206
    %v4208 = vpop.f32.mrb[0].mxu0
    %4209 = vmatprep.mubr.bf16.mxu0 %v3855
    %4210 = vmatmul.mubr.bf16.gmra.mrb[0].mxu0 %v3854
    %v4211 = vpop.f32.mrb[0].mxu0
    %v4212 = vadd.f32 %v4164, %v4211
    %v4213 = vpop.f32.mrb[0].mxu0
    %v4214 = vpop.f32.mrb[0].mxu0
    %v4215 = vpop.f32.mrb[0].mxu0
    %4216 = vdwg.mxu0
    %v4217 = vadd.f32 %v3513, %v4204
    %v4218 = vadd.f32 %v3514, %v4207
    %v4219 = vadd.f32 %v3515, %v4212
    %s4220 = scalar_lea.vmem %s16, 1
    %v4221 = vld [vmem:[%s4220] sm:$0x1]
    %s4222 = scalar_lea.vmem %s17, 1
    %v4223 = vld [vmem:[%s4222] sm:$0x1]
    %4224 = vadd.xlane.f32.xlu0 %v4217
    %v4225 = vpop.xlane.xlu0 %4224
    %4226 = vadd.xlane.f32.xlu0 %v4218
    %v4227 = vpop.xlane.xlu0 %4226
    %v4228 = vsel %vm1402, %v4219, 0.0
    %4229 = vadd.xlane.f32.xlu0 %v4228
    %v4230 = vpop.xlane.xlu0 %4229
    %v4231 = vmul.f32 %v4225, %v1406
    %v4232 = vmul.f32 %v4227, %v1406
    %v4233 = vmul.f32 %v4230, %v1406
    %v4234 = vsub.f32 %v4217, %v4231
    %v4235 = vsub.f32 %v4218, %v4232
    %v4236 = vsub.f32 %v4219, %v4233
    %v4237 = vmul.f32 %v4234, %v4234
    %v4238 = vmul.f32 %v4235, %v4235
    %v4239 = vmul.f32 %v4236, %v4236
    %4240 = vadd.xlane.f32.xlu0 %v4237
    %v4241 = vpop.xlane.xlu0 %4240
    %4242 = vadd.xlane.f32.xlu0 %v4238
    %v4243 = vpop.xlane.xlu0 %4242
    %v4244 = vsel %vm1402, %v4239, 0.0
    %4245 = vadd.xlane.f32.xlu0 %v4244
    %v4246 = vpop.xlane.xlu0 %4245
    %v4247 = vmul.f32 %v4241, %v1406
    %v4248 = vmul.f32 %v4243, %v1406
    %v4249 = vmul.f32 %v4246, %v1406
    %v4250 = vadd.f32 %v4247, 1e-05
    %v4251 = vadd.f32 %v4248, 1e-05
    %v4252 = vadd.f32 %v4249, 1e-05
    %v4253 = vrsqrt.pop %v4250
    %v4254 = vrsqrt.pop %v4251
    %v4255 = vrsqrt.pop %v4252
    %v4256 = vmul.f32 %v4234, %v4253
    %v4257 = vmul.f32 %v4235, %v4254
    %v4258 = vmul.f32 %v4236, %v4255
    %v4260 = vlaneseq
    %v4261 = vshrl.u32 %v4260, 7
    %v4262 = vsub.s32 0, %v4261
    %v4263 = vrot.slane %v4221, %v4262
    %v4265 = vmul.f32 %v4256, %v4263
    %v4266 = vmul.f32 %v4257, %v4263
    %v4267 = vmul.f32 %v4258, %v4263
    %v4269 = vlaneseq
    %v4270 = vshrl.u32 %v4269, 7
    %v4271 = vsub.s32 0, %v4270
    %v4272 = vrot.slane %v4223, %v4271
    %v4274 = vadd.f32 %v4265, %v4272
    %v4275 = vadd.f32 %v4266, %v4272
    %v4276 = vadd.f32 %v4267, %v4272
    %v4277 = vpack.c.bf16 %v4275, %v4274
    %v4278 = vpack.c.bf16 %v4276, %v4276
    %s4279 = scalar_lea.vmem %s6, 384
    %v4280 = vld [vmem:[%s4279] sm:$0xff]
    %v4281 = vld [vmem:[%s4279 + $0x8] sm:$0xf]
    %v4282 = vld [vmem:[%s4279 + $0xc] sm:$0xff]
    %v4283 = vld [vmem:[%s4279 + $0x14] sm:$0xf]
    %v4284 = vld [vmem:[%s4279 + $0x18] sm:$0xff]
    %v4285 = vld [vmem:[%s4279 + $0x20] sm:$0xf]
    %v4286 = vld [vmem:[%s4279 + $0x24] sm:$0xff]
    %v4287 = vld [vmem:[%s4279 + $0x2c] sm:$0xf]
    %v4288 = vld [vmem:[%s4279 + $0x30] sm:$0xff]
    %v4289 = vld [vmem:[%s4279 + $0x38] sm:$0xf]
    %v4290 = vld [vmem:[%s4279 + $0x3c] sm:$0xff]
    %v4291 = vld [vmem:[%s4279 + $0x44] sm:$0xf]
    %v4292 = vld [vmem:[%s4279 + $0x48] sm:$0xff]
    %v4293 = vld [vmem:[%s4279 + $0x50] sm:$0xf]
    %v4294 = vld [vmem:[%s4279 + $0x54] sm:$0xff]
    %v4295 = vld [vmem:[%s4279 + $0x5c] sm:$0xf]
    %v4296 = vld [vmem:[%s4279 + $0x60] sm:$0xff]
    %v4297 = vld [vmem:[%s4279 + $0x68] sm:$0xf]
    %v4298 = vld [vmem:[%s4279 + $0x6c] sm:$0xff]
    %v4299 = vld [vmem:[%s4279 + $0x74] sm:$0xf]
    %v4300 = vld [vmem:[%s4279 + $0x78] sm:$0xff]
    %v4301 = vld [vmem:[%s4279 + $0x80] sm:$0xf]
    %v4302 = vld [vmem:[%s4279 + $0x84] sm:$0xff]
    %v4303 = vld [vmem:[%s4279 + $0x8c] sm:$0xf]
    %v4304 = vld [vmem:[%s4279 + $0x90] sm:$0xff]
    %v4305 = vld [vmem:[%s4279 + $0x98] sm:$0xf]
    %v4306 = vld [vmem:[%s4279 + $0x9c] sm:$0xff]
    %v4307 = vld [vmem:[%s4279 + $0xa4] sm:$0xf]
    %v4308 = vld [vmem:[%s4279 + $0xa8] sm:$0xff]
    %v4309 = vld [vmem:[%s4279 + $0xb0] sm:$0xf]
    %v4310 = vld [vmem:[%s4279 + $0xb4] sm:$0xff]
    %v4311 = vld [vmem:[%s4279 + $0xbc] sm:$0xf]
    %s4312 = scalar_lea.vmem %s7, 6
    %v4313 = vld [vmem:[%s4312] sm:$0x7]
    %v4315 = vlaneseq
    %v4316 = vshrl.u32 %v4315, 7
    %v4317 = vsub.s32 0, %v4316
    %v4318 = vrot.slane %v4313, %v4317
    %v4319 = vlaneseq
    %v4320 = vshrl.u32 %v4319, 7
    %v4321 = vsub.s32 1, %v4320
    %v4322 = vrot.slane %v4313, %v4321
    %v4323 = vlaneseq
    %v4324 = vshrl.u32 %v4323, 7
    %v4325 = vsub.s32 2, %v4324
    %v4326 = vrot.slane %v4313, %v4325
    %v4362 = vunpack.c.l.b16 %v4280
    %v4363 = vunpack.c.h.b16 %v4280
    %v4364 = vunpack.c.l.b16 %v4281
    %v4365 = vunpack.c.l.b16 %v4282
    %v4366 = vunpack.c.h.b16 %v4282
    %v4367 = vunpack.c.l.b16 %v4283
    %v4368 = vunpack.c.l.b16 %v4284
    %v4369 = vunpack.c.h.b16 %v4284
    %v4370 = vunpack.c.l.b16 %v4285
    %v4371 = vunpack.c.l.b16 %v4286
    %v4372 = vunpack.c.h.b16 %v4286
    %v4373 = vunpack.c.l.b16 %v4287
    %v4374 = vunpack.c.l.b16 %v4288
    %v4375 = vunpack.c.h.b16 %v4288
    %v4376 = vunpack.c.l.b16 %v4289
    %v4377 = vunpack.c.l.b16 %v4290
    %v4378 = vunpack.c.h.b16 %v4290
    %v4379 = vunpack.c.l.b16 %v4291
    %v4380 = vunpack.c.l.b16 %v4292
    %v4381 = vunpack.c.h.b16 %v4292
    %v4382 = vunpack.c.l.b16 %v4293
    %v4383 = vunpack.c.l.b16 %v4294
    %v4384 = vunpack.c.h.b16 %v4294
    %v4385 = vunpack.c.l.b16 %v4295
    %v4386 = vunpack.c.l.b16 %v4296
    %v4387 = vunpack.c.h.b16 %v4296
    %v4388 = vunpack.c.l.b16 %v4297
    %v4389 = vunpack.c.l.b16 %v4298
    %v4390 = vunpack.c.h.b16 %v4298
    %v4391 = vunpack.c.l.b16 %v4299
    %v4392 = vunpack.c.l.b16 %v4300
    %v4393 = vunpack.c.h.b16 %v4300
    %v4394 = vunpack.c.l.b16 %v4301
    %v4395 = vunpack.c.l.b16 %v4302
    %v4396 = vunpack.c.h.b16 %v4302
    %v4397 = vunpack.c.l.b16 %v4303
    %v4398 = vunpack.c.l.b16 %v4304
    %v4399 = vunpack.c.h.b16 %v4304
    %v4400 = vunpack.c.l.b16 %v4305
    %v4401 = vunpack.c.l.b16 %v4306
    %v4402 = vunpack.c.h.b16 %v4306
    %v4403 = vunpack.c.l.b16 %v4307
    %v4404 = vunpack.c.l.b16 %v4308
    %v4405 = vunpack.c.h.b16 %v4308
    %v4406 = vunpack.c.l.b16 %v4309
    %v4407 = vunpack.c.l.b16 %v4310
    %v4408 = vunpack.c.h.b16 %v4310
    %v4409 = vunpack.c.l.b16 %v4311
    %v4410 = vpack.c.b16 %v4365, %v4362
    %v4411 = vpack.c.b16 %v4366, %v4363
    %v4412 = vpack.c.b16 %v4367, %v4364
    %v4413 = vpack.c.b16 %v4371, %v4368
    %v4414 = vpack.c.b16 %v4372, %v4369
    %v4415 = vpack.c.b16 %v4373, %v4370
    %v4416 = vpack.c.b16 %v4377, %v4374
    %v4417 = vpack.c.b16 %v4378, %v4375
    %v4418 = vpack.c.b16 %v4379, %v4376
    %v4419 = vpack.c.b16 %v4383, %v4380
    %v4420 = vpack.c.b16 %v4384, %v4381
    %v4421 = vpack.c.b16 %v4385, %v4382
    %v4422 = vpack.c.b16 %v4389, %v4386
    %v4423 = vpack.c.b16 %v4390, %v4387
    %v4424 = vpack.c.b16 %v4391, %v4388
    %v4425 = vpack.c.b16 %v4395, %v4392
    %v4426 = vpack.c.b16 %v4396, %v4393
    %v4427 = vpack.c.b16 %v4397, %v4394
    %v4428 = vpack.c.b16 %v4401, %v4398
    %v4429 = vpack.c.b16 %v4402, %v4399
    %v4430 = vpack.c.b16 %v4403, %v4400
    %v4431 = vpack.c.b16 %v4407, %v4404
    %v4432 = vpack.c.b16 %v4408, %v4405
    %v4433 = vpack.c.b16 %v4409, %v4406
    %4458 = vmatprep.subr.bf16.mxu0 %v4411
    %4459 = vmatpush1.bf16.msra.mxu0 %v4410
    %4460 = vmatprep.subr.bf16.mxu0 %v4414
    %4461 = vmatpush1.bf16.msra.mxu0 %v4413
    %4462 = vmatprep.subr.bf16.mxu0 %v4417
    %4463 = vmatpush1.bf16.msra.mxu0 %v4416
    %4464 = vmatprep.subr.bf16.mxu0 %v4420
    %4465 = vmatpush1.bf16.msra.mxu0 %v4419
    %4466 = vmatprep.subr.bf16.mxu0 %v4423
    %4467 = vmatpush1.bf16.msra.mxu0 %v4422
    %4468 = vmatprep.subr.bf16.mxu0 %v4426
    %4469 = vmatpush1.bf16.msra.mxu0 %v4425
    %4470 = vmatprep.subr.bf16.mxu0 %v4429
    %4471 = vmatpush1.bf16.msra.mxu0 %v4428
    %4472 = vmatprep.subr.bf16.mxu0 %v4432
    %4473 = vmatpush1.bf16.msra.mxu0 %v4431
    %4474 = vmatprep.subr.bf16.mxu0 0
    %4475 = vmatpush1.bf16.msra.mxu0 0
    %4476 = vmatprep.subr.bf16.mxu0 0
    %4477 = vmatpush1.bf16.msra.mxu0 0
    %4478 = vmatprep.subr.bf16.mxu0 0
    %4479 = vmatpush1.bf16.msra.mxu0 0
    %4480 = vmatprep.subr.bf16.mxu0 0
    %4481 = vmatpush1.bf16.msra.mxu0 0
    %4482 = vmatprep.subr.bf16.mxu0 0
    %4483 = vmatpush1.bf16.msra.mxu0 0
    %4484 = vmatprep.subr.bf16.mxu0 0
    %4485 = vmatpush1.bf16.msra.mxu0 0
    %4486 = vmatprep.subr.bf16.mxu0 0
    %4487 = vmatpush1.bf16.msra.mxu0 0
    %4488 = vmatprep.subr.bf16.mxu0 0
    %4489 = vmatpush1.bf16.msra.mxu0 0
    %4490 = vmatprep.mubr.bf16.mxu0 0
    %4491 = vmatmul.mubr.bf16.gmra.mrb[0].mxu0 %v4277
    %v4492 = vpop.f32.mrb[0].mxu0
    %v4493 = vadd.f32 %v4318, %v4492
    %v4494 = vpop.f32.mrb[0].mxu0
    %v4495 = vadd.f32 %v4322, %v4494
    %v4496 = vpop.f32.mrb[0].mxu0
    %v4497 = vadd.f32 %v4318, %v4496
    %v4498 = vpop.f32.mrb[0].mxu0
    %v4499 = vadd.f32 %v4322, %v4498
    %4500 = vmatprep.mubr.bf16.mxu0 0
    %4501 = vmatmul.mubr.bf16.gmra.mrb[0].mxu0 %v4278
    %v4502 = vpop.f32.mrb[0].mxu0
    %v4503 = vadd.f32 %v4318, %v4502
    %v4504 = vpop.f32.mrb[0].mxu0
    %v4505 = vadd.f32 %v4322, %v4504
    %v4506 = vpop.f32.mrb[0].mxu0
    %v4507 = vpop.f32.mrb[0].mxu0
    %4508 = vdwg.mxu0
    %4509 = vmatprep.subr.bf16.mxu0 0
    %4510 = vmatpush1.bf16.msra.mxu0 %v4412
    %4511 = vmatprep.subr.bf16.mxu0 0
    %4512 = vmatpush1.bf16.msra.mxu0 %v4415
    %4513 = vmatprep.subr.bf16.mxu0 0
    %4514 = vmatpush1.bf16.msra.mxu0 %v4418
    %4515 = vmatprep.subr.bf16.mxu0 0
    %4516 = vmatpush1.bf16.msra.mxu0 %v4421
    %4517 = vmatprep.subr.bf16.mxu0 0
    %4518 = vmatpush1.bf16.msra.mxu0 %v4424
    %4519 = vmatprep.subr.bf16.mxu0 0
    %4520 = vmatpush1.bf16.msra.mxu0 %v4427
    %4521 = vmatprep.subr.bf16.mxu0 0
    %4522 = vmatpush1.bf16.msra.mxu0 %v4430
    %4523 = vmatprep.subr.bf16.mxu0 0
    %4524 = vmatpush1.bf16.msra.mxu0 %v4433
    %4525 = vmatprep.subr.bf16.mxu0 0
    %4526 = vmatpush1.bf16.msra.mxu0 0
    %4527 = vmatprep.subr.bf16.mxu0 0
    %4528 = vmatpush1.bf16.msra.mxu0 0
    %4529 = vmatprep.subr.bf16.mxu0 0
    %4530 = vmatpush1.bf16.msra.mxu0 0
    %4531 = vmatprep.subr.bf16.mxu0 0
    %4532 = vmatpush1.bf16.msra.mxu0 0
    %4533 = vmatprep.subr.bf16.mxu0 0
    %4534 = vmatpush1.bf16.msra.mxu0 0
    %4535 = vmatprep.subr.bf16.mxu0 0
    %4536 = vmatpush1.bf16.msra.mxu0 0
    %4537 = vmatprep.subr.bf16.mxu0 0
    %4538 = vmatpush1.bf16.msra.mxu0 0
    %4539 = vmatprep.subr.bf16.mxu0 0
    %4540 = vmatpush1.bf16.msra.mxu0 0
    %4541 = vmatprep.mubr.bf16.mxu0 0
    %4542 = vmatmul.mubr.bf16.gmra.mrb[0].mxu0 %v4277
    %v4543 = vpop.f32.mrb[0].mxu0
    %v4544 = vadd.f32 %v4326, %v4543
    %v4545 = vpop.f32.mrb[0].mxu0
    %v4546 = vpop.f32.mrb[0].mxu0
    %v4547 = vadd.f32 %v4326, %v4546
    %v4548 = vpop.f32.mrb[0].mxu0
    %4549 = vmatprep.mubr.bf16.mxu0 0
    %4550 = vmatmul.mubr.bf16.gmra.mrb[0].mxu0 %v4278
    %v4551 = vpop.f32.mrb[0].mxu0
    %v4552 = vadd.f32 %v4326, %v4551
    %v4553 = vpop.f32.mrb[0].mxu0
    %v4554 = vpop.f32.mrb[0].mxu0
    %v4555 = vpop.f32.mrb[0].mxu0
    %4556 = vdwg.mxu0
    %s4557 = scalar_lea.vmem %s8, 128
    %v4558 = vld [vmem:[%s4557] sm:$0xf]
    %v4559 = vld [vmem:[%s4557 + $0x4] sm:$0xf]
    %v4560 = vld [vmem:[%s4557 + $0x8] sm:$0xf]
    %v4561 = vld [vmem:[%s4557 + $0xc] sm:$0xf]
    %v4562 = vld [vmem:[%s4557 + $0x10] sm:$0xf]
    %v4563 = vld [vmem:[%s4557 + $0x14] sm:$0xf]
    %v4564 = vld [vmem:[%s4557 + $0x18] sm:$0xf]
    %v4565 = vld [vmem:[%s4557 + $0x1c] sm:$0xf]
    %v4566 = vld [vmem:[%s4557 + $0x20] sm:$0xf]
    %v4567 = vld [vmem:[%s4557 + $0x24] sm:$0xf]
    %v4568 = vld [vmem:[%s4557 + $0x28] sm:$0xf]
    %v4569 = vld [vmem:[%s4557 + $0x2c] sm:$0xf]
    %v4570 = vld [vmem:[%s4557 + $0x30] sm:$0xf]
    %v4571 = vld [vmem:[%s4557 + $0x34] sm:$0xf]
    %v4572 = vld [vmem:[%s4557 + $0x38] sm:$0xf]
    %v4573 = vld [vmem:[%s4557 + $0x3c] sm:$0xf]
    %v4574 = vmul.f32 %v4493, 0.17677669
    %v4575 = vmul.f32 %v4497, 0.17677669
    %v4576 = vmul.f32 %v4503, 0.17677669
    %v4577 = vpack.c.bf16 %v4575, %v4574
    %v4578 = vpack.c.bf16 %v4576, %v4576
    %v4579 = vpack.c.bf16 %v4499, %v4495
    %v4580 = vpack.c.bf16 %v4505, %v4505
    %v4581 = vpack.c.bf16 %v4547, %v4544
    %v4582 = vpack.c.bf16 %v4552, %v4552
    %v4584 = vsel %vm448, %v4577, 0
    %v4587 = vsel %vm448, %v4578, 0
    %v4590 = vsel %vm448, %v4579, 0
    %v4593 = vsel %vm448, %v4580, 0
    %4595 = vmatprep.subr.bf16.mxu0 0
    %4596 = vmatpush1.bf16.xpose.msra.mxu0 %v4590
    %4597 = vmatprep.subr.bf16.mxu0 0
    %4598 = vmatpush1.bf16.xpose.msra.mxu0 %v4593
    %4599 = vmatprep.subr.bf16.mxu0 0
    %4600 = vmatpush1.bf16.xpose.msra.mxu0 0
    %4601 = vmatprep.subr.bf16.mxu0 0
    %4602 = vmatpush1.bf16.xpose.msra.mxu0 0
    %4603 = vmatprep.subr.bf16.mxu0 0
    %4604 = vmatpush1.bf16.xpose.msra.mxu0 0
    %4605 = vmatprep.subr.bf16.mxu0 0
    %4606 = vmatpush1.bf16.xpose.msra.mxu0 0
    %4607 = vmatprep.subr.bf16.mxu0 0
    %4608 = vmatpush1.bf16.xpose.msra.mxu0 0
    %4609 = vmatprep.subr.bf16.mxu0 0
    %4610 = vmatpush1.bf16.xpose.msra.mxu0 0
    %4611 = vmatprep.subr.bf16.mxu0 0
    %4612 = vmatpush1.bf16.xpose.msra.mxu0 0
    %4613 = vmatprep.subr.bf16.mxu0 0
    %4614 = vmatpush1.bf16.xpose.msra.mxu0 0
    %4615 = vmatprep.subr.bf16.mxu0 0
    %4616 = vmatpush1.bf16.xpose.msra.mxu0 0
    %4617 = vmatprep.subr.bf16.mxu0 0
    %4618 = vmatpush1.bf16.xpose.msra.mxu0 0
    %4619 = vmatprep.subr.bf16.mxu0 0
    %4620 = vmatpush1.bf16.xpose.msra.mxu0 0
    %4621 = vmatprep.subr.bf16.mxu0 0
    %4622 = vmatpush1.bf16.xpose.msra.mxu0 0
    %4623 = vmatprep.subr.bf16.mxu0 0
    %4624 = vmatpush1.bf16.xpose.msra.mxu0 0
    %4625 = vmatprep.subr.bf16.mxu0 0
    %4626 = vmatpush1.bf16.xpose.msra.mxu0 0
    %4627 = vmatprep.mubr.bf16.mxu0 0
    %4628 = vmatmul.mubr.bf16.gmra.mrb[0].mxu0 %v4584
    %v4629 = vpop.f32.mrb[0].mxu0
    %v4630 = vadd.f32 %v142, %v4629
    %v4631 = vpop.f32.mrb[0].mxu0
    %v4632 = vpop.f32.mrb[0].mxu0
    %v4633 = vadd.f32 %v143, %v4632
    %v4634 = vpop.f32.mrb[0].mxu0
    %4635 = vmatprep.mubr.bf16.mxu0 0
    %4636 = vmatmul.mubr.bf16.gmra.mrb[0].mxu0 %v4587
    %v4637 = vpop.f32.mrb[0].mxu0
    %v4638 = vadd.f32 %v144, %v4637
    %v4639 = vpop.f32.mrb[0].mxu0
    %v4640 = vpop.f32.mrb[0].mxu0
    %v4641 = vpop.f32.mrb[0].mxu0
    %4642 = vdwg.mxu0
    %v4643 = vsel %vm509, %v4630, -inf
    %4644 = vmax.xlane.f32.xlu0 %v4643
    %v4645 = vpop.xlane.xlu0 %4644
    %v4646 = vsel %vm509, %v4633, -inf
    %4647 = vmax.xlane.f32.xlu0 %v4646
    %v4648 = vpop.xlane.xlu0 %4647
    %v4649 = vsel %vm516, %v4638, -inf
    %4650 = vmax.xlane.f32.xlu0 %v4649
    %v4651 = vpop.xlane.xlu0 %4650
    %v4652 = vsub.f32 %v4630, %v4645
    %v4653 = vsub.f32 %v4633, %v4648
    %v4654 = vsub.f32 %v4638, %v4651
    %v4655 = vmul.f32 %v4652, 1.442695
    %v4656 = vpow.pop %v4655
    %v4657 = vmul.f32 %v4653, 1.442695
    %v4658 = vpow.pop %v4657
    %v4659 = vmul.f32 %v4654, 1.442695
    %v4660 = vpow.pop %v4659
    %v4661 = vsel %vm509, %v4656, 0.0
    %4662 = vadd.xlane.f32.xlu0 %v4661
    %v4663 = vpop.xlane.xlu0 %4662
    %v4664 = vsel %vm509, %v4658, 0.0
    %4665 = vadd.xlane.f32.xlu0 %v4664
    %v4666 = vpop.xlane.xlu0 %4665
    %v4667 = vsel %vm516, %v4660, 0.0
    %4668 = vadd.xlane.f32.xlu0 %v4667
    %v4669 = vpop.xlane.xlu0 %4668
    %v4670 = vrcp.pop %v4663
    %v4671 = vrcp.pop %v4666
    %v4672 = vrcp.pop %v4669
    %v4673 = vmul.f32 %v4656, %v4670
    %v4674 = vmul.f32 %v4658, %v4671
    %v4675 = vmul.f32 %v4660, %v4672
    %v4676 = vpack.c.bf16 %v4674, %v4673
    %v4677 = vpack.c.bf16 %v4675, %v4675
    %v4679 = vsel %vm509, %v4676, 0
    %v4682 = vsel %vm509, %v4677, 0
    %v4685 = vsel %vm552, %v4582, 0
    %4687 = vmatprep.subr.bf16.mxu0 0
    %4688 = vmatpush1.bf16.msra.mxu0 %v4581
    %4689 = vmatprep.subr.bf16.mxu0 0
    %4690 = vmatpush1.bf16.msra.mxu0 %v4685
    %4691 = vmatprep.subr.bf16.mxu0 0
    %4692 = vmatpush1.bf16.msra.mxu0 0
    %4693 = vmatprep.subr.bf16.mxu0 0
    %4694 = vmatpush1.bf16.msra.mxu0 0
    %4695 = vmatprep.subr.bf16.mxu0 0
    %4696 = vmatpush1.bf16.msra.mxu0 0
    %4697 = vmatprep.subr.bf16.mxu0 0
    %4698 = vmatpush1.bf16.msra.mxu0 0
    %4699 = vmatprep.subr.bf16.mxu0 0
    %4700 = vmatpush1.bf16.msra.mxu0 0
    %4701 = vmatprep.subr.bf16.mxu0 0
    %4702 = vmatpush1.bf16.msra.mxu0 0
    %4703 = vmatprep.subr.bf16.mxu0 0
    %4704 = vmatpush1.bf16.msra.mxu0 0
    %4705 = vmatprep.subr.bf16.mxu0 0
    %4706 = vmatpush1.bf16.msra.mxu0 0
    %4707 = vmatprep.subr.bf16.mxu0 0
    %4708 = vmatpush1.bf16.msra.mxu0 0
    %4709 = vmatprep.subr.bf16.mxu0 0
    %4710 = vmatpush1.bf16.msra.mxu0 0
    %4711 = vmatprep.subr.bf16.mxu0 0
    %4712 = vmatpush1.bf16.msra.mxu0 0
    %4713 = vmatprep.subr.bf16.mxu0 0
    %4714 = vmatpush1.bf16.msra.mxu0 0
    %4715 = vmatprep.subr.bf16.mxu0 0
    %4716 = vmatpush1.bf16.msra.mxu0 0
    %4717 = vmatprep.subr.bf16.mxu0 0
    %4718 = vmatpush1.bf16.msra.mxu0 0
    %4719 = vmatprep.mubr.bf16.mxu0 0
    %4720 = vmatmul.mubr.bf16.gmra.mrb[0].mxu0 %v4679
    %v4721 = vpop.f32.mrb[0].mxu0
    %v4722 = vadd.f32 0.0, %v4721
    %v4723 = vpop.f32.mrb[0].mxu0
    %v4724 = vpop.f32.mrb[0].mxu0
    %v4725 = vadd.f32 0.0, %v4724
    %v4726 = vpop.f32.mrb[0].mxu0
    %4727 = vmatprep.mubr.bf16.mxu0 0
    %4728 = vmatmul.mubr.bf16.gmra.mrb[0].mxu0 %v4682
    %v4729 = vpop.f32.mrb[0].mxu0
    %v4730 = vadd.f32 0.0, %v4729
    %v4731 = vpop.f32.mrb[0].mxu0
    %v4732 = vpop.f32.mrb[0].mxu0
    %v4733 = vpop.f32.mrb[0].mxu0
    %4734 = vdwg.mxu0
    %v4735 = vpack.c.bf16 %v4725, %v4722
    %v4736 = vpack.c.bf16 %v4730, %v4730
    %4739 = vrot.lane.b32.xlu0 %v4577, 96
    %v4740 = vpop.permute.xlu0 %4739
    %4741 = vrot.lane.b32.xlu0 %v4578, 96
    %v4742 = vpop.permute.xlu0 %4741
    %4745 = vrot.lane.b32.xlu0 %v4579, 96
    %v4746 = vpop.permute.xlu0 %4745
    %4747 = vrot.lane.b32.xlu0 %v4580, 96
    %v4748 = vpop.permute.xlu0 %4747
    %v4750 = vsel %vm448, %v4740, 0
    %v4753 = vsel %vm448, %v4742, 0
    %v4756 = vsel %vm448, %v4746, 0
    %v4759 = vsel %vm448, %v4748, 0
    %4761 = vmatprep.subr.bf16.mxu0 0
    %4762 = vmatpush1.bf16.xpose.msra.mxu0 %v4756
    %4763 = vmatprep.subr.bf16.mxu0 0
    %4764 = vmatpush1.bf16.xpose.msra.mxu0 %v4759
    %4765 = vmatprep.subr.bf16.mxu0 0
    %4766 = vmatpush1.bf16.xpose.msra.mxu0 0
    %4767 = vmatprep.subr.bf16.mxu0 0
    %4768 = vmatpush1.bf16.xpose.msra.mxu0 0
    %4769 = vmatprep.subr.bf16.mxu0 0
    %4770 = vmatpush1.bf16.xpose.msra.mxu0 0
    %4771 = vmatprep.subr.bf16.mxu0 0
    %4772 = vmatpush1.bf16.xpose.msra.mxu0 0
    %4773 = vmatprep.subr.bf16.mxu0 0
    %4774 = vmatpush1.bf16.xpose.msra.mxu0 0
    %4775 = vmatprep.subr.bf16.mxu0 0
    %4776 = vmatpush1.bf16.xpose.msra.mxu0 0
    %4777 = vmatprep.subr.bf16.mxu0 0
    %4778 = vmatpush1.bf16.xpose.msra.mxu0 0
    %4779 = vmatprep.subr.bf16.mxu0 0
    %4780 = vmatpush1.bf16.xpose.msra.mxu0 0
    %4781 = vmatprep.subr.bf16.mxu0 0
    %4782 = vmatpush1.bf16.xpose.msra.mxu0 0
    %4783 = vmatprep.subr.bf16.mxu0 0
    %4784 = vmatpush1.bf16.xpose.msra.mxu0 0
    %4785 = vmatprep.subr.bf16.mxu0 0
    %4786 = vmatpush1.bf16.xpose.msra.mxu0 0
    %4787 = vmatprep.subr.bf16.mxu0 0
    %4788 = vmatpush1.bf16.xpose.msra.mxu0 0
    %4789 = vmatprep.subr.bf16.mxu0 0
    %4790 = vmatpush1.bf16.xpose.msra.mxu0 0
    %4791 = vmatprep.subr.bf16.mxu0 0
    %4792 = vmatpush1.bf16.xpose.msra.mxu0 0
    %4793 = vmatprep.mubr.bf16.mxu0 0
    %4794 = vmatmul.mubr.bf16.gmra.mrb[0].mxu0 %v4750
    %v4795 = vpop.f32.mrb[0].mxu0
    %v4796 = vadd.f32 %v142, %v4795
    %v4797 = vpop.f32.mrb[0].mxu0
    %v4798 = vpop.f32.mrb[0].mxu0
    %v4799 = vadd.f32 %v143, %v4798
    %v4800 = vpop.f32.mrb[0].mxu0
    %4801 = vmatprep.mubr.bf16.mxu0 0
    %4802 = vmatmul.mubr.bf16.gmra.mrb[0].mxu0 %v4753
    %v4803 = vpop.f32.mrb[0].mxu0
    %v4804 = vadd.f32 %v144, %v4803
    %v4805 = vpop.f32.mrb[0].mxu0
    %v4806 = vpop.f32.mrb[0].mxu0
    %v4807 = vpop.f32.mrb[0].mxu0
    %4808 = vdwg.mxu0
    %v4809 = vsel %vm509, %v4796, -inf
    %4810 = vmax.xlane.f32.xlu0 %v4809
    %v4811 = vpop.xlane.xlu0 %4810
    %v4812 = vsel %vm509, %v4799, -inf
    %4813 = vmax.xlane.f32.xlu0 %v4812
    %v4814 = vpop.xlane.xlu0 %4813
    %v4815 = vsel %vm516, %v4804, -inf
    %4816 = vmax.xlane.f32.xlu0 %v4815
    %v4817 = vpop.xlane.xlu0 %4816
    %v4818 = vsub.f32 %v4796, %v4811
    %v4819 = vsub.f32 %v4799, %v4814
    %v4820 = vsub.f32 %v4804, %v4817
    %v4821 = vmul.f32 %v4818, 1.442695
    %v4822 = vpow.pop %v4821
    %v4823 = vmul.f32 %v4819, 1.442695
    %v4824 = vpow.pop %v4823
    %v4825 = vmul.f32 %v4820, 1.442695
    %v4826 = vpow.pop %v4825
    %v4827 = vsel %vm509, %v4822, 0.0
    %4828 = vadd.xlane.f32.xlu0 %v4827
    %v4829 = vpop.xlane.xlu0 %4828
    %v4830 = vsel %vm509, %v4824, 0.0
    %4831 = vadd.xlane.f32.xlu0 %v4830
    %v4832 = vpop.xlane.xlu0 %4831
    %v4833 = vsel %vm516, %v4826, 0.0
    %4834 = vadd.xlane.f32.xlu0 %v4833
    %v4835 = vpop.xlane.xlu0 %4834
    %v4836 = vrcp.pop %v4829
    %v4837 = vrcp.pop %v4832
    %v4838 = vrcp.pop %v4835
    %v4839 = vmul.f32 %v4822, %v4836
    %v4840 = vmul.f32 %v4824, %v4837
    %v4841 = vmul.f32 %v4826, %v4838
    %v4842 = vpack.c.bf16 %v4840, %v4839
    %v4843 = vpack.c.bf16 %v4841, %v4841
    %4846 = vrot.lane.b32.xlu0 %v4581, 96
    %v4847 = vpop.permute.xlu0 %4846
    %4848 = vrot.lane.b32.xlu0 %v4582, 96
    %v4849 = vpop.permute.xlu0 %4848
    %v4852 = vsel %vm509, %v4842, 0
    %v4855 = vsel %vm509, %v4843, 0
    %v4858 = vsel %vm552, %v4849, 0
    %4860 = vmatprep.subr.bf16.mxu0 0
    %4861 = vmatpush1.bf16.msra.mxu0 %v4847
    %4862 = vmatprep.subr.bf16.mxu0 0
    %4863 = vmatpush1.bf16.msra.mxu0 %v4858
    %4864 = vmatprep.subr.bf16.mxu0 0
    %4865 = vmatpush1.bf16.msra.mxu0 0
    %4866 = vmatprep.subr.bf16.mxu0 0
    %4867 = vmatpush1.bf16.msra.mxu0 0
    %4868 = vmatprep.subr.bf16.mxu0 0
    %4869 = vmatpush1.bf16.msra.mxu0 0
    %4870 = vmatprep.subr.bf16.mxu0 0
    %4871 = vmatpush1.bf16.msra.mxu0 0
    %4872 = vmatprep.subr.bf16.mxu0 0
    %4873 = vmatpush1.bf16.msra.mxu0 0
    %4874 = vmatprep.subr.bf16.mxu0 0
    %4875 = vmatpush1.bf16.msra.mxu0 0
    %4876 = vmatprep.subr.bf16.mxu0 0
    %4877 = vmatpush1.bf16.msra.mxu0 0
    %4878 = vmatprep.subr.bf16.mxu0 0
    %4879 = vmatpush1.bf16.msra.mxu0 0
    %4880 = vmatprep.subr.bf16.mxu0 0
    %4881 = vmatpush1.bf16.msra.mxu0 0
    %4882 = vmatprep.subr.bf16.mxu0 0
    %4883 = vmatpush1.bf16.msra.mxu0 0
    %4884 = vmatprep.subr.bf16.mxu0 0
    %4885 = vmatpush1.bf16.msra.mxu0 0
    %4886 = vmatprep.subr.bf16.mxu0 0
    %4887 = vmatpush1.bf16.msra.mxu0 0
    %4888 = vmatprep.subr.bf16.mxu0 0
    %4889 = vmatpush1.bf16.msra.mxu0 0
    %4890 = vmatprep.subr.bf16.mxu0 0
    %4891 = vmatpush1.bf16.msra.mxu0 0
    %4892 = vmatprep.mubr.bf16.mxu0 0
    %4893 = vmatmul.mubr.bf16.gmra.mrb[0].mxu0 %v4852
    %v4894 = vpop.f32.mrb[0].mxu0
    %v4895 = vadd.f32 0.0, %v4894
    %v4896 = vpop.f32.mrb[0].mxu0
    %v4897 = vpop.f32.mrb[0].mxu0
    %v4898 = vadd.f32 0.0, %v4897
    %v4899 = vpop.f32.mrb[0].mxu0
    %4900 = vmatprep.mubr.bf16.mxu0 0
    %4901 = vmatmul.mubr.bf16.gmra.mrb[0].mxu0 %v4855
    %v4902 = vpop.f32.mrb[0].mxu0
    %v4903 = vadd.f32 0.0, %v4902
    %v4904 = vpop.f32.mrb[0].mxu0
    %v4905 = vpop.f32.mrb[0].mxu0
    %v4906 = vpop.f32.mrb[0].mxu0
    %4907 = vdwg.mxu0
    %v4908 = vpack.c.bf16 %v4898, %v4895
    %v4909 = vpack.c.bf16 %v4903, %v4903
    %v4914 = vunpack.c.l.b16 %v4562
    %v4915 = vunpack.c.l.b16 %v4563
    %v4916 = vunpack.c.l.b16 %v4564
    %v4917 = vunpack.c.l.b16 %v4565
    %v4918 = vpack.c.b16 %v4915, %v4914
    %v4919 = vpack.c.b16 %v4917, %v4916
    %v4923 = vsel %vm448, %v4908, 0
    %v4926 = vsel %vm448, %v4909, 0
    %4928 = vmatprep.subr.bf16.mxu0 0
    %4929 = vmatpush1.bf16.msra.mxu0 %v4918
    %4930 = vmatprep.subr.bf16.mxu0 0
    %4931 = vmatpush1.bf16.msra.mxu0 %v4919
    %4932 = vmatprep.subr.bf16.mxu0 0
    %4933 = vmatpush1.bf16.msra.mxu0 0
    %4934 = vmatprep.subr.bf16.mxu0 0
    %4935 = vmatpush1.bf16.msra.mxu0 0
    %4936 = vmatprep.subr.bf16.mxu0 0
    %4937 = vmatpush1.bf16.msra.mxu0 0
    %4938 = vmatprep.subr.bf16.mxu0 0
    %4939 = vmatpush1.bf16.msra.mxu0 0
    %4940 = vmatprep.subr.bf16.mxu0 0
    %4941 = vmatpush1.bf16.msra.mxu0 0
    %4942 = vmatprep.subr.bf16.mxu0 0
    %4943 = vmatpush1.bf16.msra.mxu0 0
    %4944 = vmatprep.subr.bf16.mxu0 0
    %4945 = vmatpush1.bf16.msra.mxu0 0
    %4946 = vmatprep.subr.bf16.mxu0 0
    %4947 = vmatpush1.bf16.msra.mxu0 0
    %4948 = vmatprep.subr.bf16.mxu0 0
    %4949 = vmatpush1.bf16.msra.mxu0 0
    %4950 = vmatprep.subr.bf16.mxu0 0
    %4951 = vmatpush1.bf16.msra.mxu0 0
    %4952 = vmatprep.subr.bf16.mxu0 0
    %4953 = vmatpush1.bf16.msra.mxu0 0
    %4954 = vmatprep.subr.bf16.mxu0 0
    %4955 = vmatpush1.bf16.msra.mxu0 0
    %4956 = vmatprep.subr.bf16.mxu0 0
    %4957 = vmatpush1.bf16.msra.mxu0 0
    %4958 = vmatprep.subr.bf16.mxu0 0
    %4959 = vmatpush1.bf16.msra.mxu0 0
    %4960 = vmatprep.mubr.bf16.mxu0 0
    %4961 = vmatmul.mubr.bf16.gmra.mrb[0].mxu0 %v4923
    %v4962 = vpop.f32.mrb[0].mxu0
    %v4963 = vadd.f32 0.0, %v4962
    %v4964 = vpop.f32.mrb[0].mxu0
    %v4965 = vpop.f32.mrb[0].mxu0
    %v4966 = vadd.f32 0.0, %v4965
    %v4967 = vpop.f32.mrb[0].mxu0
    %4968 = vmatprep.mubr.bf16.mxu0 0
    %4969 = vmatmul.mubr.bf16.gmra.mrb[0].mxu0 %v4926
    %v4970 = vpop.f32.mrb[0].mxu0
    %v4971 = vadd.f32 0.0, %v4970
    %v4972 = vpop.f32.mrb[0].mxu0
    %v4973 = vpop.f32.mrb[0].mxu0
    %v4974 = vpop.f32.mrb[0].mxu0
    %4975 = vdwg.mxu0
    %v4980 = vunpack.c.l.b16 %v4558
    %v4981 = vunpack.c.l.b16 %v4559
    %v4982 = vunpack.c.l.b16 %v4560
    %v4983 = vunpack.c.l.b16 %v4561
    %v4984 = vpack.c.b16 %v4981, %v4980
    %v4985 = vpack.c.b16 %v4983, %v4982
    %v4989 = vsel %vm448, %v4735, 0
    %v4992 = vsel %vm448, %v4736, 0
    %4994 = vmatprep.subr.bf16.mxu0 0
    %4995 = vmatpush1.bf16.msra.mxu0 %v4984
    %4996 = vmatprep.subr.bf16.mxu0 0
    %4997 = vmatpush1.bf16.msra.mxu0 %v4985
    %4998 = vmatprep.subr.bf16.mxu0 0
    %4999 = vmatpush1.bf16.msra.mxu0 0
    %5000 = vmatprep.subr.bf16.mxu0 0
    %5001 = vmatpush1.bf16.msra.mxu0 0
    %5002 = vmatprep.subr.bf16.mxu0 0
    %5003 = vmatpush1.bf16.msra.mxu0 0
    %5004 = vmatprep.subr.bf16.mxu0 0
    %5005 = vmatpush1.bf16.msra.mxu0 0
    %5006 = vmatprep.subr.bf16.mxu0 0
    %5007 = vmatpush1.bf16.msra.mxu0 0
    %5008 = vmatprep.subr.bf16.mxu0 0
    %5009 = vmatpush1.bf16.msra.mxu0 0
    %5010 = vmatprep.subr.bf16.mxu0 0
    %5011 = vmatpush1.bf16.msra.mxu0 0
    %5012 = vmatprep.subr.bf16.mxu0 0
    %5013 = vmatpush1.bf16.msra.mxu0 0
    %5014 = vmatprep.subr.bf16.mxu0 0
    %5015 = vmatpush1.bf16.msra.mxu0 0
    %5016 = vmatprep.subr.bf16.mxu0 0
    %5017 = vmatpush1.bf16.msra.mxu0 0
    %5018 = vmatprep.subr.bf16.mxu0 0
    %5019 = vmatpush1.bf16.msra.mxu0 0
    %5020 = vmatprep.subr.bf16.mxu0 0
    %5021 = vmatpush1.bf16.msra.mxu0 0
    %5022 = vmatprep.subr.bf16.mxu0 0
    %5023 = vmatpush1.bf16.msra.mxu0 0
    %5024 = vmatprep.subr.bf16.mxu0 0
    %5025 = vmatpush1.bf16.msra.mxu0 0
    %5026 = vmatprep.mubr.bf16.mxu0 0
    %5027 = vmatmul.mubr.bf16.gmra.mrb[0].mxu0 %v4989
    %v5028 = vpop.f32.mrb[0].mxu0
    %v5029 = vadd.f32 %v4963, %v5028
    %v5030 = vpop.f32.mrb[0].mxu0
    %v5031 = vpop.f32.mrb[0].mxu0
    %v5032 = vadd.f32 %v4966, %v5031
    %v5033 = vpop.f32.mrb[0].mxu0
    %5034 = vmatprep.mubr.bf16.mxu0 0
    %5035 = vmatmul.mubr.bf16.gmra.mrb[0].mxu0 %v4992
    %v5036 = vpop.f32.mrb[0].mxu0
    %v5037 = vadd.f32 %v4971, %v5036
    %v5038 = vpop.f32.mrb[0].mxu0
    %v5039 = vpop.f32.mrb[0].mxu0
    %v5040 = vpop.f32.mrb[0].mxu0
    %5041 = vdwg.mxu0
    %5042 = vrot.lane.b32.xlu0 %v4577, 64
    %v5043 = vpop.permute.xlu0 %5042
    %5044 = vrot.lane.b32.xlu0 %v4578, 64
    %v5045 = vpop.permute.xlu0 %5044
    %5046 = vrot.lane.b32.xlu0 %v4579, 64
    %v5047 = vpop.permute.xlu0 %5046
    %5048 = vrot.lane.b32.xlu0 %v4580, 64
    %v5049 = vpop.permute.xlu0 %5048
    %v5051 = vsel %vm448, %v5043, 0
    %v5054 = vsel %vm448, %v5045, 0
    %v5057 = vsel %vm448, %v5047, 0
    %v5060 = vsel %vm448, %v5049, 0
    %5062 = vmatprep.subr.bf16.mxu0 0
    %5063 = vmatpush1.bf16.xpose.msra.mxu0 %v5057
    %5064 = vmatprep.subr.bf16.mxu0 0
    %5065 = vmatpush1.bf16.xpose.msra.mxu0 %v5060
    %5066 = vmatprep.subr.bf16.mxu0 0
    %5067 = vmatpush1.bf16.xpose.msra.mxu0 0
    %5068 = vmatprep.subr.bf16.mxu0 0
    %5069 = vmatpush1.bf16.xpose.msra.mxu0 0
    %5070 = vmatprep.subr.bf16.mxu0 0
    %5071 = vmatpush1.bf16.xpose.msra.mxu0 0
    %5072 = vmatprep.subr.bf16.mxu0 0
    %5073 = vmatpush1.bf16.xpose.msra.mxu0 0
    %5074 = vmatprep.subr.bf16.mxu0 0
    %5075 = vmatpush1.bf16.xpose.msra.mxu0 0
    %5076 = vmatprep.subr.bf16.mxu0 0
    %5077 = vmatpush1.bf16.xpose.msra.mxu0 0
    %5078 = vmatprep.subr.bf16.mxu0 0
    %5079 = vmatpush1.bf16.xpose.msra.mxu0 0
    %5080 = vmatprep.subr.bf16.mxu0 0
    %5081 = vmatpush1.bf16.xpose.msra.mxu0 0
    %5082 = vmatprep.subr.bf16.mxu0 0
    %5083 = vmatpush1.bf16.xpose.msra.mxu0 0
    %5084 = vmatprep.subr.bf16.mxu0 0
    %5085 = vmatpush1.bf16.xpose.msra.mxu0 0
    %5086 = vmatprep.subr.bf16.mxu0 0
    %5087 = vmatpush1.bf16.xpose.msra.mxu0 0
    %5088 = vmatprep.subr.bf16.mxu0 0
    %5089 = vmatpush1.bf16.xpose.msra.mxu0 0
    %5090 = vmatprep.subr.bf16.mxu0 0
    %5091 = vmatpush1.bf16.xpose.msra.mxu0 0
    %5092 = vmatprep.subr.bf16.mxu0 0
    %5093 = vmatpush1.bf16.xpose.msra.mxu0 0
    %5094 = vmatprep.mubr.bf16.mxu0 0
    %5095 = vmatmul.mubr.bf16.gmra.mrb[0].mxu0 %v5051
    %v5096 = vpop.f32.mrb[0].mxu0
    %v5097 = vadd.f32 %v142, %v5096
    %v5098 = vpop.f32.mrb[0].mxu0
    %v5099 = vpop.f32.mrb[0].mxu0
    %v5100 = vadd.f32 %v143, %v5099
    %v5101 = vpop.f32.mrb[0].mxu0
    %5102 = vmatprep.mubr.bf16.mxu0 0
    %5103 = vmatmul.mubr.bf16.gmra.mrb[0].mxu0 %v5054
    %v5104 = vpop.f32.mrb[0].mxu0
    %v5105 = vadd.f32 %v144, %v5104
    %v5106 = vpop.f32.mrb[0].mxu0
    %v5107 = vpop.f32.mrb[0].mxu0
    %v5108 = vpop.f32.mrb[0].mxu0
    %5109 = vdwg.mxu0
    %v5110 = vsel %vm509, %v5097, -inf
    %5111 = vmax.xlane.f32.xlu0 %v5110
    %v5112 = vpop.xlane.xlu0 %5111
    %v5113 = vsel %vm509, %v5100, -inf
    %5114 = vmax.xlane.f32.xlu0 %v5113
    %v5115 = vpop.xlane.xlu0 %5114
    %v5116 = vsel %vm516, %v5105, -inf
    %5117 = vmax.xlane.f32.xlu0 %v5116
    %v5118 = vpop.xlane.xlu0 %5117
    %v5119 = vsub.f32 %v5097, %v5112
    %v5120 = vsub.f32 %v5100, %v5115
    %v5121 = vsub.f32 %v5105, %v5118
    %v5122 = vmul.f32 %v5119, 1.442695
    %v5123 = vpow.pop %v5122
    %v5124 = vmul.f32 %v5120, 1.442695
    %v5125 = vpow.pop %v5124
    %v5126 = vmul.f32 %v5121, 1.442695
    %v5127 = vpow.pop %v5126
    %v5128 = vsel %vm509, %v5123, 0.0
    %5129 = vadd.xlane.f32.xlu0 %v5128
    %v5130 = vpop.xlane.xlu0 %5129
    %v5131 = vsel %vm509, %v5125, 0.0
    %5132 = vadd.xlane.f32.xlu0 %v5131
    %v5133 = vpop.xlane.xlu0 %5132
    %v5134 = vsel %vm516, %v5127, 0.0
    %5135 = vadd.xlane.f32.xlu0 %v5134
    %v5136 = vpop.xlane.xlu0 %5135
    %v5137 = vrcp.pop %v5130
    %v5138 = vrcp.pop %v5133
    %v5139 = vrcp.pop %v5136
    %v5140 = vmul.f32 %v5123, %v5137
    %v5141 = vmul.f32 %v5125, %v5138
    %v5142 = vmul.f32 %v5127, %v5139
    %v5143 = vpack.c.bf16 %v5141, %v5140
    %v5144 = vpack.c.bf16 %v5142, %v5142
    %5145 = vrot.lane.b32.xlu0 %v4581, 64
    %v5146 = vpop.permute.xlu0 %5145
    %5147 = vrot.lane.b32.xlu0 %v4582, 64
    %v5148 = vpop.permute.xlu0 %5147
    %v5151 = vsel %vm509, %v5143, 0
    %v5154 = vsel %vm509, %v5144, 0
    %v5157 = vsel %vm552, %v5148, 0
    %5159 = vmatprep.subr.bf16.mxu0 0
    %5160 = vmatpush1.bf16.msra.mxu0 %v5146
    %5161 = vmatprep.subr.bf16.mxu0 0
    %5162 = vmatpush1.bf16.msra.mxu0 %v5157
    %5163 = vmatprep.subr.bf16.mxu0 0
    %5164 = vmatpush1.bf16.msra.mxu0 0
    %5165 = vmatprep.subr.bf16.mxu0 0
    %5166 = vmatpush1.bf16.msra.mxu0 0
    %5167 = vmatprep.subr.bf16.mxu0 0
    %5168 = vmatpush1.bf16.msra.mxu0 0
    %5169 = vmatprep.subr.bf16.mxu0 0
    %5170 = vmatpush1.bf16.msra.mxu0 0
    %5171 = vmatprep.subr.bf16.mxu0 0
    %5172 = vmatpush1.bf16.msra.mxu0 0
    %5173 = vmatprep.subr.bf16.mxu0 0
    %5174 = vmatpush1.bf16.msra.mxu0 0
    %5175 = vmatprep.subr.bf16.mxu0 0
    %5176 = vmatpush1.bf16.msra.mxu0 0
    %5177 = vmatprep.subr.bf16.mxu0 0
    %5178 = vmatpush1.bf16.msra.mxu0 0
    %5179 = vmatprep.subr.bf16.mxu0 0
    %5180 = vmatpush1.bf16.msra.mxu0 0
    %5181 = vmatprep.subr.bf16.mxu0 0
    %5182 = vmatpush1.bf16.msra.mxu0 0
    %5183 = vmatprep.subr.bf16.mxu0 0
    %5184 = vmatpush1.bf16.msra.mxu0 0
    %5185 = vmatprep.subr.bf16.mxu0 0
    %5186 = vmatpush1.bf16.msra.mxu0 0
    %5187 = vmatprep.subr.bf16.mxu0 0
    %5188 = vmatpush1.bf16.msra.mxu0 0
    %5189 = vmatprep.subr.bf16.mxu0 0
    %5190 = vmatpush1.bf16.msra.mxu0 0
    %5191 = vmatprep.mubr.bf16.mxu0 0
    %5192 = vmatmul.mubr.bf16.gmra.mrb[0].mxu0 %v5151
    %v5193 = vpop.f32.mrb[0].mxu0
    %v5194 = vadd.f32 0.0, %v5193
    %v5195 = vpop.f32.mrb[0].mxu0
    %v5196 = vpop.f32.mrb[0].mxu0
    %v5197 = vadd.f32 0.0, %v5196
    %v5198 = vpop.f32.mrb[0].mxu0
    %5199 = vmatprep.mubr.bf16.mxu0 0
    %5200 = vmatmul.mubr.bf16.gmra.mrb[0].mxu0 %v5154
    %v5201 = vpop.f32.mrb[0].mxu0
    %v5202 = vadd.f32 0.0, %v5201
    %v5203 = vpop.f32.mrb[0].mxu0
    %v5204 = vpop.f32.mrb[0].mxu0
    %v5205 = vpop.f32.mrb[0].mxu0
    %5206 = vdwg.mxu0
    %v5207 = vpack.c.bf16 %v5197, %v5194
    %v5208 = vpack.c.bf16 %v5202, %v5202
    %v5213 = vunpack.c.l.b16 %v4566
    %v5214 = vunpack.c.l.b16 %v4567
    %v5215 = vunpack.c.l.b16 %v4568
    %v5216 = vunpack.c.l.b16 %v4569
    %v5217 = vpack.c.b16 %v5214, %v5213
    %v5218 = vpack.c.b16 %v5216, %v5215
    %v5222 = vsel %vm448, %v5207, 0
    %v5225 = vsel %vm448, %v5208, 0
    %5227 = vmatprep.subr.bf16.mxu0 0
    %5228 = vmatpush1.bf16.msra.mxu0 %v5217
    %5229 = vmatprep.subr.bf16.mxu0 0
    %5230 = vmatpush1.bf16.msra.mxu0 %v5218
    %5231 = vmatprep.subr.bf16.mxu0 0
    %5232 = vmatpush1.bf16.msra.mxu0 0
    %5233 = vmatprep.subr.bf16.mxu0 0
    %5234 = vmatpush1.bf16.msra.mxu0 0
    %5235 = vmatprep.subr.bf16.mxu0 0
    %5236 = vmatpush1.bf16.msra.mxu0 0
    %5237 = vmatprep.subr.bf16.mxu0 0
    %5238 = vmatpush1.bf16.msra.mxu0 0
    %5239 = vmatprep.subr.bf16.mxu0 0
    %5240 = vmatpush1.bf16.msra.mxu0 0
    %5241 = vmatprep.subr.bf16.mxu0 0
    %5242 = vmatpush1.bf16.msra.mxu0 0
    %5243 = vmatprep.subr.bf16.mxu0 0
    %5244 = vmatpush1.bf16.msra.mxu0 0
    %5245 = vmatprep.subr.bf16.mxu0 0
    %5246 = vmatpush1.bf16.msra.mxu0 0
    %5247 = vmatprep.subr.bf16.mxu0 0
    %5248 = vmatpush1.bf16.msra.mxu0 0
    %5249 = vmatprep.subr.bf16.mxu0 0
    %5250 = vmatpush1.bf16.msra.mxu0 0
    %5251 = vmatprep.subr.bf16.mxu0 0
    %5252 = vmatpush1.bf16.msra.mxu0 0
    %5253 = vmatprep.subr.bf16.mxu0 0
    %5254 = vmatpush1.bf16.msra.mxu0 0
    %5255 = vmatprep.subr.bf16.mxu0 0
    %5256 = vmatpush1.bf16.msra.mxu0 0
    %5257 = vmatprep.subr.bf16.mxu0 0
    %5258 = vmatpush1.bf16.msra.mxu0 0
    %5259 = vmatprep.mubr.bf16.mxu0 0
    %5260 = vmatmul.mubr.bf16.gmra.mrb[0].mxu0 %v5222
    %v5261 = vpop.f32.mrb[0].mxu0
    %v5262 = vadd.f32 0.0, %v5261
    %v5263 = vpop.f32.mrb[0].mxu0
    %v5264 = vpop.f32.mrb[0].mxu0
    %v5265 = vadd.f32 0.0, %v5264
    %v5266 = vpop.f32.mrb[0].mxu0
    %5267 = vmatprep.mubr.bf16.mxu0 0
    %5268 = vmatmul.mubr.bf16.gmra.mrb[0].mxu0 %v5225
    %v5269 = vpop.f32.mrb[0].mxu0
    %v5270 = vadd.f32 0.0, %v5269
    %v5271 = vpop.f32.mrb[0].mxu0
    %v5272 = vpop.f32.mrb[0].mxu0
    %v5273 = vpop.f32.mrb[0].mxu0
    %5274 = vdwg.mxu0
    %v5275 = vadd.f32 %v5029, %v5262
    %v5276 = vadd.f32 %v5032, %v5265
    %v5277 = vadd.f32 %v5037, %v5270
    %5278 = vrot.lane.b32.xlu0 %v4577, 32
    %v5279 = vpop.permute.xlu0 %5278
    %5280 = vrot.lane.b32.xlu0 %v4578, 32
    %v5281 = vpop.permute.xlu0 %5280
    %5282 = vrot.lane.b32.xlu0 %v4579, 32
    %v5283 = vpop.permute.xlu0 %5282
    %5284 = vrot.lane.b32.xlu0 %v4580, 32
    %v5285 = vpop.permute.xlu0 %5284
    %v5287 = vsel %vm448, %v5279, 0
    %v5290 = vsel %vm448, %v5281, 0
    %v5293 = vsel %vm448, %v5283, 0
    %v5296 = vsel %vm448, %v5285, 0
    %5298 = vmatprep.subr.bf16.mxu0 0
    %5299 = vmatpush1.bf16.xpose.msra.mxu0 %v5293
    %5300 = vmatprep.subr.bf16.mxu0 0
    %5301 = vmatpush1.bf16.xpose.msra.mxu0 %v5296
    %5302 = vmatprep.subr.bf16.mxu0 0
    %5303 = vmatpush1.bf16.xpose.msra.mxu0 0
    %5304 = vmatprep.subr.bf16.mxu0 0
    %5305 = vmatpush1.bf16.xpose.msra.mxu0 0
    %5306 = vmatprep.subr.bf16.mxu0 0
    %5307 = vmatpush1.bf16.xpose.msra.mxu0 0
    %5308 = vmatprep.subr.bf16.mxu0 0
    %5309 = vmatpush1.bf16.xpose.msra.mxu0 0
    %5310 = vmatprep.subr.bf16.mxu0 0
    %5311 = vmatpush1.bf16.xpose.msra.mxu0 0
    %5312 = vmatprep.subr.bf16.mxu0 0
    %5313 = vmatpush1.bf16.xpose.msra.mxu0 0
    %5314 = vmatprep.subr.bf16.mxu0 0
    %5315 = vmatpush1.bf16.xpose.msra.mxu0 0
    %5316 = vmatprep.subr.bf16.mxu0 0
    %5317 = vmatpush1.bf16.xpose.msra.mxu0 0
    %5318 = vmatprep.subr.bf16.mxu0 0
    %5319 = vmatpush1.bf16.xpose.msra.mxu0 0
    %5320 = vmatprep.subr.bf16.mxu0 0
    %5321 = vmatpush1.bf16.xpose.msra.mxu0 0
    %5322 = vmatprep.subr.bf16.mxu0 0
    %5323 = vmatpush1.bf16.xpose.msra.mxu0 0
    %5324 = vmatprep.subr.bf16.mxu0 0
    %5325 = vmatpush1.bf16.xpose.msra.mxu0 0
    %5326 = vmatprep.subr.bf16.mxu0 0
    %5327 = vmatpush1.bf16.xpose.msra.mxu0 0
    %5328 = vmatprep.subr.bf16.mxu0 0
    %5329 = vmatpush1.bf16.xpose.msra.mxu0 0
    %5330 = vmatprep.mubr.bf16.mxu0 0
    %5331 = vmatmul.mubr.bf16.gmra.mrb[0].mxu0 %v5287
    %v5332 = vpop.f32.mrb[0].mxu0
    %v5333 = vadd.f32 %v142, %v5332
    %v5334 = vpop.f32.mrb[0].mxu0
    %v5335 = vpop.f32.mrb[0].mxu0
    %v5336 = vadd.f32 %v143, %v5335
    %v5337 = vpop.f32.mrb[0].mxu0
    %5338 = vmatprep.mubr.bf16.mxu0 0
    %5339 = vmatmul.mubr.bf16.gmra.mrb[0].mxu0 %v5290
    %v5340 = vpop.f32.mrb[0].mxu0
    %v5341 = vadd.f32 %v144, %v5340
    %v5342 = vpop.f32.mrb[0].mxu0
    %v5343 = vpop.f32.mrb[0].mxu0
    %v5344 = vpop.f32.mrb[0].mxu0
    %5345 = vdwg.mxu0
    %v5346 = vsel %vm509, %v5333, -inf
    %5347 = vmax.xlane.f32.xlu0 %v5346
    %v5348 = vpop.xlane.xlu0 %5347
    %v5349 = vsel %vm509, %v5336, -inf
    %5350 = vmax.xlane.f32.xlu0 %v5349
    %v5351 = vpop.xlane.xlu0 %5350
    %v5352 = vsel %vm516, %v5341, -inf
    %5353 = vmax.xlane.f32.xlu0 %v5352
    %v5354 = vpop.xlane.xlu0 %5353
    %v5355 = vsub.f32 %v5333, %v5348
    %v5356 = vsub.f32 %v5336, %v5351
    %v5357 = vsub.f32 %v5341, %v5354
    %v5358 = vmul.f32 %v5355, 1.442695
    %v5359 = vpow.pop %v5358
    %v5360 = vmul.f32 %v5356, 1.442695
    %v5361 = vpow.pop %v5360
    %v5362 = vmul.f32 %v5357, 1.442695
    %v5363 = vpow.pop %v5362
    %v5364 = vsel %vm509, %v5359, 0.0
    %5365 = vadd.xlane.f32.xlu0 %v5364
    %v5366 = vpop.xlane.xlu0 %5365
    %v5367 = vsel %vm509, %v5361, 0.0
    %5368 = vadd.xlane.f32.xlu0 %v5367
    %v5369 = vpop.xlane.xlu0 %5368
    %v5370 = vsel %vm516, %v5363, 0.0
    %5371 = vadd.xlane.f32.xlu0 %v5370
    %v5372 = vpop.xlane.xlu0 %5371
    %v5373 = vrcp.pop %v5366
    %v5374 = vrcp.pop %v5369
    %v5375 = vrcp.pop %v5372
    %v5376 = vmul.f32 %v5359, %v5373
    %v5377 = vmul.f32 %v5361, %v5374
    %v5378 = vmul.f32 %v5363, %v5375
    %v5379 = vpack.c.bf16 %v5377, %v5376
    %v5380 = vpack.c.bf16 %v5378, %v5378
    %5381 = vrot.lane.b32.xlu0 %v4581, 32
    %v5382 = vpop.permute.xlu0 %5381
    %5383 = vrot.lane.b32.xlu0 %v4582, 32
    %v5384 = vpop.permute.xlu0 %5383
    %v5387 = vsel %vm509, %v5379, 0
    %v5390 = vsel %vm509, %v5380, 0
    %v5393 = vsel %vm552, %v5384, 0
    %5395 = vmatprep.subr.bf16.mxu0 0
    %5396 = vmatpush1.bf16.msra.mxu0 %v5382
    %5397 = vmatprep.subr.bf16.mxu0 0
    %5398 = vmatpush1.bf16.msra.mxu0 %v5393
    %5399 = vmatprep.subr.bf16.mxu0 0
    %5400 = vmatpush1.bf16.msra.mxu0 0
    %5401 = vmatprep.subr.bf16.mxu0 0
    %5402 = vmatpush1.bf16.msra.mxu0 0
    %5403 = vmatprep.subr.bf16.mxu0 0
    %5404 = vmatpush1.bf16.msra.mxu0 0
    %5405 = vmatprep.subr.bf16.mxu0 0
    %5406 = vmatpush1.bf16.msra.mxu0 0
    %5407 = vmatprep.subr.bf16.mxu0 0
    %5408 = vmatpush1.bf16.msra.mxu0 0
    %5409 = vmatprep.subr.bf16.mxu0 0
    %5410 = vmatpush1.bf16.msra.mxu0 0
    %5411 = vmatprep.subr.bf16.mxu0 0
    %5412 = vmatpush1.bf16.msra.mxu0 0
    %5413 = vmatprep.subr.bf16.mxu0 0
    %5414 = vmatpush1.bf16.msra.mxu0 0
    %5415 = vmatprep.subr.bf16.mxu0 0
    %5416 = vmatpush1.bf16.msra.mxu0 0
    %5417 = vmatprep.subr.bf16.mxu0 0
    %5418 = vmatpush1.bf16.msra.mxu0 0
    %5419 = vmatprep.subr.bf16.mxu0 0
    %5420 = vmatpush1.bf16.msra.mxu0 0
    %5421 = vmatprep.subr.bf16.mxu0 0
    %5422 = vmatpush1.bf16.msra.mxu0 0
    %5423 = vmatprep.subr.bf16.mxu0 0
    %5424 = vmatpush1.bf16.msra.mxu0 0
    %5425 = vmatprep.subr.bf16.mxu0 0
    %5426 = vmatpush1.bf16.msra.mxu0 0
    %5427 = vmatprep.mubr.bf16.mxu0 0
    %5428 = vmatmul.mubr.bf16.gmra.mrb[0].mxu0 %v5387
    %v5429 = vpop.f32.mrb[0].mxu0
    %v5430 = vadd.f32 0.0, %v5429
    %v5431 = vpop.f32.mrb[0].mxu0
    %v5432 = vpop.f32.mrb[0].mxu0
    %v5433 = vadd.f32 0.0, %v5432
    %v5434 = vpop.f32.mrb[0].mxu0
    %5435 = vmatprep.mubr.bf16.mxu0 0
    %5436 = vmatmul.mubr.bf16.gmra.mrb[0].mxu0 %v5390
    %v5437 = vpop.f32.mrb[0].mxu0
    %v5438 = vadd.f32 0.0, %v5437
    %v5439 = vpop.f32.mrb[0].mxu0
    %v5440 = vpop.f32.mrb[0].mxu0
    %v5441 = vpop.f32.mrb[0].mxu0
    %5442 = vdwg.mxu0
    %v5443 = vpack.c.bf16 %v5433, %v5430
    %v5444 = vpack.c.bf16 %v5438, %v5438
    %v5449 = vunpack.c.l.b16 %v4570
    %v5450 = vunpack.c.l.b16 %v4571
    %v5451 = vunpack.c.l.b16 %v4572
    %v5452 = vunpack.c.l.b16 %v4573
    %v5453 = vpack.c.b16 %v5450, %v5449
    %v5454 = vpack.c.b16 %v5452, %v5451
    %v5458 = vsel %vm448, %v5443, 0
    %v5461 = vsel %vm448, %v5444, 0
    %5463 = vmatprep.subr.bf16.mxu0 0
    %5464 = vmatpush1.bf16.msra.mxu0 %v5453
    %5465 = vmatprep.subr.bf16.mxu0 0
    %5466 = vmatpush1.bf16.msra.mxu0 %v5454
    %5467 = vmatprep.subr.bf16.mxu0 0
    %5468 = vmatpush1.bf16.msra.mxu0 0
    %5469 = vmatprep.subr.bf16.mxu0 0
    %5470 = vmatpush1.bf16.msra.mxu0 0
    %5471 = vmatprep.subr.bf16.mxu0 0
    %5472 = vmatpush1.bf16.msra.mxu0 0
    %5473 = vmatprep.subr.bf16.mxu0 0
    %5474 = vmatpush1.bf16.msra.mxu0 0
    %5475 = vmatprep.subr.bf16.mxu0 0
    %5476 = vmatpush1.bf16.msra.mxu0 0
    %5477 = vmatprep.subr.bf16.mxu0 0
    %5478 = vmatpush1.bf16.msra.mxu0 0
    %5479 = vmatprep.subr.bf16.mxu0 0
    %5480 = vmatpush1.bf16.msra.mxu0 0
    %5481 = vmatprep.subr.bf16.mxu0 0
    %5482 = vmatpush1.bf16.msra.mxu0 0
    %5483 = vmatprep.subr.bf16.mxu0 0
    %5484 = vmatpush1.bf16.msra.mxu0 0
    %5485 = vmatprep.subr.bf16.mxu0 0
    %5486 = vmatpush1.bf16.msra.mxu0 0
    %5487 = vmatprep.subr.bf16.mxu0 0
    %5488 = vmatpush1.bf16.msra.mxu0 0
    %5489 = vmatprep.subr.bf16.mxu0 0
    %5490 = vmatpush1.bf16.msra.mxu0 0
    %5491 = vmatprep.subr.bf16.mxu0 0
    %5492 = vmatpush1.bf16.msra.mxu0 0
    %5493 = vmatprep.subr.bf16.mxu0 0
    %5494 = vmatpush1.bf16.msra.mxu0 0
    %5495 = vmatprep.mubr.bf16.mxu0 0
    %5496 = vmatmul.mubr.bf16.gmra.mrb[0].mxu0 %v5458
    %v5497 = vpop.f32.mrb[0].mxu0
    %v5498 = vadd.f32 0.0, %v5497
    %v5499 = vpop.f32.mrb[0].mxu0
    %v5500 = vpop.f32.mrb[0].mxu0
    %v5501 = vadd.f32 0.0, %v5500
    %v5502 = vpop.f32.mrb[0].mxu0
    %5503 = vmatprep.mubr.bf16.mxu0 0
    %5504 = vmatmul.mubr.bf16.gmra.mrb[0].mxu0 %v5461
    %v5505 = vpop.f32.mrb[0].mxu0
    %v5506 = vadd.f32 0.0, %v5505
    %v5507 = vpop.f32.mrb[0].mxu0
    %v5508 = vpop.f32.mrb[0].mxu0
    %v5509 = vpop.f32.mrb[0].mxu0
    %5510 = vdwg.mxu0
    %v5511 = vadd.f32 %v5275, %v5498
    %v5512 = vadd.f32 %v5276, %v5501
    %v5513 = vadd.f32 %v5277, %v5506
    %s5514 = scalar_lea.vmem %s9, 2
    %v5515 = vld [vmem:[%s5514] sm:$0x1]
    %v5517 = vlaneseq
    %v5518 = vshrl.u32 %v5517, 7
    %v5519 = vsub.s32 0, %v5518
    %v5520 = vrot.slane %v5515, %v5519
    %v5522 = vadd.f32 %v5511, %v5520
    %v5523 = vadd.f32 %v5512, %v5520
    %v5524 = vadd.f32 %v5513, %v5520
    %v5525 = vadd.f32 %v4274, %v5522
    %v5526 = vadd.f32 %v4275, %v5523
    %v5527 = vadd.f32 %v4276, %v5524
    %s5528 = scalar_lea.vmem %s14, 2
    %v5529 = vld [vmem:[%s5528] sm:$0x1]
    %s5530 = scalar_lea.vmem %s15, 2
    %v5531 = vld [vmem:[%s5530] sm:$0x1]
    %5532 = vadd.xlane.f32.xlu0 %v5525
    %v5533 = vpop.xlane.xlu0 %5532
    %5534 = vadd.xlane.f32.xlu0 %v5526
    %v5535 = vpop.xlane.xlu0 %5534
    %v5536 = vsel %vm1402, %v5527, 0.0
    %5537 = vadd.xlane.f32.xlu0 %v5536
    %v5538 = vpop.xlane.xlu0 %5537
    %v5539 = vmul.f32 %v5533, %v1406
    %v5540 = vmul.f32 %v5535, %v1406
    %v5541 = vmul.f32 %v5538, %v1406
    %v5542 = vsub.f32 %v5525, %v5539
    %v5543 = vsub.f32 %v5526, %v5540
    %v5544 = vsub.f32 %v5527, %v5541
    %v5545 = vmul.f32 %v5542, %v5542
    %v5546 = vmul.f32 %v5543, %v5543
    %v5547 = vmul.f32 %v5544, %v5544
    %5548 = vadd.xlane.f32.xlu0 %v5545
    %v5549 = vpop.xlane.xlu0 %5548
    %5550 = vadd.xlane.f32.xlu0 %v5546
    %v5551 = vpop.xlane.xlu0 %5550
    %v5552 = vsel %vm1402, %v5547, 0.0
    %5553 = vadd.xlane.f32.xlu0 %v5552
    %v5554 = vpop.xlane.xlu0 %5553
    %v5555 = vmul.f32 %v5549, %v1406
    %v5556 = vmul.f32 %v5551, %v1406
    %v5557 = vmul.f32 %v5554, %v1406
    %v5558 = vadd.f32 %v5555, 1e-05
    %v5559 = vadd.f32 %v5556, 1e-05
    %v5560 = vadd.f32 %v5557, 1e-05
    %v5561 = vrsqrt.pop %v5558
    %v5562 = vrsqrt.pop %v5559
    %v5563 = vrsqrt.pop %v5560
    %v5564 = vmul.f32 %v5542, %v5561
    %v5565 = vmul.f32 %v5543, %v5562
    %v5566 = vmul.f32 %v5544, %v5563
    %v5568 = vlaneseq
    %v5569 = vshrl.u32 %v5568, 7
    %v5570 = vsub.s32 0, %v5569
    %v5571 = vrot.slane %v5529, %v5570
    %v5573 = vmul.f32 %v5564, %v5571
    %v5574 = vmul.f32 %v5565, %v5571
    %v5575 = vmul.f32 %v5566, %v5571
    %v5577 = vlaneseq
    %v5578 = vshrl.u32 %v5577, 7
    %v5579 = vsub.s32 0, %v5578
    %v5580 = vrot.slane %v5531, %v5579
    %v5582 = vadd.f32 %v5573, %v5580
    %v5583 = vadd.f32 %v5574, %v5580
    %v5584 = vadd.f32 %v5575, %v5580
    %v5585 = vpack.c.bf16 %v5583, %v5582
    %v5586 = vpack.c.bf16 %v5584, %v5584
    %s5587 = scalar_lea.vmem %s10, 512
    %v5588 = vld [vmem:[%s5587] sm:$0xff]
    %v5589 = vld [vmem:[%s5587 + $0x8] sm:$0xff]
    %v5590 = vld [vmem:[%s5587 + $0x10] sm:$0xff]
    %v5591 = vld [vmem:[%s5587 + $0x18] sm:$0xff]
    %v5592 = vld [vmem:[%s5587 + $0x20] sm:$0xff]
    %v5593 = vld [vmem:[%s5587 + $0x28] sm:$0xff]
    %v5594 = vld [vmem:[%s5587 + $0x30] sm:$0xff]
    %v5595 = vld [vmem:[%s5587 + $0x38] sm:$0xff]
    %v5596 = vld [vmem:[%s5587 + $0x40] sm:$0xff]
    %v5597 = vld [vmem:[%s5587 + $0x48] sm:$0xff]
    %v5598 = vld [vmem:[%s5587 + $0x50] sm:$0xff]
    %v5599 = vld [vmem:[%s5587 + $0x58] sm:$0xff]
    %v5600 = vld [vmem:[%s5587 + $0x60] sm:$0xff]
    %v5601 = vld [vmem:[%s5587 + $0x68] sm:$0xff]
    %v5602 = vld [vmem:[%s5587 + $0x70] sm:$0xff]
    %v5603 = vld [vmem:[%s5587 + $0x78] sm:$0xff]
    %v5604 = vld [vmem:[%s5587 + $0x80] sm:$0xff]
    %v5605 = vld [vmem:[%s5587 + $0x88] sm:$0xff]
    %v5606 = vld [vmem:[%s5587 + $0x90] sm:$0xff]
    %v5607 = vld [vmem:[%s5587 + $0x98] sm:$0xff]
    %v5608 = vld [vmem:[%s5587 + $0xa0] sm:$0xff]
    %v5609 = vld [vmem:[%s5587 + $0xa8] sm:$0xff]
    %v5610 = vld [vmem:[%s5587 + $0xb0] sm:$0xff]
    %v5611 = vld [vmem:[%s5587 + $0xb8] sm:$0xff]
    %v5612 = vld [vmem:[%s5587 + $0xc0] sm:$0xff]
    %v5613 = vld [vmem:[%s5587 + $0xc8] sm:$0xff]
    %v5614 = vld [vmem:[%s5587 + $0xd0] sm:$0xff]
    %v5615 = vld [vmem:[%s5587 + $0xd8] sm:$0xff]
    %v5616 = vld [vmem:[%s5587 + $0xe0] sm:$0xff]
    %v5617 = vld [vmem:[%s5587 + $0xe8] sm:$0xff]
    %v5618 = vld [vmem:[%s5587 + $0xf0] sm:$0xff]
    %v5619 = vld [vmem:[%s5587 + $0xf8] sm:$0xff]
    %s5620 = scalar_lea.vmem %s11, 8
    %v5621 = vld [vmem:[%s5620] sm:$0xf]
    %v5623 = vlaneseq
    %v5624 = vshrl.u32 %v5623, 7
    %v5625 = vsub.s32 0, %v5624
    %v5626 = vrot.slane %v5621, %v5625
    %v5627 = vlaneseq
    %v5628 = vshrl.u32 %v5627, 7
    %v5629 = vsub.s32 1, %v5628
    %v5630 = vrot.slane %v5621, %v5629
    %v5631 = vlaneseq
    %v5632 = vshrl.u32 %v5631, 7
    %v5633 = vsub.s32 2, %v5632
    %v5634 = vrot.slane %v5621, %v5633
    %v5635 = vlaneseq
    %v5636 = vshrl.u32 %v5635, 7
    %v5637 = vsub.s32 3, %v5636
    %v5638 = vrot.slane %v5621, %v5637
    %v5675 = vunpack.c.l.b16 %v5588
    %v5676 = vunpack.c.h.b16 %v5588
    %v5677 = vunpack.c.l.b16 %v5589
    %v5678 = vunpack.c.h.b16 %v5589
    %v5679 = vunpack.c.l.b16 %v5590
    %v5680 = vunpack.c.h.b16 %v5590
    %v5681 = vunpack.c.l.b16 %v5591
    %v5682 = vunpack.c.h.b16 %v5591
    %v5683 = vunpack.c.l.b16 %v5592
    %v5684 = vunpack.c.h.b16 %v5592
    %v5685 = vunpack.c.l.b16 %v5593
    %v5686 = vunpack.c.h.b16 %v5593
    %v5687 = vunpack.c.l.b16 %v5594
    %v5688 = vunpack.c.h.b16 %v5594
    %v5689 = vunpack.c.l.b16 %v5595
    %v5690 = vunpack.c.h.b16 %v5595
    %v5691 = vunpack.c.l.b16 %v5596
    %v5692 = vunpack.c.h.b16 %v5596
    %v5693 = vunpack.c.l.b16 %v5597
    %v5694 = vunpack.c.h.b16 %v5597
    %v5695 = vunpack.c.l.b16 %v5598
    %v5696 = vunpack.c.h.b16 %v5598
    %v5697 = vunpack.c.l.b16 %v5599
    %v5698 = vunpack.c.h.b16 %v5599
    %v5699 = vunpack.c.l.b16 %v5600
    %v5700 = vunpack.c.h.b16 %v5600
    %v5701 = vunpack.c.l.b16 %v5601
    %v5702 = vunpack.c.h.b16 %v5601
    %v5703 = vunpack.c.l.b16 %v5602
    %v5704 = vunpack.c.h.b16 %v5602
    %v5705 = vunpack.c.l.b16 %v5603
    %v5706 = vunpack.c.h.b16 %v5603
    %v5707 = vunpack.c.l.b16 %v5604
    %v5708 = vunpack.c.h.b16 %v5604
    %v5709 = vunpack.c.l.b16 %v5605
    %v5710 = vunpack.c.h.b16 %v5605
    %v5711 = vunpack.c.l.b16 %v5606
    %v5712 = vunpack.c.h.b16 %v5606
    %v5713 = vunpack.c.l.b16 %v5607
    %v5714 = vunpack.c.h.b16 %v5607
    %v5715 = vunpack.c.l.b16 %v5608
    %v5716 = vunpack.c.h.b16 %v5608
    %v5717 = vunpack.c.l.b16 %v5609
    %v5718 = vunpack.c.h.b16 %v5609
    %v5719 = vunpack.c.l.b16 %v5610
    %v5720 = vunpack.c.h.b16 %v5610
    %v5721 = vunpack.c.l.b16 %v5611
    %v5722 = vunpack.c.h.b16 %v5611
    %v5723 = vunpack.c.l.b16 %v5612
    %v5724 = vunpack.c.h.b16 %v5612
    %v5725 = vunpack.c.l.b16 %v5613
    %v5726 = vunpack.c.h.b16 %v5613
    %v5727 = vunpack.c.l.b16 %v5614
    %v5728 = vunpack.c.h.b16 %v5614
    %v5729 = vunpack.c.l.b16 %v5615
    %v5730 = vunpack.c.h.b16 %v5615
    %v5731 = vunpack.c.l.b16 %v5616
    %v5732 = vunpack.c.h.b16 %v5616
    %v5733 = vunpack.c.l.b16 %v5617
    %v5734 = vunpack.c.h.b16 %v5617
    %v5735 = vunpack.c.l.b16 %v5618
    %v5736 = vunpack.c.h.b16 %v5618
    %v5737 = vunpack.c.l.b16 %v5619
    %v5738 = vunpack.c.h.b16 %v5619
    %v5739 = vpack.c.b16 %v5679, %v5675
    %v5740 = vpack.c.b16 %v5680, %v5676
    %v5741 = vpack.c.b16 %v5681, %v5677
    %v5742 = vpack.c.b16 %v5682, %v5678
    %v5743 = vpack.c.b16 %v5687, %v5683
    %v5744 = vpack.c.b16 %v5688, %v5684
    %v5745 = vpack.c.b16 %v5689, %v5685
    %v5746 = vpack.c.b16 %v5690, %v5686
    %v5747 = vpack.c.b16 %v5695, %v5691
    %v5748 = vpack.c.b16 %v5696, %v5692
    %v5749 = vpack.c.b16 %v5697, %v5693
    %v5750 = vpack.c.b16 %v5698, %v5694
    %v5751 = vpack.c.b16 %v5703, %v5699
    %v5752 = vpack.c.b16 %v5704, %v5700
    %v5753 = vpack.c.b16 %v5705, %v5701
    %v5754 = vpack.c.b16 %v5706, %v5702
    %v5755 = vpack.c.b16 %v5711, %v5707
    %v5756 = vpack.c.b16 %v5712, %v5708
    %v5757 = vpack.c.b16 %v5713, %v5709
    %v5758 = vpack.c.b16 %v5714, %v5710
    %v5759 = vpack.c.b16 %v5719, %v5715
    %v5760 = vpack.c.b16 %v5720, %v5716
    %v5761 = vpack.c.b16 %v5721, %v5717
    %v5762 = vpack.c.b16 %v5722, %v5718
    %v5763 = vpack.c.b16 %v5727, %v5723
    %v5764 = vpack.c.b16 %v5728, %v5724
    %v5765 = vpack.c.b16 %v5729, %v5725
    %v5766 = vpack.c.b16 %v5730, %v5726
    %v5767 = vpack.c.b16 %v5735, %v5731
    %v5768 = vpack.c.b16 %v5736, %v5732
    %v5769 = vpack.c.b16 %v5737, %v5733
    %v5770 = vpack.c.b16 %v5738, %v5734
    %5803 = vmatprep.subr.bf16.mxu0 %v5740
    %5804 = vmatpush1.bf16.msra.mxu0 %v5739
    %5805 = vmatprep.subr.bf16.mxu0 %v5744
    %5806 = vmatpush1.bf16.msra.mxu0 %v5743
    %5807 = vmatprep.subr.bf16.mxu0 %v5748
    %5808 = vmatpush1.bf16.msra.mxu0 %v5747
    %5809 = vmatprep.subr.bf16.mxu0 %v5752
    %5810 = vmatpush1.bf16.msra.mxu0 %v5751
    %5811 = vmatprep.subr.bf16.mxu0 %v5756
    %5812 = vmatpush1.bf16.msra.mxu0 %v5755
    %5813 = vmatprep.subr.bf16.mxu0 %v5760
    %5814 = vmatpush1.bf16.msra.mxu0 %v5759
    %5815 = vmatprep.subr.bf16.mxu0 %v5764
    %5816 = vmatpush1.bf16.msra.mxu0 %v5763
    %5817 = vmatprep.subr.bf16.mxu0 %v5768
    %5818 = vmatpush1.bf16.msra.mxu0 %v5767
    %5819 = vmatprep.subr.bf16.mxu0 0
    %5820 = vmatpush1.bf16.msra.mxu0 0
    %5821 = vmatprep.subr.bf16.mxu0 0
    %5822 = vmatpush1.bf16.msra.mxu0 0
    %5823 = vmatprep.subr.bf16.mxu0 0
    %5824 = vmatpush1.bf16.msra.mxu0 0
    %5825 = vmatprep.subr.bf16.mxu0 0
    %5826 = vmatpush1.bf16.msra.mxu0 0
    %5827 = vmatprep.subr.bf16.mxu0 0
    %5828 = vmatpush1.bf16.msra.mxu0 0
    %5829 = vmatprep.subr.bf16.mxu0 0
    %5830 = vmatpush1.bf16.msra.mxu0 0
    %5831 = vmatprep.subr.bf16.mxu0 0
    %5832 = vmatpush1.bf16.msra.mxu0 0
    %5833 = vmatprep.subr.bf16.mxu0 0
    %5834 = vmatpush1.bf16.msra.mxu0 0
    %5835 = vmatprep.mubr.bf16.mxu0 0
    %5836 = vmatmul.mubr.bf16.gmra.mrb[0].mxu0 %v5585
    %v5837 = vpop.f32.mrb[0].mxu0
    %v5838 = vadd.f32 %v5626, %v5837
    %v5839 = vpop.f32.mrb[0].mxu0
    %v5840 = vadd.f32 %v5630, %v5839
    %v5841 = vpop.f32.mrb[0].mxu0
    %v5842 = vadd.f32 %v5626, %v5841
    %v5843 = vpop.f32.mrb[0].mxu0
    %v5844 = vadd.f32 %v5630, %v5843
    %5845 = vmatprep.mubr.bf16.mxu0 0
    %5846 = vmatmul.mubr.bf16.gmra.mrb[0].mxu0 %v5586
    %v5847 = vpop.f32.mrb[0].mxu0
    %v5848 = vadd.f32 %v5626, %v5847
    %v5849 = vpop.f32.mrb[0].mxu0
    %v5850 = vadd.f32 %v5630, %v5849
    %v5851 = vpop.f32.mrb[0].mxu0
    %v5852 = vpop.f32.mrb[0].mxu0
    %5853 = vdwg.mxu0
    %5854 = vmatprep.subr.bf16.mxu0 %v5742
    %5855 = vmatpush1.bf16.msra.mxu0 %v5741
    %5856 = vmatprep.subr.bf16.mxu0 %v5746
    %5857 = vmatpush1.bf16.msra.mxu0 %v5745
    %5858 = vmatprep.subr.bf16.mxu0 %v5750
    %5859 = vmatpush1.bf16.msra.mxu0 %v5749
    %5860 = vmatprep.subr.bf16.mxu0 %v5754
    %5861 = vmatpush1.bf16.msra.mxu0 %v5753
    %5862 = vmatprep.subr.bf16.mxu0 %v5758
    %5863 = vmatpush1.bf16.msra.mxu0 %v5757
    %5864 = vmatprep.subr.bf16.mxu0 %v5762
    %5865 = vmatpush1.bf16.msra.mxu0 %v5761
    %5866 = vmatprep.subr.bf16.mxu0 %v5766
    %5867 = vmatpush1.bf16.msra.mxu0 %v5765
    %5868 = vmatprep.subr.bf16.mxu0 %v5770
    %5869 = vmatpush1.bf16.msra.mxu0 %v5769
    %5870 = vmatprep.subr.bf16.mxu0 0
    %5871 = vmatpush1.bf16.msra.mxu0 0
    %5872 = vmatprep.subr.bf16.mxu0 0
    %5873 = vmatpush1.bf16.msra.mxu0 0
    %5874 = vmatprep.subr.bf16.mxu0 0
    %5875 = vmatpush1.bf16.msra.mxu0 0
    %5876 = vmatprep.subr.bf16.mxu0 0
    %5877 = vmatpush1.bf16.msra.mxu0 0
    %5878 = vmatprep.subr.bf16.mxu0 0
    %5879 = vmatpush1.bf16.msra.mxu0 0
    %5880 = vmatprep.subr.bf16.mxu0 0
    %5881 = vmatpush1.bf16.msra.mxu0 0
    %5882 = vmatprep.subr.bf16.mxu0 0
    %5883 = vmatpush1.bf16.msra.mxu0 0
    %5884 = vmatprep.subr.bf16.mxu0 0
    %5885 = vmatpush1.bf16.msra.mxu0 0
    %5886 = vmatprep.mubr.bf16.mxu0 0
    %5887 = vmatmul.mubr.bf16.gmra.mrb[0].mxu0 %v5585
    %v5888 = vpop.f32.mrb[0].mxu0
    %v5889 = vadd.f32 %v5634, %v5888
    %v5890 = vpop.f32.mrb[0].mxu0
    %v5891 = vadd.f32 %v5638, %v5890
    %v5892 = vpop.f32.mrb[0].mxu0
    %v5893 = vadd.f32 %v5634, %v5892
    %v5894 = vpop.f32.mrb[0].mxu0
    %v5895 = vadd.f32 %v5638, %v5894
    %5896 = vmatprep.mubr.bf16.mxu0 0
    %5897 = vmatmul.mubr.bf16.gmra.mrb[0].mxu0 %v5586
    %v5898 = vpop.f32.mrb[0].mxu0
    %v5899 = vadd.f32 %v5634, %v5898
    %v5900 = vpop.f32.mrb[0].mxu0
    %v5901 = vadd.f32 %v5638, %v5900
    %v5902 = vpop.f32.mrb[0].mxu0
    %v5903 = vpop.f32.mrb[0].mxu0
    %5904 = vdwg.mxu0
    %v5905 = vmax.f32 %v5838, 0.0
    %v5906 = vmax.f32 %v5840, 0.0
    %v5907 = vmax.f32 %v5889, 0.0
    %v5908 = vmax.f32 %v5891, 0.0
    %v5909 = vmax.f32 %v5842, 0.0
    %v5910 = vmax.f32 %v5844, 0.0
    %v5911 = vmax.f32 %v5893, 0.0
    %v5912 = vmax.f32 %v5895, 0.0
    %v5913 = vmax.f32 %v5848, 0.0
    %v5914 = vmax.f32 %v5850, 0.0
    %v5915 = vmax.f32 %v5899, 0.0
    %v5916 = vmax.f32 %v5901, 0.0
    %v5917 = vpack.c.bf16 %v5909, %v5905
    %v5918 = vpack.c.bf16 %v5910, %v5906
    %v5919 = vpack.c.bf16 %v5911, %v5907
    %v5920 = vpack.c.bf16 %v5912, %v5908
    %v5921 = vpack.c.bf16 %v5913, %v5913
    %v5922 = vpack.c.bf16 %v5914, %v5914
    %v5923 = vpack.c.bf16 %v5915, %v5915
    %v5924 = vpack.c.bf16 %v5916, %v5916
    %s5925 = scalar_lea.vmem %s12, 512
    %v5926 = vld [vmem:[%s5925] sm:$0xf]
    %v5927 = vld [vmem:[%s5925 + $0x4] sm:$0xf]
    %v5928 = vld [vmem:[%s5925 + $0x8] sm:$0xf]
    %v5929 = vld [vmem:[%s5925 + $0xc] sm:$0xf]
    %v5930 = vld [vmem:[%s5925 + $0x10] sm:$0xf]
    %v5931 = vld [vmem:[%s5925 + $0x14] sm:$0xf]
    %v5932 = vld [vmem:[%s5925 + $0x18] sm:$0xf]
    %v5933 = vld [vmem:[%s5925 + $0x1c] sm:$0xf]
    %v5934 = vld [vmem:[%s5925 + $0x20] sm:$0xf]
    %v5935 = vld [vmem:[%s5925 + $0x24] sm:$0xf]
    %v5936 = vld [vmem:[%s5925 + $0x28] sm:$0xf]
    %v5937 = vld [vmem:[%s5925 + $0x2c] sm:$0xf]
    %v5938 = vld [vmem:[%s5925 + $0x30] sm:$0xf]
    %v5939 = vld [vmem:[%s5925 + $0x34] sm:$0xf]
    %v5940 = vld [vmem:[%s5925 + $0x38] sm:$0xf]
    %v5941 = vld [vmem:[%s5925 + $0x3c] sm:$0xf]
    %v5942 = vld [vmem:[%s5925 + $0x40] sm:$0xf]
    %v5943 = vld [vmem:[%s5925 + $0x44] sm:$0xf]
    %v5944 = vld [vmem:[%s5925 + $0x48] sm:$0xf]
    %v5945 = vld [vmem:[%s5925 + $0x4c] sm:$0xf]
    %v5946 = vld [vmem:[%s5925 + $0x50] sm:$0xf]
    %v5947 = vld [vmem:[%s5925 + $0x54] sm:$0xf]
    %v5948 = vld [vmem:[%s5925 + $0x58] sm:$0xf]
    %v5949 = vld [vmem:[%s5925 + $0x5c] sm:$0xf]
    %v5950 = vld [vmem:[%s5925 + $0x60] sm:$0xf]
    %v5951 = vld [vmem:[%s5925 + $0x64] sm:$0xf]
    %v5952 = vld [vmem:[%s5925 + $0x68] sm:$0xf]
    %v5953 = vld [vmem:[%s5925 + $0x6c] sm:$0xf]
    %v5954 = vld [vmem:[%s5925 + $0x70] sm:$0xf]
    %v5955 = vld [vmem:[%s5925 + $0x74] sm:$0xf]
    %v5956 = vld [vmem:[%s5925 + $0x78] sm:$0xf]
    %v5957 = vld [vmem:[%s5925 + $0x7c] sm:$0xf]
    %v5958 = vld [vmem:[%s5925 + $0x80] sm:$0xf]
    %v5959 = vld [vmem:[%s5925 + $0x84] sm:$0xf]
    %v5960 = vld [vmem:[%s5925 + $0x88] sm:$0xf]
    %v5961 = vld [vmem:[%s5925 + $0x8c] sm:$0xf]
    %v5962 = vld [vmem:[%s5925 + $0x90] sm:$0xf]
    %v5963 = vld [vmem:[%s5925 + $0x94] sm:$0xf]
    %v5964 = vld [vmem:[%s5925 + $0x98] sm:$0xf]
    %v5965 = vld [vmem:[%s5925 + $0x9c] sm:$0xf]
    %v5966 = vld [vmem:[%s5925 + $0xa0] sm:$0xf]
    %v5967 = vld [vmem:[%s5925 + $0xa4] sm:$0xf]
    %v5968 = vld [vmem:[%s5925 + $0xa8] sm:$0xf]
    %v5969 = vld [vmem:[%s5925 + $0xac] sm:$0xf]
    %v5970 = vld [vmem:[%s5925 + $0xb0] sm:$0xf]
    %v5971 = vld [vmem:[%s5925 + $0xb4] sm:$0xf]
    %v5972 = vld [vmem:[%s5925 + $0xb8] sm:$0xf]
    %v5973 = vld [vmem:[%s5925 + $0xbc] sm:$0xf]
    %v5974 = vld [vmem:[%s5925 + $0xc0] sm:$0xf]
    %v5975 = vld [vmem:[%s5925 + $0xc4] sm:$0xf]
    %v5976 = vld [vmem:[%s5925 + $0xc8] sm:$0xf]
    %v5977 = vld [vmem:[%s5925 + $0xcc] sm:$0xf]
    %v5978 = vld [vmem:[%s5925 + $0xd0] sm:$0xf]
    %v5979 = vld [vmem:[%s5925 + $0xd4] sm:$0xf]
    %v5980 = vld [vmem:[%s5925 + $0xd8] sm:$0xf]
    %v5981 = vld [vmem:[%s5925 + $0xdc] sm:$0xf]
    %v5982 = vld [vmem:[%s5925 + $0xe0] sm:$0xf]
    %v5983 = vld [vmem:[%s5925 + $0xe4] sm:$0xf]
    %v5984 = vld [vmem:[%s5925 + $0xe8] sm:$0xf]
    %v5985 = vld [vmem:[%s5925 + $0xec] sm:$0xf]
    %v5986 = vld [vmem:[%s5925 + $0xf0] sm:$0xf]
    %v5987 = vld [vmem:[%s5925 + $0xf4] sm:$0xf]
    %v5988 = vld [vmem:[%s5925 + $0xf8] sm:$0xf]
    %v5989 = vld [vmem:[%s5925 + $0xfc] sm:$0xf]
    %s5990 = scalar_lea.vmem %s13, 2
    %v5991 = vld [vmem:[%s5990] sm:$0x1]
    %v5993 = vlaneseq
    %v5994 = vshrl.u32 %v5993, 7
    %v5995 = vsub.s32 0, %v5994
    %v5996 = vrot.slane %v5991, %v5995
    %v6062 = vunpack.c.l.b16 %v5926
    %v6063 = vunpack.c.l.b16 %v5927
    %v6064 = vunpack.c.l.b16 %v5928
    %v6065 = vunpack.c.l.b16 %v5929
    %v6066 = vunpack.c.l.b16 %v5930
    %v6067 = vunpack.c.l.b16 %v5931
    %v6068 = vunpack.c.l.b16 %v5932
    %v6069 = vunpack.c.l.b16 %v5933
    %v6070 = vunpack.c.l.b16 %v5934
    %v6071 = vunpack.c.l.b16 %v5935
    %v6072 = vunpack.c.l.b16 %v5936
    %v6073 = vunpack.c.l.b16 %v5937
    %v6074 = vunpack.c.l.b16 %v5938
    %v6075 = vunpack.c.l.b16 %v5939
    %v6076 = vunpack.c.l.b16 %v5940
    %v6077 = vunpack.c.l.b16 %v5941
    %v6078 = vunpack.c.l.b16 %v5942
    %v6079 = vunpack.c.l.b16 %v5943
    %v6080 = vunpack.c.l.b16 %v5944
    %v6081 = vunpack.c.l.b16 %v5945
    %v6082 = vunpack.c.l.b16 %v5946
    %v6083 = vunpack.c.l.b16 %v5947
    %v6084 = vunpack.c.l.b16 %v5948
    %v6085 = vunpack.c.l.b16 %v5949
    %v6086 = vunpack.c.l.b16 %v5950
    %v6087 = vunpack.c.l.b16 %v5951
    %v6088 = vunpack.c.l.b16 %v5952
    %v6089 = vunpack.c.l.b16 %v5953
    %v6090 = vunpack.c.l.b16 %v5954
    %v6091 = vunpack.c.l.b16 %v5955
    %v6092 = vunpack.c.l.b16 %v5956
    %v6093 = vunpack.c.l.b16 %v5957
    %v6094 = vunpack.c.l.b16 %v5958
    %v6095 = vunpack.c.l.b16 %v5959
    %v6096 = vunpack.c.l.b16 %v5960
    %v6097 = vunpack.c.l.b16 %v5961
    %v6098 = vunpack.c.l.b16 %v5962
    %v6099 = vunpack.c.l.b16 %v5963
    %v6100 = vunpack.c.l.b16 %v5964
    %v6101 = vunpack.c.l.b16 %v5965
    %v6102 = vunpack.c.l.b16 %v5966
    %v6103 = vunpack.c.l.b16 %v5967
    %v6104 = vunpack.c.l.b16 %v5968
    %v6105 = vunpack.c.l.b16 %v5969
    %v6106 = vunpack.c.l.b16 %v5970
    %v6107 = vunpack.c.l.b16 %v5971
    %v6108 = vunpack.c.l.b16 %v5972
    %v6109 = vunpack.c.l.b16 %v5973
    %v6110 = vunpack.c.l.b16 %v5974
    %v6111 = vunpack.c.l.b16 %v5975
    %v6112 = vunpack.c.l.b16 %v5976
    %v6113 = vunpack.c.l.b16 %v5977
    %v6114 = vunpack.c.l.b16 %v5978
    %v6115 = vunpack.c.l.b16 %v5979
    %v6116 = vunpack.c.l.b16 %v5980
    %v6117 = vunpack.c.l.b16 %v5981
    %v6118 = vunpack.c.l.b16 %v5982
    %v6119 = vunpack.c.l.b16 %v5983
    %v6120 = vunpack.c.l.b16 %v5984
    %v6121 = vunpack.c.l.b16 %v5985
    %v6122 = vunpack.c.l.b16 %v5986
    %v6123 = vunpack.c.l.b16 %v5987
    %v6124 = vunpack.c.l.b16 %v5988
    %v6125 = vunpack.c.l.b16 %v5989
    %v6126 = vpack.c.b16 %v6063, %v6062
    %v6127 = vpack.c.b16 %v6065, %v6064
    %v6128 = vpack.c.b16 %v6067, %v6066
    %v6129 = vpack.c.b16 %v6069, %v6068
    %v6130 = vpack.c.b16 %v6071, %v6070
    %v6131 = vpack.c.b16 %v6073, %v6072
    %v6132 = vpack.c.b16 %v6075, %v6074
    %v6133 = vpack.c.b16 %v6077, %v6076
    %v6134 = vpack.c.b16 %v6079, %v6078
    %v6135 = vpack.c.b16 %v6081, %v6080
    %v6136 = vpack.c.b16 %v6083, %v6082
    %v6137 = vpack.c.b16 %v6085, %v6084
    %v6138 = vpack.c.b16 %v6087, %v6086
    %v6139 = vpack.c.b16 %v6089, %v6088
    %v6140 = vpack.c.b16 %v6091, %v6090
    %v6141 = vpack.c.b16 %v6093, %v6092
    %v6142 = vpack.c.b16 %v6095, %v6094
    %v6143 = vpack.c.b16 %v6097, %v6096
    %v6144 = vpack.c.b16 %v6099, %v6098
    %v6145 = vpack.c.b16 %v6101, %v6100
    %v6146 = vpack.c.b16 %v6103, %v6102
    %v6147 = vpack.c.b16 %v6105, %v6104
    %v6148 = vpack.c.b16 %v6107, %v6106
    %v6149 = vpack.c.b16 %v6109, %v6108
    %v6150 = vpack.c.b16 %v6111, %v6110
    %v6151 = vpack.c.b16 %v6113, %v6112
    %v6152 = vpack.c.b16 %v6115, %v6114
    %v6153 = vpack.c.b16 %v6117, %v6116
    %v6154 = vpack.c.b16 %v6119, %v6118
    %v6155 = vpack.c.b16 %v6121, %v6120
    %v6156 = vpack.c.b16 %v6123, %v6122
    %v6157 = vpack.c.b16 %v6125, %v6124
    %6190 = vmatprep.subr.bf16.mxu0 0
    %6191 = vmatpush1.bf16.msra.mxu0 %v6126
    %6192 = vmatprep.subr.bf16.mxu0 0
    %6193 = vmatpush1.bf16.msra.mxu0 %v6127
    %6194 = vmatprep.subr.bf16.mxu0 0
    %6195 = vmatpush1.bf16.msra.mxu0 %v6128
    %6196 = vmatprep.subr.bf16.mxu0 0
    %6197 = vmatpush1.bf16.msra.mxu0 %v6129
    %6198 = vmatprep.subr.bf16.mxu0 0
    %6199 = vmatpush1.bf16.msra.mxu0 %v6130
    %6200 = vmatprep.subr.bf16.mxu0 0
    %6201 = vmatpush1.bf16.msra.mxu0 %v6131
    %6202 = vmatprep.subr.bf16.mxu0 0
    %6203 = vmatpush1.bf16.msra.mxu0 %v6132
    %6204 = vmatprep.subr.bf16.mxu0 0
    %6205 = vmatpush1.bf16.msra.mxu0 %v6133
    %6206 = vmatprep.subr.bf16.mxu0 0
    %6207 = vmatpush1.bf16.msra.mxu0 %v6134
    %6208 = vmatprep.subr.bf16.mxu0 0
    %6209 = vmatpush1.bf16.msra.mxu0 %v6135
    %6210 = vmatprep.subr.bf16.mxu0 0
    %6211 = vmatpush1.bf16.msra.mxu0 %v6136
    %6212 = vmatprep.subr.bf16.mxu0 0
    %6213 = vmatpush1.bf16.msra.mxu0 %v6137
    %6214 = vmatprep.subr.bf16.mxu0 0
    %6215 = vmatpush1.bf16.msra.mxu0 %v6138
    %6216 = vmatprep.subr.bf16.mxu0 0
    %6217 = vmatpush1.bf16.msra.mxu0 %v6139
    %6218 = vmatprep.subr.bf16.mxu0 0
    %6219 = vmatpush1.bf16.msra.mxu0 %v6140
    %6220 = vmatprep.subr.bf16.mxu0 0
    %6221 = vmatpush1.bf16.msra.mxu0 %v6141
    %6222 = vmatprep.mubr.bf16.mxu0 %v5918
    %6223 = vmatmul.mubr.bf16.gmra.mrb[0].mxu0 %v5917
    %v6224 = vpop.f32.mrb[0].mxu0
    %v6225 = vadd.f32 %v5996, %v6224
    %v6226 = vpop.f32.mrb[0].mxu0
    %v6227 = vpop.f32.mrb[0].mxu0
    %v6228 = vadd.f32 %v5996, %v6227
    %v6229 = vpop.f32.mrb[0].mxu0
    %6230 = vmatprep.mubr.bf16.mxu0 %v5922
    %6231 = vmatmul.mubr.bf16.gmra.mrb[0].mxu0 %v5921
    %v6232 = vpop.f32.mrb[0].mxu0
    %v6233 = vadd.f32 %v5996, %v6232
    %v6234 = vpop.f32.mrb[0].mxu0
    %v6235 = vpop.f32.mrb[0].mxu0
    %v6236 = vpop.f32.mrb[0].mxu0
    %6237 = vdwg.mxu0
    %6238 = vmatprep.subr.bf16.mxu0 0
    %6239 = vmatpush1.bf16.msra.mxu0 %v6142
    %6240 = vmatprep.subr.bf16.mxu0 0
    %6241 = vmatpush1.bf16.msra.mxu0 %v6143
    %6242 = vmatprep.subr.bf16.mxu0 0
    %6243 = vmatpush1.bf16.msra.mxu0 %v6144
    %6244 = vmatprep.subr.bf16.mxu0 0
    %6245 = vmatpush1.bf16.msra.mxu0 %v6145
    %6246 = vmatprep.subr.bf16.mxu0 0
    %6247 = vmatpush1.bf16.msra.mxu0 %v6146
    %6248 = vmatprep.subr.bf16.mxu0 0
    %6249 = vmatpush1.bf16.msra.mxu0 %v6147
    %6250 = vmatprep.subr.bf16.mxu0 0
    %6251 = vmatpush1.bf16.msra.mxu0 %v6148
    %6252 = vmatprep.subr.bf16.mxu0 0
    %6253 = vmatpush1.bf16.msra.mxu0 %v6149
    %6254 = vmatprep.subr.bf16.mxu0 0
    %6255 = vmatpush1.bf16.msra.mxu0 %v6150
    %6256 = vmatprep.subr.bf16.mxu0 0
    %6257 = vmatpush1.bf16.msra.mxu0 %v6151
    %6258 = vmatprep.subr.bf16.mxu0 0
    %6259 = vmatpush1.bf16.msra.mxu0 %v6152
    %6260 = vmatprep.subr.bf16.mxu0 0
    %6261 = vmatpush1.bf16.msra.mxu0 %v6153
    %6262 = vmatprep.subr.bf16.mxu0 0
    %6263 = vmatpush1.bf16.msra.mxu0 %v6154
    %6264 = vmatprep.subr.bf16.mxu0 0
    %6265 = vmatpush1.bf16.msra.mxu0 %v6155
    %6266 = vmatprep.subr.bf16.mxu0 0
    %6267 = vmatpush1.bf16.msra.mxu0 %v6156
    %6268 = vmatprep.subr.bf16.mxu0 0
    %6269 = vmatpush1.bf16.msra.mxu0 %v6157
    %6270 = vmatprep.mubr.bf16.mxu0 %v5920
    %6271 = vmatmul.mubr.bf16.gmra.mrb[0].mxu0 %v5919
    %v6272 = vpop.f32.mrb[0].mxu0
    %v6273 = vadd.f32 %v6225, %v6272
    %v6274 = vpop.f32.mrb[0].mxu0
    %v6275 = vpop.f32.mrb[0].mxu0
    %v6276 = vadd.f32 %v6228, %v6275
    %v6277 = vpop.f32.mrb[0].mxu0
    %6278 = vmatprep.mubr.bf16.mxu0 %v5924
    %6279 = vmatmul.mubr.bf16.gmra.mrb[0].mxu0 %v5923
    %v6280 = vpop.f32.mrb[0].mxu0
    %v6281 = vadd.f32 %v6233, %v6280
    %v6282 = vpop.f32.mrb[0].mxu0
    %v6283 = vpop.f32.mrb[0].mxu0
    %v6284 = vpop.f32.mrb[0].mxu0
    %6285 = vdwg.mxu0
    %v6286 = vadd.f32 %v5582, %v6273
    %v6287 = vadd.f32 %v5583, %v6276
    %v6288 = vadd.f32 %v5584, %v6281
    %s6289 = scalar_lea.vmem %s16, 2
    %v6290 = vld [vmem:[%s6289] sm:$0x1]
    %s6291 = scalar_lea.vmem %s17, 2
    %v6292 = vld [vmem:[%s6291] sm:$0x1]
    %6293 = vadd.xlane.f32.xlu0 %v6286
    %v6294 = vpop.xlane.xlu0 %6293
    %6295 = vadd.xlane.f32.xlu0 %v6287
    %v6296 = vpop.xlane.xlu0 %6295
    %v6297 = vsel %vm1402, %v6288, 0.0
    %6298 = vadd.xlane.f32.xlu0 %v6297
    %v6299 = vpop.xlane.xlu0 %6298
    %v6300 = vmul.f32 %v6294, %v1406
    %v6301 = vmul.f32 %v6296, %v1406
    %v6302 = vmul.f32 %v6299, %v1406
    %v6303 = vsub.f32 %v6286, %v6300
    %v6304 = vsub.f32 %v6287, %v6301
    %v6305 = vsub.f32 %v6288, %v6302
    %v6306 = vmul.f32 %v6303, %v6303
    %v6307 = vmul.f32 %v6304, %v6304
    %v6308 = vmul.f32 %v6305, %v6305
    %6309 = vadd.xlane.f32.xlu0 %v6306
    %v6310 = vpop.xlane.xlu0 %6309
    %6311 = vadd.xlane.f32.xlu0 %v6307
    %v6312 = vpop.xlane.xlu0 %6311
    %v6313 = vsel %vm1402, %v6308, 0.0
    %6314 = vadd.xlane.f32.xlu0 %v6313
    %v6315 = vpop.xlane.xlu0 %6314
    %v6316 = vmul.f32 %v6310, %v1406
    %v6317 = vmul.f32 %v6312, %v1406
    %v6318 = vmul.f32 %v6315, %v1406
    %v6319 = vadd.f32 %v6316, 1e-05
    %v6320 = vadd.f32 %v6317, 1e-05
    %v6321 = vadd.f32 %v6318, 1e-05
    %v6322 = vrsqrt.pop %v6319
    %v6323 = vrsqrt.pop %v6320
    %v6324 = vrsqrt.pop %v6321
    %v6325 = vmul.f32 %v6303, %v6322
    %v6326 = vmul.f32 %v6304, %v6323
    %v6327 = vmul.f32 %v6305, %v6324
    %v6329 = vlaneseq
    %v6330 = vshrl.u32 %v6329, 7
    %v6331 = vsub.s32 0, %v6330
    %v6332 = vrot.slane %v6290, %v6331
    %v6334 = vmul.f32 %v6325, %v6332
    %v6335 = vmul.f32 %v6326, %v6332
    %v6336 = vmul.f32 %v6327, %v6332
    %v6338 = vlaneseq
    %v6339 = vshrl.u32 %v6338, 7
    %v6340 = vsub.s32 0, %v6339
    %v6341 = vrot.slane %v6292, %v6340
    %v6343 = vadd.f32 %v6334, %v6341
    %v6344 = vadd.f32 %v6335, %v6341
    %v6345 = vadd.f32 %v6336, %v6341
    %v6346 = vpack.c.bf16 %v6344, %v6343
    %v6347 = vpack.c.bf16 %v6345, %v6345
    %s6348 = scalar_lea.vmem %s6, 576
    %v6349 = vld [vmem:[%s6348] sm:$0xff]
    %v6350 = vld [vmem:[%s6348 + $0x8] sm:$0xf]
    %v6351 = vld [vmem:[%s6348 + $0xc] sm:$0xff]
    %v6352 = vld [vmem:[%s6348 + $0x14] sm:$0xf]
    %v6353 = vld [vmem:[%s6348 + $0x18] sm:$0xff]
    %v6354 = vld [vmem:[%s6348 + $0x20] sm:$0xf]
    %v6355 = vld [vmem:[%s6348 + $0x24] sm:$0xff]
    %v6356 = vld [vmem:[%s6348 + $0x2c] sm:$0xf]
    %v6357 = vld [vmem:[%s6348 + $0x30] sm:$0xff]
    %v6358 = vld [vmem:[%s6348 + $0x38] sm:$0xf]
    %v6359 = vld [vmem:[%s6348 + $0x3c] sm:$0xff]
    %v6360 = vld [vmem:[%s6348 + $0x44] sm:$0xf]
    %v6361 = vld [vmem:[%s6348 + $0x48] sm:$0xff]
    %v6362 = vld [vmem:[%s6348 + $0x50] sm:$0xf]
    %v6363 = vld [vmem:[%s6348 + $0x54] sm:$0xff]
    %v6364 = vld [vmem:[%s6348 + $0x5c] sm:$0xf]
    %v6365 = vld [vmem:[%s6348 + $0x60] sm:$0xff]
    %v6366 = vld [vmem:[%s6348 + $0x68] sm:$0xf]
    %v6367 = vld [vmem:[%s6348 + $0x6c] sm:$0xff]
    %v6368 = vld [vmem:[%s6348 + $0x74] sm:$0xf]
    %v6369 = vld [vmem:[%s6348 + $0x78] sm:$0xff]
    %v6370 = vld [vmem:[%s6348 + $0x80] sm:$0xf]
    %v6371 = vld [vmem:[%s6348 + $0x84] sm:$0xff]
    %v6372 = vld [vmem:[%s6348 + $0x8c] sm:$0xf]
    %v6373 = vld [vmem:[%s6348 + $0x90] sm:$0xff]
    %v6374 = vld [vmem:[%s6348 + $0x98] sm:$0xf]
    %v6375 = vld [vmem:[%s6348 + $0x9c] sm:$0xff]
    %v6376 = vld [vmem:[%s6348 + $0xa4] sm:$0xf]
    %v6377 = vld [vmem:[%s6348 + $0xa8] sm:$0xff]
    %v6378 = vld [vmem:[%s6348 + $0xb0] sm:$0xf]
    %v6379 = vld [vmem:[%s6348 + $0xb4] sm:$0xff]
    %v6380 = vld [vmem:[%s6348 + $0xbc] sm:$0xf]
    %s6381 = scalar_lea.vmem %s7, 9
    %v6382 = vld [vmem:[%s6381] sm:$0x7]
    %v6384 = vlaneseq
    %v6385 = vshrl.u32 %v6384, 7
    %v6386 = vsub.s32 0, %v6385
    %v6387 = vrot.slane %v6382, %v6386
    %v6388 = vlaneseq
    %v6389 = vshrl.u32 %v6388, 7
    %v6390 = vsub.s32 1, %v6389
    %v6391 = vrot.slane %v6382, %v6390
    %v6392 = vlaneseq
    %v6393 = vshrl.u32 %v6392, 7
    %v6394 = vsub.s32 2, %v6393
    %v6395 = vrot.slane %v6382, %v6394
    %v6431 = vunpack.c.l.b16 %v6349
    %v6432 = vunpack.c.h.b16 %v6349
    %v6433 = vunpack.c.l.b16 %v6350
    %v6434 = vunpack.c.l.b16 %v6351
    %v6435 = vunpack.c.h.b16 %v6351
    %v6436 = vunpack.c.l.b16 %v6352
    %v6437 = vunpack.c.l.b16 %v6353
    %v6438 = vunpack.c.h.b16 %v6353
    %v6439 = vunpack.c.l.b16 %v6354
    %v6440 = vunpack.c.l.b16 %v6355
    %v6441 = vunpack.c.h.b16 %v6355
    %v6442 = vunpack.c.l.b16 %v6356
    %v6443 = vunpack.c.l.b16 %v6357
    %v6444 = vunpack.c.h.b16 %v6357
    %v6445 = vunpack.c.l.b16 %v6358
    %v6446 = vunpack.c.l.b16 %v6359
    %v6447 = vunpack.c.h.b16 %v6359
    %v6448 = vunpack.c.l.b16 %v6360
    %v6449 = vunpack.c.l.b16 %v6361
    %v6450 = vunpack.c.h.b16 %v6361
    %v6451 = vunpack.c.l.b16 %v6362
    %v6452 = vunpack.c.l.b16 %v6363
    %v6453 = vunpack.c.h.b16 %v6363
    %v6454 = vunpack.c.l.b16 %v6364
    %v6455 = vunpack.c.l.b16 %v6365
    %v6456 = vunpack.c.h.b16 %v6365
    %v6457 = vunpack.c.l.b16 %v6366
    %v6458 = vunpack.c.l.b16 %v6367
    %v6459 = vunpack.c.h.b16 %v6367
    %v6460 = vunpack.c.l.b16 %v6368
    %v6461 = vunpack.c.l.b16 %v6369
    %v6462 = vunpack.c.h.b16 %v6369
    %v6463 = vunpack.c.l.b16 %v6370
    %v6464 = vunpack.c.l.b16 %v6371
    %v6465 = vunpack.c.h.b16 %v6371
    %v6466 = vunpack.c.l.b16 %v6372
    %v6467 = vunpack.c.l.b16 %v6373
    %v6468 = vunpack.c.h.b16 %v6373
    %v6469 = vunpack.c.l.b16 %v6374
    %v6470 = vunpack.c.l.b16 %v6375
    %v6471 = vunpack.c.h.b16 %v6375
    %v6472 = vunpack.c.l.b16 %v6376
    %v6473 = vunpack.c.l.b16 %v6377
    %v6474 = vunpack.c.h.b16 %v6377
    %v6475 = vunpack.c.l.b16 %v6378
    %v6476 = vunpack.c.l.b16 %v6379
    %v6477 = vunpack.c.h.b16 %v6379
    %v6478 = vunpack.c.l.b16 %v6380
    %v6479 = vpack.c.b16 %v6434, %v6431
    %v6480 = vpack.c.b16 %v6435, %v6432
    %v6481 = vpack.c.b16 %v6436, %v6433
    %v6482 = vpack.c.b16 %v6440, %v6437
    %v6483 = vpack.c.b16 %v6441, %v6438
    %v6484 = vpack.c.b16 %v6442, %v6439
    %v6485 = vpack.c.b16 %v6446, %v6443
    %v6486 = vpack.c.b16 %v6447, %v6444
    %v6487 = vpack.c.b16 %v6448, %v6445
    %v6488 = vpack.c.b16 %v6452, %v6449
    %v6489 = vpack.c.b16 %v6453, %v6450
    %v6490 = vpack.c.b16 %v6454, %v6451
    %v6491 = vpack.c.b16 %v6458, %v6455
    %v6492 = vpack.c.b16 %v6459, %v6456
    %v6493 = vpack.c.b16 %v6460, %v6457
    %v6494 = vpack.c.b16 %v6464, %v6461
    %v6495 = vpack.c.b16 %v6465, %v6462
    %v6496 = vpack.c.b16 %v6466, %v6463
    %v6497 = vpack.c.b16 %v6470, %v6467
    %v6498 = vpack.c.b16 %v6471, %v6468
    %v6499 = vpack.c.b16 %v6472, %v6469
    %v6500 = vpack.c.b16 %v6476, %v6473
    %v6501 = vpack.c.b16 %v6477, %v6474
    %v6502 = vpack.c.b16 %v6478, %v6475
    %6527 = vmatprep.subr.bf16.mxu0 %v6480
    %6528 = vmatpush1.bf16.msra.mxu0 %v6479
    %6529 = vmatprep.subr.bf16.mxu0 %v6483
    %6530 = vmatpush1.bf16.msra.mxu0 %v6482
    %6531 = vmatprep.subr.bf16.mxu0 %v6486
    %6532 = vmatpush1.bf16.msra.mxu0 %v6485
    %6533 = vmatprep.subr.bf16.mxu0 %v6489
    %6534 = vmatpush1.bf16.msra.mxu0 %v6488
    %6535 = vmatprep.subr.bf16.mxu0 %v6492
    %6536 = vmatpush1.bf16.msra.mxu0 %v6491
    %6537 = vmatprep.subr.bf16.mxu0 %v6495
    %6538 = vmatpush1.bf16.msra.mxu0 %v6494
    %6539 = vmatprep.subr.bf16.mxu0 %v6498
    %6540 = vmatpush1.bf16.msra.mxu0 %v6497
    %6541 = vmatprep.subr.bf16.mxu0 %v6501
    %6542 = vmatpush1.bf16.msra.mxu0 %v6500
    %6543 = vmatprep.subr.bf16.mxu0 0
    %6544 = vmatpush1.bf16.msra.mxu0 0
    %6545 = vmatprep.subr.bf16.mxu0 0
    %6546 = vmatpush1.bf16.msra.mxu0 0
    %6547 = vmatprep.subr.bf16.mxu0 0
    %6548 = vmatpush1.bf16.msra.mxu0 0
    %6549 = vmatprep.subr.bf16.mxu0 0
    %6550 = vmatpush1.bf16.msra.mxu0 0
    %6551 = vmatprep.subr.bf16.mxu0 0
    %6552 = vmatpush1.bf16.msra.mxu0 0
    %6553 = vmatprep.subr.bf16.mxu0 0
    %6554 = vmatpush1.bf16.msra.mxu0 0
    %6555 = vmatprep.subr.bf16.mxu0 0
    %6556 = vmatpush1.bf16.msra.mxu0 0
    %6557 = vmatprep.subr.bf16.mxu0 0
    %6558 = vmatpush1.bf16.msra.mxu0 0
    %6559 = vmatprep.mubr.bf16.mxu0 0
    %6560 = vmatmul.mubr.bf16.gmra.mrb[0].mxu0 %v6346
    %v6561 = vpop.f32.mrb[0].mxu0
    %v6562 = vadd.f32 %v6387, %v6561
    %v6563 = vpop.f32.mrb[0].mxu0
    %v6564 = vadd.f32 %v6391, %v6563
    %v6565 = vpop.f32.mrb[0].mxu0
    %v6566 = vadd.f32 %v6387, %v6565
    %v6567 = vpop.f32.mrb[0].mxu0
    %v6568 = vadd.f32 %v6391, %v6567
    %6569 = vmatprep.mubr.bf16.mxu0 0
    %6570 = vmatmul.mubr.bf16.gmra.mrb[0].mxu0 %v6347
    %v6571 = vpop.f32.mrb[0].mxu0
    %v6572 = vadd.f32 %v6387, %v6571
    %v6573 = vpop.f32.mrb[0].mxu0
    %v6574 = vadd.f32 %v6391, %v6573
    %v6575 = vpop.f32.mrb[0].mxu0
    %v6576 = vpop.f32.mrb[0].mxu0
    %6577 = vdwg.mxu0
    %6578 = vmatprep.subr.bf16.mxu0 0
    %6579 = vmatpush1.bf16.msra.mxu0 %v6481
    %6580 = vmatprep.subr.bf16.mxu0 0
    %6581 = vmatpush1.bf16.msra.mxu0 %v6484
    %6582 = vmatprep.subr.bf16.mxu0 0
    %6583 = vmatpush1.bf16.msra.mxu0 %v6487
    %6584 = vmatprep.subr.bf16.mxu0 0
    %6585 = vmatpush1.bf16.msra.mxu0 %v6490
    %6586 = vmatprep.subr.bf16.mxu0 0
    %6587 = vmatpush1.bf16.msra.mxu0 %v6493
    %6588 = vmatprep.subr.bf16.mxu0 0
    %6589 = vmatpush1.bf16.msra.mxu0 %v6496
    %6590 = vmatprep.subr.bf16.mxu0 0
    %6591 = vmatpush1.bf16.msra.mxu0 %v6499
    %6592 = vmatprep.subr.bf16.mxu0 0
    %6593 = vmatpush1.bf16.msra.mxu0 %v6502
    %6594 = vmatprep.subr.bf16.mxu0 0
    %6595 = vmatpush1.bf16.msra.mxu0 0
    %6596 = vmatprep.subr.bf16.mxu0 0
    %6597 = vmatpush1.bf16.msra.mxu0 0
    %6598 = vmatprep.subr.bf16.mxu0 0
    %6599 = vmatpush1.bf16.msra.mxu0 0
    %6600 = vmatprep.subr.bf16.mxu0 0
    %6601 = vmatpush1.bf16.msra.mxu0 0
    %6602 = vmatprep.subr.bf16.mxu0 0
    %6603 = vmatpush1.bf16.msra.mxu0 0
    %6604 = vmatprep.subr.bf16.mxu0 0
    %6605 = vmatpush1.bf16.msra.mxu0 0
    %6606 = vmatprep.subr.bf16.mxu0 0
    %6607 = vmatpush1.bf16.msra.mxu0 0
    %6608 = vmatprep.subr.bf16.mxu0 0
    %6609 = vmatpush1.bf16.msra.mxu0 0
    %6610 = vmatprep.mubr.bf16.mxu0 0
    %6611 = vmatmul.mubr.bf16.gmra.mrb[0].mxu0 %v6346
    %v6612 = vpop.f32.mrb[0].mxu0
    %v6613 = vadd.f32 %v6395, %v6612
    %v6614 = vpop.f32.mrb[0].mxu0
    %v6615 = vpop.f32.mrb[0].mxu0
    %v6616 = vadd.f32 %v6395, %v6615
    %v6617 = vpop.f32.mrb[0].mxu0
    %6618 = vmatprep.mubr.bf16.mxu0 0
    %6619 = vmatmul.mubr.bf16.gmra.mrb[0].mxu0 %v6347
    %v6620 = vpop.f32.mrb[0].mxu0
    %v6621 = vadd.f32 %v6395, %v6620
    %v6622 = vpop.f32.mrb[0].mxu0
    %v6623 = vpop.f32.mrb[0].mxu0
    %v6624 = vpop.f32.mrb[0].mxu0
    %6625 = vdwg.mxu0
    %s6626 = scalar_lea.vmem %s8, 192
    %v6627 = vld [vmem:[%s6626] sm:$0xf]
    %v6628 = vld [vmem:[%s6626 + $0x4] sm:$0xf]
    %v6629 = vld [vmem:[%s6626 + $0x8] sm:$0xf]
    %v6630 = vld [vmem:[%s6626 + $0xc] sm:$0xf]
    %v6631 = vld [vmem:[%s6626 + $0x10] sm:$0xf]
    %v6632 = vld [vmem:[%s6626 + $0x14] sm:$0xf]
    %v6633 = vld [vmem:[%s6626 + $0x18] sm:$0xf]
    %v6634 = vld [vmem:[%s6626 + $0x1c] sm:$0xf]
    %v6635 = vld [vmem:[%s6626 + $0x20] sm:$0xf]
    %v6636 = vld [vmem:[%s6626 + $0x24] sm:$0xf]
    %v6637 = vld [vmem:[%s6626 + $0x28] sm:$0xf]
    %v6638 = vld [vmem:[%s6626 + $0x2c] sm:$0xf]
    %v6639 = vld [vmem:[%s6626 + $0x30] sm:$0xf]
    %v6640 = vld [vmem:[%s6626 + $0x34] sm:$0xf]
    %v6641 = vld [vmem:[%s6626 + $0x38] sm:$0xf]
    %v6642 = vld [vmem:[%s6626 + $0x3c] sm:$0xf]
    %v6643 = vmul.f32 %v6562, 0.17677669
    %v6644 = vmul.f32 %v6566, 0.17677669
    %v6645 = vmul.f32 %v6572, 0.17677669
    %v6646 = vpack.c.bf16 %v6644, %v6643
    %v6647 = vpack.c.bf16 %v6645, %v6645
    %v6648 = vpack.c.bf16 %v6568, %v6564
    %v6649 = vpack.c.bf16 %v6574, %v6574
    %v6650 = vpack.c.bf16 %v6616, %v6613
    %v6651 = vpack.c.bf16 %v6621, %v6621
    %v6653 = vsel %vm448, %v6646, 0
    %v6656 = vsel %vm448, %v6647, 0
    %v6659 = vsel %vm448, %v6648, 0
    %v6662 = vsel %vm448, %v6649, 0
    %6664 = vmatprep.subr.bf16.mxu0 0
    %6665 = vmatpush1.bf16.xpose.msra.mxu0 %v6659
    %6666 = vmatprep.subr.bf16.mxu0 0
    %6667 = vmatpush1.bf16.xpose.msra.mxu0 %v6662
    %6668 = vmatprep.subr.bf16.mxu0 0
    %6669 = vmatpush1.bf16.xpose.msra.mxu0 0
    %6670 = vmatprep.subr.bf16.mxu0 0
    %6671 = vmatpush1.bf16.xpose.msra.mxu0 0
    %6672 = vmatprep.subr.bf16.mxu0 0
    %6673 = vmatpush1.bf16.xpose.msra.mxu0 0
    %6674 = vmatprep.subr.bf16.mxu0 0
    %6675 = vmatpush1.bf16.xpose.msra.mxu0 0
    %6676 = vmatprep.subr.bf16.mxu0 0
    %6677 = vmatpush1.bf16.xpose.msra.mxu0 0
    %6678 = vmatprep.subr.bf16.mxu0 0
    %6679 = vmatpush1.bf16.xpose.msra.mxu0 0
    %6680 = vmatprep.subr.bf16.mxu0 0
    %6681 = vmatpush1.bf16.xpose.msra.mxu0 0
    %6682 = vmatprep.subr.bf16.mxu0 0
    %6683 = vmatpush1.bf16.xpose.msra.mxu0 0
    %6684 = vmatprep.subr.bf16.mxu0 0
    %6685 = vmatpush1.bf16.xpose.msra.mxu0 0
    %6686 = vmatprep.subr.bf16.mxu0 0
    %6687 = vmatpush1.bf16.xpose.msra.mxu0 0
    %6688 = vmatprep.subr.bf16.mxu0 0
    %6689 = vmatpush1.bf16.xpose.msra.mxu0 0
    %6690 = vmatprep.subr.bf16.mxu0 0
    %6691 = vmatpush1.bf16.xpose.msra.mxu0 0
    %6692 = vmatprep.subr.bf16.mxu0 0
    %6693 = vmatpush1.bf16.xpose.msra.mxu0 0
    %6694 = vmatprep.subr.bf16.mxu0 0
    %6695 = vmatpush1.bf16.xpose.msra.mxu0 0
    %6696 = vmatprep.mubr.bf16.mxu0 0
    %6697 = vmatmul.mubr.bf16.gmra.mrb[0].mxu0 %v6653
    %v6698 = vpop.f32.mrb[0].mxu0
    %v6699 = vadd.f32 %v142, %v6698
    %v6700 = vpop.f32.mrb[0].mxu0
    %v6701 = vpop.f32.mrb[0].mxu0
    %v6702 = vadd.f32 %v143, %v6701
    %v6703 = vpop.f32.mrb[0].mxu0
    %6704 = vmatprep.mubr.bf16.mxu0 0
    %6705 = vmatmul.mubr.bf16.gmra.mrb[0].mxu0 %v6656
    %v6706 = vpop.f32.mrb[0].mxu0
    %v6707 = vadd.f32 %v144, %v6706
    %v6708 = vpop.f32.mrb[0].mxu0
    %v6709 = vpop.f32.mrb[0].mxu0
    %v6710 = vpop.f32.mrb[0].mxu0
    %6711 = vdwg.mxu0
    %v6712 = vsel %vm509, %v6699, -inf
    %6713 = vmax.xlane.f32.xlu0 %v6712
    %v6714 = vpop.xlane.xlu0 %6713
    %v6715 = vsel %vm509, %v6702, -inf
    %6716 = vmax.xlane.f32.xlu0 %v6715
    %v6717 = vpop.xlane.xlu0 %6716
    %v6718 = vsel %vm516, %v6707, -inf
    %6719 = vmax.xlane.f32.xlu0 %v6718
    %v6720 = vpop.xlane.xlu0 %6719
    %v6721 = vsub.f32 %v6699, %v6714
    %v6722 = vsub.f32 %v6702, %v6717
    %v6723 = vsub.f32 %v6707, %v6720
    %v6724 = vmul.f32 %v6721, 1.442695
    %v6725 = vpow.pop %v6724
    %v6726 = vmul.f32 %v6722, 1.442695
    %v6727 = vpow.pop %v6726
    %v6728 = vmul.f32 %v6723, 1.442695
    %v6729 = vpow.pop %v6728
    %v6730 = vsel %vm509, %v6725, 0.0
    %6731 = vadd.xlane.f32.xlu0 %v6730
    %v6732 = vpop.xlane.xlu0 %6731
    %v6733 = vsel %vm509, %v6727, 0.0
    %6734 = vadd.xlane.f32.xlu0 %v6733
    %v6735 = vpop.xlane.xlu0 %6734
    %v6736 = vsel %vm516, %v6729, 0.0
    %6737 = vadd.xlane.f32.xlu0 %v6736
    %v6738 = vpop.xlane.xlu0 %6737
    %v6739 = vrcp.pop %v6732
    %v6740 = vrcp.pop %v6735
    %v6741 = vrcp.pop %v6738
    %v6742 = vmul.f32 %v6725, %v6739
    %v6743 = vmul.f32 %v6727, %v6740
    %v6744 = vmul.f32 %v6729, %v6741
    %v6745 = vpack.c.bf16 %v6743, %v6742
    %v6746 = vpack.c.bf16 %v6744, %v6744
    %v6748 = vsel %vm509, %v6745, 0
    %v6751 = vsel %vm509, %v6746, 0
    %v6754 = vsel %vm552, %v6651, 0
    %6756 = vmatprep.subr.bf16.mxu0 0
    %6757 = vmatpush1.bf16.msra.mxu0 %v6650
    %6758 = vmatprep.subr.bf16.mxu0 0
    %6759 = vmatpush1.bf16.msra.mxu0 %v6754
    %6760 = vmatprep.subr.bf16.mxu0 0
    %6761 = vmatpush1.bf16.msra.mxu0 0
    %6762 = vmatprep.subr.bf16.mxu0 0
    %6763 = vmatpush1.bf16.msra.mxu0 0
    %6764 = vmatprep.subr.bf16.mxu0 0
    %6765 = vmatpush1.bf16.msra.mxu0 0
    %6766 = vmatprep.subr.bf16.mxu0 0
    %6767 = vmatpush1.bf16.msra.mxu0 0
    %6768 = vmatprep.subr.bf16.mxu0 0
    %6769 = vmatpush1.bf16.msra.mxu0 0
    %6770 = vmatprep.subr.bf16.mxu0 0
    %6771 = vmatpush1.bf16.msra.mxu0 0
    %6772 = vmatprep.subr.bf16.mxu0 0
    %6773 = vmatpush1.bf16.msra.mxu0 0
    %6774 = vmatprep.subr.bf16.mxu0 0
    %6775 = vmatpush1.bf16.msra.mxu0 0
    %6776 = vmatprep.subr.bf16.mxu0 0
    %6777 = vmatpush1.bf16.msra.mxu0 0
    %6778 = vmatprep.subr.bf16.mxu0 0
    %6779 = vmatpush1.bf16.msra.mxu0 0
    %6780 = vmatprep.subr.bf16.mxu0 0
    %6781 = vmatpush1.bf16.msra.mxu0 0
    %6782 = vmatprep.subr.bf16.mxu0 0
    %6783 = vmatpush1.bf16.msra.mxu0 0
    %6784 = vmatprep.subr.bf16.mxu0 0
    %6785 = vmatpush1.bf16.msra.mxu0 0
    %6786 = vmatprep.subr.bf16.mxu0 0
    %6787 = vmatpush1.bf16.msra.mxu0 0
    %6788 = vmatprep.mubr.bf16.mxu0 0
    %6789 = vmatmul.mubr.bf16.gmra.mrb[0].mxu0 %v6748
    %v6790 = vpop.f32.mrb[0].mxu0
    %v6791 = vadd.f32 0.0, %v6790
    %v6792 = vpop.f32.mrb[0].mxu0
    %v6793 = vpop.f32.mrb[0].mxu0
    %v6794 = vadd.f32 0.0, %v6793
    %v6795 = vpop.f32.mrb[0].mxu0
    %6796 = vmatprep.mubr.bf16.mxu0 0
    %6797 = vmatmul.mubr.bf16.gmra.mrb[0].mxu0 %v6751
    %v6798 = vpop.f32.mrb[0].mxu0
    %v6799 = vadd.f32 0.0, %v6798
    %v6800 = vpop.f32.mrb[0].mxu0
    %v6801 = vpop.f32.mrb[0].mxu0
    %v6802 = vpop.f32.mrb[0].mxu0
    %6803 = vdwg.mxu0
    %v6804 = vpack.c.bf16 %v6794, %v6791
    %v6805 = vpack.c.bf16 %v6799, %v6799
    %6808 = vrot.lane.b32.xlu0 %v6646, 96
    %v6809 = vpop.permute.xlu0 %6808
    %6810 = vrot.lane.b32.xlu0 %v6647, 96
    %v6811 = vpop.permute.xlu0 %6810
    %6814 = vrot.lane.b32.xlu0 %v6648, 96
    %v6815 = vpop.permute.xlu0 %6814
    %6816 = vrot.lane.b32.xlu0 %v6649, 96
    %v6817 = vpop.permute.xlu0 %6816
    %v6819 = vsel %vm448, %v6809, 0
    %v6822 = vsel %vm448, %v6811, 0
    %v6825 = vsel %vm448, %v6815, 0
    %v6828 = vsel %vm448, %v6817, 0
    %6830 = vmatprep.subr.bf16.mxu0 0
    %6831 = vmatpush1.bf16.xpose.msra.mxu0 %v6825
    %6832 = vmatprep.subr.bf16.mxu0 0
    %6833 = vmatpush1.bf16.xpose.msra.mxu0 %v6828
    %6834 = vmatprep.subr.bf16.mxu0 0
    %6835 = vmatpush1.bf16.xpose.msra.mxu0 0
    %6836 = vmatprep.subr.bf16.mxu0 0
    %6837 = vmatpush1.bf16.xpose.msra.mxu0 0
    %6838 = vmatprep.subr.bf16.mxu0 0
    %6839 = vmatpush1.bf16.xpose.msra.mxu0 0
    %6840 = vmatprep.subr.bf16.mxu0 0
    %6841 = vmatpush1.bf16.xpose.msra.mxu0 0
    %6842 = vmatprep.subr.bf16.mxu0 0
    %6843 = vmatpush1.bf16.xpose.msra.mxu0 0
    %6844 = vmatprep.subr.bf16.mxu0 0
    %6845 = vmatpush1.bf16.xpose.msra.mxu0 0
    %6846 = vmatprep.subr.bf16.mxu0 0
    %6847 = vmatpush1.bf16.xpose.msra.mxu0 0
    %6848 = vmatprep.subr.bf16.mxu0 0
    %6849 = vmatpush1.bf16.xpose.msra.mxu0 0
    %6850 = vmatprep.subr.bf16.mxu0 0
    %6851 = vmatpush1.bf16.xpose.msra.mxu0 0
    %6852 = vmatprep.subr.bf16.mxu0 0
    %6853 = vmatpush1.bf16.xpose.msra.mxu0 0
    %6854 = vmatprep.subr.bf16.mxu0 0
    %6855 = vmatpush1.bf16.xpose.msra.mxu0 0
    %6856 = vmatprep.subr.bf16.mxu0 0
    %6857 = vmatpush1.bf16.xpose.msra.mxu0 0
    %6858 = vmatprep.subr.bf16.mxu0 0
    %6859 = vmatpush1.bf16.xpose.msra.mxu0 0
    %6860 = vmatprep.subr.bf16.mxu0 0
    %6861 = vmatpush1.bf16.xpose.msra.mxu0 0
    %6862 = vmatprep.mubr.bf16.mxu0 0
    %6863 = vmatmul.mubr.bf16.gmra.mrb[0].mxu0 %v6819
    %v6864 = vpop.f32.mrb[0].mxu0
    %v6865 = vadd.f32 %v142, %v6864
    %v6866 = vpop.f32.mrb[0].mxu0
    %v6867 = vpop.f32.mrb[0].mxu0
    %v6868 = vadd.f32 %v143, %v6867
    %v6869 = vpop.f32.mrb[0].mxu0
    %6870 = vmatprep.mubr.bf16.mxu0 0
    %6871 = vmatmul.mubr.bf16.gmra.mrb[0].mxu0 %v6822
    %v6872 = vpop.f32.mrb[0].mxu0
    %v6873 = vadd.f32 %v144, %v6872
    %v6874 = vpop.f32.mrb[0].mxu0
    %v6875 = vpop.f32.mrb[0].mxu0
    %v6876 = vpop.f32.mrb[0].mxu0
    %6877 = vdwg.mxu0
    %v6878 = vsel %vm509, %v6865, -inf
    %6879 = vmax.xlane.f32.xlu0 %v6878
    %v6880 = vpop.xlane.xlu0 %6879
    %v6881 = vsel %vm509, %v6868, -inf
    %6882 = vmax.xlane.f32.xlu0 %v6881
    %v6883 = vpop.xlane.xlu0 %6882
    %v6884 = vsel %vm516, %v6873, -inf
    %6885 = vmax.xlane.f32.xlu0 %v6884
    %v6886 = vpop.xlane.xlu0 %6885
    %v6887 = vsub.f32 %v6865, %v6880
    %v6888 = vsub.f32 %v6868, %v6883
    %v6889 = vsub.f32 %v6873, %v6886
    %v6890 = vmul.f32 %v6887, 1.442695
    %v6891 = vpow.pop %v6890
    %v6892 = vmul.f32 %v6888, 1.442695
    %v6893 = vpow.pop %v6892
    %v6894 = vmul.f32 %v6889, 1.442695
    %v6895 = vpow.pop %v6894
    %v6896 = vsel %vm509, %v6891, 0.0
    %6897 = vadd.xlane.f32.xlu0 %v6896
    %v6898 = vpop.xlane.xlu0 %6897
    %v6899 = vsel %vm509, %v6893, 0.0
    %6900 = vadd.xlane.f32.xlu0 %v6899
    %v6901 = vpop.xlane.xlu0 %6900
    %v6902 = vsel %vm516, %v6895, 0.0
    %6903 = vadd.xlane.f32.xlu0 %v6902
    %v6904 = vpop.xlane.xlu0 %6903
    %v6905 = vrcp.pop %v6898
    %v6906 = vrcp.pop %v6901
    %v6907 = vrcp.pop %v6904
    %v6908 = vmul.f32 %v6891, %v6905
    %v6909 = vmul.f32 %v6893, %v6906
    %v6910 = vmul.f32 %v6895, %v6907
    %v6911 = vpack.c.bf16 %v6909, %v6908
    %v6912 = vpack.c.bf16 %v6910, %v6910
    %6915 = vrot.lane.b32.xlu0 %v6650, 96
    %v6916 = vpop.permute.xlu0 %6915
    %6917 = vrot.lane.b32.xlu0 %v6651, 96
    %v6918 = vpop.permute.xlu0 %6917
    %v6921 = vsel %vm509, %v6911, 0
    %v6924 = vsel %vm509, %v6912, 0
    %v6927 = vsel %vm552, %v6918, 0
    %6929 = vmatprep.subr.bf16.mxu0 0
    %6930 = vmatpush1.bf16.msra.mxu0 %v6916
    %6931 = vmatprep.subr.bf16.mxu0 0
    %6932 = vmatpush1.bf16.msra.mxu0 %v6927
    %6933 = vmatprep.subr.bf16.mxu0 0
    %6934 = vmatpush1.bf16.msra.mxu0 0
    %6935 = vmatprep.subr.bf16.mxu0 0
    %6936 = vmatpush1.bf16.msra.mxu0 0
    %6937 = vmatprep.subr.bf16.mxu0 0
    %6938 = vmatpush1.bf16.msra.mxu0 0
    %6939 = vmatprep.subr.bf16.mxu0 0
    %6940 = vmatpush1.bf16.msra.mxu0 0
    %6941 = vmatprep.subr.bf16.mxu0 0
    %6942 = vmatpush1.bf16.msra.mxu0 0
    %6943 = vmatprep.subr.bf16.mxu0 0
    %6944 = vmatpush1.bf16.msra.mxu0 0
    %6945 = vmatprep.subr.bf16.mxu0 0
    %6946 = vmatpush1.bf16.msra.mxu0 0
    %6947 = vmatprep.subr.bf16.mxu0 0
    %6948 = vmatpush1.bf16.msra.mxu0 0
    %6949 = vmatprep.subr.bf16.mxu0 0
    %6950 = vmatpush1.bf16.msra.mxu0 0
    %6951 = vmatprep.subr.bf16.mxu0 0
    %6952 = vmatpush1.bf16.msra.mxu0 0
    %6953 = vmatprep.subr.bf16.mxu0 0
    %6954 = vmatpush1.bf16.msra.mxu0 0
    %6955 = vmatprep.subr.bf16.mxu0 0
    %6956 = vmatpush1.bf16.msra.mxu0 0
    %6957 = vmatprep.subr.bf16.mxu0 0
    %6958 = vmatpush1.bf16.msra.mxu0 0
    %6959 = vmatprep.subr.bf16.mxu0 0
    %6960 = vmatpush1.bf16.msra.mxu0 0
    %6961 = vmatprep.mubr.bf16.mxu0 0
    %6962 = vmatmul.mubr.bf16.gmra.mrb[0].mxu0 %v6921
    %v6963 = vpop.f32.mrb[0].mxu0
    %v6964 = vadd.f32 0.0, %v6963
    %v6965 = vpop.f32.mrb[0].mxu0
    %v6966 = vpop.f32.mrb[0].mxu0
    %v6967 = vadd.f32 0.0, %v6966
    %v6968 = vpop.f32.mrb[0].mxu0
    %6969 = vmatprep.mubr.bf16.mxu0 0
    %6970 = vmatmul.mubr.bf16.gmra.mrb[0].mxu0 %v6924
    %v6971 = vpop.f32.mrb[0].mxu0
    %v6972 = vadd.f32 0.0, %v6971
    %v6973 = vpop.f32.mrb[0].mxu0
    %v6974 = vpop.f32.mrb[0].mxu0
    %v6975 = vpop.f32.mrb[0].mxu0
    %6976 = vdwg.mxu0
    %v6977 = vpack.c.bf16 %v6967, %v6964
    %v6978 = vpack.c.bf16 %v6972, %v6972
    %v6983 = vunpack.c.l.b16 %v6631
    %v6984 = vunpack.c.l.b16 %v6632
    %v6985 = vunpack.c.l.b16 %v6633
    %v6986 = vunpack.c.l.b16 %v6634
    %v6987 = vpack.c.b16 %v6984, %v6983
    %v6988 = vpack.c.b16 %v6986, %v6985
    %v6992 = vsel %vm448, %v6977, 0
    %v6995 = vsel %vm448, %v6978, 0
    %6997 = vmatprep.subr.bf16.mxu0 0
    %6998 = vmatpush1.bf16.msra.mxu0 %v6987
    %6999 = vmatprep.subr.bf16.mxu0 0
    %7000 = vmatpush1.bf16.msra.mxu0 %v6988
    %7001 = vmatprep.subr.bf16.mxu0 0
    %7002 = vmatpush1.bf16.msra.mxu0 0
    %7003 = vmatprep.subr.bf16.mxu0 0
    %7004 = vmatpush1.bf16.msra.mxu0 0
    %7005 = vmatprep.subr.bf16.mxu0 0
    %7006 = vmatpush1.bf16.msra.mxu0 0
    %7007 = vmatprep.subr.bf16.mxu0 0
    %7008 = vmatpush1.bf16.msra.mxu0 0
    %7009 = vmatprep.subr.bf16.mxu0 0
    %7010 = vmatpush1.bf16.msra.mxu0 0
    %7011 = vmatprep.subr.bf16.mxu0 0
    %7012 = vmatpush1.bf16.msra.mxu0 0
    %7013 = vmatprep.subr.bf16.mxu0 0
    %7014 = vmatpush1.bf16.msra.mxu0 0
    %7015 = vmatprep.subr.bf16.mxu0 0
    %7016 = vmatpush1.bf16.msra.mxu0 0
    %7017 = vmatprep.subr.bf16.mxu0 0
    %7018 = vmatpush1.bf16.msra.mxu0 0
    %7019 = vmatprep.subr.bf16.mxu0 0
    %7020 = vmatpush1.bf16.msra.mxu0 0
    %7021 = vmatprep.subr.bf16.mxu0 0
    %7022 = vmatpush1.bf16.msra.mxu0 0
    %7023 = vmatprep.subr.bf16.mxu0 0
    %7024 = vmatpush1.bf16.msra.mxu0 0
    %7025 = vmatprep.subr.bf16.mxu0 0
    %7026 = vmatpush1.bf16.msra.mxu0 0
    %7027 = vmatprep.subr.bf16.mxu0 0
    %7028 = vmatpush1.bf16.msra.mxu0 0
    %7029 = vmatprep.mubr.bf16.mxu0 0
    %7030 = vmatmul.mubr.bf16.gmra.mrb[0].mxu0 %v6992
    %v7031 = vpop.f32.mrb[0].mxu0
    %v7032 = vadd.f32 0.0, %v7031
    %v7033 = vpop.f32.mrb[0].mxu0
    %v7034 = vpop.f32.mrb[0].mxu0
    %v7035 = vadd.f32 0.0, %v7034
    %v7036 = vpop.f32.mrb[0].mxu0
    %7037 = vmatprep.mubr.bf16.mxu0 0
    %7038 = vmatmul.mubr.bf16.gmra.mrb[0].mxu0 %v6995
    %v7039 = vpop.f32.mrb[0].mxu0
    %v7040 = vadd.f32 0.0, %v7039
    %v7041 = vpop.f32.mrb[0].mxu0
    %v7042 = vpop.f32.mrb[0].mxu0
    %v7043 = vpop.f32.mrb[0].mxu0
    %7044 = vdwg.mxu0
    %v7049 = vunpack.c.l.b16 %v6627
    %v7050 = vunpack.c.l.b16 %v6628
    %v7051 = vunpack.c.l.b16 %v6629
    %v7052 = vunpack.c.l.b16 %v6630
    %v7053 = vpack.c.b16 %v7050, %v7049
    %v7054 = vpack.c.b16 %v7052, %v7051
    %v7058 = vsel %vm448, %v6804, 0
    %v7061 = vsel %vm448, %v6805, 0
    %7063 = vmatprep.subr.bf16.mxu0 0
    %7064 = vmatpush1.bf16.msra.mxu0 %v7053
    %7065 = vmatprep.subr.bf16.mxu0 0
    %7066 = vmatpush1.bf16.msra.mxu0 %v7054
    %7067 = vmatprep.subr.bf16.mxu0 0
    %7068 = vmatpush1.bf16.msra.mxu0 0
    %7069 = vmatprep.subr.bf16.mxu0 0
    %7070 = vmatpush1.bf16.msra.mxu0 0
    %7071 = vmatprep.subr.bf16.mxu0 0
    %7072 = vmatpush1.bf16.msra.mxu0 0
    %7073 = vmatprep.subr.bf16.mxu0 0
    %7074 = vmatpush1.bf16.msra.mxu0 0
    %7075 = vmatprep.subr.bf16.mxu0 0
    %7076 = vmatpush1.bf16.msra.mxu0 0
    %7077 = vmatprep.subr.bf16.mxu0 0
    %7078 = vmatpush1.bf16.msra.mxu0 0
    %7079 = vmatprep.subr.bf16.mxu0 0
    %7080 = vmatpush1.bf16.msra.mxu0 0
    %7081 = vmatprep.subr.bf16.mxu0 0
    %7082 = vmatpush1.bf16.msra.mxu0 0
    %7083 = vmatprep.subr.bf16.mxu0 0
    %7084 = vmatpush1.bf16.msra.mxu0 0
    %7085 = vmatprep.subr.bf16.mxu0 0
    %7086 = vmatpush1.bf16.msra.mxu0 0
    %7087 = vmatprep.subr.bf16.mxu0 0
    %7088 = vmatpush1.bf16.msra.mxu0 0
    %7089 = vmatprep.subr.bf16.mxu0 0
    %7090 = vmatpush1.bf16.msra.mxu0 0
    %7091 = vmatprep.subr.bf16.mxu0 0
    %7092 = vmatpush1.bf16.msra.mxu0 0
    %7093 = vmatprep.subr.bf16.mxu0 0
    %7094 = vmatpush1.bf16.msra.mxu0 0
    %7095 = vmatprep.mubr.bf16.mxu0 0
    %7096 = vmatmul.mubr.bf16.gmra.mrb[0].mxu0 %v7058
    %v7097 = vpop.f32.mrb[0].mxu0
    %v7098 = vadd.f32 %v7032, %v7097
    %v7099 = vpop.f32.mrb[0].mxu0
    %v7100 = vpop.f32.mrb[0].mxu0
    %v7101 = vadd.f32 %v7035, %v7100
    %v7102 = vpop.f32.mrb[0].mxu0
    %7103 = vmatprep.mubr.bf16.mxu0 0
    %7104 = vmatmul.mubr.bf16.gmra.mrb[0].mxu0 %v7061
    %v7105 = vpop.f32.mrb[0].mxu0
    %v7106 = vadd.f32 %v7040, %v7105
    %v7107 = vpop.f32.mrb[0].mxu0
    %v7108 = vpop.f32.mrb[0].mxu0
    %v7109 = vpop.f32.mrb[0].mxu0
    %7110 = vdwg.mxu0
    %7111 = vrot.lane.b32.xlu0 %v6646, 64
    %v7112 = vpop.permute.xlu0 %7111
    %7113 = vrot.lane.b32.xlu0 %v6647, 64
    %v7114 = vpop.permute.xlu0 %7113
    %7115 = vrot.lane.b32.xlu0 %v6648, 64
    %v7116 = vpop.permute.xlu0 %7115
    %7117 = vrot.lane.b32.xlu0 %v6649, 64
    %v7118 = vpop.permute.xlu0 %7117
    %v7120 = vsel %vm448, %v7112, 0
    %v7123 = vsel %vm448, %v7114, 0
    %v7126 = vsel %vm448, %v7116, 0
    %v7129 = vsel %vm448, %v7118, 0
    %7131 = vmatprep.subr.bf16.mxu0 0
    %7132 = vmatpush1.bf16.xpose.msra.mxu0 %v7126
    %7133 = vmatprep.subr.bf16.mxu0 0
    %7134 = vmatpush1.bf16.xpose.msra.mxu0 %v7129
    %7135 = vmatprep.subr.bf16.mxu0 0
    %7136 = vmatpush1.bf16.xpose.msra.mxu0 0
    %7137 = vmatprep.subr.bf16.mxu0 0
    %7138 = vmatpush1.bf16.xpose.msra.mxu0 0
    %7139 = vmatprep.subr.bf16.mxu0 0
    %7140 = vmatpush1.bf16.xpose.msra.mxu0 0
    %7141 = vmatprep.subr.bf16.mxu0 0
    %7142 = vmatpush1.bf16.xpose.msra.mxu0 0
    %7143 = vmatprep.subr.bf16.mxu0 0
    %7144 = vmatpush1.bf16.xpose.msra.mxu0 0
    %7145 = vmatprep.subr.bf16.mxu0 0
    %7146 = vmatpush1.bf16.xpose.msra.mxu0 0
    %7147 = vmatprep.subr.bf16.mxu0 0
    %7148 = vmatpush1.bf16.xpose.msra.mxu0 0
    %7149 = vmatprep.subr.bf16.mxu0 0
    %7150 = vmatpush1.bf16.xpose.msra.mxu0 0
    %7151 = vmatprep.subr.bf16.mxu0 0
    %7152 = vmatpush1.bf16.xpose.msra.mxu0 0
    %7153 = vmatprep.subr.bf16.mxu0 0
    %7154 = vmatpush1.bf16.xpose.msra.mxu0 0
    %7155 = vmatprep.subr.bf16.mxu0 0
    %7156 = vmatpush1.bf16.xpose.msra.mxu0 0
    %7157 = vmatprep.subr.bf16.mxu0 0
    %7158 = vmatpush1.bf16.xpose.msra.mxu0 0
    %7159 = vmatprep.subr.bf16.mxu0 0
    %7160 = vmatpush1.bf16.xpose.msra.mxu0 0
    %7161 = vmatprep.subr.bf16.mxu0 0
    %7162 = vmatpush1.bf16.xpose.msra.mxu0 0
    %7163 = vmatprep.mubr.bf16.mxu0 0
    %7164 = vmatmul.mubr.bf16.gmra.mrb[0].mxu0 %v7120
    %v7165 = vpop.f32.mrb[0].mxu0
    %v7166 = vadd.f32 %v142, %v7165
    %v7167 = vpop.f32.mrb[0].mxu0
    %v7168 = vpop.f32.mrb[0].mxu0
    %v7169 = vadd.f32 %v143, %v7168
    %v7170 = vpop.f32.mrb[0].mxu0
    %7171 = vmatprep.mubr.bf16.mxu0 0
    %7172 = vmatmul.mubr.bf16.gmra.mrb[0].mxu0 %v7123
    %v7173 = vpop.f32.mrb[0].mxu0
    %v7174 = vadd.f32 %v144, %v7173
    %v7175 = vpop.f32.mrb[0].mxu0
    %v7176 = vpop.f32.mrb[0].mxu0
    %v7177 = vpop.f32.mrb[0].mxu0
    %7178 = vdwg.mxu0
    %v7179 = vsel %vm509, %v7166, -inf
    %7180 = vmax.xlane.f32.xlu0 %v7179
    %v7181 = vpop.xlane.xlu0 %7180
    %v7182 = vsel %vm509, %v7169, -inf
    %7183 = vmax.xlane.f32.xlu0 %v7182
    %v7184 = vpop.xlane.xlu0 %7183
    %v7185 = vsel %vm516, %v7174, -inf
    %7186 = vmax.xlane.f32.xlu0 %v7185
    %v7187 = vpop.xlane.xlu0 %7186
    %v7188 = vsub.f32 %v7166, %v7181
    %v7189 = vsub.f32 %v7169, %v7184
    %v7190 = vsub.f32 %v7174, %v7187
    %v7191 = vmul.f32 %v7188, 1.442695
    %v7192 = vpow.pop %v7191
    %v7193 = vmul.f32 %v7189, 1.442695
    %v7194 = vpow.pop %v7193
    %v7195 = vmul.f32 %v7190, 1.442695
    %v7196 = vpow.pop %v7195
    %v7197 = vsel %vm509, %v7192, 0.0
    %7198 = vadd.xlane.f32.xlu0 %v7197
    %v7199 = vpop.xlane.xlu0 %7198
    %v7200 = vsel %vm509, %v7194, 0.0
    %7201 = vadd.xlane.f32.xlu0 %v7200
    %v7202 = vpop.xlane.xlu0 %7201
    %v7203 = vsel %vm516, %v7196, 0.0
    %7204 = vadd.xlane.f32.xlu0 %v7203
    %v7205 = vpop.xlane.xlu0 %7204
    %v7206 = vrcp.pop %v7199
    %v7207 = vrcp.pop %v7202
    %v7208 = vrcp.pop %v7205
    %v7209 = vmul.f32 %v7192, %v7206
    %v7210 = vmul.f32 %v7194, %v7207
    %v7211 = vmul.f32 %v7196, %v7208
    %v7212 = vpack.c.bf16 %v7210, %v7209
    %v7213 = vpack.c.bf16 %v7211, %v7211
    %7214 = vrot.lane.b32.xlu0 %v6650, 64
    %v7215 = vpop.permute.xlu0 %7214
    %7216 = vrot.lane.b32.xlu0 %v6651, 64
    %v7217 = vpop.permute.xlu0 %7216
    %v7220 = vsel %vm509, %v7212, 0
    %v7223 = vsel %vm509, %v7213, 0
    %v7226 = vsel %vm552, %v7217, 0
    %7228 = vmatprep.subr.bf16.mxu0 0
    %7229 = vmatpush1.bf16.msra.mxu0 %v7215
    %7230 = vmatprep.subr.bf16.mxu0 0
    %7231 = vmatpush1.bf16.msra.mxu0 %v7226
    %7232 = vmatprep.subr.bf16.mxu0 0
    %7233 = vmatpush1.bf16.msra.mxu0 0
    %7234 = vmatprep.subr.bf16.mxu0 0
    %7235 = vmatpush1.bf16.msra.mxu0 0
    %7236 = vmatprep.subr.bf16.mxu0 0
    %7237 = vmatpush1.bf16.msra.mxu0 0
    %7238 = vmatprep.subr.bf16.mxu0 0
    %7239 = vmatpush1.bf16.msra.mxu0 0
    %7240 = vmatprep.subr.bf16.mxu0 0
    %7241 = vmatpush1.bf16.msra.mxu0 0
    %7242 = vmatprep.subr.bf16.mxu0 0
    %7243 = vmatpush1.bf16.msra.mxu0 0
    %7244 = vmatprep.subr.bf16.mxu0 0
    %7245 = vmatpush1.bf16.msra.mxu0 0
    %7246 = vmatprep.subr.bf16.mxu0 0
    %7247 = vmatpush1.bf16.msra.mxu0 0
    %7248 = vmatprep.subr.bf16.mxu0 0
    %7249 = vmatpush1.bf16.msra.mxu0 0
    %7250 = vmatprep.subr.bf16.mxu0 0
    %7251 = vmatpush1.bf16.msra.mxu0 0
    %7252 = vmatprep.subr.bf16.mxu0 0
    %7253 = vmatpush1.bf16.msra.mxu0 0
    %7254 = vmatprep.subr.bf16.mxu0 0
    %7255 = vmatpush1.bf16.msra.mxu0 0
    %7256 = vmatprep.subr.bf16.mxu0 0
    %7257 = vmatpush1.bf16.msra.mxu0 0
    %7258 = vmatprep.subr.bf16.mxu0 0
    %7259 = vmatpush1.bf16.msra.mxu0 0
    %7260 = vmatprep.mubr.bf16.mxu0 0
    %7261 = vmatmul.mubr.bf16.gmra.mrb[0].mxu0 %v7220
    %v7262 = vpop.f32.mrb[0].mxu0
    %v7263 = vadd.f32 0.0, %v7262
    %v7264 = vpop.f32.mrb[0].mxu0
    %v7265 = vpop.f32.mrb[0].mxu0
    %v7266 = vadd.f32 0.0, %v7265
    %v7267 = vpop.f32.mrb[0].mxu0
    %7268 = vmatprep.mubr.bf16.mxu0 0
    %7269 = vmatmul.mubr.bf16.gmra.mrb[0].mxu0 %v7223
    %v7270 = vpop.f32.mrb[0].mxu0
    %v7271 = vadd.f32 0.0, %v7270
    %v7272 = vpop.f32.mrb[0].mxu0
    %v7273 = vpop.f32.mrb[0].mxu0
    %v7274 = vpop.f32.mrb[0].mxu0
    %7275 = vdwg.mxu0
    %v7276 = vpack.c.bf16 %v7266, %v7263
    %v7277 = vpack.c.bf16 %v7271, %v7271
    %v7282 = vunpack.c.l.b16 %v6635
    %v7283 = vunpack.c.l.b16 %v6636
    %v7284 = vunpack.c.l.b16 %v6637
    %v7285 = vunpack.c.l.b16 %v6638
    %v7286 = vpack.c.b16 %v7283, %v7282
    %v7287 = vpack.c.b16 %v7285, %v7284
    %v7291 = vsel %vm448, %v7276, 0
    %v7294 = vsel %vm448, %v7277, 0
    %7296 = vmatprep.subr.bf16.mxu0 0
    %7297 = vmatpush1.bf16.msra.mxu0 %v7286
    %7298 = vmatprep.subr.bf16.mxu0 0
    %7299 = vmatpush1.bf16.msra.mxu0 %v7287
    %7300 = vmatprep.subr.bf16.mxu0 0
    %7301 = vmatpush1.bf16.msra.mxu0 0
    %7302 = vmatprep.subr.bf16.mxu0 0
    %7303 = vmatpush1.bf16.msra.mxu0 0
    %7304 = vmatprep.subr.bf16.mxu0 0
    %7305 = vmatpush1.bf16.msra.mxu0 0
    %7306 = vmatprep.subr.bf16.mxu0 0
    %7307 = vmatpush1.bf16.msra.mxu0 0
    %7308 = vmatprep.subr.bf16.mxu0 0
    %7309 = vmatpush1.bf16.msra.mxu0 0
    %7310 = vmatprep.subr.bf16.mxu0 0
    %7311 = vmatpush1.bf16.msra.mxu0 0
    %7312 = vmatprep.subr.bf16.mxu0 0
    %7313 = vmatpush1.bf16.msra.mxu0 0
    %7314 = vmatprep.subr.bf16.mxu0 0
    %7315 = vmatpush1.bf16.msra.mxu0 0
    %7316 = vmatprep.subr.bf16.mxu0 0
    %7317 = vmatpush1.bf16.msra.mxu0 0
    %7318 = vmatprep.subr.bf16.mxu0 0
    %7319 = vmatpush1.bf16.msra.mxu0 0
    %7320 = vmatprep.subr.bf16.mxu0 0
    %7321 = vmatpush1.bf16.msra.mxu0 0
    %7322 = vmatprep.subr.bf16.mxu0 0
    %7323 = vmatpush1.bf16.msra.mxu0 0
    %7324 = vmatprep.subr.bf16.mxu0 0
    %7325 = vmatpush1.bf16.msra.mxu0 0
    %7326 = vmatprep.subr.bf16.mxu0 0
    %7327 = vmatpush1.bf16.msra.mxu0 0
    %7328 = vmatprep.mubr.bf16.mxu0 0
    %7329 = vmatmul.mubr.bf16.gmra.mrb[0].mxu0 %v7291
    %v7330 = vpop.f32.mrb[0].mxu0
    %v7331 = vadd.f32 0.0, %v7330
    %v7332 = vpop.f32.mrb[0].mxu0
    %v7333 = vpop.f32.mrb[0].mxu0
    %v7334 = vadd.f32 0.0, %v7333
    %v7335 = vpop.f32.mrb[0].mxu0
    %7336 = vmatprep.mubr.bf16.mxu0 0
    %7337 = vmatmul.mubr.bf16.gmra.mrb[0].mxu0 %v7294
    %v7338 = vpop.f32.mrb[0].mxu0
    %v7339 = vadd.f32 0.0, %v7338
    %v7340 = vpop.f32.mrb[0].mxu0
    %v7341 = vpop.f32.mrb[0].mxu0
    %v7342 = vpop.f32.mrb[0].mxu0
    %7343 = vdwg.mxu0
    %v7344 = vadd.f32 %v7098, %v7331
    %v7345 = vadd.f32 %v7101, %v7334
    %v7346 = vadd.f32 %v7106, %v7339
    %7347 = vrot.lane.b32.xlu0 %v6646, 32
    %v7348 = vpop.permute.xlu0 %7347
    %7349 = vrot.lane.b32.xlu0 %v6647, 32
    %v7350 = vpop.permute.xlu0 %7349
    %7351 = vrot.lane.b32.xlu0 %v6648, 32
    %v7352 = vpop.permute.xlu0 %7351
    %7353 = vrot.lane.b32.xlu0 %v6649, 32
    %v7354 = vpop.permute.xlu0 %7353
    %v7356 = vsel %vm448, %v7348, 0
    %v7359 = vsel %vm448, %v7350, 0
    %v7362 = vsel %vm448, %v7352, 0
    %v7365 = vsel %vm448, %v7354, 0
    %7367 = vmatprep.subr.bf16.mxu0 0
    %7368 = vmatpush1.bf16.xpose.msra.mxu0 %v7362
    %7369 = vmatprep.subr.bf16.mxu0 0
    %7370 = vmatpush1.bf16.xpose.msra.mxu0 %v7365
    %7371 = vmatprep.subr.bf16.mxu0 0
    %7372 = vmatpush1.bf16.xpose.msra.mxu0 0
    %7373 = vmatprep.subr.bf16.mxu0 0
    %7374 = vmatpush1.bf16.xpose.msra.mxu0 0
    %7375 = vmatprep.subr.bf16.mxu0 0
    %7376 = vmatpush1.bf16.xpose.msra.mxu0 0
    %7377 = vmatprep.subr.bf16.mxu0 0
    %7378 = vmatpush1.bf16.xpose.msra.mxu0 0
    %7379 = vmatprep.subr.bf16.mxu0 0
    %7380 = vmatpush1.bf16.xpose.msra.mxu0 0
    %7381 = vmatprep.subr.bf16.mxu0 0
    %7382 = vmatpush1.bf16.xpose.msra.mxu0 0
    %7383 = vmatprep.subr.bf16.mxu0 0
    %7384 = vmatpush1.bf16.xpose.msra.mxu0 0
    %7385 = vmatprep.subr.bf16.mxu0 0
    %7386 = vmatpush1.bf16.xpose.msra.mxu0 0
    %7387 = vmatprep.subr.bf16.mxu0 0
    %7388 = vmatpush1.bf16.xpose.msra.mxu0 0
    %7389 = vmatprep.subr.bf16.mxu0 0
    %7390 = vmatpush1.bf16.xpose.msra.mxu0 0
    %7391 = vmatprep.subr.bf16.mxu0 0
    %7392 = vmatpush1.bf16.xpose.msra.mxu0 0
    %7393 = vmatprep.subr.bf16.mxu0 0
    %7394 = vmatpush1.bf16.xpose.msra.mxu0 0
    %7395 = vmatprep.subr.bf16.mxu0 0
    %7396 = vmatpush1.bf16.xpose.msra.mxu0 0
    %7397 = vmatprep.subr.bf16.mxu0 0
    %7398 = vmatpush1.bf16.xpose.msra.mxu0 0
    %7399 = vmatprep.mubr.bf16.mxu0 0
    %7400 = vmatmul.mubr.bf16.gmra.mrb[0].mxu0 %v7356
    %v7401 = vpop.f32.mrb[0].mxu0
    %v7402 = vadd.f32 %v142, %v7401
    %v7403 = vpop.f32.mrb[0].mxu0
    %v7404 = vpop.f32.mrb[0].mxu0
    %v7405 = vadd.f32 %v143, %v7404
    %v7406 = vpop.f32.mrb[0].mxu0
    %7407 = vmatprep.mubr.bf16.mxu0 0
    %7408 = vmatmul.mubr.bf16.gmra.mrb[0].mxu0 %v7359
    %v7409 = vpop.f32.mrb[0].mxu0
    %v7410 = vadd.f32 %v144, %v7409
    %v7411 = vpop.f32.mrb[0].mxu0
    %v7412 = vpop.f32.mrb[0].mxu0
    %v7413 = vpop.f32.mrb[0].mxu0
    %7414 = vdwg.mxu0
    %v7415 = vsel %vm509, %v7402, -inf
    %7416 = vmax.xlane.f32.xlu0 %v7415
    %v7417 = vpop.xlane.xlu0 %7416
    %v7418 = vsel %vm509, %v7405, -inf
    %7419 = vmax.xlane.f32.xlu0 %v7418
    %v7420 = vpop.xlane.xlu0 %7419
    %v7421 = vsel %vm516, %v7410, -inf
    %7422 = vmax.xlane.f32.xlu0 %v7421
    %v7423 = vpop.xlane.xlu0 %7422
    %v7424 = vsub.f32 %v7402, %v7417
    %v7425 = vsub.f32 %v7405, %v7420
    %v7426 = vsub.f32 %v7410, %v7423
    %v7427 = vmul.f32 %v7424, 1.442695
    %v7428 = vpow.pop %v7427
    %v7429 = vmul.f32 %v7425, 1.442695
    %v7430 = vpow.pop %v7429
    %v7431 = vmul.f32 %v7426, 1.442695
    %v7432 = vpow.pop %v7431
    %v7433 = vsel %vm509, %v7428, 0.0
    %7434 = vadd.xlane.f32.xlu0 %v7433
    %v7435 = vpop.xlane.xlu0 %7434
    %v7436 = vsel %vm509, %v7430, 0.0
    %7437 = vadd.xlane.f32.xlu0 %v7436
    %v7438 = vpop.xlane.xlu0 %7437
    %v7439 = vsel %vm516, %v7432, 0.0
    %7440 = vadd.xlane.f32.xlu0 %v7439
    %v7441 = vpop.xlane.xlu0 %7440
    %v7442 = vrcp.pop %v7435
    %v7443 = vrcp.pop %v7438
    %v7444 = vrcp.pop %v7441
    %v7445 = vmul.f32 %v7428, %v7442
    %v7446 = vmul.f32 %v7430, %v7443
    %v7447 = vmul.f32 %v7432, %v7444
    %v7448 = vpack.c.bf16 %v7446, %v7445
    %v7449 = vpack.c.bf16 %v7447, %v7447
    %7450 = vrot.lane.b32.xlu0 %v6650, 32
    %v7451 = vpop.permute.xlu0 %7450
    %7452 = vrot.lane.b32.xlu0 %v6651, 32
    %v7453 = vpop.permute.xlu0 %7452
    %v7456 = vsel %vm509, %v7448, 0
    %v7459 = vsel %vm509, %v7449, 0
    %v7462 = vsel %vm552, %v7453, 0
    %7464 = vmatprep.subr.bf16.mxu0 0
    %7465 = vmatpush1.bf16.msra.mxu0 %v7451
    %7466 = vmatprep.subr.bf16.mxu0 0
    %7467 = vmatpush1.bf16.msra.mxu0 %v7462
    %7468 = vmatprep.subr.bf16.mxu0 0
    %7469 = vmatpush1.bf16.msra.mxu0 0
    %7470 = vmatprep.subr.bf16.mxu0 0
    %7471 = vmatpush1.bf16.msra.mxu0 0
    %7472 = vmatprep.subr.bf16.mxu0 0
    %7473 = vmatpush1.bf16.msra.mxu0 0
    %7474 = vmatprep.subr.bf16.mxu0 0
    %7475 = vmatpush1.bf16.msra.mxu0 0
    %7476 = vmatprep.subr.bf16.mxu0 0
    %7477 = vmatpush1.bf16.msra.mxu0 0
    %7478 = vmatprep.subr.bf16.mxu0 0
    %7479 = vmatpush1.bf16.msra.mxu0 0
    %7480 = vmatprep.subr.bf16.mxu0 0
    %7481 = vmatpush1.bf16.msra.mxu0 0
    %7482 = vmatprep.subr.bf16.mxu0 0
    %7483 = vmatpush1.bf16.msra.mxu0 0
    %7484 = vmatprep.subr.bf16.mxu0 0
    %7485 = vmatpush1.bf16.msra.mxu0 0
    %7486 = vmatprep.subr.bf16.mxu0 0
    %7487 = vmatpush1.bf16.msra.mxu0 0
    %7488 = vmatprep.subr.bf16.mxu0 0
    %7489 = vmatpush1.bf16.msra.mxu0 0
    %7490 = vmatprep.subr.bf16.mxu0 0
    %7491 = vmatpush1.bf16.msra.mxu0 0
    %7492 = vmatprep.subr.bf16.mxu0 0
    %7493 = vmatpush1.bf16.msra.mxu0 0
    %7494 = vmatprep.subr.bf16.mxu0 0
    %7495 = vmatpush1.bf16.msra.mxu0 0
    %7496 = vmatprep.mubr.bf16.mxu0 0
    %7497 = vmatmul.mubr.bf16.gmra.mrb[0].mxu0 %v7456
    %v7498 = vpop.f32.mrb[0].mxu0
    %v7499 = vadd.f32 0.0, %v7498
    %v7500 = vpop.f32.mrb[0].mxu0
    %v7501 = vpop.f32.mrb[0].mxu0
    %v7502 = vadd.f32 0.0, %v7501
    %v7503 = vpop.f32.mrb[0].mxu0
    %7504 = vmatprep.mubr.bf16.mxu0 0
    %7505 = vmatmul.mubr.bf16.gmra.mrb[0].mxu0 %v7459
    %v7506 = vpop.f32.mrb[0].mxu0
    %v7507 = vadd.f32 0.0, %v7506
    %v7508 = vpop.f32.mrb[0].mxu0
    %v7509 = vpop.f32.mrb[0].mxu0
    %v7510 = vpop.f32.mrb[0].mxu0
    %7511 = vdwg.mxu0
    %v7512 = vpack.c.bf16 %v7502, %v7499
    %v7513 = vpack.c.bf16 %v7507, %v7507
    %v7518 = vunpack.c.l.b16 %v6639
    %v7519 = vunpack.c.l.b16 %v6640
    %v7520 = vunpack.c.l.b16 %v6641
    %v7521 = vunpack.c.l.b16 %v6642
    %v7522 = vpack.c.b16 %v7519, %v7518
    %v7523 = vpack.c.b16 %v7521, %v7520
    %v7527 = vsel %vm448, %v7512, 0
    %v7530 = vsel %vm448, %v7513, 0
    %7532 = vmatprep.subr.bf16.mxu0 0
    %7533 = vmatpush1.bf16.msra.mxu0 %v7522
    %7534 = vmatprep.subr.bf16.mxu0 0
    %7535 = vmatpush1.bf16.msra.mxu0 %v7523
    %7536 = vmatprep.subr.bf16.mxu0 0
    %7537 = vmatpush1.bf16.msra.mxu0 0
    %7538 = vmatprep.subr.bf16.mxu0 0
    %7539 = vmatpush1.bf16.msra.mxu0 0
    %7540 = vmatprep.subr.bf16.mxu0 0
    %7541 = vmatpush1.bf16.msra.mxu0 0
    %7542 = vmatprep.subr.bf16.mxu0 0
    %7543 = vmatpush1.bf16.msra.mxu0 0
    %7544 = vmatprep.subr.bf16.mxu0 0
    %7545 = vmatpush1.bf16.msra.mxu0 0
    %7546 = vmatprep.subr.bf16.mxu0 0
    %7547 = vmatpush1.bf16.msra.mxu0 0
    %7548 = vmatprep.subr.bf16.mxu0 0
    %7549 = vmatpush1.bf16.msra.mxu0 0
    %7550 = vmatprep.subr.bf16.mxu0 0
    %7551 = vmatpush1.bf16.msra.mxu0 0
    %7552 = vmatprep.subr.bf16.mxu0 0
    %7553 = vmatpush1.bf16.msra.mxu0 0
    %7554 = vmatprep.subr.bf16.mxu0 0
    %7555 = vmatpush1.bf16.msra.mxu0 0
    %7556 = vmatprep.subr.bf16.mxu0 0
    %7557 = vmatpush1.bf16.msra.mxu0 0
    %7558 = vmatprep.subr.bf16.mxu0 0
    %7559 = vmatpush1.bf16.msra.mxu0 0
    %7560 = vmatprep.subr.bf16.mxu0 0
    %7561 = vmatpush1.bf16.msra.mxu0 0
    %7562 = vmatprep.subr.bf16.mxu0 0
    %7563 = vmatpush1.bf16.msra.mxu0 0
    %7564 = vmatprep.mubr.bf16.mxu0 0
    %7565 = vmatmul.mubr.bf16.gmra.mrb[0].mxu0 %v7527
    %v7566 = vpop.f32.mrb[0].mxu0
    %v7567 = vadd.f32 0.0, %v7566
    %v7568 = vpop.f32.mrb[0].mxu0
    %v7569 = vpop.f32.mrb[0].mxu0
    %v7570 = vadd.f32 0.0, %v7569
    %v7571 = vpop.f32.mrb[0].mxu0
    %7572 = vmatprep.mubr.bf16.mxu0 0
    %7573 = vmatmul.mubr.bf16.gmra.mrb[0].mxu0 %v7530
    %v7574 = vpop.f32.mrb[0].mxu0
    %v7575 = vadd.f32 0.0, %v7574
    %v7576 = vpop.f32.mrb[0].mxu0
    %v7577 = vpop.f32.mrb[0].mxu0
    %v7578 = vpop.f32.mrb[0].mxu0
    %7579 = vdwg.mxu0
    %v7580 = vadd.f32 %v7344, %v7567
    %v7581 = vadd.f32 %v7345, %v7570
    %v7582 = vadd.f32 %v7346, %v7575
    %s7583 = scalar_lea.vmem %s9, 3
    %v7584 = vld [vmem:[%s7583] sm:$0x1]
    %v7586 = vlaneseq
    %v7587 = vshrl.u32 %v7586, 7
    %v7588 = vsub.s32 0, %v7587
    %v7589 = vrot.slane %v7584, %v7588
    %v7591 = vadd.f32 %v7580, %v7589
    %v7592 = vadd.f32 %v7581, %v7589
    %v7593 = vadd.f32 %v7582, %v7589
    %v7594 = vadd.f32 %v6343, %v7591
    %v7595 = vadd.f32 %v6344, %v7592
    %v7596 = vadd.f32 %v6345, %v7593
    %s7597 = scalar_lea.vmem %s14, 3
    %v7598 = vld [vmem:[%s7597] sm:$0x1]
    %s7599 = scalar_lea.vmem %s15, 3
    %v7600 = vld [vmem:[%s7599] sm:$0x1]
    %7601 = vadd.xlane.f32.xlu0 %v7594
    %v7602 = vpop.xlane.xlu0 %7601
    %7603 = vadd.xlane.f32.xlu0 %v7595
    %v7604 = vpop.xlane.xlu0 %7603
    %v7605 = vsel %vm1402, %v7596, 0.0
    %7606 = vadd.xlane.f32.xlu0 %v7605
    %v7607 = vpop.xlane.xlu0 %7606
    %v7608 = vmul.f32 %v7602, %v1406
    %v7609 = vmul.f32 %v7604, %v1406
    %v7610 = vmul.f32 %v7607, %v1406
    %v7611 = vsub.f32 %v7594, %v7608
    %v7612 = vsub.f32 %v7595, %v7609
    %v7613 = vsub.f32 %v7596, %v7610
    %v7614 = vmul.f32 %v7611, %v7611
    %v7615 = vmul.f32 %v7612, %v7612
    %v7616 = vmul.f32 %v7613, %v7613
    %7617 = vadd.xlane.f32.xlu0 %v7614
    %v7618 = vpop.xlane.xlu0 %7617
    %7619 = vadd.xlane.f32.xlu0 %v7615
    %v7620 = vpop.xlane.xlu0 %7619
    %v7621 = vsel %vm1402, %v7616, 0.0
    %7622 = vadd.xlane.f32.xlu0 %v7621
    %v7623 = vpop.xlane.xlu0 %7622
    %v7624 = vmul.f32 %v7618, %v1406
    %v7625 = vmul.f32 %v7620, %v1406
    %v7626 = vmul.f32 %v7623, %v1406
    %v7627 = vadd.f32 %v7624, 1e-05
    %v7628 = vadd.f32 %v7625, 1e-05
    %v7629 = vadd.f32 %v7626, 1e-05
    %v7630 = vrsqrt.pop %v7627
    %v7631 = vrsqrt.pop %v7628
    %v7632 = vrsqrt.pop %v7629
    %v7633 = vmul.f32 %v7611, %v7630
    %v7634 = vmul.f32 %v7612, %v7631
    %v7635 = vmul.f32 %v7613, %v7632
    %v7637 = vlaneseq
    %v7638 = vshrl.u32 %v7637, 7
    %v7639 = vsub.s32 0, %v7638
    %v7640 = vrot.slane %v7598, %v7639
    %v7642 = vmul.f32 %v7633, %v7640
    %v7643 = vmul.f32 %v7634, %v7640
    %v7644 = vmul.f32 %v7635, %v7640
    %v7646 = vlaneseq
    %v7647 = vshrl.u32 %v7646, 7
    %v7648 = vsub.s32 0, %v7647
    %v7649 = vrot.slane %v7600, %v7648
    %v7651 = vadd.f32 %v7642, %v7649
    %v7652 = vadd.f32 %v7643, %v7649
    %v7653 = vadd.f32 %v7644, %v7649
    %v7654 = vpack.c.bf16 %v7652, %v7651
    %v7655 = vpack.c.bf16 %v7653, %v7653
    %s7656 = scalar_lea.vmem %s10, 768
    %v7657 = vld [vmem:[%s7656] sm:$0xff]
    %v7658 = vld [vmem:[%s7656 + $0x8] sm:$0xff]
    %v7659 = vld [vmem:[%s7656 + $0x10] sm:$0xff]
    %v7660 = vld [vmem:[%s7656 + $0x18] sm:$0xff]
    %v7661 = vld [vmem:[%s7656 + $0x20] sm:$0xff]
    %v7662 = vld [vmem:[%s7656 + $0x28] sm:$0xff]
    %v7663 = vld [vmem:[%s7656 + $0x30] sm:$0xff]
    %v7664 = vld [vmem:[%s7656 + $0x38] sm:$0xff]
    %v7665 = vld [vmem:[%s7656 + $0x40] sm:$0xff]
    %v7666 = vld [vmem:[%s7656 + $0x48] sm:$0xff]
    %v7667 = vld [vmem:[%s7656 + $0x50] sm:$0xff]
    %v7668 = vld [vmem:[%s7656 + $0x58] sm:$0xff]
    %v7669 = vld [vmem:[%s7656 + $0x60] sm:$0xff]
    %v7670 = vld [vmem:[%s7656 + $0x68] sm:$0xff]
    %v7671 = vld [vmem:[%s7656 + $0x70] sm:$0xff]
    %v7672 = vld [vmem:[%s7656 + $0x78] sm:$0xff]
    %v7673 = vld [vmem:[%s7656 + $0x80] sm:$0xff]
    %v7674 = vld [vmem:[%s7656 + $0x88] sm:$0xff]
    %v7675 = vld [vmem:[%s7656 + $0x90] sm:$0xff]
    %v7676 = vld [vmem:[%s7656 + $0x98] sm:$0xff]
    %v7677 = vld [vmem:[%s7656 + $0xa0] sm:$0xff]
    %v7678 = vld [vmem:[%s7656 + $0xa8] sm:$0xff]
    %v7679 = vld [vmem:[%s7656 + $0xb0] sm:$0xff]
    %v7680 = vld [vmem:[%s7656 + $0xb8] sm:$0xff]
    %v7681 = vld [vmem:[%s7656 + $0xc0] sm:$0xff]
    %v7682 = vld [vmem:[%s7656 + $0xc8] sm:$0xff]
    %v7683 = vld [vmem:[%s7656 + $0xd0] sm:$0xff]
    %v7684 = vld [vmem:[%s7656 + $0xd8] sm:$0xff]
    %v7685 = vld [vmem:[%s7656 + $0xe0] sm:$0xff]
    %v7686 = vld [vmem:[%s7656 + $0xe8] sm:$0xff]
    %v7687 = vld [vmem:[%s7656 + $0xf0] sm:$0xff]
    %v7688 = vld [vmem:[%s7656 + $0xf8] sm:$0xff]
    %s7689 = scalar_lea.vmem %s11, 12
    %v7690 = vld [vmem:[%s7689] sm:$0xf]
    %v7692 = vlaneseq
    %v7693 = vshrl.u32 %v7692, 7
    %v7694 = vsub.s32 0, %v7693
    %v7695 = vrot.slane %v7690, %v7694
    %v7696 = vlaneseq
    %v7697 = vshrl.u32 %v7696, 7
    %v7698 = vsub.s32 1, %v7697
    %v7699 = vrot.slane %v7690, %v7698
    %v7700 = vlaneseq
    %v7701 = vshrl.u32 %v7700, 7
    %v7702 = vsub.s32 2, %v7701
    %v7703 = vrot.slane %v7690, %v7702
    %v7704 = vlaneseq
    %v7705 = vshrl.u32 %v7704, 7
    %v7706 = vsub.s32 3, %v7705
    %v7707 = vrot.slane %v7690, %v7706
    %v7744 = vunpack.c.l.b16 %v7657
    %v7745 = vunpack.c.h.b16 %v7657
    %v7746 = vunpack.c.l.b16 %v7658
    %v7747 = vunpack.c.h.b16 %v7658
    %v7748 = vunpack.c.l.b16 %v7659
    %v7749 = vunpack.c.h.b16 %v7659
    %v7750 = vunpack.c.l.b16 %v7660
    %v7751 = vunpack.c.h.b16 %v7660
    %v7752 = vunpack.c.l.b16 %v7661
    %v7753 = vunpack.c.h.b16 %v7661
    %v7754 = vunpack.c.l.b16 %v7662
    %v7755 = vunpack.c.h.b16 %v7662
    %v7756 = vunpack.c.l.b16 %v7663
    %v7757 = vunpack.c.h.b16 %v7663
    %v7758 = vunpack.c.l.b16 %v7664
    %v7759 = vunpack.c.h.b16 %v7664
    %v7760 = vunpack.c.l.b16 %v7665
    %v7761 = vunpack.c.h.b16 %v7665
    %v7762 = vunpack.c.l.b16 %v7666
    %v7763 = vunpack.c.h.b16 %v7666
    %v7764 = vunpack.c.l.b16 %v7667
    %v7765 = vunpack.c.h.b16 %v7667
    %v7766 = vunpack.c.l.b16 %v7668
    %v7767 = vunpack.c.h.b16 %v7668
    %v7768 = vunpack.c.l.b16 %v7669
    %v7769 = vunpack.c.h.b16 %v7669
    %v7770 = vunpack.c.l.b16 %v7670
    %v7771 = vunpack.c.h.b16 %v7670
    %v7772 = vunpack.c.l.b16 %v7671
    %v7773 = vunpack.c.h.b16 %v7671
    %v7774 = vunpack.c.l.b16 %v7672
    %v7775 = vunpack.c.h.b16 %v7672
    %v7776 = vunpack.c.l.b16 %v7673
    %v7777 = vunpack.c.h.b16 %v7673
    %v7778 = vunpack.c.l.b16 %v7674
    %v7779 = vunpack.c.h.b16 %v7674
    %v7780 = vunpack.c.l.b16 %v7675
    %v7781 = vunpack.c.h.b16 %v7675
    %v7782 = vunpack.c.l.b16 %v7676
    %v7783 = vunpack.c.h.b16 %v7676
    %v7784 = vunpack.c.l.b16 %v7677
    %v7785 = vunpack.c.h.b16 %v7677
    %v7786 = vunpack.c.l.b16 %v7678
    %v7787 = vunpack.c.h.b16 %v7678
    %v7788 = vunpack.c.l.b16 %v7679
    %v7789 = vunpack.c.h.b16 %v7679
    %v7790 = vunpack.c.l.b16 %v7680
    %v7791 = vunpack.c.h.b16 %v7680
    %v7792 = vunpack.c.l.b16 %v7681
    %v7793 = vunpack.c.h.b16 %v7681
    %v7794 = vunpack.c.l.b16 %v7682
    %v7795 = vunpack.c.h.b16 %v7682
    %v7796 = vunpack.c.l.b16 %v7683
    %v7797 = vunpack.c.h.b16 %v7683
    %v7798 = vunpack.c.l.b16 %v7684
    %v7799 = vunpack.c.h.b16 %v7684
    %v7800 = vunpack.c.l.b16 %v7685
    %v7801 = vunpack.c.h.b16 %v7685
    %v7802 = vunpack.c.l.b16 %v7686
    %v7803 = vunpack.c.h.b16 %v7686
    %v7804 = vunpack.c.l.b16 %v7687
    %v7805 = vunpack.c.h.b16 %v7687
    %v7806 = vunpack.c.l.b16 %v7688
    %v7807 = vunpack.c.h.b16 %v7688
    %v7808 = vpack.c.b16 %v7748, %v7744
    %v7809 = vpack.c.b16 %v7749, %v7745
    %v7810 = vpack.c.b16 %v7750, %v7746
    %v7811 = vpack.c.b16 %v7751, %v7747
    %v7812 = vpack.c.b16 %v7756, %v7752
    %v7813 = vpack.c.b16 %v7757, %v7753
    %v7814 = vpack.c.b16 %v7758, %v7754
    %v7815 = vpack.c.b16 %v7759, %v7755
    %v7816 = vpack.c.b16 %v7764, %v7760
    %v7817 = vpack.c.b16 %v7765, %v7761
    %v7818 = vpack.c.b16 %v7766, %v7762
    %v7819 = vpack.c.b16 %v7767, %v7763
    %v7820 = vpack.c.b16 %v7772, %v7768
    %v7821 = vpack.c.b16 %v7773, %v7769
    %v7822 = vpack.c.b16 %v7774, %v7770
    %v7823 = vpack.c.b16 %v7775, %v7771
    %v7824 = vpack.c.b16 %v7780, %v7776
    %v7825 = vpack.c.b16 %v7781, %v7777
    %v7826 = vpack.c.b16 %v7782, %v7778
    %v7827 = vpack.c.b16 %v7783, %v7779
    %v7828 = vpack.c.b16 %v7788, %v7784
    %v7829 = vpack.c.b16 %v7789, %v7785
    %v7830 = vpack.c.b16 %v7790, %v7786
    %v7831 = vpack.c.b16 %v7791, %v7787
    %v7832 = vpack.c.b16 %v7796, %v7792
    %v7833 = vpack.c.b16 %v7797, %v7793
    %v7834 = vpack.c.b16 %v7798, %v7794
    %v7835 = vpack.c.b16 %v7799, %v7795
    %v7836 = vpack.c.b16 %v7804, %v7800
    %v7837 = vpack.c.b16 %v7805, %v7801
    %v7838 = vpack.c.b16 %v7806, %v7802
    %v7839 = vpack.c.b16 %v7807, %v7803
    %7872 = vmatprep.subr.bf16.mxu0 %v7809
    %7873 = vmatpush1.bf16.msra.mxu0 %v7808
    %7874 = vmatprep.subr.bf16.mxu0 %v7813
    %7875 = vmatpush1.bf16.msra.mxu0 %v7812
    %7876 = vmatprep.subr.bf16.mxu0 %v7817
    %7877 = vmatpush1.bf16.msra.mxu0 %v7816
    %7878 = vmatprep.subr.bf16.mxu0 %v7821
    %7879 = vmatpush1.bf16.msra.mxu0 %v7820
    %7880 = vmatprep.subr.bf16.mxu0 %v7825
    %7881 = vmatpush1.bf16.msra.mxu0 %v7824
    %7882 = vmatprep.subr.bf16.mxu0 %v7829
    %7883 = vmatpush1.bf16.msra.mxu0 %v7828
    %7884 = vmatprep.subr.bf16.mxu0 %v7833
    %7885 = vmatpush1.bf16.msra.mxu0 %v7832
    %7886 = vmatprep.subr.bf16.mxu0 %v7837
    %7887 = vmatpush1.bf16.msra.mxu0 %v7836
    %7888 = vmatprep.subr.bf16.mxu0 0
    %7889 = vmatpush1.bf16.msra.mxu0 0
    %7890 = vmatprep.subr.bf16.mxu0 0
    %7891 = vmatpush1.bf16.msra.mxu0 0
    %7892 = vmatprep.subr.bf16.mxu0 0
    %7893 = vmatpush1.bf16.msra.mxu0 0
    %7894 = vmatprep.subr.bf16.mxu0 0
    %7895 = vmatpush1.bf16.msra.mxu0 0
    %7896 = vmatprep.subr.bf16.mxu0 0
    %7897 = vmatpush1.bf16.msra.mxu0 0
    %7898 = vmatprep.subr.bf16.mxu0 0
    %7899 = vmatpush1.bf16.msra.mxu0 0
    %7900 = vmatprep.subr.bf16.mxu0 0
    %7901 = vmatpush1.bf16.msra.mxu0 0
    %7902 = vmatprep.subr.bf16.mxu0 0
    %7903 = vmatpush1.bf16.msra.mxu0 0
    %7904 = vmatprep.mubr.bf16.mxu0 0
    %7905 = vmatmul.mubr.bf16.gmra.mrb[0].mxu0 %v7654
    %v7906 = vpop.f32.mrb[0].mxu0
    %v7907 = vadd.f32 %v7695, %v7906
    %v7908 = vpop.f32.mrb[0].mxu0
    %v7909 = vadd.f32 %v7699, %v7908
    %v7910 = vpop.f32.mrb[0].mxu0
    %v7911 = vadd.f32 %v7695, %v7910
    %v7912 = vpop.f32.mrb[0].mxu0
    %v7913 = vadd.f32 %v7699, %v7912
    %7914 = vmatprep.mubr.bf16.mxu0 0
    %7915 = vmatmul.mubr.bf16.gmra.mrb[0].mxu0 %v7655
    %v7916 = vpop.f32.mrb[0].mxu0
    %v7917 = vadd.f32 %v7695, %v7916
    %v7918 = vpop.f32.mrb[0].mxu0
    %v7919 = vadd.f32 %v7699, %v7918
    %v7920 = vpop.f32.mrb[0].mxu0
    %v7921 = vpop.f32.mrb[0].mxu0
    %7922 = vdwg.mxu0
    %7923 = vmatprep.subr.bf16.mxu0 %v7811
    %7924 = vmatpush1.bf16.msra.mxu0 %v7810
    %7925 = vmatprep.subr.bf16.mxu0 %v7815
    %7926 = vmatpush1.bf16.msra.mxu0 %v7814
    %7927 = vmatprep.subr.bf16.mxu0 %v7819
    %7928 = vmatpush1.bf16.msra.mxu0 %v7818
    %7929 = vmatprep.subr.bf16.mxu0 %v7823
    %7930 = vmatpush1.bf16.msra.mxu0 %v7822
    %7931 = vmatprep.subr.bf16.mxu0 %v7827
    %7932 = vmatpush1.bf16.msra.mxu0 %v7826
    %7933 = vmatprep.subr.bf16.mxu0 %v7831
    %7934 = vmatpush1.bf16.msra.mxu0 %v7830
    %7935 = vmatprep.subr.bf16.mxu0 %v7835
    %7936 = vmatpush1.bf16.msra.mxu0 %v7834
    %7937 = vmatprep.subr.bf16.mxu0 %v7839
    %7938 = vmatpush1.bf16.msra.mxu0 %v7838
    %7939 = vmatprep.subr.bf16.mxu0 0
    %7940 = vmatpush1.bf16.msra.mxu0 0
    %7941 = vmatprep.subr.bf16.mxu0 0
    %7942 = vmatpush1.bf16.msra.mxu0 0
    %7943 = vmatprep.subr.bf16.mxu0 0
    %7944 = vmatpush1.bf16.msra.mxu0 0
    %7945 = vmatprep.subr.bf16.mxu0 0
    %7946 = vmatpush1.bf16.msra.mxu0 0
    %7947 = vmatprep.subr.bf16.mxu0 0
    %7948 = vmatpush1.bf16.msra.mxu0 0
    %7949 = vmatprep.subr.bf16.mxu0 0
    %7950 = vmatpush1.bf16.msra.mxu0 0
    %7951 = vmatprep.subr.bf16.mxu0 0
    %7952 = vmatpush1.bf16.msra.mxu0 0
    %7953 = vmatprep.subr.bf16.mxu0 0
    %7954 = vmatpush1.bf16.msra.mxu0 0
    %7955 = vmatprep.mubr.bf16.mxu0 0
    %7956 = vmatmul.mubr.bf16.gmra.mrb[0].mxu0 %v7654
    %v7957 = vpop.f32.mrb[0].mxu0
    %v7958 = vadd.f32 %v7703, %v7957
    %v7959 = vpop.f32.mrb[0].mxu0
    %v7960 = vadd.f32 %v7707, %v7959
    %v7961 = vpop.f32.mrb[0].mxu0
    %v7962 = vadd.f32 %v7703, %v7961
    %v7963 = vpop.f32.mrb[0].mxu0
    %v7964 = vadd.f32 %v7707, %v7963
    %7965 = vmatprep.mubr.bf16.mxu0 0
    %7966 = vmatmul.mubr.bf16.gmra.mrb[0].mxu0 %v7655
    %v7967 = vpop.f32.mrb[0].mxu0
    %v7968 = vadd.f32 %v7703, %v7967
    %v7969 = vpop.f32.mrb[0].mxu0
    %v7970 = vadd.f32 %v7707, %v7969
    %v7971 = vpop.f32.mrb[0].mxu0
    %v7972 = vpop.f32.mrb[0].mxu0
    %7973 = vdwg.mxu0
    %v7974 = vmax.f32 %v7907, 0.0
    %v7975 = vmax.f32 %v7909, 0.0
    %v7976 = vmax.f32 %v7958, 0.0
    %v7977 = vmax.f32 %v7960, 0.0
    %v7978 = vmax.f32 %v7911, 0.0
    %v7979 = vmax.f32 %v7913, 0.0
    %v7980 = vmax.f32 %v7962, 0.0
    %v7981 = vmax.f32 %v7964, 0.0
    %v7982 = vmax.f32 %v7917, 0.0
    %v7983 = vmax.f32 %v7919, 0.0
    %v7984 = vmax.f32 %v7968, 0.0
    %v7985 = vmax.f32 %v7970, 0.0
    %v7986 = vpack.c.bf16 %v7978, %v7974
    %v7987 = vpack.c.bf16 %v7979, %v7975
    %v7988 = vpack.c.bf16 %v7980, %v7976
    %v7989 = vpack.c.bf16 %v7981, %v7977
    %v7990 = vpack.c.bf16 %v7982, %v7982
    %v7991 = vpack.c.bf16 %v7983, %v7983
    %v7992 = vpack.c.bf16 %v7984, %v7984
    %v7993 = vpack.c.bf16 %v7985, %v7985
    %s7994 = scalar_lea.vmem %s12, 768
    %v7995 = vld [vmem:[%s7994] sm:$0xf]
    %v7996 = vld [vmem:[%s7994 + $0x4] sm:$0xf]
    %v7997 = vld [vmem:[%s7994 + $0x8] sm:$0xf]
    %v7998 = vld [vmem:[%s7994 + $0xc] sm:$0xf]
    %v7999 = vld [vmem:[%s7994 + $0x10] sm:$0xf]
    %v8000 = vld [vmem:[%s7994 + $0x14] sm:$0xf]
    %v8001 = vld [vmem:[%s7994 + $0x18] sm:$0xf]
    %v8002 = vld [vmem:[%s7994 + $0x1c] sm:$0xf]
    %v8003 = vld [vmem:[%s7994 + $0x20] sm:$0xf]
    %v8004 = vld [vmem:[%s7994 + $0x24] sm:$0xf]
    %v8005 = vld [vmem:[%s7994 + $0x28] sm:$0xf]
    %v8006 = vld [vmem:[%s7994 + $0x2c] sm:$0xf]
    %v8007 = vld [vmem:[%s7994 + $0x30] sm:$0xf]
    %v8008 = vld [vmem:[%s7994 + $0x34] sm:$0xf]
    %v8009 = vld [vmem:[%s7994 + $0x38] sm:$0xf]
    %v8010 = vld [vmem:[%s7994 + $0x3c] sm:$0xf]
    %v8011 = vld [vmem:[%s7994 + $0x40] sm:$0xf]
    %v8012 = vld [vmem:[%s7994 + $0x44] sm:$0xf]
    %v8013 = vld [vmem:[%s7994 + $0x48] sm:$0xf]
    %v8014 = vld [vmem:[%s7994 + $0x4c] sm:$0xf]
    %v8015 = vld [vmem:[%s7994 + $0x50] sm:$0xf]
    %v8016 = vld [vmem:[%s7994 + $0x54] sm:$0xf]
    %v8017 = vld [vmem:[%s7994 + $0x58] sm:$0xf]
    %v8018 = vld [vmem:[%s7994 + $0x5c] sm:$0xf]
    %v8019 = vld [vmem:[%s7994 + $0x60] sm:$0xf]
    %v8020 = vld [vmem:[%s7994 + $0x64] sm:$0xf]
    %v8021 = vld [vmem:[%s7994 + $0x68] sm:$0xf]
    %v8022 = vld [vmem:[%s7994 + $0x6c] sm:$0xf]
    %v8023 = vld [vmem:[%s7994 + $0x70] sm:$0xf]
    %v8024 = vld [vmem:[%s7994 + $0x74] sm:$0xf]
    %v8025 = vld [vmem:[%s7994 + $0x78] sm:$0xf]
    %v8026 = vld [vmem:[%s7994 + $0x7c] sm:$0xf]
    %v8027 = vld [vmem:[%s7994 + $0x80] sm:$0xf]
    %v8028 = vld [vmem:[%s7994 + $0x84] sm:$0xf]
    %v8029 = vld [vmem:[%s7994 + $0x88] sm:$0xf]
    %v8030 = vld [vmem:[%s7994 + $0x8c] sm:$0xf]
    %v8031 = vld [vmem:[%s7994 + $0x90] sm:$0xf]
    %v8032 = vld [vmem:[%s7994 + $0x94] sm:$0xf]
    %v8033 = vld [vmem:[%s7994 + $0x98] sm:$0xf]
    %v8034 = vld [vmem:[%s7994 + $0x9c] sm:$0xf]
    %v8035 = vld [vmem:[%s7994 + $0xa0] sm:$0xf]
    %v8036 = vld [vmem:[%s7994 + $0xa4] sm:$0xf]
    %v8037 = vld [vmem:[%s7994 + $0xa8] sm:$0xf]
    %v8038 = vld [vmem:[%s7994 + $0xac] sm:$0xf]
    %v8039 = vld [vmem:[%s7994 + $0xb0] sm:$0xf]
    %v8040 = vld [vmem:[%s7994 + $0xb4] sm:$0xf]
    %v8041 = vld [vmem:[%s7994 + $0xb8] sm:$0xf]
    %v8042 = vld [vmem:[%s7994 + $0xbc] sm:$0xf]
    %v8043 = vld [vmem:[%s7994 + $0xc0] sm:$0xf]
    %v8044 = vld [vmem:[%s7994 + $0xc4] sm:$0xf]
    %v8045 = vld [vmem:[%s7994 + $0xc8] sm:$0xf]
    %v8046 = vld [vmem:[%s7994 + $0xcc] sm:$0xf]
    %v8047 = vld [vmem:[%s7994 + $0xd0] sm:$0xf]
    %v8048 = vld [vmem:[%s7994 + $0xd4] sm:$0xf]
    %v8049 = vld [vmem:[%s7994 + $0xd8] sm:$0xf]
    %v8050 = vld [vmem:[%s7994 + $0xdc] sm:$0xf]
    %v8051 = vld [vmem:[%s7994 + $0xe0] sm:$0xf]
    %v8052 = vld [vmem:[%s7994 + $0xe4] sm:$0xf]
    %v8053 = vld [vmem:[%s7994 + $0xe8] sm:$0xf]
    %v8054 = vld [vmem:[%s7994 + $0xec] sm:$0xf]
    %v8055 = vld [vmem:[%s7994 + $0xf0] sm:$0xf]
    %v8056 = vld [vmem:[%s7994 + $0xf4] sm:$0xf]
    %v8057 = vld [vmem:[%s7994 + $0xf8] sm:$0xf]
    %v8058 = vld [vmem:[%s7994 + $0xfc] sm:$0xf]
    %s8059 = scalar_lea.vmem %s13, 3
    %v8060 = vld [vmem:[%s8059] sm:$0x1]
    %v8062 = vlaneseq
    %v8063 = vshrl.u32 %v8062, 7
    %v8064 = vsub.s32 0, %v8063
    %v8065 = vrot.slane %v8060, %v8064
    %v8131 = vunpack.c.l.b16 %v7995
    %v8132 = vunpack.c.l.b16 %v7996
    %v8133 = vunpack.c.l.b16 %v7997
    %v8134 = vunpack.c.l.b16 %v7998
    %v8135 = vunpack.c.l.b16 %v7999
    %v8136 = vunpack.c.l.b16 %v8000
    %v8137 = vunpack.c.l.b16 %v8001
    %v8138 = vunpack.c.l.b16 %v8002
    %v8139 = vunpack.c.l.b16 %v8003
    %v8140 = vunpack.c.l.b16 %v8004
    %v8141 = vunpack.c.l.b16 %v8005
    %v8142 = vunpack.c.l.b16 %v8006
    %v8143 = vunpack.c.l.b16 %v8007
    %v8144 = vunpack.c.l.b16 %v8008
    %v8145 = vunpack.c.l.b16 %v8009
    %v8146 = vunpack.c.l.b16 %v8010
    %v8147 = vunpack.c.l.b16 %v8011
    %v8148 = vunpack.c.l.b16 %v8012
    %v8149 = vunpack.c.l.b16 %v8013
    %v8150 = vunpack.c.l.b16 %v8014
    %v8151 = vunpack.c.l.b16 %v8015
    %v8152 = vunpack.c.l.b16 %v8016
    %v8153 = vunpack.c.l.b16 %v8017
    %v8154 = vunpack.c.l.b16 %v8018
    %v8155 = vunpack.c.l.b16 %v8019
    %v8156 = vunpack.c.l.b16 %v8020
    %v8157 = vunpack.c.l.b16 %v8021
    %v8158 = vunpack.c.l.b16 %v8022
    %v8159 = vunpack.c.l.b16 %v8023
    %v8160 = vunpack.c.l.b16 %v8024
    %v8161 = vunpack.c.l.b16 %v8025
    %v8162 = vunpack.c.l.b16 %v8026
    %v8163 = vunpack.c.l.b16 %v8027
    %v8164 = vunpack.c.l.b16 %v8028
    %v8165 = vunpack.c.l.b16 %v8029
    %v8166 = vunpack.c.l.b16 %v8030
    %v8167 = vunpack.c.l.b16 %v8031
    %v8168 = vunpack.c.l.b16 %v8032
    %v8169 = vunpack.c.l.b16 %v8033
    %v8170 = vunpack.c.l.b16 %v8034
    %v8171 = vunpack.c.l.b16 %v8035
    %v8172 = vunpack.c.l.b16 %v8036
    %v8173 = vunpack.c.l.b16 %v8037
    %v8174 = vunpack.c.l.b16 %v8038
    %v8175 = vunpack.c.l.b16 %v8039
    %v8176 = vunpack.c.l.b16 %v8040
    %v8177 = vunpack.c.l.b16 %v8041
    %v8178 = vunpack.c.l.b16 %v8042
    %v8179 = vunpack.c.l.b16 %v8043
    %v8180 = vunpack.c.l.b16 %v8044
    %v8181 = vunpack.c.l.b16 %v8045
    %v8182 = vunpack.c.l.b16 %v8046
    %v8183 = vunpack.c.l.b16 %v8047
    %v8184 = vunpack.c.l.b16 %v8048
    %v8185 = vunpack.c.l.b16 %v8049
    %v8186 = vunpack.c.l.b16 %v8050
    %v8187 = vunpack.c.l.b16 %v8051
    %v8188 = vunpack.c.l.b16 %v8052
    %v8189 = vunpack.c.l.b16 %v8053
    %v8190 = vunpack.c.l.b16 %v8054
    %v8191 = vunpack.c.l.b16 %v8055
    %v8192 = vunpack.c.l.b16 %v8056
    %v8193 = vunpack.c.l.b16 %v8057
    %v8194 = vunpack.c.l.b16 %v8058
    %v8195 = vpack.c.b16 %v8132, %v8131
    %v8196 = vpack.c.b16 %v8134, %v8133
    %v8197 = vpack.c.b16 %v8136, %v8135
    %v8198 = vpack.c.b16 %v8138, %v8137
    %v8199 = vpack.c.b16 %v8140, %v8139
    %v8200 = vpack.c.b16 %v8142, %v8141
    %v8201 = vpack.c.b16 %v8144, %v8143
    %v8202 = vpack.c.b16 %v8146, %v8145
    %v8203 = vpack.c.b16 %v8148, %v8147
    %v8204 = vpack.c.b16 %v8150, %v8149
    %v8205 = vpack.c.b16 %v8152, %v8151
    %v8206 = vpack.c.b16 %v8154, %v8153
    %v8207 = vpack.c.b16 %v8156, %v8155
    %v8208 = vpack.c.b16 %v8158, %v8157
    %v8209 = vpack.c.b16 %v8160, %v8159
    %v8210 = vpack.c.b16 %v8162, %v8161
    %v8211 = vpack.c.b16 %v8164, %v8163
    %v8212 = vpack.c.b16 %v8166, %v8165
    %v8213 = vpack.c.b16 %v8168, %v8167
    %v8214 = vpack.c.b16 %v8170, %v8169
    %v8215 = vpack.c.b16 %v8172, %v8171
    %v8216 = vpack.c.b16 %v8174, %v8173
    %v8217 = vpack.c.b16 %v8176, %v8175
    %v8218 = vpack.c.b16 %v8178, %v8177
    %v8219 = vpack.c.b16 %v8180, %v8179
    %v8220 = vpack.c.b16 %v8182, %v8181
    %v8221 = vpack.c.b16 %v8184, %v8183
    %v8222 = vpack.c.b16 %v8186, %v8185
    %v8223 = vpack.c.b16 %v8188, %v8187
    %v8224 = vpack.c.b16 %v8190, %v8189
    %v8225 = vpack.c.b16 %v8192, %v8191
    %v8226 = vpack.c.b16 %v8194, %v8193
    %8259 = vmatprep.subr.bf16.mxu0 0
    %8260 = vmatpush1.bf16.msra.mxu0 %v8195
    %8261 = vmatprep.subr.bf16.mxu0 0
    %8262 = vmatpush1.bf16.msra.mxu0 %v8196
    %8263 = vmatprep.subr.bf16.mxu0 0
    %8264 = vmatpush1.bf16.msra.mxu0 %v8197
    %8265 = vmatprep.subr.bf16.mxu0 0
    %8266 = vmatpush1.bf16.msra.mxu0 %v8198
    %8267 = vmatprep.subr.bf16.mxu0 0
    %8268 = vmatpush1.bf16.msra.mxu0 %v8199
    %8269 = vmatprep.subr.bf16.mxu0 0
    %8270 = vmatpush1.bf16.msra.mxu0 %v8200
    %8271 = vmatprep.subr.bf16.mxu0 0
    %8272 = vmatpush1.bf16.msra.mxu0 %v8201
    %8273 = vmatprep.subr.bf16.mxu0 0
    %8274 = vmatpush1.bf16.msra.mxu0 %v8202
    %8275 = vmatprep.subr.bf16.mxu0 0
    %8276 = vmatpush1.bf16.msra.mxu0 %v8203
    %8277 = vmatprep.subr.bf16.mxu0 0
    %8278 = vmatpush1.bf16.msra.mxu0 %v8204
    %8279 = vmatprep.subr.bf16.mxu0 0
    %8280 = vmatpush1.bf16.msra.mxu0 %v8205
    %8281 = vmatprep.subr.bf16.mxu0 0
    %8282 = vmatpush1.bf16.msra.mxu0 %v8206
    %8283 = vmatprep.subr.bf16.mxu0 0
    %8284 = vmatpush1.bf16.msra.mxu0 %v8207
    %8285 = vmatprep.subr.bf16.mxu0 0
    %8286 = vmatpush1.bf16.msra.mxu0 %v8208
    %8287 = vmatprep.subr.bf16.mxu0 0
    %8288 = vmatpush1.bf16.msra.mxu0 %v8209
    %8289 = vmatprep.subr.bf16.mxu0 0
    %8290 = vmatpush1.bf16.msra.mxu0 %v8210
    %8291 = vmatprep.mubr.bf16.mxu0 %v7987
    %8292 = vmatmul.mubr.bf16.gmra.mrb[0].mxu0 %v7986
    %v8293 = vpop.f32.mrb[0].mxu0
    %v8294 = vpop.f32.mrb[0].mxu0
    %v8295 = vpop.f32.mrb[0].mxu0
    %v8296 = vadd.f32 %v8065, %v8295
    %v8297 = vpop.f32.mrb[0].mxu0
    %8298 = vmatprep.mubr.bf16.mxu0 %v7991
    %8299 = vmatmul.mubr.bf16.gmra.mrb[0].mxu0 %v7990
    %v8300 = vpop.f32.mrb[0].mxu0
    %v8301 = vadd.f32 %v8065, %v8300
    %v8302 = vpop.f32.mrb[0].mxu0
    %v8303 = vpop.f32.mrb[0].mxu0
    %v8304 = vpop.f32.mrb[0].mxu0
    %8305 = vdwg.mxu0
    %8306 = vmatprep.subr.bf16.mxu0 0
    %8307 = vmatpush1.bf16.msra.mxu0 %v8211
    %8308 = vmatprep.subr.bf16.mxu0 0
    %8309 = vmatpush1.bf16.msra.mxu0 %v8212
    %8310 = vmatprep.subr.bf16.mxu0 0
    %8311 = vmatpush1.bf16.msra.mxu0 %v8213
    %8312 = vmatprep.subr.bf16.mxu0 0
    %8313 = vmatpush1.bf16.msra.mxu0 %v8214
    %8314 = vmatprep.subr.bf16.mxu0 0
    %8315 = vmatpush1.bf16.msra.mxu0 %v8215
    %8316 = vmatprep.subr.bf16.mxu0 0
    %8317 = vmatpush1.bf16.msra.mxu0 %v8216
    %8318 = vmatprep.subr.bf16.mxu0 0
    %8319 = vmatpush1.bf16.msra.mxu0 %v8217
    %8320 = vmatprep.subr.bf16.mxu0 0
    %8321 = vmatpush1.bf16.msra.mxu0 %v8218
    %8322 = vmatprep.subr.bf16.mxu0 0
    %8323 = vmatpush1.bf16.msra.mxu0 %v8219
    %8324 = vmatprep.subr.bf16.mxu0 0
    %8325 = vmatpush1.bf16.msra.mxu0 %v8220
    %8326 = vmatprep.subr.bf16.mxu0 0
    %8327 = vmatpush1.bf16.msra.mxu0 %v8221
    %8328 = vmatprep.subr.bf16.mxu0 0
    %8329 = vmatpush1.bf16.msra.mxu0 %v8222
    %8330 = vmatprep.subr.bf16.mxu0 0
    %8331 = vmatpush1.bf16.msra.mxu0 %v8223
    %8332 = vmatprep.subr.bf16.mxu0 0
    %8333 = vmatpush1.bf16.msra.mxu0 %v8224
    %8334 = vmatprep.subr.bf16.mxu0 0
    %8335 = vmatpush1.bf16.msra.mxu0 %v8225
    %8336 = vmatprep.subr.bf16.mxu0 0
    %8337 = vmatpush1.bf16.msra.mxu0 %v8226
    %8338 = vmatprep.mubr.bf16.mxu0 %v7989
    %8339 = vmatmul.mubr.bf16.gmra.mrb[0].mxu0 %v7988
    %v8340 = vpop.f32.mrb[0].mxu0
    %v8341 = vpop.f32.mrb[0].mxu0
    %v8342 = vpop.f32.mrb[0].mxu0
    %v8343 = vadd.f32 %v8296, %v8342
    %v8344 = vpop.f32.mrb[0].mxu0
    %8345 = vmatprep.mubr.bf16.mxu0 %v7993
    %8346 = vmatmul.mubr.bf16.gmra.mrb[0].mxu0 %v7992
    %v8347 = vpop.f32.mrb[0].mxu0
    %v8348 = vadd.f32 %v8301, %v8347
    %v8349 = vpop.f32.mrb[0].mxu0
    %v8350 = vpop.f32.mrb[0].mxu0
    %v8351 = vpop.f32.mrb[0].mxu0
    %8352 = vdwg.mxu0
    %v8353 = vadd.f32 %v7652, %v8343
    %v8354 = vadd.f32 %v7653, %v8348
    %s8355 = scalar_lea.vmem %s16, 3
    %v8356 = vld [vmem:[%s8355] sm:$0x1]
    %s8357 = scalar_lea.vmem %s17, 3
    %v8358 = vld [vmem:[%s8357] sm:$0x1]
    %8359 = vadd.xlane.f32.xlu0 %v8353
    %v8360 = vpop.xlane.xlu0 %8359
    %v8361 = vsel %vm1402, %v8354, 0.0
    %8362 = vadd.xlane.f32.xlu0 %v8361
    %v8363 = vpop.xlane.xlu0 %8362
    %v8364 = vmul.f32 %v8360, %v1406
    %v8365 = vmul.f32 %v8363, %v1406
    %v8366 = vsub.f32 %v8353, %v8364
    %v8367 = vsub.f32 %v8354, %v8365
    %v8368 = vmul.f32 %v8366, %v8366
    %v8369 = vmul.f32 %v8367, %v8367
    %8370 = vadd.xlane.f32.xlu0 %v8368
    %v8371 = vpop.xlane.xlu0 %8370
    %v8372 = vsel %vm1402, %v8369, 0.0
    %8373 = vadd.xlane.f32.xlu0 %v8372
    %v8374 = vpop.xlane.xlu0 %8373
    %v8375 = vmul.f32 %v8371, %v1406
    %v8376 = vmul.f32 %v8374, %v1406
    %v8377 = vadd.f32 %v8375, 1e-05
    %v8378 = vadd.f32 %v8376, 1e-05
    %v8379 = vrsqrt.pop %v8377
    %v8380 = vrsqrt.pop %v8378
    %v8381 = vmul.f32 %v8366, %v8379
    %v8382 = vmul.f32 %v8367, %v8380
    %v8384 = vlaneseq
    %v8385 = vshrl.u32 %v8384, 7
    %v8386 = vsub.s32 0, %v8385
    %v8387 = vrot.slane %v8356, %v8386
    %v8389 = vmul.f32 %v8381, %v8387
    %v8390 = vmul.f32 %v8382, %v8387
    %v8392 = vlaneseq
    %v8393 = vshrl.u32 %v8392, 7
    %v8394 = vsub.s32 0, %v8393
    %v8395 = vrot.slane %v8358, %v8394
    %v8397 = vadd.f32 %v8389, %v8395
    %v8398 = vadd.f32 %v8390, %v8395
    %8399 = vst [vmem:[#allocation2] sm:$0x1] %v8397
    %8400 = vst [vmem:[#allocation2] sm:$0x2] %v8398
    %v8401 = vld [vmem:[#allocation2] sm:$0x3]
    %v8402 = vpack.c.bf16 %v8401, %v8401
    %v8403 = vld [vmem:[%s18] sm:$0xf]
    %v8404 = vld [vmem:[%s18 + $0x4] sm:$0xf]
    %v8405 = vld [vmem:[%s18 + $0x8] sm:$0xf]
    %v8406 = vld [vmem:[%s18 + $0xc] sm:$0xf]
    %v8407 = vld [vmem:[%s18 + $0x10] sm:$0xf]
    %v8408 = vld [vmem:[%s18 + $0x14] sm:$0xf]
    %v8409 = vld [vmem:[%s18 + $0x18] sm:$0xf]
    %v8410 = vld [vmem:[%s18 + $0x1c] sm:$0xf]
    %v8411 = vld [vmem:[%s18 + $0x20] sm:$0xf]
    %v8412 = vld [vmem:[%s18 + $0x24] sm:$0xf]
    %v8413 = vld [vmem:[%s18 + $0x28] sm:$0xf]
    %v8414 = vld [vmem:[%s18 + $0x2c] sm:$0xf]
    %v8415 = vld [vmem:[%s18 + $0x30] sm:$0xf]
    %v8416 = vld [vmem:[%s18 + $0x34] sm:$0xf]
    %v8417 = vld [vmem:[%s18 + $0x38] sm:$0xf]
    %v8418 = vld [vmem:[%s18 + $0x3c] sm:$0xf]
    %v8419 = vld [vmem:[%s19] sm:$0x1]
    %v8421 = vlaneseq
    %v8422 = vshrl.u32 %v8421, 7
    %v8423 = vsub.s32 0, %v8422
    %v8424 = vrot.slane %v8419, %v8423
    %v8442 = vunpack.c.l.b16 %v8403
    %v8443 = vunpack.c.l.b16 %v8404
    %v8444 = vunpack.c.l.b16 %v8405
    %v8445 = vunpack.c.l.b16 %v8406
    %v8446 = vunpack.c.l.b16 %v8407
    %v8447 = vunpack.c.l.b16 %v8408
    %v8448 = vunpack.c.l.b16 %v8409
    %v8449 = vunpack.c.l.b16 %v8410
    %v8450 = vunpack.c.l.b16 %v8411
    %v8451 = vunpack.c.l.b16 %v8412
    %v8452 = vunpack.c.l.b16 %v8413
    %v8453 = vunpack.c.l.b16 %v8414
    %v8454 = vunpack.c.l.b16 %v8415
    %v8455 = vunpack.c.l.b16 %v8416
    %v8456 = vunpack.c.l.b16 %v8417
    %v8457 = vunpack.c.l.b16 %v8418
    %v8458 = vpack.c.b16 %v8443, %v8442
    %v8459 = vpack.c.b16 %v8445, %v8444
    %v8460 = vpack.c.b16 %v8447, %v8446
    %v8461 = vpack.c.b16 %v8449, %v8448
    %v8462 = vpack.c.b16 %v8451, %v8450
    %v8463 = vpack.c.b16 %v8453, %v8452
    %v8464 = vpack.c.b16 %v8455, %v8454
    %v8465 = vpack.c.b16 %v8457, %v8456
    %8474 = vmatprep.subr.bf16.mxu0 0
    %8475 = vmatpush1.bf16.msra.mxu0 %v8458
    %8476 = vmatprep.subr.bf16.mxu0 0
    %8477 = vmatpush1.bf16.msra.mxu0 %v8459
    %8478 = vmatprep.subr.bf16.mxu0 0
    %8479 = vmatpush1.bf16.msra.mxu0 %v8460
    %8480 = vmatprep.subr.bf16.mxu0 0
    %8481 = vmatpush1.bf16.msra.mxu0 %v8461
    %8482 = vmatprep.subr.bf16.mxu0 0
    %8483 = vmatpush1.bf16.msra.mxu0 %v8462
    %8484 = vmatprep.subr.bf16.mxu0 0
    %8485 = vmatpush1.bf16.msra.mxu0 %v8463
    %8486 = vmatprep.subr.bf16.mxu0 0
    %8487 = vmatpush1.bf16.msra.mxu0 %v8464
    %8488 = vmatprep.subr.bf16.mxu0 0
    %8489 = vmatpush1.bf16.msra.mxu0 %v8465
    %8490 = vmatprep.subr.bf16.mxu0 0
    %8491 = vmatpush1.bf16.msra.mxu0 0
    %8492 = vmatprep.subr.bf16.mxu0 0
    %8493 = vmatpush1.bf16.msra.mxu0 0
    %8494 = vmatprep.subr.bf16.mxu0 0
    %8495 = vmatpush1.bf16.msra.mxu0 0
    %8496 = vmatprep.subr.bf16.mxu0 0
    %8497 = vmatpush1.bf16.msra.mxu0 0
    %8498 = vmatprep.subr.bf16.mxu0 0
    %8499 = vmatpush1.bf16.msra.mxu0 0
    %8500 = vmatprep.subr.bf16.mxu0 0
    %8501 = vmatpush1.bf16.msra.mxu0 0
    %8502 = vmatprep.subr.bf16.mxu0 0
    %8503 = vmatpush1.bf16.msra.mxu0 0
    %8504 = vmatprep.subr.bf16.mxu0 0
    %8505 = vmatpush1.bf16.msra.mxu0 0
    %8506 = vmatprep.mubr.bf16.mxu0 0
    %8507 = vmatmul.mubr.bf16.gmra.mrb[0].mxu0 %v8402
    %v8508 = vpop.f32.mrb[0].mxu0
    %v8509 = vadd.f32 %v8424, %v8508
    %v8510 = vpop.f32.mrb[0].mxu0
    %v8511 = vpop.f32.mrb[0].mxu0
    %v8512 = vpop.f32.mrb[0].mxu0
    %8513 = vdwg.mxu0
    %8514 = vst [vmem:[#allocation3] sm:$0x3] %v8509
    // Predicated region
    $region82: #{cls4_forward.1} parent=1 // pred_check
      _
    $region83: #{cls4_forward.1} parent=1 // pred_check_branch
      %8516 = sbr.rel (0) target = $region85
    $region84: #{cls4_forward.1} parent=1 // pred_region
      %s8518 = ssub.s32 32, 32
      %8519 = vsyncadd [#allocation4], %s8518
      %s8521 = sshll.u32 [#allocation3], 4
      %s8522 = int_to_ptr.vmem [resolvable:$true] %s8521
      %8524 = dma.vmem_to_hbm [thread:$0]  %s8522, 32, %s20, [#allocation4]
    $region85: #{cls4_forward.1} parent=1 // pred_fallthru
      _
    // Predicated region
    $region86: #{cls4_forward.1} parent=1 // pred_check
      _
    $region87: #{cls4_forward.1} parent=1 // pred_check_branch
      %8526 = sbr.rel (0) target = $region89
    $region88: #{cls4_forward.1} parent=1 // pred_region
      %8527 = dma.done [#allocation4], 32
    $region89: #{cls4_forward.1} parent=1 // pred_fallthru
      _
    %8528 = vsyncpa [#allocation4], 1

</llo_original>
